<compile_context>
chip_gen: v7x
topology: tpu7x:2x2x1
jax: 0.10.0
libtpu: 0.0.40
codegen_flags: <defaults>
</compile_context>

<pallas_src>
import functools
import math

import jax
import jax.numpy as jnp
import numpy as np
from jax import lax
from jax.experimental import pallas as pl
from jax.experimental.pallas import tpu as pltpu


def _vmem_limit_bytes():
    """Per-generation VMEM budget with headroom (v7x: 64 MiB physical / TC)."""
    try:
        cap = int(pltpu.get_tpu_info().vmem_capacity_bytes)
    except Exception:
        cap = 64 * 1024 * 1024
    return max(32 * 1024 * 1024, min(cap // 2, 96 * 1024 * 1024))


# ----------------------------------------------------------------------------
# Fused ASPP kernel
# ----------------------------------------------------------------------------
def _aspp_fused_kernel(x_ref, w_ref, c_ref, o_ref, acc_ref, *, taps):
    # x_ref  : (1, D, H, W, Cin)   full unpadded volume of one batch element
    # w_ref  : (T, Cin, Cout)      folded per-tap weights (atrous_w @ out_w slice)
    # c_ref  : (1, 1, Cout)        per-batch constant row (biases + pooled branch)
    # o_ref  : (1, TD*H*W, Cout)   output rows for one D-slab (2-D slab store)
    # acc_ref: (TD, H, W, Cout)    f32 accumulator scratch
    _, D, H, W, Cin = x_ref.shape
    TD, _, _, Cout = acc_ref.shape
    t = pl.program_id(1)
    d0 = t * TD

    # init accumulator with the per-batch constant row
    acc_ref[...] = jnp.broadcast_to(
        c_ref[...].reshape(1, 1, 1, Cout), (TD, H, W, Cout)
    ).astype(jnp.float32)

    for ti, (dz, dy, dx) in enumerate(taps):
        # statically-known valid output box along H / W for this tap
        oh0, oh1 = max(0, -dy), min(H, H - dy)
        ow0, ow1 = max(0, -dx), min(W, W - dx)
        vh, vw = oh1 - oh0, ow1 - ow0
        ih0, iw0 = oh0 + dy, ow0 + dx
        w_tap = w_ref[ti]  # (Cin, Cout)

        def _tap(dz=dz, oh0=oh0, oh1=oh1, ow0=ow0, ow1=ow1,
                 vh=vh, vw=vw, ih0=ih0, iw0=iw0, w_tap=w_tap):
            if dz == 0:
                src_d = pl.multiple_of(d0, TD)
            else:
                src_d = pl.multiple_of(jnp.clip(d0 + dz, 0, D - TD), TD)
            patch = x_ref[0, pl.ds(src_d, TD), ih0:ih0 + vh, iw0:iw0 + vw, :]
            contrib = jnp.dot(
                patch.reshape(TD * vh * vw, Cin), w_tap,
                preferred_element_type=jnp.float32,
            )
            acc_ref[:, oh0:oh1, ow0:ow1, :] += contrib.reshape(TD, vh, vw, Cout)

        if dz == 0:
            _tap()  # center taps are valid everywhere
        else:
            # TD divides D and every active |dz|, so this tap's D-window for
            # the current tile is either fully inside the volume or entirely
            # in the (virtual) zero padding -> a single scalar gate suffices.
            valid = jnp.logical_and(d0 + dz >= 0, d0 + dz + TD <= D)
            pl.when(valid)(_tap)

    o_ref[...] = acc_ref[...].reshape(1, TD * H * W, Cout).astype(o_ref.dtype)


# ----------------------------------------------------------------------------
# Weight folding (plain JAX, tiny) + fused forward
# ----------------------------------------------------------------------------
def _fold_params(p, D, H, W):
    """Fold each branch with its slice of the 1x1x1 output projection."""
    depth = p["out_b"].shape[0]
    hp = lax.Precision.HIGHEST
    # concat order in the reference: [img, a1, a6, a12, a18]
    w_img, w_a1, w_a6, w_a12, w_a18 = (
        p["out_w"][i * depth:(i + 1) * depth] for i in range(5)
    )

    offsets = [(0, 0, 0)]
    weights = [None]  # merged center tap, filled below
    center = jnp.dot(p["a1_w"], w_a1, precision=hp)

    for w3, wsl, dil in ((p["a6_w"], w_a6, 6),
                         (p["a12_w"], w_a12, 12),
                         (p["a18_w"], w_a18, 18)):
        center = center + jnp.dot(w3[1, 1, 1], wsl, precision=hp)
        for kd in range(3):
            for kh in range(3):
                for kw in range(3):
                    if (kd, kh, kw) == (1, 1, 1):
                        continue
                    dz, dy, dx = (kd - 1) * dil, (kh - 1) * dil, (kw - 1) * dil
                    if abs(dz) >= D or abs(dy) >= H or abs(dx) >= W:
                        continue  # tap only ever reads zero padding -> dead
                    offsets.append((dz, dy, dx))
                    weights.append(jnp.dot(w3[kd, kh, kw], wsl, precision=hp))
    weights[0] = center
    w_taps = jnp.stack(weights, axis=0)  # (T, Cin, depth)

    bias = (p["out_b"]
            + jnp.dot(p["a1_b"], w_a1, precision=hp)
            + jnp.dot(p["a6_b"], w_a6, precision=hp)
            + jnp.dot(p["a12_b"], w_a12, precision=hp)
            + jnp.dot(p["a18_b"], w_a18, precision=hp))  # (depth,)
    return tuple(offsets), w_taps, w_img, bias


def _choose_d_tile(D, H, W, Cin, depth, offsets):
    """Largest D tile that divides D and every active |dz|, under a VMEM budget."""
    g = D
    for v in {abs(o[0]) for o in offsets if o[0] != 0}:
        g = math.gcd(g, v)
    budget = 4 * 1024 * 1024
    td = 1
    for cand in range(1, g + 1):
        if g % cand == 0 and cand * H * W * max(Cin, depth) * 4 <= budget:
            td = cand
    return td


@jax.jit
def aspp_forward(x, p):
    """x: (N, D, H, W, Cin) -> (N, D, H, W, depth)."""
    N, D, H, W, Cin = x.shape
    depth = p["out_b"].shape[0]
    hp = lax.Precision.HIGHEST

    offsets, w_taps, w_img, bias = _fold_params(p, D, H, W)
    T = len(offsets)

    # Tiny pooled-image branch stays in plain JAX (per review): global mean,
    # 1x1x1 conv, its out_w slice, and all biases fold into one row per batch.
    pooled = x.mean(axis=(1, 2, 3))                                   # (N, Cin)
    img = jnp.dot(pooled, p["conv_w"], precision=hp) + p["conv_b"]    # (N, depth)
    const_rows = (jnp.dot(img, w_img, precision=hp) + bias)[:, None, :]  # (N,1,depth)

    td = _choose_d_tile(D, H, W, Cin, depth, offsets)
    n_dt = D // td

    kernel = functools.partial(_aspp_fused_kernel, taps=offsets)
    out = pl.pallas_call(
        kernel,
        out_shape=jax.ShapeDtypeStruct((N * n_dt, td * H * W, depth), jnp.float32),
        grid_spec=pltpu.PrefetchScalarGridSpec(
            num_scalar_prefetch=0,
            grid=(N, n_dt),
            in_specs=[
                # full unpadded volume of batch n; block index depends only on
                # n -> stays VMEM-resident across the inner D-tile axis
                pl.BlockSpec((1, D, H, W, Cin), lambda n, t: (n, 0, 0, 0, 0)),
                # folded tap weights: grid-invariant, loaded once
                pl.BlockSpec((T, Cin, depth), lambda n, t: (0, 0, 0)),
                # per-batch constant row
                pl.BlockSpec((1, 1, depth), lambda n, t: (n, 0, 0)),
            ],
            out_specs=pl.BlockSpec(
                (1, td * H * W, depth), lambda n, t: (n * n_dt + t, 0, 0)
            ),
            scratch_shapes=[pltpu.VMEM((td, H, W, depth), jnp.float32)],
        ),
        compiler_params=pltpu.CompilerParams(
            dimension_semantics=("parallel", "parallel"),
            vmem_limit_bytes=_vmem_limit_bytes(),
        ),
    )(x, w_taps, const_rows)

    return out.reshape(N, D, H, W, depth)


# ----------------------------------------------------------------------------
# Parameters + pure-JAX reference (unfused) for correctness checking
# ----------------------------------------------------------------------------
def init_params(key, in_ch, depth):
    ks = jax.random.split(key, 12)
    s = 0.1

    def w(k, shape):
        return s * jax.random.normal(k, shape, jnp.float32)

    return dict(
        conv_w=w(ks[0], (in_ch, depth)), conv_b=w(ks[1], (depth,)),
        a1_w=w(ks[2], (in_ch, depth)), a1_b=w(ks[3], (depth,)),
        a6_w=w(ks[4], (3, 3, 3, in_ch, depth)), a6_b=w(ks[5], (depth,)),
        a12_w=w(ks[6], (3, 3, 3, in_ch, depth)), a12_b=w(ks[7], (depth,)),
        a18_w=w(ks[8], (3, 3, 3, in_ch, depth)), a18_b=w(ks[9], (depth,)),
        out_w=w(ks[10], (5 * depth, depth)), out_b=w(ks[11], (depth,)),
    )


def aspp_reference(x, p):
    N, D, H, W, Cin = x.shape
    depth = p["conv_w"].shape[1]
    hp = lax.Precision.HIGHEST

    pooled = x.mean(axis=(1, 2, 3))
    img = jnp.dot(pooled, p["conv_w"], precision=hp) + p["conv_b"]
    img = jnp.broadcast_to(img[:, None, None, None, :], (N, D, H, W, depth))

    a1 = jnp.einsum("ndhwc,co->ndhwo", x, p["a1_w"], precision=hp) + p["a1_b"]

    def dconv(w, b, dil):
        return (
            lax.conv_general_dilated(
                x, w, window_strides=(1, 1, 1),
                padding=[(dil, dil)] * 3, rhs_dilation=(dil, dil, dil),
                dimension_numbers=("NDHWC", "DHWIO", "NDHWC"),
                precision=hp,
            )
            + b
        )

    a6 = dconv(p["a6_w"], p["a6_b"], 6)
    a12 = dconv(p["a12_w"], p["a12_b"], 12)
    a18 = dconv(p["a18_w"], p["a18_b"], 18)

    cat = jnp.concatenate([img, a1, a6, a12, a18], axis=-1)
    return jnp.einsum("ndhwc,co->ndhwo", cat, p["out_w"], precision=hp) + p["out_b"]


if __name__ == "__main__":
    key = jax.random.PRNGKey(0)
    kx, kp = jax.random.split(key)

    # Small shapes: batch=2, spatial 8x8x8, in_channel=4, depth=8.
    N, D, H, W = 2, 8, 8, 8
    in_ch, depth = 4, 8

    x = jax.random.normal(kx, (N, D, H, W, in_ch), jnp.float32)
    params = init_params(kp, in_ch, depth)

    out = jax.block_until_ready(aspp_forward(x, params))
    ref = jax.block_until_ready(aspp_reference(x, params))

    assert out.shape == (N, D, H, W, depth), out.shape
    np.testing.assert_allclose(
        np.asarray(out), np.asarray(ref), rtol=1e-2, atol=1e-2
    )
    print("KERNEL_OK")
</pallas_src>

<mosaic_0001>
module attributes {stable_mosaic.version = 11 : i64} {
  func.func @_aspp_fused_kernel(%arg0: i32, %arg1: i32, %arg2: memref<1x8x8x8x4xf32, #tpu.memory_space<vmem>>, %arg3: memref<27x4x8xf32, #tpu.memory_space<vmem>>, %arg4: memref<1x1x8xf32, #tpu.memory_space<vmem>>, %arg5: memref<1x128x8xf32, #tpu.memory_space<vmem>>, %arg6: memref<2x8x8x8xf32, #tpu.memory_space<vmem>>) attributes {dimension_semantics = [#tpu.dimension_semantics<parallel>, #tpu.dimension_semantics<parallel>], iteration_bounds = array<i64: 2, 4>, scalar_prefetch = 0 : i64, scratch_operands = 1 : i64, tpu.core_type = #tpu.core_type<tc>, window_params = [{transform_indices = @transform_0, window_bounds = array<i64: 1, 8, 8, 8, 4>}, {pipeline_mode = #tpu.pipeline_mode<synchronous>, transform_indices = @transform_1, window_bounds = array<i64: 27, 4, 8>}, {transform_indices = @transform_2, window_bounds = array<i64: 1, 1, 8>}, {transform_indices = @transform_3, window_bounds = array<i64: 1, 128, 8>}]} {
    %c2_i32 = arith.constant 2 : i32
    %0 = arith.muli %arg1, %c2_i32 : i32
    %c0 = arith.constant 0 : index
    %c0_0 = arith.constant 0 : index
    %c0_1 = arith.constant 0 : index
    %1 = vector.load %arg4[%c0, %c0_0, %c0_1] : memref<1x1x8xf32, #tpu.memory_space<vmem>>, vector<1x1x8xf32>
    %2 = vector.shape_cast %1 : vector<1x1x8xf32> to vector<1x1x1x8xf32>
    %3 = vector.shape_cast %2 : vector<1x1x1x8xf32> to vector<1x1x1x8xf32>
    %4 = vector.broadcast %3 : vector<1x1x1x8xf32> to vector<2x8x8x8xf32>
    %c0_2 = arith.constant 0 : index
    %c0_3 = arith.constant 0 : index
    %c0_4 = arith.constant 0 : index
    %c0_5 = arith.constant 0 : index
    %5 = vector.load %arg6[%c0_2, %c0_3, %c0_4, %c0_5] : memref<2x8x8x8xf32, #tpu.memory_space<vmem>>, vector<2x8x8x8xf32>
    tpu.vector_store %arg6[%c0_2, %c0_3, %c0_4, %c0_5], %4 {strides = array<i32>} : memref<2x8x8x8xf32, #tpu.memory_space<vmem>>, vector<2x8x8x8xf32>,
    %c0_6 = arith.constant 0 : index
    %c0_7 = arith.constant 0 : index
    %c0_8 = arith.constant 0 : index
    %6 = vector.load %arg3[%c0_6, %c0_7, %c0_8] : memref<27x4x8xf32, #tpu.memory_space<vmem>>, vector<1x4x8xf32>
    %7 = vector.shape_cast %6 : vector<1x4x8xf32> to vector<4x8xf32>
    %8 = tpu.assume_multiple %0, 2 : i32
    %c0_9 = arith.constant 0 : index
    %9 = arith.index_cast %8 : i32 to index
    %c0_10 = arith.constant 0 : index
    %c0_11 = arith.constant 0 : index
    %c0_12 = arith.constant 0 : index
    %10 = vector.load %arg2[%c0_9, %9, %c0_10, %c0_11, %c0_12] : memref<1x8x8x8x4xf32, #tpu.memory_space<vmem>>, vector<1x2x8x8x4xf32>
    %11 = vector.shape_cast %10 : vector<1x2x8x8x4xf32> to vector<2x8x8x4xf32>
    %12 = vector.shape_cast %11 : vector<2x8x8x4xf32> to vector<128x4xf32>
    %cst = arith.constant dense<0.000000e+00> : vector<128x8xf32>
    %13 = tpu.matmul %12, %7, %cst {dimension_numbers = #tpu.dot_dimension_numbers<[1], [0], [0], [1], [0, 0, 1, 1], [], []>} : vector<128x4xf32>, vector<4x8xf32>, vector<128x8xf32> -> vector<128x8xf32>
    %c0_13 = arith.constant 0 : index
    %c0_14 = arith.constant 0 : index
    %c0_15 = arith.constant 0 : index
    %c0_16 = arith.constant 0 : index
    %14 = vector.load %arg6[%c0_13, %c0_14, %c0_15, %c0_16] : memref<2x8x8x8xf32, #tpu.memory_space<vmem>>, vector<2x8x8x8xf32>
    %15 = vector.shape_cast %13 : vector<128x8xf32> to vector<2x8x8x8xf32>
    %16 = arith.addf %14, %15 : vector<2x8x8x8xf32>
    %c0_17 = arith.constant 0 : index
    %c0_18 = arith.constant 0 : index
    %c0_19 = arith.constant 0 : index
    %c0_20 = arith.constant 0 : index
    %17 = vector.load %arg6[%c0_17, %c0_18, %c0_19, %c0_20] : memref<2x8x8x8xf32, #tpu.memory_space<vmem>>, vector<2x8x8x8xf32>
    tpu.vector_store %arg6[%c0_17, %c0_18, %c0_19, %c0_20], %16 {strides = array<i32>} : memref<2x8x8x8xf32, #tpu.memory_space<vmem>>, vector<2x8x8x8xf32>,
    %c1 = arith.constant 1 : index
    %c0_21 = arith.constant 0 : index
    %c0_22 = arith.constant 0 : index
    %18 = vector.load %arg3[%c1, %c0_21, %c0_22] : memref<27x4x8xf32, #tpu.memory_space<vmem>>, vector<1x4x8xf32>
    %19 = vector.shape_cast %18 : vector<1x4x8xf32> to vector<4x8xf32>
    %c-6_i32 = arith.constant -6 : i32
    %20 = arith.addi %0, %c-6_i32 : i32
    %c0_i32 = arith.constant 0 : i32
    %21 = arith.cmpi sge, %20, %c0_i32 : i32
    %c-6_i32_23 = arith.constant -6 : i32
    %22 = arith.addi %0, %c-6_i32_23 : i32
    %c2_i32_24 = arith.constant 2 : i32
    %23 = arith.addi %22, %c2_i32_24 : i32
    %c8_i32 = arith.constant 8 : i32
    %24 = arith.cmpi sle, %23, %c8_i32 : i32
    %25 = arith.andi %21, %24 : i1
    %26 = arith.extui %25 : i1 to i32
    %c0_i32_25 = arith.constant 0 : i32
    %27 = arith.cmpi ne, %26, %c0_i32_25 : i32
    scf.if %27 {
      %c-6_i32_288 = arith.constant -6 : i32
      %297 = arith.addi %0, %c-6_i32_288 : i32
      %c0_i32_289 = arith.constant 0 : i32
      %c6_i32_290 = arith.constant 6 : i32
      %298 = arith.maxsi %c0_i32_289, %297 : i32
      %299 = arith.minsi %c6_i32_290, %298 : i32
      %300 = tpu.assume_multiple %299, 2 : i32
      %c0_291 = arith.constant 0 : index
      %301 = arith.index_cast %300 : i32 to index
      %c0_292 = arith.constant 0 : index
      %c0_293 = arith.constant 0 : index
      %c0_294 = arith.constant 0 : index
      %302 = vector.load %arg2[%c0_291, %301, %c0_292, %c0_293, %c0_294] : memref<1x8x8x8x4xf32, #tpu.memory_space<vmem>>, vector<1x2x2x2x4xf32>
      %303 = vector.shape_cast %302 : vector<1x2x2x2x4xf32> to vector<2x2x2x4xf32>
      %304 = vector.shape_cast %303 : vector<2x2x2x4xf32> to vector<8x4xf32>
      %cst_295 = arith.constant dense<0.000000e+00> : vector<8x8xf32>
      %305 = tpu.matmul %304, %19, %cst_295 {dimension_numbers = #tpu.dot_dimension_numbers<[1], [0], [0], [1], [0, 0, 1, 1], [], []>} : vector<8x4xf32>, vector<4x8xf32>, vector<8x8xf32> -> vector<8x8xf32>
      %c0_296 = arith.constant 0 : index
      %c6_297 = arith.constant 6 : index
      %c6_298 = arith.constant 6 : index
      %c0_299 = arith.constant 0 : index
      %306 = vector.load %arg6[%c0_296, %c6_297, %c6_298, %c0_299] : memref<2x8x8x8xf32, #tpu.memory_space<vmem>>, vector<2x2x2x8xf32>
      %307 = vector.shape_cast %305 : vector<8x8xf32> to vector<2x2x2x8xf32>
      %308 = arith.addf %306, %307 : vector<2x2x2x8xf32>
      %c0_300 = arith.constant 0 : index
      %c6_301 = arith.constant 6 : index
      %c6_302 = arith.constant 6 : index
      %c0_303 = arith.constant 0 : index
      %309 = vector.load %arg6[%c0_300, %c6_301, %c6_302, %c0_303] : memref<2x8x8x8xf32, #tpu.memory_space<vmem>>, vector<2x2x2x8xf32>
      tpu.vector_store %arg6[%c0_300, %c6_301, %c6_302, %c0_303], %308 {strides = array<i32>} : memref<2x8x8x8xf32, #tpu.memory_space<vmem>>, vector<2x2x2x8xf32>,
    } else {
    }
    %c2 = arith.constant 2 : index
    %c0_26 = arith.constant 0 : index
    %c0_27 = arith.constant 0 : index
    %28 = vector.load %arg3[%c2, %c0_26, %c0_27] : memref<27x4x8xf32, #tpu.memory_space<vmem>>, vector<1x4x8xf32>
    %29 = vector.shape_cast %28 : vector<1x4x8xf32> to vector<4x8xf32>
    %c-6_i32_28 = arith.constant -6 : i32
    %30 = arith.addi %0, %c-6_i32_28 : i32
    %c0_i32_29 = arith.constant 0 : i32
    %31 = arith.cmpi sge, %30, %c0_i32_29 : i32
    %c-6_i32_30 = arith.constant -6 : i32
    %32 = arith.addi %0, %c-6_i32_30 : i32
    %c2_i32_31 = arith.constant 2 : i32
    %33 = arith.addi %32, %c2_i32_31 : i32
    %c8_i32_32 = arith.constant 8 : i32
    %34 = arith.cmpi sle, %33, %c8_i32_32 : i32
    %35 = arith.andi %31, %34 : i1
    %36 = arith.extui %35 : i1 to i32
    %c0_i32_33 = arith.constant 0 : i32
    %37 = arith.cmpi ne, %36, %c0_i32_33 : i32
    scf.if %37 {
      %c-6_i32_288 = arith.constant -6 : i32
      %297 = arith.addi %0, %c-6_i32_288 : i32
      %c0_i32_289 = arith.constant 0 : i32
      %c6_i32_290 = arith.constant 6 : i32
      %298 = arith.maxsi %c0_i32_289, %297 : i32
      %299 = arith.minsi %c6_i32_290, %298 : i32
      %300 = tpu.assume_multiple %299, 2 : i32
      %c0_291 = arith.constant 0 : index
      %301 = arith.index_cast %300 : i32 to index
      %c0_292 = arith.constant 0 : index
      %c0_293 = arith.constant 0 : index
      %c0_294 = arith.constant 0 : index
      %302 = vector.load %arg2[%c0_291, %301, %c0_292, %c0_293, %c0_294] : memref<1x8x8x8x4xf32, #tpu.memory_space<vmem>>, vector<1x2x2x8x4xf32>
      %303 = vector.shape_cast %302 : vector<1x2x2x8x4xf32> to vector<2x2x8x4xf32>
      %304 = vector.shape_cast %303 : vector<2x2x8x4xf32> to vector<32x4xf32>
      %cst_295 = arith.constant dense<0.000000e+00> : vector<32x8xf32>
      %305 = tpu.matmul %304, %29, %cst_295 {dimension_numbers = #tpu.dot_dimension_numbers<[1], [0], [0], [1], [0, 0, 1, 1], [], []>} : vector<32x4xf32>, vector<4x8xf32>, vector<32x8xf32> -> vector<32x8xf32>
      %c0_296 = arith.constant 0 : index
      %c6_297 = arith.constant 6 : index
      %c0_298 = arith.constant 0 : index
      %c0_299 = arith.constant 0 : index
      %306 = vector.load %arg6[%c0_296, %c6_297, %c0_298, %c0_299] : memref<2x8x8x8xf32, #tpu.memory_space<vmem>>, vector<2x2x8x8xf32>
      %307 = vector.shape_cast %305 : vector<32x8xf32> to vector<2x2x8x8xf32>
      %308 = arith.addf %306, %307 : vector<2x2x8x8xf32>
      %c0_300 = arith.constant 0 : index
      %c6_301 = arith.constant 6 : index
      %c0_302 = arith.constant 0 : index
      %c0_303 = arith.constant 0 : index
      %309 = vector.load %arg6[%c0_300, %c6_301, %c0_302, %c0_303] : memref<2x8x8x8xf32, #tpu.memory_space<vmem>>, vector<2x2x8x8xf32>
      tpu.vector_store %arg6[%c0_300, %c6_301, %c0_302, %c0_303], %308 {strides = array<i32>} : memref<2x8x8x8xf32, #tpu.memory_space<vmem>>, vector<2x2x8x8xf32>,
    } else {
    }
    %c3 = arith.constant 3 : index
    %c0_34 = arith.constant 0 : index
    %c0_35 = arith.constant 0 : index
    %38 = vector.load %arg3[%c3, %c0_34, %c0_35] : memref<27x4x8xf32, #tpu.memory_space<vmem>>, vector<1x4x8xf32>
    %39 = vector.shape_cast %38 : vector<1x4x8xf32> to vector<4x8xf32>
    %c-6_i32_36 = arith.constant -6 : i32
    %40 = arith.addi %0, %c-6_i32_36 : i32
    %c0_i32_37 = arith.constant 0 : i32
    %41 = arith.cmpi sge, %40, %c0_i32_37 : i32
    %c-6_i32_38 = arith.constant -6 : i32
    %42 = arith.addi %0, %c-6_i32_38 : i32
    %c2_i32_39 = arith.constant 2 : i32
    %43 = arith.addi %42, %c2_i32_39 : i32
    %c8_i32_40 = arith.constant 8 : i32
    %44 = arith.cmpi sle, %43, %c8_i32_40 : i32
    %45 = arith.andi %41, %44 : i1
    %46 = arith.extui %45 : i1 to i32
    %c0_i32_41 = arith.constant 0 : i32
    %47 = arith.cmpi ne, %46, %c0_i32_41 : i32
    scf.if %47 {
      %c-6_i32_288 = arith.constant -6 : i32
      %297 = arith.addi %0, %c-6_i32_288 : i32
      %c0_i32_289 = arith.constant 0 : i32
      %c6_i32_290 = arith.constant 6 : i32
      %298 = arith.maxsi %c0_i32_289, %297 : i32
      %299 = arith.minsi %c6_i32_290, %298 : i32
      %300 = tpu.assume_multiple %299, 2 : i32
      %c0_291 = arith.constant 0 : index
      %301 = arith.index_cast %300 : i32 to index
      %c0_292 = arith.constant 0 : index
      %c6_293 = arith.constant 6 : index
      %c0_294 = arith.constant 0 : index
      %302 = vector.load %arg2[%c0_291, %301, %c0_292, %c6_293, %c0_294] : memref<1x8x8x8x4xf32, #tpu.memory_space<vmem>>, vector<1x2x2x2x4xf32>
      %303 = vector.shape_cast %302 : vector<1x2x2x2x4xf32> to vector<2x2x2x4xf32>
      %304 = vector.shape_cast %303 : vector<2x2x2x4xf32> to vector<8x4xf32>
      %cst_295 = arith.constant dense<0.000000e+00> : vector<8x8xf32>
      %305 = tpu.matmul %304, %39, %cst_295 {dimension_numbers = #tpu.dot_dimension_numbers<[1], [0], [0], [1], [0, 0, 1, 1], [], []>} : vector<8x4xf32>, vector<4x8xf32>, vector<8x8xf32> -> vector<8x8xf32>
      %c0_296 = arith.constant 0 : index
      %c6_297 = arith.constant 6 : index
      %c0_298 = arith.constant 0 : index
      %c0_299 = arith.constant 0 : index
      %306 = vector.load %arg6[%c0_296, %c6_297, %c0_298, %c0_299] : memref<2x8x8x8xf32, #tpu.memory_space<vmem>>, vector<2x2x2x8xf32>
      %307 = vector.shape_cast %305 : vector<8x8xf32> to vector<2x2x2x8xf32>
      %308 = arith.addf %306, %307 : vector<2x2x2x8xf32>
      %c0_300 = arith.constant 0 : index
      %c6_301 = arith.constant 6 : index
      %c0_302 = arith.constant 0 : index
      %c0_303 = arith.constant 0 : index
      %309 = vector.load %arg6[%c0_300, %c6_301, %c0_302, %c0_303] : memref<2x8x8x8xf32, #tpu.memory_space<vmem>>, vector<2x2x2x8xf32>
      tpu.vector_store %arg6[%c0_300, %c6_301, %c0_302, %c0_303], %308 {strides = array<i32>} : memref<2x8x8x8xf32, #tpu.memory_space<vmem>>, vector<2x2x2x8xf32>,
    } else {
    }
    %c4 = arith.constant 4 : index
    %c0_42 = arith.constant 0 : index
    %c0_43 = arith.constant 0 : index
    %48 = vector.load %arg3[%c4, %c0_42, %c0_43] : memref<27x4x8xf32, #tpu.memory_space<vmem>>, vector<1x4x8xf32>
    %49 = vector.shape_cast %48 : vector<1x4x8xf32> to vector<4x8xf32>
    %c-6_i32_44 = arith.constant -6 : i32
    %50 = arith.addi %0, %c-6_i32_44 : i32
    %c0_i32_45 = arith.constant 0 : i32
    %51 = arith.cmpi sge, %50, %c0_i32_45 : i32
    %c-6_i32_46 = arith.constant -6 : i32
    %52 = arith.addi %0, %c-6_i32_46 : i32
    %c2_i32_47 = arith.constant 2 : i32
    %53 = arith.addi %52, %c2_i32_47 : i32
    %c8_i32_48 = arith.constant 8 : i32
    %54 = arith.cmpi sle, %53, %c8_i32_48 : i32
    %55 = arith.andi %51, %54 : i1
    %56 = arith.extui %55 : i1 to i32
    %c0_i32_49 = arith.constant 0 : i32
    %57 = arith.cmpi ne, %56, %c0_i32_49 : i32
    scf.if %57 {
      %c-6_i32_288 = arith.constant -6 : i32
      %297 = arith.addi %0, %c-6_i32_288 : i32
      %c0_i32_289 = arith.constant 0 : i32
      %c6_i32_290 = arith.constant 6 : i32
      %298 = arith.maxsi %c0_i32_289, %297 : i32
      %299 = arith.minsi %c6_i32_290, %298 : i32
      %300 = tpu.assume_multiple %299, 2 : i32
      %c0_291 = arith.constant 0 : index
      %301 = arith.index_cast %300 : i32 to index
      %c0_292 = arith.constant 0 : index
      %c0_293 = arith.constant 0 : index
      %c0_294 = arith.constant 0 : index
      %302 = vector.load %arg2[%c0_291, %301, %c0_292, %c0_293, %c0_294] : memref<1x8x8x8x4xf32, #tpu.memory_space<vmem>>, vector<1x2x8x2x4xf32>
      %303 = vector.shape_cast %302 : vector<1x2x8x2x4xf32> to vector<2x8x2x4xf32>
      %304 = vector.shape_cast %303 : vector<2x8x2x4xf32> to vector<32x4xf32>
      %cst_295 = arith.constant dense<0.000000e+00> : vector<32x8xf32>
      %305 = tpu.matmul %304, %49, %cst_295 {dimension_numbers = #tpu.dot_dimension_numbers<[1], [0], [0], [1], [0, 0, 1, 1], [], []>} : vector<32x4xf32>, vector<4x8xf32>, vector<32x8xf32> -> vector<32x8xf32>
      %c0_296 = arith.constant 0 : index
      %c0_297 = arith.constant 0 : index
      %c6_298 = arith.constant 6 : index
      %c0_299 = arith.constant 0 : index
      %306 = vector.load %arg6[%c0_296, %c0_297, %c6_298, %c0_299] : memref<2x8x8x8xf32, #tpu.memory_space<vmem>>, vector<2x8x2x8xf32>
      %307 = vector.shape_cast %305 : vector<32x8xf32> to vector<2x8x2x8xf32>
      %308 = arith.addf %306, %307 : vector<2x8x2x8xf32>
      %c0_300 = arith.constant 0 : index
      %c0_301 = arith.constant 0 : index
      %c6_302 = arith.constant 6 : index
      %c0_303 = arith.constant 0 : index
      %309 = vector.load %arg6[%c0_300, %c0_301, %c6_302, %c0_303] : memref<2x8x8x8xf32, #tpu.memory_space<vmem>>, vector<2x8x2x8xf32>
      tpu.vector_store %arg6[%c0_300, %c0_301, %c6_302, %c0_303], %308 {strides = array<i32>} : memref<2x8x8x8xf32, #tpu.memory_space<vmem>>, vector<2x8x2x8xf32>,
    } else {
    }
    %c5 = arith.constant 5 : index
    %c0_50 = arith.constant 0 : index
    %c0_51 = arith.constant 0 : index
    %58 = vector.load %arg3[%c5, %c0_50, %c0_51] : memref<27x4x8xf32, #tpu.memory_space<vmem>>, vector<1x4x8xf32>
    %59 = vector.shape_cast %58 : vector<1x4x8xf32> to vector<4x8xf32>
    %c-6_i32_52 = arith.constant -6 : i32
    %60 = arith.addi %0, %c-6_i32_52 : i32
    %c0_i32_53 = arith.constant 0 : i32
    %61 = arith.cmpi sge, %60, %c0_i32_53 : i32
    %c-6_i32_54 = arith.constant -6 : i32
    %62 = arith.addi %0, %c-6_i32_54 : i32
    %c2_i32_55 = arith.constant 2 : i32
    %63 = arith.addi %62, %c2_i32_55 : i32
    %c8_i32_56 = arith.constant 8 : i32
    %64 = arith.cmpi sle, %63, %c8_i32_56 : i32
    %65 = arith.andi %61, %64 : i1
    %66 = arith.extui %65 : i1 to i32
    %c0_i32_57 = arith.constant 0 : i32
    %67 = arith.cmpi ne, %66, %c0_i32_57 : i32
    scf.if %67 {
      %c-6_i32_288 = arith.constant -6 : i32
      %297 = arith.addi %0, %c-6_i32_288 : i32
      %c0_i32_289 = arith.constant 0 : i32
      %c6_i32_290 = arith.constant 6 : i32
      %298 = arith.maxsi %c0_i32_289, %297 : i32
      %299 = arith.minsi %c6_i32_290, %298 : i32
      %300 = tpu.assume_multiple %299, 2 : i32
      %c0_291 = arith.constant 0 : index
      %301 = arith.index_cast %300 : i32 to index
      %c0_292 = arith.constant 0 : index
      %c0_293 = arith.constant 0 : index
      %c0_294 = arith.constant 0 : index
      %302 = vector.load %arg2[%c0_291, %301, %c0_292, %c0_293, %c0_294] : memref<1x8x8x8x4xf32, #tpu.memory_space<vmem>>, vector<1x2x8x8x4xf32>
      %303 = vector.shape_cast %302 : vector<1x2x8x8x4xf32> to vector<2x8x8x4xf32>
      %304 = vector.shape_cast %303 : vector<2x8x8x4xf32> to vector<128x4xf32>
      %cst_295 = arith.constant dense<0.000000e+00> : vector<128x8xf32>
      %305 = tpu.matmul %304, %59, %cst_295 {dimension_numbers = #tpu.dot_dimension_numbers<[1], [0], [0], [1], [0, 0, 1, 1], [], []>} : vector<128x4xf32>, vector<4x8xf32>, vector<128x8xf32> -> vector<128x8xf32>
      %c0_296 = arith.constant 0 : index
      %c0_297 = arith.constant 0 : index
      %c0_298 = arith.constant 0 : index
      %c0_299 = arith.constant 0 : index
      %306 = vector.load %arg6[%c0_296, %c0_297, %c0_298, %c0_299] : memref<2x8x8x8xf32, #tpu.memory_space<vmem>>, vector<2x8x8x8xf32>
      %307 = vector.shape_cast %305 : vector<128x8xf32> to vector<2x8x8x8xf32>
      %308 = arith.addf %306, %307 : vector<2x8x8x8xf32>
      %c0_300 = arith.constant 0 : index
      %c0_301 = arith.constant 0 : index
      %c0_302 = arith.constant 0 : index
      %c0_303 = arith.constant 0 : index
      %309 = vector.load %arg6[%c0_300, %c0_301, %c0_302, %c0_303] : memref<2x8x8x8xf32, #tpu.memory_space<vmem>>, vector<2x8x8x8xf32>
      tpu.vector_store %arg6[%c0_300, %c0_301, %c0_302, %c0_303], %308 {strides = array<i32>} : memref<2x8x8x8xf32, #tpu.memory_space<vmem>>, vector<2x8x8x8xf32>,
    } else {
    }
    %c6 = arith.constant 6 : index
    %c0_58 = arith.constant 0 : index
    %c0_59 = arith.constant 0 : index
    %68 = vector.load %arg3[%c6, %c0_58, %c0_59] : memref<27x4x8xf32, #tpu.memory_space<vmem>>, vector<1x4x8xf32>
    %69 = vector.shape_cast %68 : vector<1x4x8xf32> to vector<4x8xf32>
    %c-6_i32_60 = arith.constant -6 : i32
    %70 = arith.addi %0, %c-6_i32_60 : i32
    %c0_i32_61 = arith.constant 0 : i32
    %71 = arith.cmpi sge, %70, %c0_i32_61 : i32
    %c-6_i32_62 = arith.constant -6 : i32
    %72 = arith.addi %0, %c-6_i32_62 : i32
    %c2_i32_63 = arith.constant 2 : i32
    %73 = arith.addi %72, %c2_i32_63 : i32
    %c8_i32_64 = arith.constant 8 : i32
    %74 = arith.cmpi sle, %73, %c8_i32_64 : i32
    %75 = arith.andi %71, %74 : i1
    %76 = arith.extui %75 : i1 to i32
    %c0_i32_65 = arith.constant 0 : i32
    %77 = arith.cmpi ne, %76, %c0_i32_65 : i32
    scf.if %77 {
      %c-6_i32_288 = arith.constant -6 : i32
      %297 = arith.addi %0, %c-6_i32_288 : i32
      %c0_i32_289 = arith.constant 0 : i32
      %c6_i32_290 = arith.constant 6 : i32
      %298 = arith.maxsi %c0_i32_289, %297 : i32
      %299 = arith.minsi %c6_i32_290, %298 : i32
      %300 = tpu.assume_multiple %299, 2 : i32
      %c0_291 = arith.constant 0 : index
      %301 = arith.index_cast %300 : i32 to index
      %c0_292 = arith.constant 0 : index
      %c6_293 = arith.constant 6 : index
      %c0_294 = arith.constant 0 : index
      %302 = vector.load %arg2[%c0_291, %301, %c0_292, %c6_293, %c0_294] : memref<1x8x8x8x4xf32, #tpu.memory_space<vmem>>, vector<1x2x8x2x4xf32>
      %303 = vector.shape_cast %302 : vector<1x2x8x2x4xf32> to vector<2x8x2x4xf32>
      %304 = vector.shape_cast %303 : vector<2x8x2x4xf32> to vector<32x4xf32>
      %cst_295 = arith.constant dense<0.000000e+00> : vector<32x8xf32>
      %305 = tpu.matmul %304, %69, %cst_295 {dimension_numbers = #tpu.dot_dimension_numbers<[1], [0], [0], [1], [0, 0, 1, 1], [], []>} : vector<32x4xf32>, vector<4x8xf32>, vector<32x8xf32> -> vector<32x8xf32>
      %c0_296 = arith.constant 0 : index
      %c0_297 = arith.constant 0 : index
      %c0_298 = arith.constant 0 : index
      %c0_299 = arith.constant 0 : index
      %306 = vector.load %arg6[%c0_296, %c0_297, %c0_298, %c0_299] : memref<2x8x8x8xf32, #tpu.memory_space<vmem>>, vector<2x8x2x8xf32>
      %307 = vector.shape_cast %305 : vector<32x8xf32> to vector<2x8x2x8xf32>
      %308 = arith.addf %306, %307 : vector<2x8x2x8xf32>
      %c0_300 = arith.constant 0 : index
      %c0_301 = arith.constant 0 : index
      %c0_302 = arith.constant 0 : index
      %c0_303 = arith.constant 0 : index
      %309 = vector.load %arg6[%c0_300, %c0_301, %c0_302, %c0_303] : memref<2x8x8x8xf32, #tpu.memory_space<vmem>>, vector<2x8x2x8xf32>
      tpu.vector_store %arg6[%c0_300, %c0_301, %c0_302, %c0_303], %308 {strides = array<i32>} : memref<2x8x8x8xf32, #tpu.memory_space<vmem>>, vector<2x8x2x8xf32>,
    } else {
    }
    %c7 = arith.constant 7 : index
    %c0_66 = arith.constant 0 : index
    %c0_67 = arith.constant 0 : index
    %78 = vector.load %arg3[%c7, %c0_66, %c0_67] : memref<27x4x8xf32, #tpu.memory_space<vmem>>, vector<1x4x8xf32>
    %79 = vector.shape_cast %78 : vector<1x4x8xf32> to vector<4x8xf32>
    %c-6_i32_68 = arith.constant -6 : i32
    %80 = arith.addi %0, %c-6_i32_68 : i32
    %c0_i32_69 = arith.constant 0 : i32
    %81 = arith.cmpi sge, %80, %c0_i32_69 : i32
    %c-6_i32_70 = arith.constant -6 : i32
    %82 = arith.addi %0, %c-6_i32_70 : i32
    %c2_i32_71 = arith.constant 2 : i32
    %83 = arith.addi %82, %c2_i32_71 : i32
    %c8_i32_72 = arith.constant 8 : i32
    %84 = arith.cmpi sle, %83, %c8_i32_72 : i32
    %85 = arith.andi %81, %84 : i1
    %86 = arith.extui %85 : i1 to i32
    %c0_i32_73 = arith.constant 0 : i32
    %87 = arith.cmpi ne, %86, %c0_i32_73 : i32
    scf.if %87 {
      %c-6_i32_288 = arith.constant -6 : i32
      %297 = arith.addi %0, %c-6_i32_288 : i32
      %c0_i32_289 = arith.constant 0 : i32
      %c6_i32_290 = arith.constant 6 : i32
      %298 = arith.maxsi %c0_i32_289, %297 : i32
      %299 = arith.minsi %c6_i32_290, %298 : i32
      %300 = tpu.assume_multiple %299, 2 : i32
      %c0_291 = arith.constant 0 : index
      %301 = arith.index_cast %300 : i32 to index
      %c6_292 = arith.constant 6 : index
      %c0_293 = arith.constant 0 : index
      %c0_294 = arith.constant 0 : index
      %302 = vector.load %arg2[%c0_291, %301, %c6_292, %c0_293, %c0_294] : memref<1x8x8x8x4xf32, #tpu.memory_space<vmem>>, vector<1x2x2x2x4xf32>
      %303 = vector.shape_cast %302 : vector<1x2x2x2x4xf32> to vector<2x2x2x4xf32>
      %304 = vector.shape_cast %303 : vector<2x2x2x4xf32> to vector<8x4xf32>
      %cst_295 = arith.constant dense<0.000000e+00> : vector<8x8xf32>
      %305 = tpu.matmul %304, %79, %cst_295 {dimension_numbers = #tpu.dot_dimension_numbers<[1], [0], [0], [1], [0, 0, 1, 1], [], []>} : vector<8x4xf32>, vector<4x8xf32>, vector<8x8xf32> -> vector<8x8xf32>
      %c0_296 = arith.constant 0 : index
      %c0_297 = arith.constant 0 : index
      %c6_298 = arith.constant 6 : index
      %c0_299 = arith.constant 0 : index
      %306 = vector.load %arg6[%c0_296, %c0_297, %c6_298, %c0_299] : memref<2x8x8x8xf32, #tpu.memory_space<vmem>>, vector<2x2x2x8xf32>
      %307 = vector.shape_cast %305 : vector<8x8xf32> to vector<2x2x2x8xf32>
      %308 = arith.addf %306, %307 : vector<2x2x2x8xf32>
      %c0_300 = arith.constant 0 : index
      %c0_301 = arith.constant 0 : index
      %c6_302 = arith.constant 6 : index
      %c0_303 = arith.constant 0 : index
      %309 = vector.load %arg6[%c0_300, %c0_301, %c6_302, %c0_303] : memref<2x8x8x8xf32, #tpu.memory_space<vmem>>, vector<2x2x2x8xf32>
      tpu.vector_store %arg6[%c0_300, %c0_301, %c6_302, %c0_303], %308 {strides = array<i32>} : memref<2x8x8x8xf32, #tpu.memory_space<vmem>>, vector<2x2x2x8xf32>,
    } else {
    }
    %c8 = arith.constant 8 : index
    %c0_74 = arith.constant 0 : index
    %c0_75 = arith.constant 0 : index
    %88 = vector.load %arg3[%c8, %c0_74, %c0_75] : memref<27x4x8xf32, #tpu.memory_space<vmem>>, vector<1x4x8xf32>
    %89 = vector.shape_cast %88 : vector<1x4x8xf32> to vector<4x8xf32>
    %c-6_i32_76 = arith.constant -6 : i32
    %90 = arith.addi %0, %c-6_i32_76 : i32
    %c0_i32_77 = arith.constant 0 : i32
    %91 = arith.cmpi sge, %90, %c0_i32_77 : i32
    %c-6_i32_78 = arith.constant -6 : i32
    %92 = arith.addi %0, %c-6_i32_78 : i32
    %c2_i32_79 = arith.constant 2 : i32
    %93 = arith.addi %92, %c2_i32_79 : i32
    %c8_i32_80 = arith.constant 8 : i32
    %94 = arith.cmpi sle, %93, %c8_i32_80 : i32
    %95 = arith.andi %91, %94 : i1
    %96 = arith.extui %95 : i1 to i32
    %c0_i32_81 = arith.constant 0 : i32
    %97 = arith.cmpi ne, %96, %c0_i32_81 : i32
    scf.if %97 {
      %c-6_i32_288 = arith.constant -6 : i32
      %297 = arith.addi %0, %c-6_i32_288 : i32
      %c0_i32_289 = arith.constant 0 : i32
      %c6_i32_290 = arith.constant 6 : i32
      %298 = arith.maxsi %c0_i32_289, %297 : i32
      %299 = arith.minsi %c6_i32_290, %298 : i32
      %300 = tpu.assume_multiple %299, 2 : i32
      %c0_291 = arith.constant 0 : index
      %301 = arith.index_cast %300 : i32 to index
      %c6_292 = arith.constant 6 : index
      %c0_293 = arith.constant 0 : index
      %c0_294 = arith.constant 0 : index
      %302 = vector.load %arg2[%c0_291, %301, %c6_292, %c0_293, %c0_294] : memref<1x8x8x8x4xf32, #tpu.memory_space<vmem>>, vector<1x2x2x8x4xf32>
      %303 = vector.shape_cast %302 : vector<1x2x2x8x4xf32> to vector<2x2x8x4xf32>
      %304 = vector.shape_cast %303 : vector<2x2x8x4xf32> to vector<32x4xf32>
      %cst_295 = arith.constant dense<0.000000e+00> : vector<32x8xf32>
      %305 = tpu.matmul %304, %89, %cst_295 {dimension_numbers = #tpu.dot_dimension_numbers<[1], [0], [0], [1], [0, 0, 1, 1], [], []>} : vector<32x4xf32>, vector<4x8xf32>, vector<32x8xf32> -> vector<32x8xf32>
      %c0_296 = arith.constant 0 : index
      %c0_297 = arith.constant 0 : index
      %c0_298 = arith.constant 0 : index
      %c0_299 = arith.constant 0 : index
      %306 = vector.load %arg6[%c0_296, %c0_297, %c0_298, %c0_299] : memref<2x8x8x8xf32, #tpu.memory_space<vmem>>, vector<2x2x8x8xf32>
      %307 = vector.shape_cast %305 : vector<32x8xf32> to vector<2x2x8x8xf32>
      %308 = arith.addf %306, %307 : vector<2x2x8x8xf32>
      %c0_300 = arith.constant 0 : index
      %c0_301 = arith.constant 0 : index
      %c0_302 = arith.constant 0 : index
      %c0_303 = arith.constant 0 : index
      %309 = vector.load %arg6[%c0_300, %c0_301, %c0_302, %c0_303] : memref<2x8x8x8xf32, #tpu.memory_space<vmem>>, vector<2x2x8x8xf32>
      tpu.vector_store %arg6[%c0_300, %c0_301, %c0_302, %c0_303], %308 {strides = array<i32>} : memref<2x8x8x8xf32, #tpu.memory_space<vmem>>, vector<2x2x8x8xf32>,
    } else {
    }
    %c9 = arith.constant 9 : index
    %c0_82 = arith.constant 0 : index
    %c0_83 = arith.constant 0 : index
    %98 = vector.load %arg3[%c9, %c0_82, %c0_83] : memref<27x4x8xf32, #tpu.memory_space<vmem>>, vector<1x4x8xf32>
    %99 = vector.shape_cast %98 : vector<1x4x8xf32> to vector<4x8xf32>
    %c-6_i32_84 = arith.constant -6 : i32
    %100 = arith.addi %0, %c-6_i32_84 : i32
    %c0_i32_85 = arith.constant 0 : i32
    %101 = arith.cmpi sge, %100, %c0_i32_85 : i32
    %c-6_i32_86 = arith.constant -6 : i32
    %102 = arith.addi %0, %c-6_i32_86 : i32
    %c2_i32_87 = arith.constant 2 : i32
    %103 = arith.addi %102, %c2_i32_87 : i32
    %c8_i32_88 = arith.constant 8 : i32
    %104 = arith.cmpi sle, %103, %c8_i32_88 : i32
    %105 = arith.andi %101, %104 : i1
    %106 = arith.extui %105 : i1 to i32
    %c0_i32_89 = arith.constant 0 : i32
    %107 = arith.cmpi ne, %106, %c0_i32_89 : i32
    scf.if %107 {
      %c-6_i32_288 = arith.constant -6 : i32
      %297 = arith.addi %0, %c-6_i32_288 : i32
      %c0_i32_289 = arith.constant 0 : i32
      %c6_i32_290 = arith.constant 6 : i32
      %298 = arith.maxsi %c0_i32_289, %297 : i32
      %299 = arith.minsi %c6_i32_290, %298 : i32
      %300 = tpu.assume_multiple %299, 2 : i32
      %c0_291 = arith.constant 0 : index
      %301 = arith.index_cast %300 : i32 to index
      %c6_292 = arith.constant 6 : index
      %c6_293 = arith.constant 6 : index
      %c0_294 = arith.constant 0 : index
      %302 = vector.load %arg2[%c0_291, %301, %c6_292, %c6_293, %c0_294] : memref<1x8x8x8x4xf32, #tpu.memory_space<vmem>>, vector<1x2x2x2x4xf32>
      %303 = vector.shape_cast %302 : vector<1x2x2x2x4xf32> to vector<2x2x2x4xf32>
      %304 = vector.shape_cast %303 : vector<2x2x2x4xf32> to vector<8x4xf32>
      %cst_295 = arith.constant dense<0.000000e+00> : vector<8x8xf32>
      %305 = tpu.matmul %304, %99, %cst_295 {dimension_numbers = #tpu.dot_dimension_numbers<[1], [0], [0], [1], [0, 0, 1, 1], [], []>} : vector<8x4xf32>, vector<4x8xf32>, vector<8x8xf32> -> vector<8x8xf32>
      %c0_296 = arith.constant 0 : index
      %c0_297 = arith.constant 0 : index
      %c0_298 = arith.constant 0 : index
      %c0_299 = arith.constant 0 : index
      %306 = vector.load %arg6[%c0_296, %c0_297, %c0_298, %c0_299] : memref<2x8x8x8xf32, #tpu.memory_space<vmem>>, vector<2x2x2x8xf32>
      %307 = vector.shape_cast %305 : vector<8x8xf32> to vector<2x2x2x8xf32>
      %308 = arith.addf %306, %307 : vector<2x2x2x8xf32>
      %c0_300 = arith.constant 0 : index
      %c0_301 = arith.constant 0 : index
      %c0_302 = arith.constant 0 : index
      %c0_303 = arith.constant 0 : index
      %309 = vector.load %arg6[%c0_300, %c0_301, %c0_302, %c0_303] : memref<2x8x8x8xf32, #tpu.memory_space<vmem>>, vector<2x2x2x8xf32>
      tpu.vector_store %arg6[%c0_300, %c0_301, %c0_302, %c0_303], %308 {strides = array<i32>} : memref<2x8x8x8xf32, #tpu.memory_space<vmem>>, vector<2x2x2x8xf32>,
    } else {
    }
    %c10 = arith.constant 10 : index
    %c0_90 = arith.constant 0 : index
    %c0_91 = arith.constant 0 : index
    %108 = vector.load %arg3[%c10, %c0_90, %c0_91] : memref<27x4x8xf32, #tpu.memory_space<vmem>>, vector<1x4x8xf32>
    %109 = vector.shape_cast %108 : vector<1x4x8xf32> to vector<4x8xf32>
    %110 = tpu.assume_multiple %0, 2 : i32
    %c0_92 = arith.constant 0 : index
    %111 = arith.index_cast %110 : i32 to index
    %c0_93 = arith.constant 0 : index
    %c0_94 = arith.constant 0 : index
    %c0_95 = arith.constant 0 : index
    %112 = vector.load %arg2[%c0_92, %111, %c0_93, %c0_94, %c0_95] : memref<1x8x8x8x4xf32, #tpu.memory_space<vmem>>, vector<1x2x2x2x4xf32>
    %113 = vector.shape_cast %112 : vector<1x2x2x2x4xf32> to vector<2x2x2x4xf32>
    %114 = vector.shape_cast %113 : vector<2x2x2x4xf32> to vector<8x4xf32>
    %cst_96 = arith.constant dense<0.000000e+00> : vector<8x8xf32>
    %115 = tpu.matmul %114, %109, %cst_96 {dimension_numbers = #tpu.dot_dimension_numbers<[1], [0], [0], [1], [0, 0, 1, 1], [], []>} : vector<8x4xf32>, vector<4x8xf32>, vector<8x8xf32> -> vector<8x8xf32>
    %c0_97 = arith.constant 0 : index
    %c6_98 = arith.constant 6 : index
    %c6_99 = arith.constant 6 : index
    %c0_100 = arith.constant 0 : index
    %116 = vector.load %arg6[%c0_97, %c6_98, %c6_99, %c0_100] : memref<2x8x8x8xf32, #tpu.memory_space<vmem>>, vector<2x2x2x8xf32>
    %117 = vector.shape_cast %115 : vector<8x8xf32> to vector<2x2x2x8xf32>
    %118 = arith.addf %116, %117 : vector<2x2x2x8xf32>
    %c0_101 = arith.constant 0 : index
    %c6_102 = arith.constant 6 : index
    %c6_103 = arith.constant 6 : index
    %c0_104 = arith.constant 0 : index
    %119 = vector.load %arg6[%c0_101, %c6_102, %c6_103, %c0_104] : memref<2x8x8x8xf32, #tpu.memory_space<vmem>>, vector<2x2x2x8xf32>
    tpu.vector_store %arg6[%c0_101, %c6_102, %c6_103, %c0_104], %118 {strides = array<i32>} : memref<2x8x8x8xf32, #tpu.memory_space<vmem>>, vector<2x2x2x8xf32>,
    %c11 = arith.constant 11 : index
    %c0_105 = arith.constant 0 : index
    %c0_106 = arith.constant 0 : index
    %120 = vector.load %arg3[%c11, %c0_105, %c0_106] : memref<27x4x8xf32, #tpu.memory_space<vmem>>, vector<1x4x8xf32>
    %121 = vector.shape_cast %120 : vector<1x4x8xf32> to vector<4x8xf32>
    %122 = tpu.assume_multiple %0, 2 : i32
    %c0_107 = arith.constant 0 : index
    %123 = arith.index_cast %122 : i32 to index
    %c0_108 = arith.constant 0 : index
    %c0_109 = arith.constant 0 : index
    %c0_110 = arith.constant 0 : index
    %124 = vector.load %arg2[%c0_107, %123, %c0_108, %c0_109, %c0_110] : memref<1x8x8x8x4xf32, #tpu.memory_space<vmem>>, vector<1x2x2x8x4xf32>
    %125 = vector.shape_cast %124 : vector<1x2x2x8x4xf32> to vector<2x2x8x4xf32>
    %126 = vector.shape_cast %125 : vector<2x2x8x4xf32> to vector<32x4xf32>
    %cst_111 = arith.constant dense<0.000000e+00> : vector<32x8xf32>
    %127 = tpu.matmul %126, %121, %cst_111 {dimension_numbers = #tpu.dot_dimension_numbers<[1], [0], [0], [1], [0, 0, 1, 1], [], []>} : vector<32x4xf32>, vector<4x8xf32>, vector<32x8xf32> -> vector<32x8xf32>
    %c0_112 = arith.constant 0 : index
    %c6_113 = arith.constant 6 : index
    %c0_114 = arith.constant 0 : index
    %c0_115 = arith.constant 0 : index
    %128 = vector.load %arg6[%c0_112, %c6_113, %c0_114, %c0_115] : memref<2x8x8x8xf32, #tpu.memory_space<vmem>>, vector<2x2x8x8xf32>
    %129 = vector.shape_cast %127 : vector<32x8xf32> to vector<2x2x8x8xf32>
    %130 = arith.addf %128, %129 : vector<2x2x8x8xf32>
    %c0_116 = arith.constant 0 : index
    %c6_117 = arith.constant 6 : index
    %c0_118 = arith.constant 0 : index
    %c0_119 = arith.constant 0 : index
    %131 = vector.load %arg6[%c0_116, %c6_117, %c0_118, %c0_119] : memref<2x8x8x8xf32, #tpu.memory_space<vmem>>, vector<2x2x8x8xf32>
    tpu.vector_store %arg6[%c0_116, %c6_117, %c0_118, %c0_119], %130 {strides = array<i32>} : memref<2x8x8x8xf32, #tpu.memory_space<vmem>>, vector<2x2x8x8xf32>,
    %c12 = arith.constant 12 : index
    %c0_120 = arith.constant 0 : index
    %c0_121 = arith.constant 0 : index
    %132 = vector.load %arg3[%c12, %c0_120, %c0_121] : memref<27x4x8xf32, #tpu.memory_space<vmem>>, vector<1x4x8xf32>
    %133 = vector.shape_cast %132 : vector<1x4x8xf32> to vector<4x8xf32>
    %134 = tpu.assume_multiple %0, 2 : i32
    %c0_122 = arith.constant 0 : index
    %135 = arith.index_cast %134 : i32 to index
    %c0_123 = arith.constant 0 : index
    %c6_124 = arith.constant 6 : index
    %c0_125 = arith.constant 0 : index
    %136 = vector.load %arg2[%c0_122, %135, %c0_123, %c6_124, %c0_125] : memref<1x8x8x8x4xf32, #tpu.memory_space<vmem>>, vector<1x2x2x2x4xf32>
    %137 = vector.shape_cast %136 : vector<1x2x2x2x4xf32> to vector<2x2x2x4xf32>
    %138 = vector.shape_cast %137 : vector<2x2x2x4xf32> to vector<8x4xf32>
    %cst_126 = arith.constant dense<0.000000e+00> : vector<8x8xf32>
    %139 = tpu.matmul %138, %133, %cst_126 {dimension_numbers = #tpu.dot_dimension_numbers<[1], [0], [0], [1], [0, 0, 1, 1], [], []>} : vector<8x4xf32>, vector<4x8xf32>, vector<8x8xf32> -> vector<8x8xf32>
    %c0_127 = arith.constant 0 : index
    %c6_128 = arith.constant 6 : index
    %c0_129 = arith.constant 0 : index
    %c0_130 = arith.constant 0 : index
    %140 = vector.load %arg6[%c0_127, %c6_128, %c0_129, %c0_130] : memref<2x8x8x8xf32, #tpu.memory_space<vmem>>, vector<2x2x2x8xf32>
    %141 = vector.shape_cast %139 : vector<8x8xf32> to vector<2x2x2x8xf32>
    %142 = arith.addf %140, %141 : vector<2x2x2x8xf32>
    %c0_131 = arith.constant 0 : index
    %c6_132 = arith.constant 6 : index
    %c0_133 = arith.constant 0 : index
    %c0_134 = arith.constant 0 : index
    %143 = vector.load %arg6[%c0_131, %c6_132, %c0_133, %c0_134] : memref<2x8x8x8xf32, #tpu.memory_space<vmem>>, vector<2x2x2x8xf32>
    tpu.vector_store %arg6[%c0_131, %c6_132, %c0_133, %c0_134], %142 {strides = array<i32>} : memref<2x8x8x8xf32, #tpu.memory_space<vmem>>, vector<2x2x2x8xf32>,
    %c13 = arith.constant 13 : index
    %c0_135 = arith.constant 0 : index
    %c0_136 = arith.constant 0 : index
    %144 = vector.load %arg3[%c13, %c0_135, %c0_136] : memref<27x4x8xf32, #tpu.memory_space<vmem>>, vector<1x4x8xf32>
    %145 = vector.shape_cast %144 : vector<1x4x8xf32> to vector<4x8xf32>
    %146 = tpu.assume_multiple %0, 2 : i32
    %c0_137 = arith.constant 0 : index
    %147 = arith.index_cast %146 : i32 to index
    %c0_138 = arith.constant 0 : index
    %c0_139 = arith.constant 0 : index
    %c0_140 = arith.constant 0 : index
    %148 = vector.load %arg2[%c0_137, %147, %c0_138, %c0_139, %c0_140] : memref<1x8x8x8x4xf32, #tpu.memory_space<vmem>>, vector<1x2x8x2x4xf32>
    %149 = vector.shape_cast %148 : vector<1x2x8x2x4xf32> to vector<2x8x2x4xf32>
    %150 = vector.shape_cast %149 : vector<2x8x2x4xf32> to vector<32x4xf32>
    %cst_141 = arith.constant dense<0.000000e+00> : vector<32x8xf32>
    %151 = tpu.matmul %150, %145, %cst_141 {dimension_numbers = #tpu.dot_dimension_numbers<[1], [0], [0], [1], [0, 0, 1, 1], [], []>} : vector<32x4xf32>, vector<4x8xf32>, vector<32x8xf32> -> vector<32x8xf32>
    %c0_142 = arith.constant 0 : index
    %c0_143 = arith.constant 0 : index
    %c6_144 = arith.constant 6 : index
    %c0_145 = arith.constant 0 : index
    %152 = vector.load %arg6[%c0_142, %c0_143, %c6_144, %c0_145] : memref<2x8x8x8xf32, #tpu.memory_space<vmem>>, vector<2x8x2x8xf32>
    %153 = vector.shape_cast %151 : vector<32x8xf32> to vector<2x8x2x8xf32>
    %154 = arith.addf %152, %153 : vector<2x8x2x8xf32>
    %c0_146 = arith.constant 0 : index
    %c0_147 = arith.constant 0 : index
    %c6_148 = arith.constant 6 : index
    %c0_149 = arith.constant 0 : index
    %155 = vector.load %arg6[%c0_146, %c0_147, %c6_148, %c0_149] : memref<2x8x8x8xf32, #tpu.memory_space<vmem>>, vector<2x8x2x8xf32>
    tpu.vector_store %arg6[%c0_146, %c0_147, %c6_148, %c0_149], %154 {strides = array<i32>} : memref<2x8x8x8xf32, #tpu.memory_space<vmem>>, vector<2x8x2x8xf32>,
    %c14 = arith.constant 14 : index
    %c0_150 = arith.constant 0 : index
    %c0_151 = arith.constant 0 : index
    %156 = vector.load %arg3[%c14, %c0_150, %c0_151] : memref<27x4x8xf32, #tpu.memory_space<vmem>>, vector<1x4x8xf32>
    %157 = vector.shape_cast %156 : vector<1x4x8xf32> to vector<4x8xf32>
    %158 = tpu.assume_multiple %0, 2 : i32
    %c0_152 = arith.constant 0 : index
    %159 = arith.index_cast %158 : i32 to index
    %c0_153 = arith.constant 0 : index
    %c6_154 = arith.constant 6 : index
    %c0_155 = arith.constant 0 : index
    %160 = vector.load %arg2[%c0_152, %159, %c0_153, %c6_154, %c0_155] : memref<1x8x8x8x4xf32, #tpu.memory_space<vmem>>, vector<1x2x8x2x4xf32>
    %161 = vector.shape_cast %160 : vector<1x2x8x2x4xf32> to vector<2x8x2x4xf32>
    %162 = vector.shape_cast %161 : vector<2x8x2x4xf32> to vector<32x4xf32>
    %cst_156 = arith.constant dense<0.000000e+00> : vector<32x8xf32>
    %163 = tpu.matmul %162, %157, %cst_156 {dimension_numbers = #tpu.dot_dimension_numbers<[1], [0], [0], [1], [0, 0, 1, 1], [], []>} : vector<32x4xf32>, vector<4x8xf32>, vector<32x8xf32> -> vector<32x8xf32>
    %c0_157 = arith.constant 0 : index
    %c0_158 = arith.constant 0 : index
    %c0_159 = arith.constant 0 : index
    %c0_160 = arith.constant 0 : index
    %164 = vector.load %arg6[%c0_157, %c0_158, %c0_159, %c0_160] : memref<2x8x8x8xf32, #tpu.memory_space<vmem>>, vector<2x8x2x8xf32>
    %165 = vector.shape_cast %163 : vector<32x8xf32> to vector<2x8x2x8xf32>
    %166 = arith.addf %164, %165 : vector<2x8x2x8xf32>
    %c0_161 = arith.constant 0 : index
    %c0_162 = arith.constant 0 : index
    %c0_163 = arith.constant 0 : index
    %c0_164 = arith.constant 0 : index
    %167 = vector.load %arg6[%c0_161, %c0_162, %c0_163, %c0_164] : memref<2x8x8x8xf32, #tpu.memory_space<vmem>>, vector<2x8x2x8xf32>
    tpu.vector_store %arg6[%c0_161, %c0_162, %c0_163, %c0_164], %166 {strides = array<i32>} : memref<2x8x8x8xf32, #tpu.memory_space<vmem>>, vector<2x8x2x8xf32>,
    %c15 = arith.constant 15 : index
    %c0_165 = arith.constant 0 : index
    %c0_166 = arith.constant 0 : index
    %168 = vector.load %arg3[%c15, %c0_165, %c0_166] : memref<27x4x8xf32, #tpu.memory_space<vmem>>, vector<1x4x8xf32>
    %169 = vector.shape_cast %168 : vector<1x4x8xf32> to vector<4x8xf32>
    %170 = tpu.assume_multiple %0, 2 : i32
    %c0_167 = arith.constant 0 : index
    %171 = arith.index_cast %170 : i32 to index
    %c6_168 = arith.constant 6 : index
    %c0_169 = arith.constant 0 : index
    %c0_170 = arith.constant 0 : index
    %172 = vector.load %arg2[%c0_167, %171, %c6_168, %c0_169, %c0_170] : memref<1x8x8x8x4xf32, #tpu.memory_space<vmem>>, vector<1x2x2x2x4xf32>
    %173 = vector.shape_cast %172 : vector<1x2x2x2x4xf32> to vector<2x2x2x4xf32>
    %174 = vector.shape_cast %173 : vector<2x2x2x4xf32> to vector<8x4xf32>
    %cst_171 = arith.constant dense<0.000000e+00> : vector<8x8xf32>
    %175 = tpu.matmul %174, %169, %cst_171 {dimension_numbers = #tpu.dot_dimension_numbers<[1], [0], [0], [1], [0, 0, 1, 1], [], []>} : vector<8x4xf32>, vector<4x8xf32>, vector<8x8xf32> -> vector<8x8xf32>
    %c0_172 = arith.constant 0 : index
    %c0_173 = arith.constant 0 : index
    %c6_174 = arith.constant 6 : index
    %c0_175 = arith.constant 0 : index
    %176 = vector.load %arg6[%c0_172, %c0_173, %c6_174, %c0_175] : memref<2x8x8x8xf32, #tpu.memory_space<vmem>>, vector<2x2x2x8xf32>
    %177 = vector.shape_cast %175 : vector<8x8xf32> to vector<2x2x2x8xf32>
    %178 = arith.addf %176, %177 : vector<2x2x2x8xf32>
    %c0_176 = arith.constant 0 : index
    %c0_177 = arith.constant 0 : index
    %c6_178 = arith.constant 6 : index
    %c0_179 = arith.constant 0 : index
    %179 = vector.load %arg6[%c0_176, %c0_177, %c6_178, %c0_179] : memref<2x8x8x8xf32, #tpu.memory_space<vmem>>, vector<2x2x2x8xf32>
    tpu.vector_store %arg6[%c0_176, %c0_177, %c6_178, %c0_179], %178 {strides = array<i32>} : memref<2x8x8x8xf32, #tpu.memory_space<vmem>>, vector<2x2x2x8xf32>,
    %c16 = arith.constant 16 : index
    %c0_180 = arith.constant 0 : index
    %c0_181 = arith.constant 0 : index
    %180 = vector.load %arg3[%c16, %c0_180, %c0_181] : memref<27x4x8xf32, #tpu.memory_space<vmem>>, vector<1x4x8xf32>
    %181 = vector.shape_cast %180 : vector<1x4x8xf32> to vector<4x8xf32>
    %182 = tpu.assume_multiple %0, 2 : i32
    %c0_182 = arith.constant 0 : index
    %183 = arith.index_cast %182 : i32 to index
    %c6_183 = arith.constant 6 : index
    %c0_184 = arith.constant 0 : index
    %c0_185 = arith.constant 0 : index
    %184 = vector.load %arg2[%c0_182, %183, %c6_183, %c0_184, %c0_185] : memref<1x8x8x8x4xf32, #tpu.memory_space<vmem>>, vector<1x2x2x8x4xf32>
    %185 = vector.shape_cast %184 : vector<1x2x2x8x4xf32> to vector<2x2x8x4xf32>
    %186 = vector.shape_cast %185 : vector<2x2x8x4xf32> to vector<32x4xf32>
    %cst_186 = arith.constant dense<0.000000e+00> : vector<32x8xf32>
    %187 = tpu.matmul %186, %181, %cst_186 {dimension_numbers = #tpu.dot_dimension_numbers<[1], [0], [0], [1], [0, 0, 1, 1], [], []>} : vector<32x4xf32>, vector<4x8xf32>, vector<32x8xf32> -> vector<32x8xf32>
    %c0_187 = arith.constant 0 : index
    %c0_188 = arith.constant 0 : index
    %c0_189 = arith.constant 0 : index
    %c0_190 = arith.constant 0 : index
    %188 = vector.load %arg6[%c0_187, %c0_188, %c0_189, %c0_190] : memref<2x8x8x8xf32, #tpu.memory_space<vmem>>, vector<2x2x8x8xf32>
    %189 = vector.shape_cast %187 : vector<32x8xf32> to vector<2x2x8x8xf32>
    %190 = arith.addf %188, %189 : vector<2x2x8x8xf32>
    %c0_191 = arith.constant 0 : index
    %c0_192 = arith.constant 0 : index
    %c0_193 = arith.constant 0 : index
    %c0_194 = arith.constant 0 : index
    %191 = vector.load %arg6[%c0_191, %c0_192, %c0_193, %c0_194] : memref<2x8x8x8xf32, #tpu.memory_space<vmem>>, vector<2x2x8x8xf32>
    tpu.vector_store %arg6[%c0_191, %c0_192, %c0_193, %c0_194], %190 {strides = array<i32>} : memref<2x8x8x8xf32, #tpu.memory_space<vmem>>, vector<2x2x8x8xf32>,
    %c17 = arith.constant 17 : index
    %c0_195 = arith.constant 0 : index
    %c0_196 = arith.constant 0 : index
    %192 = vector.load %arg3[%c17, %c0_195, %c0_196] : memref<27x4x8xf32, #tpu.memory_space<vmem>>, vector<1x4x8xf32>
    %193 = vector.shape_cast %192 : vector<1x4x8xf32> to vector<4x8xf32>
    %194 = tpu.assume_multiple %0, 2 : i32
    %c0_197 = arith.constant 0 : index
    %195 = arith.index_cast %194 : i32 to index
    %c6_198 = arith.constant 6 : index
    %c6_199 = arith.constant 6 : index
    %c0_200 = arith.constant 0 : index
    %196 = vector.load %arg2[%c0_197, %195, %c6_198, %c6_199, %c0_200] : memref<1x8x8x8x4xf32, #tpu.memory_space<vmem>>, vector<1x2x2x2x4xf32>
    %197 = vector.shape_cast %196 : vector<1x2x2x2x4xf32> to vector<2x2x2x4xf32>
    %198 = vector.shape_cast %197 : vector<2x2x2x4xf32> to vector<8x4xf32>
    %cst_201 = arith.constant dense<0.000000e+00> : vector<8x8xf32>
    %199 = tpu.matmul %198, %193, %cst_201 {dimension_numbers = #tpu.dot_dimension_numbers<[1], [0], [0], [1], [0, 0, 1, 1], [], []>} : vector<8x4xf32>, vector<4x8xf32>, vector<8x8xf32> -> vector<8x8xf32>
    %c0_202 = arith.constant 0 : index
    %c0_203 = arith.constant 0 : index
    %c0_204 = arith.constant 0 : index
    %c0_205 = arith.constant 0 : index
    %200 = vector.load %arg6[%c0_202, %c0_203, %c0_204, %c0_205] : memref<2x8x8x8xf32, #tpu.memory_space<vmem>>, vector<2x2x2x8xf32>
    %201 = vector.shape_cast %199 : vector<8x8xf32> to vector<2x2x2x8xf32>
    %202 = arith.addf %200, %201 : vector<2x2x2x8xf32>
    %c0_206 = arith.constant 0 : index
    %c0_207 = arith.constant 0 : index
    %c0_208 = arith.constant 0 : index
    %c0_209 = arith.constant 0 : index
    %203 = vector.load %arg6[%c0_206, %c0_207, %c0_208, %c0_209] : memref<2x8x8x8xf32, #tpu.memory_space<vmem>>, vector<2x2x2x8xf32>
    tpu.vector_store %arg6[%c0_206, %c0_207, %c0_208, %c0_209], %202 {strides = array<i32>} : memref<2x8x8x8xf32, #tpu.memory_space<vmem>>, vector<2x2x2x8xf32>,
    %c18 = arith.constant 18 : index
    %c0_210 = arith.constant 0 : index
    %c0_211 = arith.constant 0 : index
    %204 = vector.load %arg3[%c18, %c0_210, %c0_211] : memref<27x4x8xf32, #tpu.memory_space<vmem>>, vector<1x4x8xf32>
    %205 = vector.shape_cast %204 : vector<1x4x8xf32> to vector<4x8xf32>
    %c6_i32 = arith.constant 6 : i32
    %206 = arith.addi %0, %c6_i32 : i32
    %c0_i32_212 = arith.constant 0 : i32
    %207 = arith.cmpi sge, %206, %c0_i32_212 : i32
    %c6_i32_213 = arith.constant 6 : i32
    %208 = arith.addi %0, %c6_i32_213 : i32
    %c2_i32_214 = arith.constant 2 : i32
    %209 = arith.addi %208, %c2_i32_214 : i32
    %c8_i32_215 = arith.constant 8 : i32
    %210 = arith.cmpi sle, %209, %c8_i32_215 : i32
    %211 = arith.andi %207, %210 : i1
    %212 = arith.extui %211 : i1 to i32
    %c0_i32_216 = arith.constant 0 : i32
    %213 = arith.cmpi ne, %212, %c0_i32_216 : i32
    scf.if %213 {
      %c6_i32_288 = arith.constant 6 : i32
      %297 = arith.addi %0, %c6_i32_288 : i32
      %c0_i32_289 = arith.constant 0 : i32
      %c6_i32_290 = arith.constant 6 : i32
      %298 = arith.maxsi %c0_i32_289, %297 : i32
      %299 = arith.minsi %c6_i32_290, %298 : i32
      %300 = tpu.assume_multiple %299, 2 : i32
      %c0_291 = arith.constant 0 : index
      %301 = arith.index_cast %300 : i32 to index
      %c0_292 = arith.constant 0 : index
      %c0_293 = arith.constant 0 : index
      %c0_294 = arith.constant 0 : index
      %302 = vector.load %arg2[%c0_291, %301, %c0_292, %c0_293, %c0_294] : memref<1x8x8x8x4xf32, #tpu.memory_space<vmem>>, vector<1x2x2x2x4xf32>
      %303 = vector.shape_cast %302 : vector<1x2x2x2x4xf32> to vector<2x2x2x4xf32>
      %304 = vector.shape_cast %303 : vector<2x2x2x4xf32> to vector<8x4xf32>
      %cst_295 = arith.constant dense<0.000000e+00> : vector<8x8xf32>
      %305 = tpu.matmul %304, %205, %cst_295 {dimension_numbers = #tpu.dot_dimension_numbers<[1], [0], [0], [1], [0, 0, 1, 1], [], []>} : vector<8x4xf32>, vector<4x8xf32>, vector<8x8xf32> -> vector<8x8xf32>
      %c0_296 = arith.constant 0 : index
      %c6_297 = arith.constant 6 : index
      %c6_298 = arith.constant 6 : index
      %c0_299 = arith.constant 0 : index
      %306 = vector.load %arg6[%c0_296, %c6_297, %c6_298, %c0_299] : memref<2x8x8x8xf32, #tpu.memory_space<vmem>>, vector<2x2x2x8xf32>
      %307 = vector.shape_cast %305 : vector<8x8xf32> to vector<2x2x2x8xf32>
      %308 = arith.addf %306, %307 : vector<2x2x2x8xf32>
      %c0_300 = arith.constant 0 : index
      %c6_301 = arith.constant 6 : index
      %c6_302 = arith.constant 6 : index
      %c0_303 = arith.constant 0 : index
      %309 = vector.load %arg6[%c0_300, %c6_301, %c6_302, %c0_303] : memref<2x8x8x8xf32, #tpu.memory_space<vmem>>, vector<2x2x2x8xf32>
      tpu.vector_store %arg6[%c0_300, %c6_301, %c6_302, %c0_303], %308 {strides = array<i32>} : memref<2x8x8x8xf32, #tpu.memory_space<vmem>>, vector<2x2x2x8xf32>,
    } else {
    }
    %c19 = arith.constant 19 : index
    %c0_217 = arith.constant 0 : index
    %c0_218 = arith.constant 0 : index
    %214 = vector.load %arg3[%c19, %c0_217, %c0_218] : memref<27x4x8xf32, #tpu.memory_space<vmem>>, vector<1x4x8xf32>
    %215 = vector.shape_cast %214 : vector<1x4x8xf32> to vector<4x8xf32>
    %c6_i32_219 = arith.constant 6 : i32
    %216 = arith.addi %0, %c6_i32_219 : i32
    %c0_i32_220 = arith.constant 0 : i32
    %217 = arith.cmpi sge, %216, %c0_i32_220 : i32
    %c6_i32_221 = arith.constant 6 : i32
    %218 = arith.addi %0, %c6_i32_221 : i32
    %c2_i32_222 = arith.constant 2 : i32
    %219 = arith.addi %218, %c2_i32_222 : i32
    %c8_i32_223 = arith.constant 8 : i32
    %220 = arith.cmpi sle, %219, %c8_i32_223 : i32
    %221 = arith.andi %217, %220 : i1
    %222 = arith.extui %221 : i1 to i32
    %c0_i32_224 = arith.constant 0 : i32
    %223 = arith.cmpi ne, %222, %c0_i32_224 : i32
    scf.if %223 {
      %c6_i32_288 = arith.constant 6 : i32
      %297 = arith.addi %0, %c6_i32_288 : i32
      %c0_i32_289 = arith.constant 0 : i32
      %c6_i32_290 = arith.constant 6 : i32
      %298 = arith.maxsi %c0_i32_289, %297 : i32
      %299 = arith.minsi %c6_i32_290, %298 : i32
      %300 = tpu.assume_multiple %299, 2 : i32
      %c0_291 = arith.constant 0 : index
      %301 = arith.index_cast %300 : i32 to index
      %c0_292 = arith.constant 0 : index
      %c0_293 = arith.constant 0 : index
      %c0_294 = arith.constant 0 : index
      %302 = vector.load %arg2[%c0_291, %301, %c0_292, %c0_293, %c0_294] : memref<1x8x8x8x4xf32, #tpu.memory_space<vmem>>, vector<1x2x2x8x4xf32>
      %303 = vector.shape_cast %302 : vector<1x2x2x8x4xf32> to vector<2x2x8x4xf32>
      %304 = vector.shape_cast %303 : vector<2x2x8x4xf32> to vector<32x4xf32>
      %cst_295 = arith.constant dense<0.000000e+00> : vector<32x8xf32>
      %305 = tpu.matmul %304, %215, %cst_295 {dimension_numbers = #tpu.dot_dimension_numbers<[1], [0], [0], [1], [0, 0, 1, 1], [], []>} : vector<32x4xf32>, vector<4x8xf32>, vector<32x8xf32> -> vector<32x8xf32>
      %c0_296 = arith.constant 0 : index
      %c6_297 = arith.constant 6 : index
      %c0_298 = arith.constant 0 : index
      %c0_299 = arith.constant 0 : index
      %306 = vector.load %arg6[%c0_296, %c6_297, %c0_298, %c0_299] : memref<2x8x8x8xf32, #tpu.memory_space<vmem>>, vector<2x2x8x8xf32>
      %307 = vector.shape_cast %305 : vector<32x8xf32> to vector<2x2x8x8xf32>
      %308 = arith.addf %306, %307 : vector<2x2x8x8xf32>
      %c0_300 = arith.constant 0 : index
      %c6_301 = arith.constant 6 : index
      %c0_302 = arith.constant 0 : index
      %c0_303 = arith.constant 0 : index
      %309 = vector.load %arg6[%c0_300, %c6_301, %c0_302, %c0_303] : memref<2x8x8x8xf32, #tpu.memory_space<vmem>>, vector<2x2x8x8xf32>
      tpu.vector_store %arg6[%c0_300, %c6_301, %c0_302, %c0_303], %308 {strides = array<i32>} : memref<2x8x8x8xf32, #tpu.memory_space<vmem>>, vector<2x2x8x8xf32>,
    } else {
    }
    %c20 = arith.constant 20 : index
    %c0_225 = arith.constant 0 : index
    %c0_226 = arith.constant 0 : index
    %224 = vector.load %arg3[%c20, %c0_225, %c0_226] : memref<27x4x8xf32, #tpu.memory_space<vmem>>, vector<1x4x8xf32>
    %225 = vector.shape_cast %224 : vector<1x4x8xf32> to vector<4x8xf32>
    %c6_i32_227 = arith.constant 6 : i32
    %226 = arith.addi %0, %c6_i32_227 : i32
    %c0_i32_228 = arith.constant 0 : i32
    %227 = arith.cmpi sge, %226, %c0_i32_228 : i32
    %c6_i32_229 = arith.constant 6 : i32
    %228 = arith.addi %0, %c6_i32_229 : i32
    %c2_i32_230 = arith.constant 2 : i32
    %229 = arith.addi %228, %c2_i32_230 : i32
    %c8_i32_231 = arith.constant 8 : i32
    %230 = arith.cmpi sle, %229, %c8_i32_231 : i32
    %231 = arith.andi %227, %230 : i1
    %232 = arith.extui %231 : i1 to i32
    %c0_i32_232 = arith.constant 0 : i32
    %233 = arith.cmpi ne, %232, %c0_i32_232 : i32
    scf.if %233 {
      %c6_i32_288 = arith.constant 6 : i32
      %297 = arith.addi %0, %c6_i32_288 : i32
      %c0_i32_289 = arith.constant 0 : i32
      %c6_i32_290 = arith.constant 6 : i32
      %298 = arith.maxsi %c0_i32_289, %297 : i32
      %299 = arith.minsi %c6_i32_290, %298 : i32
      %300 = tpu.assume_multiple %299, 2 : i32
      %c0_291 = arith.constant 0 : index
      %301 = arith.index_cast %300 : i32 to index
      %c0_292 = arith.constant 0 : index
      %c6_293 = arith.constant 6 : index
      %c0_294 = arith.constant 0 : index
      %302 = vector.load %arg2[%c0_291, %301, %c0_292, %c6_293, %c0_294] : memref<1x8x8x8x4xf32, #tpu.memory_space<vmem>>, vector<1x2x2x2x4xf32>
      %303 = vector.shape_cast %302 : vector<1x2x2x2x4xf32> to vector<2x2x2x4xf32>
      %304 = vector.shape_cast %303 : vector<2x2x2x4xf32> to vector<8x4xf32>
      %cst_295 = arith.constant dense<0.000000e+00> : vector<8x8xf32>
      %305 = tpu.matmul %304, %225, %cst_295 {dimension_numbers = #tpu.dot_dimension_numbers<[1], [0], [0], [1], [0, 0, 1, 1], [], []>} : vector<8x4xf32>, vector<4x8xf32>, vector<8x8xf32> -> vector<8x8xf32>
      %c0_296 = arith.constant 0 : index
      %c6_297 = arith.constant 6 : index
      %c0_298 = arith.constant 0 : index
      %c0_299 = arith.constant 0 : index
      %306 = vector.load %arg6[%c0_296, %c6_297, %c0_298, %c0_299] : memref<2x8x8x8xf32, #tpu.memory_space<vmem>>, vector<2x2x2x8xf32>
      %307 = vector.shape_cast %305 : vector<8x8xf32> to vector<2x2x2x8xf32>
      %308 = arith.addf %306, %307 : vector<2x2x2x8xf32>
      %c0_300 = arith.constant 0 : index
      %c6_301 = arith.constant 6 : index
      %c0_302 = arith.constant 0 : index
      %c0_303 = arith.constant 0 : index
      %309 = vector.load %arg6[%c0_300, %c6_301, %c0_302, %c0_303] : memref<2x8x8x8xf32, #tpu.memory_space<vmem>>, vector<2x2x2x8xf32>
      tpu.vector_store %arg6[%c0_300, %c6_301, %c0_302, %c0_303], %308 {strides = array<i32>} : memref<2x8x8x8xf32, #tpu.memory_space<vmem>>, vector<2x2x2x8xf32>,
    } else {
    }
    %c21 = arith.constant 21 : index
    %c0_233 = arith.constant 0 : index
    %c0_234 = arith.constant 0 : index
    %234 = vector.load %arg3[%c21, %c0_233, %c0_234] : memref<27x4x8xf32, #tpu.memory_space<vmem>>, vector<1x4x8xf32>
    %235 = vector.shape_cast %234 : vector<1x4x8xf32> to vector<4x8xf32>
    %c6_i32_235 = arith.constant 6 : i32
    %236 = arith.addi %0, %c6_i32_235 : i32
    %c0_i32_236 = arith.constant 0 : i32
    %237 = arith.cmpi sge, %236, %c0_i32_236 : i32
    %c6_i32_237 = arith.constant 6 : i32
    %238 = arith.addi %0, %c6_i32_237 : i32
    %c2_i32_238 = arith.constant 2 : i32
    %239 = arith.addi %238, %c2_i32_238 : i32
    %c8_i32_239 = arith.constant 8 : i32
    %240 = arith.cmpi sle, %239, %c8_i32_239 : i32
    %241 = arith.andi %237, %240 : i1
    %242 = arith.extui %241 : i1 to i32
    %c0_i32_240 = arith.constant 0 : i32
    %243 = arith.cmpi ne, %242, %c0_i32_240 : i32
    scf.if %243 {
      %c6_i32_288 = arith.constant 6 : i32
      %297 = arith.addi %0, %c6_i32_288 : i32
      %c0_i32_289 = arith.constant 0 : i32
      %c6_i32_290 = arith.constant 6 : i32
      %298 = arith.maxsi %c0_i32_289, %297 : i32
      %299 = arith.minsi %c6_i32_290, %298 : i32
      %300 = tpu.assume_multiple %299, 2 : i32
      %c0_291 = arith.constant 0 : index
      %301 = arith.index_cast %300 : i32 to index
      %c0_292 = arith.constant 0 : index
      %c0_293 = arith.constant 0 : index
      %c0_294 = arith.constant 0 : index
      %302 = vector.load %arg2[%c0_291, %301, %c0_292, %c0_293, %c0_294] : memref<1x8x8x8x4xf32, #tpu.memory_space<vmem>>, vector<1x2x8x2x4xf32>
      %303 = vector.shape_cast %302 : vector<1x2x8x2x4xf32> to vector<2x8x2x4xf32>
      %304 = vector.shape_cast %303 : vector<2x8x2x4xf32> to vector<32x4xf32>
      %cst_295 = arith.constant dense<0.000000e+00> : vector<32x8xf32>
      %305 = tpu.matmul %304, %235, %cst_295 {dimension_numbers = #tpu.dot_dimension_numbers<[1], [0], [0], [1], [0, 0, 1, 1], [], []>} : vector<32x4xf32>, vector<4x8xf32>, vector<32x8xf32> -> vector<32x8xf32>
      %c0_296 = arith.constant 0 : index
      %c0_297 = arith.constant 0 : index
      %c6_298 = arith.constant 6 : index
      %c0_299 = arith.constant 0 : index
      %306 = vector.load %arg6[%c0_296, %c0_297, %c6_298, %c0_299] : memref<2x8x8x8xf32, #tpu.memory_space<vmem>>, vector<2x8x2x8xf32>
      %307 = vector.shape_cast %305 : vector<32x8xf32> to vector<2x8x2x8xf32>
      %308 = arith.addf %306, %307 : vector<2x8x2x8xf32>
      %c0_300 = arith.constant 0 : index
      %c0_301 = arith.constant 0 : index
      %c6_302 = arith.constant 6 : index
      %c0_303 = arith.constant 0 : index
      %309 = vector.load %arg6[%c0_300, %c0_301, %c6_302, %c0_303] : memref<2x8x8x8xf32, #tpu.memory_space<vmem>>, vector<2x8x2x8xf32>
      tpu.vector_store %arg6[%c0_300, %c0_301, %c6_302, %c0_303], %308 {strides = array<i32>} : memref<2x8x8x8xf32, #tpu.memory_space<vmem>>, vector<2x8x2x8xf32>,
    } else {
    }
    %c22 = arith.constant 22 : index
    %c0_241 = arith.constant 0 : index
    %c0_242 = arith.constant 0 : index
    %244 = vector.load %arg3[%c22, %c0_241, %c0_242] : memref<27x4x8xf32, #tpu.memory_space<vmem>>, vector<1x4x8xf32>
    %245 = vector.shape_cast %244 : vector<1x4x8xf32> to vector<4x8xf32>
    %c6_i32_243 = arith.constant 6 : i32
    %246 = arith.addi %0, %c6_i32_243 : i32
    %c0_i32_244 = arith.constant 0 : i32
    %247 = arith.cmpi sge, %246, %c0_i32_244 : i32
    %c6_i32_245 = arith.constant 6 : i32
    %248 = arith.addi %0, %c6_i32_245 : i32
    %c2_i32_246 = arith.constant 2 : i32
    %249 = arith.addi %248, %c2_i32_246 : i32
    %c8_i32_247 = arith.constant 8 : i32
    %250 = arith.cmpi sle, %249, %c8_i32_247 : i32
    %251 = arith.andi %247, %250 : i1
    %252 = arith.extui %251 : i1 to i32
    %c0_i32_248 = arith.constant 0 : i32
    %253 = arith.cmpi ne, %252, %c0_i32_248 : i32
    scf.if %253 {
      %c6_i32_288 = arith.constant 6 : i32
      %297 = arith.addi %0, %c6_i32_288 : i32
      %c0_i32_289 = arith.constant 0 : i32
      %c6_i32_290 = arith.constant 6 : i32
      %298 = arith.maxsi %c0_i32_289, %297 : i32
      %299 = arith.minsi %c6_i32_290, %298 : i32
      %300 = tpu.assume_multiple %299, 2 : i32
      %c0_291 = arith.constant 0 : index
      %301 = arith.index_cast %300 : i32 to index
      %c0_292 = arith.constant 0 : index
      %c0_293 = arith.constant 0 : index
      %c0_294 = arith.constant 0 : index
      %302 = vector.load %arg2[%c0_291, %301, %c0_292, %c0_293, %c0_294] : memref<1x8x8x8x4xf32, #tpu.memory_space<vmem>>, vector<1x2x8x8x4xf32>
      %303 = vector.shape_cast %302 : vector<1x2x8x8x4xf32> to vector<2x8x8x4xf32>
      %304 = vector.shape_cast %303 : vector<2x8x8x4xf32> to vector<128x4xf32>
      %cst_295 = arith.constant dense<0.000000e+00> : vector<128x8xf32>
      %305 = tpu.matmul %304, %245, %cst_295 {dimension_numbers = #tpu.dot_dimension_numbers<[1], [0], [0], [1], [0, 0, 1, 1], [], []>} : vector<128x4xf32>, vector<4x8xf32>, vector<128x8xf32> -> vector<128x8xf32>
      %c0_296 = arith.constant 0 : index
      %c0_297 = arith.constant 0 : index
      %c0_298 = arith.constant 0 : index
      %c0_299 = arith.constant 0 : index
      %306 = vector.load %arg6[%c0_296, %c0_297, %c0_298, %c0_299] : memref<2x8x8x8xf32, #tpu.memory_space<vmem>>, vector<2x8x8x8xf32>
      %307 = vector.shape_cast %305 : vector<128x8xf32> to vector<2x8x8x8xf32>
      %308 = arith.addf %306, %307 : vector<2x8x8x8xf32>
      %c0_300 = arith.constant 0 : index
      %c0_301 = arith.constant 0 : index
      %c0_302 = arith.constant 0 : index
      %c0_303 = arith.constant 0 : index
      %309 = vector.load %arg6[%c0_300, %c0_301, %c0_302, %c0_303] : memref<2x8x8x8xf32, #tpu.memory_space<vmem>>, vector<2x8x8x8xf32>
      tpu.vector_store %arg6[%c0_300, %c0_301, %c0_302, %c0_303], %308 {strides = array<i32>} : memref<2x8x8x8xf32, #tpu.memory_space<vmem>>, vector<2x8x8x8xf32>,
    } else {
    }
    %c23 = arith.constant 23 : index
    %c0_249 = arith.constant 0 : index
    %c0_250 = arith.constant 0 : index
    %254 = vector.load %arg3[%c23, %c0_249, %c0_250] : memref<27x4x8xf32, #tpu.memory_space<vmem>>, vector<1x4x8xf32>
    %255 = vector.shape_cast %254 : vector<1x4x8xf32> to vector<4x8xf32>
    %c6_i32_251 = arith.constant 6 : i32
    %256 = arith.addi %0, %c6_i32_251 : i32
    %c0_i32_252 = arith.constant 0 : i32
    %257 = arith.cmpi sge, %256, %c0_i32_252 : i32
    %c6_i32_253 = arith.constant 6 : i32
    %258 = arith.addi %0, %c6_i32_253 : i32
    %c2_i32_254 = arith.constant 2 : i32
    %259 = arith.addi %258, %c2_i32_254 : i32
    %c8_i32_255 = arith.constant 8 : i32
    %260 = arith.cmpi sle, %259, %c8_i32_255 : i32
    %261 = arith.andi %257, %260 : i1
    %262 = arith.extui %261 : i1 to i32
    %c0_i32_256 = arith.constant 0 : i32
    %263 = arith.cmpi ne, %262, %c0_i32_256 : i32
    scf.if %263 {
      %c6_i32_288 = arith.constant 6 : i32
      %297 = arith.addi %0, %c6_i32_288 : i32
      %c0_i32_289 = arith.constant 0 : i32
      %c6_i32_290 = arith.constant 6 : i32
      %298 = arith.maxsi %c0_i32_289, %297 : i32
      %299 = arith.minsi %c6_i32_290, %298 : i32
      %300 = tpu.assume_multiple %299, 2 : i32
      %c0_291 = arith.constant 0 : index
      %301 = arith.index_cast %300 : i32 to index
      %c0_292 = arith.constant 0 : index
      %c6_293 = arith.constant 6 : index
      %c0_294 = arith.constant 0 : index
      %302 = vector.load %arg2[%c0_291, %301, %c0_292, %c6_293, %c0_294] : memref<1x8x8x8x4xf32, #tpu.memory_space<vmem>>, vector<1x2x8x2x4xf32>
      %303 = vector.shape_cast %302 : vector<1x2x8x2x4xf32> to vector<2x8x2x4xf32>
      %304 = vector.shape_cast %303 : vector<2x8x2x4xf32> to vector<32x4xf32>
      %cst_295 = arith.constant dense<0.000000e+00> : vector<32x8xf32>
      %305 = tpu.matmul %304, %255, %cst_295 {dimension_numbers = #tpu.dot_dimension_numbers<[1], [0], [0], [1], [0, 0, 1, 1], [], []>} : vector<32x4xf32>, vector<4x8xf32>, vector<32x8xf32> -> vector<32x8xf32>
      %c0_296 = arith.constant 0 : index
      %c0_297 = arith.constant 0 : index
      %c0_298 = arith.constant 0 : index
      %c0_299 = arith.constant 0 : index
      %306 = vector.load %arg6[%c0_296, %c0_297, %c0_298, %c0_299] : memref<2x8x8x8xf32, #tpu.memory_space<vmem>>, vector<2x8x2x8xf32>
      %307 = vector.shape_cast %305 : vector<32x8xf32> to vector<2x8x2x8xf32>
      %308 = arith.addf %306, %307 : vector<2x8x2x8xf32>
      %c0_300 = arith.constant 0 : index
      %c0_301 = arith.constant 0 : index
      %c0_302 = arith.constant 0 : index
      %c0_303 = arith.constant 0 : index
      %309 = vector.load %arg6[%c0_300, %c0_301, %c0_302, %c0_303] : memref<2x8x8x8xf32, #tpu.memory_space<vmem>>, vector<2x8x2x8xf32>
      tpu.vector_store %arg6[%c0_300, %c0_301, %c0_302, %c0_303], %308 {strides = array<i32>} : memref<2x8x8x8xf32, #tpu.memory_space<vmem>>, vector<2x8x2x8xf32>,
    } else {
    }
    %c24 = arith.constant 24 : index
    %c0_257 = arith.constant 0 : index
    %c0_258 = arith.constant 0 : index
    %264 = vector.load %arg3[%c24, %c0_257, %c0_258] : memref<27x4x8xf32, #tpu.memory_space<vmem>>, vector<1x4x8xf32>
    %265 = vector.shape_cast %264 : vector<1x4x8xf32> to vector<4x8xf32>
    %c6_i32_259 = arith.constant 6 : i32
    %266 = arith.addi %0, %c6_i32_259 : i32
    %c0_i32_260 = arith.constant 0 : i32
    %267 = arith.cmpi sge, %266, %c0_i32_260 : i32
    %c6_i32_261 = arith.constant 6 : i32
    %268 = arith.addi %0, %c6_i32_261 : i32
    %c2_i32_262 = arith.constant 2 : i32
    %269 = arith.addi %268, %c2_i32_262 : i32
    %c8_i32_263 = arith.constant 8 : i32
    %270 = arith.cmpi sle, %269, %c8_i32_263 : i32
    %271 = arith.andi %267, %270 : i1
    %272 = arith.extui %271 : i1 to i32
    %c0_i32_264 = arith.constant 0 : i32
    %273 = arith.cmpi ne, %272, %c0_i32_264 : i32
    scf.if %273 {
      %c6_i32_288 = arith.constant 6 : i32
      %297 = arith.addi %0, %c6_i32_288 : i32
      %c0_i32_289 = arith.constant 0 : i32
      %c6_i32_290 = arith.constant 6 : i32
      %298 = arith.maxsi %c0_i32_289, %297 : i32
      %299 = arith.minsi %c6_i32_290, %298 : i32
      %300 = tpu.assume_multiple %299, 2 : i32
      %c0_291 = arith.constant 0 : index
      %301 = arith.index_cast %300 : i32 to index
      %c6_292 = arith.constant 6 : index
      %c0_293 = arith.constant 0 : index
      %c0_294 = arith.constant 0 : index
      %302 = vector.load %arg2[%c0_291, %301, %c6_292, %c0_293, %c0_294] : memref<1x8x8x8x4xf32, #tpu.memory_space<vmem>>, vector<1x2x2x2x4xf32>
      %303 = vector.shape_cast %302 : vector<1x2x2x2x4xf32> to vector<2x2x2x4xf32>
      %304 = vector.shape_cast %303 : vector<2x2x2x4xf32> to vector<8x4xf32>
      %cst_295 = arith.constant dense<0.000000e+00> : vector<8x8xf32>
      %305 = tpu.matmul %304, %265, %cst_295 {dimension_numbers = #tpu.dot_dimension_numbers<[1], [0], [0], [1], [0, 0, 1, 1], [], []>} : vector<8x4xf32>, vector<4x8xf32>, vector<8x8xf32> -> vector<8x8xf32>
      %c0_296 = arith.constant 0 : index
      %c0_297 = arith.constant 0 : index
      %c6_298 = arith.constant 6 : index
      %c0_299 = arith.constant 0 : index
      %306 = vector.load %arg6[%c0_296, %c0_297, %c6_298, %c0_299] : memref<2x8x8x8xf32, #tpu.memory_space<vmem>>, vector<2x2x2x8xf32>
      %307 = vector.shape_cast %305 : vector<8x8xf32> to vector<2x2x2x8xf32>
      %308 = arith.addf %306, %307 : vector<2x2x2x8xf32>
      %c0_300 = arith.constant 0 : index
      %c0_301 = arith.constant 0 : index
      %c6_302 = arith.constant 6 : index
      %c0_303 = arith.constant 0 : index
      %309 = vector.load %arg6[%c0_300, %c0_301, %c6_302, %c0_303] : memref<2x8x8x8xf32, #tpu.memory_space<vmem>>, vector<2x2x2x8xf32>
      tpu.vector_store %arg6[%c0_300, %c0_301, %c6_302, %c0_303], %308 {strides = array<i32>} : memref<2x8x8x8xf32, #tpu.memory_space<vmem>>, vector<2x2x2x8xf32>,
    } else {
    }
    %c25 = arith.constant 25 : index
    %c0_265 = arith.constant 0 : index
    %c0_266 = arith.constant 0 : index
    %274 = vector.load %arg3[%c25, %c0_265, %c0_266] : memref<27x4x8xf32, #tpu.memory_space<vmem>>, vector<1x4x8xf32>
    %275 = vector.shape_cast %274 : vector<1x4x8xf32> to vector<4x8xf32>
    %c6_i32_267 = arith.constant 6 : i32
    %276 = arith.addi %0, %c6_i32_267 : i32
    %c0_i32_268 = arith.constant 0 : i32
    %277 = arith.cmpi sge, %276, %c0_i32_268 : i32
    %c6_i32_269 = arith.constant 6 : i32
    %278 = arith.addi %0, %c6_i32_269 : i32
    %c2_i32_270 = arith.constant 2 : i32
    %279 = arith.addi %278, %c2_i32_270 : i32
    %c8_i32_271 = arith.constant 8 : i32
    %280 = arith.cmpi sle, %279, %c8_i32_271 : i32
    %281 = arith.andi %277, %280 : i1
    %282 = arith.extui %281 : i1 to i32
    %c0_i32_272 = arith.constant 0 : i32
    %283 = arith.cmpi ne, %282, %c0_i32_272 : i32
    scf.if %283 {
      %c6_i32_288 = arith.constant 6 : i32
      %297 = arith.addi %0, %c6_i32_288 : i32
      %c0_i32_289 = arith.constant 0 : i32
      %c6_i32_290 = arith.constant 6 : i32
      %298 = arith.maxsi %c0_i32_289, %297 : i32
      %299 = arith.minsi %c6_i32_290, %298 : i32
      %300 = tpu.assume_multiple %299, 2 : i32
      %c0_291 = arith.constant 0 : index
      %301 = arith.index_cast %300 : i32 to index
      %c6_292 = arith.constant 6 : index
      %c0_293 = arith.constant 0 : index
      %c0_294 = arith.constant 0 : index
      %302 = vector.load %arg2[%c0_291, %301, %c6_292, %c0_293, %c0_294] : memref<1x8x8x8x4xf32, #tpu.memory_space<vmem>>, vector<1x2x2x8x4xf32>
      %303 = vector.shape_cast %302 : vector<1x2x2x8x4xf32> to vector<2x2x8x4xf32>
      %304 = vector.shape_cast %303 : vector<2x2x8x4xf32> to vector<32x4xf32>
      %cst_295 = arith.constant dense<0.000000e+00> : vector<32x8xf32>
      %305 = tpu.matmul %304, %275, %cst_295 {dimension_numbers = #tpu.dot_dimension_numbers<[1], [0], [0], [1], [0, 0, 1, 1], [], []>} : vector<32x4xf32>, vector<4x8xf32>, vector<32x8xf32> -> vector<32x8xf32>
      %c0_296 = arith.constant 0 : index
      %c0_297 = arith.constant 0 : index
      %c0_298 = arith.constant 0 : index
      %c0_299 = arith.constant 0 : index
      %306 = vector.load %arg6[%c0_296, %c0_297, %c0_298, %c0_299] : memref<2x8x8x8xf32, #tpu.memory_space<vmem>>, vector<2x2x8x8xf32>
      %307 = vector.shape_cast %305 : vector<32x8xf32> to vector<2x2x8x8xf32>
      %308 = arith.addf %306, %307 : vector<2x2x8x8xf32>
      %c0_300 = arith.constant 0 : index
      %c0_301 = arith.constant 0 : index
      %c0_302 = arith.constant 0 : index
      %c0_303 = arith.constant 0 : index
      %309 = vector.load %arg6[%c0_300, %c0_301, %c0_302, %c0_303] : memref<2x8x8x8xf32, #tpu.memory_space<vmem>>, vector<2x2x8x8xf32>
      tpu.vector_store %arg6[%c0_300, %c0_301, %c0_302, %c0_303], %308 {strides = array<i32>} : memref<2x8x8x8xf32, #tpu.memory_space<vmem>>, vector<2x2x8x8xf32>,
    } else {
    }
    %c26 = arith.constant 26 : index
    %c0_273 = arith.constant 0 : index
    %c0_274 = arith.constant 0 : index
    %284 = vector.load %arg3[%c26, %c0_273, %c0_274] : memref<27x4x8xf32, #tpu.memory_space<vmem>>, vector<1x4x8xf32>
    %285 = vector.shape_cast %284 : vector<1x4x8xf32> to vector<4x8xf32>
    %c6_i32_275 = arith.constant 6 : i32
    %286 = arith.addi %0, %c6_i32_275 : i32
    %c0_i32_276 = arith.constant 0 : i32
    %287 = arith.cmpi sge, %286, %c0_i32_276 : i32
    %c6_i32_277 = arith.constant 6 : i32
    %288 = arith.addi %0, %c6_i32_277 : i32
    %c2_i32_278 = arith.constant 2 : i32
    %289 = arith.addi %288, %c2_i32_278 : i32
    %c8_i32_279 = arith.constant 8 : i32
    %290 = arith.cmpi sle, %289, %c8_i32_279 : i32
    %291 = arith.andi %287, %290 : i1
    %292 = arith.extui %291 : i1 to i32
    %c0_i32_280 = arith.constant 0 : i32
    %293 = arith.cmpi ne, %292, %c0_i32_280 : i32
    scf.if %293 {
      %c6_i32_288 = arith.constant 6 : i32
      %297 = arith.addi %0, %c6_i32_288 : i32
      %c0_i32_289 = arith.constant 0 : i32
      %c6_i32_290 = arith.constant 6 : i32
      %298 = arith.maxsi %c0_i32_289, %297 : i32
      %299 = arith.minsi %c6_i32_290, %298 : i32
      %300 = tpu.assume_multiple %299, 2 : i32
      %c0_291 = arith.constant 0 : index
      %301 = arith.index_cast %300 : i32 to index
      %c6_292 = arith.constant 6 : index
      %c6_293 = arith.constant 6 : index
      %c0_294 = arith.constant 0 : index
      %302 = vector.load %arg2[%c0_291, %301, %c6_292, %c6_293, %c0_294] : memref<1x8x8x8x4xf32, #tpu.memory_space<vmem>>, vector<1x2x2x2x4xf32>
      %303 = vector.shape_cast %302 : vector<1x2x2x2x4xf32> to vector<2x2x2x4xf32>
      %304 = vector.shape_cast %303 : vector<2x2x2x4xf32> to vector<8x4xf32>
      %cst_295 = arith.constant dense<0.000000e+00> : vector<8x8xf32>
      %305 = tpu.matmul %304, %285, %cst_295 {dimension_numbers = #tpu.dot_dimension_numbers<[1], [0], [0], [1], [0, 0, 1, 1], [], []>} : vector<8x4xf32>, vector<4x8xf32>, vector<8x8xf32> -> vector<8x8xf32>
      %c0_296 = arith.constant 0 : index
      %c0_297 = arith.constant 0 : index
      %c0_298 = arith.constant 0 : index
      %c0_299 = arith.constant 0 : index
      %306 = vector.load %arg6[%c0_296, %c0_297, %c0_298, %c0_299] : memref<2x8x8x8xf32, #tpu.memory_space<vmem>>, vector<2x2x2x8xf32>
      %307 = vector.shape_cast %305 : vector<8x8xf32> to vector<2x2x2x8xf32>
      %308 = arith.addf %306, %307 : vector<2x2x2x8xf32>
      %c0_300 = arith.constant 0 : index
      %c0_301 = arith.constant 0 : index
      %c0_302 = arith.constant 0 : index
      %c0_303 = arith.constant 0 : index
      %309 = vector.load %arg6[%c0_300, %c0_301, %c0_302, %c0_303] : memref<2x8x8x8xf32, #tpu.memory_space<vmem>>, vector<2x2x2x8xf32>
      tpu.vector_store %arg6[%c0_300, %c0_301, %c0_302, %c0_303], %308 {strides = array<i32>} : memref<2x8x8x8xf32, #tpu.memory_space<vmem>>, vector<2x2x2x8xf32>,
    } else {
    }
    %c0_281 = arith.constant 0 : index
    %c0_282 = arith.constant 0 : index
    %c0_283 = arith.constant 0 : index
    %c0_284 = arith.constant 0 : index
    %294 = vector.load %arg6[%c0_281, %c0_282, %c0_283, %c0_284] : memref<2x8x8x8xf32, #tpu.memory_space<vmem>>, vector<2x8x8x8xf32>
    %295 = vector.shape_cast %294 : vector<2x8x8x8xf32> to vector<1x128x8xf32>
    %c0_285 = arith.constant 0 : index
    %c0_286 = arith.constant 0 : index
    %c0_287 = arith.constant 0 : index
    %296 = vector.load %arg5[%c0_285, %c0_286, %c0_287] : memref<1x128x8xf32, #tpu.memory_space<vmem>>, vector<1x128x8xf32>
    tpu.vector_store %arg5[%c0_285, %c0_286, %c0_287], %295 {strides = array<i32>} : memref<1x128x8xf32, #tpu.memory_space<vmem>>, vector<1x128x8xf32>,
    return
  }
  func.func @transform_0(%arg0: i32, %arg1: i32) -> (i32, i32, i32, i32, i32) {
    %c0_i32 = arith.constant 0 : i32
    %c0_i32_0 = arith.constant 0 : i32
    %c0_i32_1 = arith.constant 0 : i32
    %c0_i32_2 = arith.constant 0 : i32
    %c0_i32_3 = arith.constant 0 : i32
    return %arg0, %c0_i32, %c0_i32_0, %c0_i32_1, %c0_i32_2 : i32, i32, i32, i32, i32
  }
  func.func @transform_1(%arg0: i32, %arg1: i32) -> (i32, i32, i32) {
    %c0_i32 = arith.constant 0 : i32
    %c0_i32_0 = arith.constant 0 : i32
    %c0_i32_1 = arith.constant 0 : i32
    %c0_i32_2 = arith.constant 0 : i32
    return %c0_i32, %c0_i32_0, %c0_i32_1 : i32, i32, i32
  }
  func.func @transform_2(%arg0: i32, %arg1: i32) -> (i32, i32, i32) {
    %c0_i32 = arith.constant 0 : i32
    %c0_i32_0 = arith.constant 0 : i32
    %c0_i32_1 = arith.constant 0 : i32
    return %arg0, %c0_i32, %c0_i32_0 : i32, i32, i32
  }
  func.func @transform_3(%arg0: i32, %arg1: i32) -> (i32, i32, i32) {
    %c4_i32 = arith.constant 4 : i32
    %0 = arith.muli %arg0, %c4_i32 : i32
    %1 = arith.addi %0, %arg1 : i32
    %c0_i32 = arith.constant 0 : i32
    %c0_i32_0 = arith.constant 0 : i32
    %c0_i32_1 = arith.constant 0 : i32
    return %1, %c0_i32, %c0_i32_0 : i32, i32, i32
  }
}

</mosaic_0001>

<llo_original>
// kernel: aspp_forward.1
$region0: #{aspp_forward.1}
  #allocation0 [shape = 'u32[]', space=smem, size = 0x4, offset = 0x4, fixed_abs, tag = 'smem constant byte address 0x4 - core index']
  #allocation1 [shape = 'u32[144,128]{1,0:T(1,128)}', space=vmem, size = 0x12000, scoped, tag = 'internal scratch']
  #allocation2 [shape = 'f32[2,8,8,8]{3,2,1,0:T(8,128)}', space=vmem, size = 0x10000, scoped, tag = 'scratch operand']
  %s0 = inlined_call_operand.vmem [shape: f32[2,8,8,8,4], index: 0, kind: input, shape index: {}]
  %s1 = inlined_call_operand.vmem [shape: f32[27,4,8], index: 1, kind: input, shape index: {}]
  %s2 = inlined_call_operand.vmem [shape: f32[2,1,8], index: 2, kind: input, shape index: {}]
  %s3 = inlined_call_operand.hbm [shape: f32[8,128,8], index: 3, kind: output, shape index: {}]
  %s4 = sld [smem:[#allocation0]]
  $region117: #{aspp_forward.1} parent=0
    _
  %s6 = ssub.s32 1, %s4
  %s7 = scalar_select 0, %s6, %s4
  $region1: #{aspp_forward.1} parent=0
    #allocation3 [shape = 'u8[131072]{0}', space=vmem, size = 0x20000, scoped, tag = 'output window, operand 0']
    #allocation4 [shape = 's32[2]{0}', space=sflag, size = 0x8, scoped, tag = 'scoped memory for aspp_forward.1']
    %8 = vsyncpa [#allocation4], 0
    %s9 = scalar_lea.sflag [#allocation4], 1
    %10 = vsyncpa %s9, 0
    loop: start=0, step=1, limit=10
    $region2: #{aspp_forward.1} parent=1 // loop_pre_header
      _
    $region3: #{aspp_forward.1} parent=1 // loop_header
      %s12 = sphi 0, %s16
      %p13 = scmp.ge.s32.totalorder %s12, 10
      %s19 = sphi 0, %s31
      %s20 = sphi 0, %s27
      %s21 = sphi 0, %s19
      %s22 = sphi 0, %s20
      %s23 = sphi 0, %s21
      %s24 = sphi 0, %s22
      %s34 = sphi 0, %s36
      %s37 = sphi 0, %s34
      %s38 = sphi 0, %s37
      %s54 = sphi 0, %s38
      %s58 = sphi 0, %s58
      %s60 = sphi 0, %s58
      %s61 = sphi 0, %s60
      %s75 = sphi 0, %s61
      %s81 = sphi 0, %s83
      %s84 = sphi 0, %s81
      %s85 = sphi 0, %s84
      %s101 = sphi 0, %s85
      %s111 = sphi 0, %s113
      %s114 = sphi 0, %s111
      %s115 = sphi 0, %s114
      %s131 = sphi 0, %s115
    $region4: #{aspp_forward.1} parent=1 // loop_header_branch
      %15 = sbr.rel (%p13) target = $region8
    $region5: #{aspp_forward.1} parent=1 // loop_body
      %s17 = ssub.s32 %s12, 1
      %s18 = ssub.s32 %s12, 2
      %s25 = sadd.s32 1, %s20
      %p26 = scmp.ge.s32.totalorder %s25, 4
      %s27 = scalar_select %p26, 0, %s25
      %s28 = sadd.s32 1, %s19
      %s29 = scalar_select %p26, %s28, %s19
      %p30 = scmp.ge.s32.totalorder %s29, 2
      %s31 = scalar_select %p30, 0, %s29
      %s32 = ssub.s32 %s19, %s31
      %p33 = scmp.eq.s32.totalorder %s32, 0
      %s35 = sadd.s32 %s34, 1
      %s36 = scalar_select %p33, %s34, %s35
      %p39 = pneg %p33
      %p40 = scmp.eq.s32.totalorder %s12, 7
      %p41 = por %p39, %p40
      %p42 = scmp.ne.s32.totalorder %s34, %s37
      %p43 = scmp.eq.s32.totalorder %s12, 0
      %p44 = por %p42, %p43
      %p45 = scmp.ne.s32.totalorder %s34, %s37
      %p46 = scmp.eq.s32.totalorder %s17, 7
      %p47 = por %p45, %p46
      %p48 = scmp.ne.s32.totalorder %s37, %s38
      %p49 = scmp.eq.s32.totalorder %s17, 0
      %p50 = por %p48, %p49
      %p51 = scmp.ne.s32.totalorder %s37, %s38
      %p52 = scmp.eq.s32.totalorder %s18, 7
      %p53 = por %p51, %p52
      %p55 = scmp.ne.s32.totalorder %s38, %s54
      %p56 = scmp.eq.s32.totalorder %s18, 0
      %p57 = por %p55, %p56
      %s59 = sadd.s32 %s58, 1
      %p62 = scmp.eq.s32.totalorder %s12, 7
      %p63 = scmp.ne.s32.totalorder %s58, %s60
      %p64 = scmp.eq.s32.totalorder %s12, 0
      %p65 = por %p63, %p64
      %p66 = scmp.ne.s32.totalorder %s58, %s60
      %p67 = scmp.eq.s32.totalorder %s17, 7
      %p68 = por %p66, %p67
      %p69 = scmp.ne.s32.totalorder %s60, %s61
      %p70 = scmp.eq.s32.totalorder %s17, 0
      %p71 = por %p69, %p70
      %p72 = scmp.ne.s32.totalorder %s60, %s61
      %p73 = scmp.eq.s32.totalorder %s18, 7
      %p74 = por %p72, %p73
      %p76 = scmp.ne.s32.totalorder %s61, %s75
      %p77 = scmp.eq.s32.totalorder %s18, 0
      %p78 = por %p76, %p77
      %s79 = ssub.s32 %s19, %s31
      %p80 = scmp.eq.s32.totalorder %s79, 0
      %s82 = sadd.s32 %s81, 1
      %s83 = scalar_select %p80, %s81, %s82
      %p86 = pneg %p80
      %p87 = scmp.eq.s32.totalorder %s12, 7
      %p88 = por %p86, %p87
      %p89 = scmp.ne.s32.totalorder %s81, %s84
      %p90 = scmp.eq.s32.totalorder %s12, 0
      %p91 = por %p89, %p90
      %p92 = scmp.ne.s32.totalorder %s81, %s84
      %p93 = scmp.eq.s32.totalorder %s17, 7
      %p94 = por %p92, %p93
      %p95 = scmp.ne.s32.totalorder %s84, %s85
      %p96 = scmp.eq.s32.totalorder %s17, 0
      %p97 = por %p95, %p96
      %p98 = scmp.ne.s32.totalorder %s84, %s85
      %p99 = scmp.eq.s32.totalorder %s18, 7
      %p100 = por %p98, %p99
      %p102 = scmp.ne.s32.totalorder %s85, %s101
      %p103 = scmp.eq.s32.totalorder %s18, 0
      %p104 = por %p102, %p103
      %s105 = smul.u32 %s19, 4
      %s106 = sadd.s32 %s105, %s20
      %s107 = smul.u32 %s31, 4
      %s108 = sadd.s32 %s107, %s27
      %s109 = ssub.s32 %s106, %s108
      %p110 = scmp.eq.s32.totalorder %s109, 0
      %s112 = sadd.s32 %s111, 1
      %s113 = scalar_select %p110, %s111, %s112
      %p116 = pneg %p110
      %p117 = scmp.eq.s32.totalorder %s12, 7
      %p118 = por %p116, %p117
      %p119 = scmp.ne.s32.totalorder %s111, %s114
      %p120 = scmp.eq.s32.totalorder %s12, 0
      %p121 = por %p119, %p120
      %p122 = scmp.ne.s32.totalorder %s111, %s114
      %p123 = scmp.eq.s32.totalorder %s17, 7
      %p124 = por %p122, %p123
      %p125 = scmp.ne.s32.totalorder %s114, %s115
      %p126 = scmp.eq.s32.totalorder %s17, 0
      %p127 = por %p125, %p126
      %p128 = scmp.ne.s32.totalorder %s114, %s115
      %p129 = scmp.eq.s32.totalorder %s18, 7
      %p130 = por %p128, %p129
      %p132 = scmp.ne.s32.totalorder %s115, %s131
      %p133 = scmp.eq.s32.totalorder %s18, 0
      %p134 = por %p132, %p133
      %p135 = scmp.le.s32.totalorder 1, %s12
      %p136 = scmp.lt.s32.totalorder %s12, 9
      %p137 = pnand %p135, %p136
      %p138 = pneg %p137
      // Predicated region
      $region9: #{aspp_forward.1} parent=5 // pred_check
        _
      $region10: #{aspp_forward.1} parent=5 // pred_check_branch
        %140 = sbr.rel (%p137) target = $region12
      $region11: #{aspp_forward.1} parent=5 // pred_region
        %s141 = ssub.s32 %s12, 1
        // Predicated region
        $region13: #{aspp_forward.1} parent=11 // pred_check
          %p142 = pneg %p71
        $region14: #{aspp_forward.1} parent=11 // pred_check_branch
          %144 = sbr.rel (%p142) target = $region16
        $region15: #{aspp_forward.1} parent=11 // pred_region
          _
        $region16: #{aspp_forward.1} parent=11 // pred_fallthru
          _
      $region12: #{aspp_forward.1} parent=5 // pred_fallthru
        _
      %p145 = scmp.lt.s32.totalorder %s12, 8
      // Predicated region
      $region17: #{aspp_forward.1} parent=5 // pred_check
        %p146 = pneg %p145
      $region18: #{aspp_forward.1} parent=5 // pred_check_branch
        %148 = sbr.rel (%p146) target = $region20
      $region19: #{aspp_forward.1} parent=5 // pred_region
        // Predicated region
        $region21: #{aspp_forward.1} parent=19 // pred_check
          %p149 = pneg %p44
        $region22: #{aspp_forward.1} parent=19 // pred_check_branch
          %151 = sbr.rel (%p149) target = $region24
        $region23: #{aspp_forward.1} parent=19 // pred_region
          %p152 = scmp.lt.s32.totalorder %s19, 1
          %s153 = scalar_select %p152, %s19, 1
          %s154 = smul.addr %s153, 64
          %s155 = smul.addr %s154, 8
          %s156 = scalar_lea.vmem %s0, %s155
        $region24: #{aspp_forward.1} parent=19 // pred_fallthru
          _
        // Predicated region
        $region25: #{aspp_forward.1} parent=19 // pred_check
          %p157 = pneg %p91
        $region26: #{aspp_forward.1} parent=19 // pred_check_branch
          %159 = sbr.rel (%p157) target = $region28
        $region27: #{aspp_forward.1} parent=19 // pred_region
          %p160 = scmp.lt.s32.totalorder %s19, 1
          %s161 = scalar_select %p160, %s19, 1
          %s162 = scalar_lea.vmem %s2, %s161
        $region28: #{aspp_forward.1} parent=19 // pred_fallthru
          _
      $region20: #{aspp_forward.1} parent=5 // pred_fallthru
        _
      %p163 = scmp.le.s32.totalorder 1, %s12
      %p164 = scmp.lt.s32.totalorder %s12, 9
      %p165 = pnand %p163, %p164
      %p166 = pneg %p165
      // Predicated region
      $region29: #{aspp_forward.1} parent=5 // pred_check
        _
      $region30: #{aspp_forward.1} parent=5 // pred_check_branch
        %168 = sbr.rel (%p165) target = $region32
      $region31: #{aspp_forward.1} parent=5 // pred_region
        %s169 = ssub.s32 %s12, 1
        %p170 = scmp.lt.s32.totalorder %s21, 1
        %s171 = scalar_select %p170, %s21, 1
        %s172 = smul.addr %s171, 64
        %s173 = smul.addr %s172, 8
        %s174 = scalar_lea.vmem %s0, %s173
        %p175 = pneg %p50
        %p176 = pneg %p47
        %p177 = pneg %p71
        %p178 = pneg %p68
        %p179 = scmp.lt.s32.totalorder %s21, 1
        %s180 = scalar_select %p179, %s21, 1
        %s181 = scalar_lea.vmem %s2, %s180
        %p182 = pneg %p97
        %p183 = pneg %p94
        %p184 = pneg %p127
        %p185 = pneg %p124
        %s186 = sand.u32 %s114, 1
        %s187 = scalar_lea.sflag [#allocation4], %s186
        %s188 = sand.u32 %s114, 1
        %s189 = smul.addr %s188, 128
        %s190 = scalar_lea.vmem [#allocation3], %s189
        %p191 = scmp.lt.s32.totalorder %s21, 1
        %s192 = scalar_select %p191, %s21, 1
        %s193 = smul.addr %s192, 64
        %s194 = smul.addr %s193, 8
        %s195 = scalar_lea.vmem %s0, %s194
        %p196 = scmp.lt.s32.totalorder %s21, 1
        %s197 = scalar_select %p196, %s21, 1
        %s198 = scalar_lea.vmem %s2, %s197
        %s199 = smul.u32 %s21, 4
        %s200 = sadd.s32 %s199, %s22
        %s201 = smul.u32 %s22, 2
        %v202 = vld [vmem:[%s198] sm:$0x1]
        %v204 = vlaneseq
        %v205 = vshrl.u32 %v204, 7
        %v206 = vsub.s32 0, %v205
        %v207 = vrot.slane %v202, %v206
        %vm209 = vcmask 64512
        %210 = vst.msk [vmem:[#allocation2] sm:$0xff] %vm209, %v207
        %211 = vst.msk [vmem:[#allocation2 + $0x8] sm:$0xff] %vm209, %v207
        %212 = vst.msk [vmem:[#allocation2 + $0x10] sm:$0xff] %vm209, %v207
        %213 = vst.msk [vmem:[#allocation2 + $0x18] sm:$0xff] %vm209, %v207
        %214 = vst.msk [vmem:[#allocation2 + $0x20] sm:$0xff] %vm209, %v207
        %215 = vst.msk [vmem:[#allocation2 + $0x28] sm:$0xff] %vm209, %v207
        %216 = vst.msk [vmem:[#allocation2 + $0x30] sm:$0xff] %vm209, %v207
        %217 = vst.msk [vmem:[#allocation2 + $0x38] sm:$0xff] %vm209, %v207
        %218 = vst.msk [vmem:[#allocation2 + $0x40] sm:$0xff] %vm209, %v207
        %219 = vst.msk [vmem:[#allocation2 + $0x48] sm:$0xff] %vm209, %v207
        %220 = vst.msk [vmem:[#allocation2 + $0x50] sm:$0xff] %vm209, %v207
        %221 = vst.msk [vmem:[#allocation2 + $0x58] sm:$0xff] %vm209, %v207
        %222 = vst.msk [vmem:[#allocation2 + $0x60] sm:$0xff] %vm209, %v207
        %223 = vst.msk [vmem:[#allocation2 + $0x68] sm:$0xff] %vm209, %v207
        %224 = vst.msk [vmem:[#allocation2 + $0x70] sm:$0xff] %vm209, %v207
        %225 = vst.msk [vmem:[#allocation2 + $0x78] sm:$0xff] %vm209, %v207
        %v226 = vld [vmem:[%s1] sm:$0xf]
        %s227 = smul.u32 %s201, 64
        %s228 = scalar_lea.vmem %s195, %s227
        %v229 = vld [vmem:[%s228] sm:$0xff]
        %v230 = vld [vmem:[%s228 + $0x8] sm:$0xff]
        %v231 = vld [vmem:[%s228 + $0x10] sm:$0xff]
        %v232 = vld [vmem:[%s228 + $0x18] sm:$0xff]
        %v233 = vld [vmem:[%s228 + $0x20] sm:$0xff]
        %v234 = vld [vmem:[%s228 + $0x28] sm:$0xff]
        %v235 = vld [vmem:[%s228 + $0x30] sm:$0xff]
        %v236 = vld [vmem:[%s228 + $0x38] sm:$0xff]
        %v237 = vld [vmem:[%s228 + $0x40] sm:$0xff]
        %v238 = vld [vmem:[%s228 + $0x48] sm:$0xff]
        %v239 = vld [vmem:[%s228 + $0x50] sm:$0xff]
        %v240 = vld [vmem:[%s228 + $0x58] sm:$0xff]
        %v241 = vld [vmem:[%s228 + $0x60] sm:$0xff]
        %v242 = vld [vmem:[%s228 + $0x68] sm:$0xff]
        %v243 = vld [vmem:[%s228 + $0x70] sm:$0xff]
        %v244 = vld [vmem:[%s228 + $0x78] sm:$0xff]
        %vm245 = vcmask 31744
        %v247 = vsel %vm245, %v229, 0
        %v250 = vsel %vm245, %v230, 0
        %v253 = vsel %vm245, %v231, 0
        %v256 = vsel %vm245, %v232, 0
        %v259 = vsel %vm245, %v233, 0
        %v262 = vsel %vm245, %v234, 0
        %v265 = vsel %vm245, %v235, 0
        %v268 = vsel %vm245, %v236, 0
        %v271 = vsel %vm245, %v237, 0
        %v274 = vsel %vm245, %v238, 0
        %v277 = vsel %vm245, %v239, 0
        %v280 = vsel %vm245, %v240, 0
        %v283 = vsel %vm245, %v241, 0
        %v286 = vsel %vm245, %v242, 0
        %v289 = vsel %vm245, %v243, 0
        %v292 = vsel %vm245, %v244, 0
        %vm294 = vcmask 1043456
        %v296 = vsel %vm294, %v226, 0
        %298 = vmatprep.subr.mxu0 0.0
        %299 = vmatpush1.msra.mxu0 %v296
        %300 = vmatprep.subr.mxu0 0.0
        %301 = vmatpush1.msra.mxu0 0.0
        %302 = vmatprep.subr.mxu0 0.0
        %303 = vmatpush1.msra.mxu0 0.0
        %304 = vmatprep.subr.mxu0 0.0
        %305 = vmatpush1.msra.mxu0 0.0
        %306 = vmatprep.subr.mxu0 0.0
        %307 = vmatpush1.msra.mxu0 0.0
        %308 = vmatprep.subr.mxu0 0.0
        %309 = vmatpush1.msra.mxu0 0.0
        %310 = vmatprep.subr.mxu0 0.0
        %311 = vmatpush1.msra.mxu0 0.0
        %312 = vmatprep.subr.mxu0 0.0
        %313 = vmatpush1.msra.mxu0 0.0
        %314 = vmatprep.subr.mxu0 0.0
        %315 = vmatpush1.msra.mxu0 0.0
        %316 = vmatprep.subr.mxu0 0.0
        %317 = vmatpush1.msra.mxu0 0.0
        %318 = vmatprep.subr.mxu0 0.0
        %319 = vmatpush1.msra.mxu0 0.0
        %320 = vmatprep.subr.mxu0 0.0
        %321 = vmatpush1.msra.mxu0 0.0
        %322 = vmatprep.subr.mxu0 0.0
        %323 = vmatpush1.msra.mxu0 0.0
        %324 = vmatprep.subr.mxu0 0.0
        %325 = vmatpush1.msra.mxu0 0.0
        %326 = vmatprep.subr.mxu0 0.0
        %327 = vmatpush1.msra.mxu0 0.0
        %328 = vmatprep.subr.mxu0 0.0
        %329 = vmatpush1.msra.mxu0 0.0
        %330 = vmatprep.subr.mxu0 0.0
        %331 = vmatpush1.msra.mxu0 0.0
        %332 = vmatprep.subr.mxu0 0.0
        %333 = vmatpush1.msra.mxu0 0.0
        %334 = vmatprep.subr.mxu0 0.0
        %335 = vmatpush1.msra.mxu0 0.0
        %336 = vmatprep.subr.mxu0 0.0
        %337 = vmatpush1.msra.mxu0 0.0
        %338 = vmatprep.subr.mxu0 0.0
        %339 = vmatpush1.msra.mxu0 0.0
        %340 = vmatprep.subr.mxu0 0.0
        %341 = vmatpush1.msra.mxu0 0.0
        %342 = vmatprep.subr.mxu0 0.0
        %343 = vmatpush1.msra.mxu0 0.0
        %344 = vmatprep.subr.mxu0 0.0
        %345 = vmatpush1.msra.mxu0 0.0
        %346 = vmatprep.subr.mxu0 0.0
        %347 = vmatpush1.msra.mxu0 0.0
        %348 = vmatprep.subr.mxu0 0.0
        %349 = vmatpush1.msra.mxu0 0.0
        %350 = vmatprep.subr.mxu0 0.0
        %351 = vmatpush1.msra.mxu0 0.0
        %352 = vmatprep.subr.mxu0 0.0
        %353 = vmatpush1.msra.mxu0 0.0
        %354 = vmatprep.subr.mxu0 0.0
        %355 = vmatpush1.msra.mxu0 0.0
        %356 = vmatprep.subr.mxu0 0.0
        %357 = vmatpush1.msra.mxu0 0.0
        %358 = vmatprep.subr.mxu0 0.0
        %359 = vmatpush1.msra.mxu0 0.0
        %360 = vmatprep.subr.mxu0 0.0
        %361 = vmatpush1.msra.mxu0 0.0
        %362 = vmatprep.mubr.f32.mxu0 0.0
        %363 = vmatmul.mubr.f32.gmra.mrb[0].mxu0 %v247
        %v364 = vpop.f32.mrb[0].mxu0
        %v365 = vadd.f32 0.0, %v364
        %v366 = vpop.f32.mrb[0].mxu0
        %367 = vmatprep.mubr.f32.mxu0 0.0
        %368 = vmatmul.mubr.f32.gmra.mrb[0].mxu0 %v250
        %v369 = vpop.f32.mrb[0].mxu0
        %v370 = vadd.f32 0.0, %v369
        %v371 = vpop.f32.mrb[0].mxu0
        %372 = vmatprep.mubr.f32.mxu0 0.0
        %373 = vmatmul.mubr.f32.gmra.mrb[0].mxu0 %v253
        %v374 = vpop.f32.mrb[0].mxu0
        %v375 = vadd.f32 0.0, %v374
        %v376 = vpop.f32.mrb[0].mxu0
        %377 = vmatprep.mubr.f32.mxu0 0.0
        %378 = vmatmul.mubr.f32.gmra.mrb[0].mxu0 %v256
        %v379 = vpop.f32.mrb[0].mxu0
        %v380 = vadd.f32 0.0, %v379
        %v381 = vpop.f32.mrb[0].mxu0
        %382 = vmatprep.mubr.f32.mxu0 0.0
        %383 = vmatmul.mubr.f32.gmra.mrb[0].mxu0 %v259
        %v384 = vpop.f32.mrb[0].mxu0
        %v385 = vadd.f32 0.0, %v384
        %v386 = vpop.f32.mrb[0].mxu0
        %387 = vmatprep.mubr.f32.mxu0 0.0
        %388 = vmatmul.mubr.f32.gmra.mrb[0].mxu0 %v262
        %v389 = vpop.f32.mrb[0].mxu0
        %v390 = vadd.f32 0.0, %v389
        %v391 = vpop.f32.mrb[0].mxu0
        %392 = vmatprep.mubr.f32.mxu0 0.0
        %393 = vmatmul.mubr.f32.gmra.mrb[0].mxu0 %v265
        %v394 = vpop.f32.mrb[0].mxu0
        %v395 = vadd.f32 0.0, %v394
        %v396 = vpop.f32.mrb[0].mxu0
        %397 = vmatprep.mubr.f32.mxu0 0.0
        %398 = vmatmul.mubr.f32.gmra.mrb[0].mxu0 %v268
        %v399 = vpop.f32.mrb[0].mxu0
        %v400 = vadd.f32 0.0, %v399
        %v401 = vpop.f32.mrb[0].mxu0
        %402 = vmatprep.mubr.f32.mxu0 0.0
        %403 = vmatmul.mubr.f32.gmra.mrb[0].mxu0 %v271
        %v404 = vpop.f32.mrb[0].mxu0
        %v405 = vadd.f32 0.0, %v404
        %v406 = vpop.f32.mrb[0].mxu0
        %407 = vmatprep.mubr.f32.mxu0 0.0
        %408 = vmatmul.mubr.f32.gmra.mrb[0].mxu0 %v274
        %v409 = vpop.f32.mrb[0].mxu0
        %v410 = vadd.f32 0.0, %v409
        %v411 = vpop.f32.mrb[0].mxu0
        %412 = vmatprep.mubr.f32.mxu0 0.0
        %413 = vmatmul.mubr.f32.gmra.mrb[0].mxu0 %v277
        %v414 = vpop.f32.mrb[0].mxu0
        %v415 = vadd.f32 0.0, %v414
        %v416 = vpop.f32.mrb[0].mxu0
        %417 = vmatprep.mubr.f32.mxu0 0.0
        %418 = vmatmul.mubr.f32.gmra.mrb[0].mxu0 %v280
        %v419 = vpop.f32.mrb[0].mxu0
        %v420 = vadd.f32 0.0, %v419
        %v421 = vpop.f32.mrb[0].mxu0
        %422 = vmatprep.mubr.f32.mxu0 0.0
        %423 = vmatmul.mubr.f32.gmra.mrb[0].mxu0 %v283
        %v424 = vpop.f32.mrb[0].mxu0
        %v425 = vadd.f32 0.0, %v424
        %v426 = vpop.f32.mrb[0].mxu0
        %427 = vmatprep.mubr.f32.mxu0 0.0
        %428 = vmatmul.mubr.f32.gmra.mrb[0].mxu0 %v286
        %v429 = vpop.f32.mrb[0].mxu0
        %v430 = vadd.f32 0.0, %v429
        %v431 = vpop.f32.mrb[0].mxu0
        %432 = vmatprep.mubr.f32.mxu0 0.0
        %433 = vmatmul.mubr.f32.gmra.mrb[0].mxu0 %v289
        %v434 = vpop.f32.mrb[0].mxu0
        %v435 = vadd.f32 0.0, %v434
        %v436 = vpop.f32.mrb[0].mxu0
        %437 = vmatprep.mubr.f32.mxu0 0.0
        %438 = vmatmul.mubr.f32.gmra.mrb[0].mxu0 %v292
        %v439 = vpop.f32.mrb[0].mxu0
        %v440 = vadd.f32 0.0, %v439
        %v441 = vpop.f32.mrb[0].mxu0
        %442 = vdwg.mxu0
        %v443 = vld [vmem:[#allocation2] sm:$0xff]
        %v444 = vld [vmem:[#allocation2 + $0x8] sm:$0xff]
        %v445 = vld [vmem:[#allocation2 + $0x10] sm:$0xff]
        %v446 = vld [vmem:[#allocation2 + $0x18] sm:$0xff]
        %v447 = vld [vmem:[#allocation2 + $0x20] sm:$0xff]
        %v448 = vld [vmem:[#allocation2 + $0x28] sm:$0xff]
        %v449 = vld [vmem:[#allocation2 + $0x30] sm:$0xff]
        %v450 = vld [vmem:[#allocation2 + $0x38] sm:$0xff]
        %v451 = vld [vmem:[#allocation2 + $0x40] sm:$0xff]
        %v452 = vld [vmem:[#allocation2 + $0x48] sm:$0xff]
        %v453 = vld [vmem:[#allocation2 + $0x50] sm:$0xff]
        %v454 = vld [vmem:[#allocation2 + $0x58] sm:$0xff]
        %v455 = vld [vmem:[#allocation2 + $0x60] sm:$0xff]
        %v456 = vld [vmem:[#allocation2 + $0x68] sm:$0xff]
        %v457 = vld [vmem:[#allocation2 + $0x70] sm:$0xff]
        %v458 = vld [vmem:[#allocation2 + $0x78] sm:$0xff]
        %v459 = vadd.f32 %v443, %v365
        %v460 = vadd.f32 %v444, %v370
        %v461 = vadd.f32 %v445, %v375
        %v462 = vadd.f32 %v446, %v380
        %v463 = vadd.f32 %v447, %v385
        %v464 = vadd.f32 %v448, %v390
        %v465 = vadd.f32 %v449, %v395
        %v466 = vadd.f32 %v450, %v400
        %v467 = vadd.f32 %v451, %v405
        %v468 = vadd.f32 %v452, %v410
        %v469 = vadd.f32 %v453, %v415
        %v470 = vadd.f32 %v454, %v420
        %v471 = vadd.f32 %v455, %v425
        %v472 = vadd.f32 %v456, %v430
        %v473 = vadd.f32 %v457, %v435
        %v474 = vadd.f32 %v458, %v440
        %475 = vst.msk [vmem:[#allocation2] sm:$0xff] %vm209, %v459
        %476 = vst.msk [vmem:[#allocation2 + $0x8] sm:$0xff] %vm209, %v460
        %477 = vst.msk [vmem:[#allocation2 + $0x10] sm:$0xff] %vm209, %v461
        %478 = vst.msk [vmem:[#allocation2 + $0x18] sm:$0xff] %vm209, %v462
        %479 = vst.msk [vmem:[#allocation2 + $0x20] sm:$0xff] %vm209, %v463
        %480 = vst.msk [vmem:[#allocation2 + $0x28] sm:$0xff] %vm209, %v464
        %481 = vst.msk [vmem:[#allocation2 + $0x30] sm:$0xff] %vm209, %v465
        %482 = vst.msk [vmem:[#allocation2 + $0x38] sm:$0xff] %vm209, %v466
        %483 = vst.msk [vmem:[#allocation2 + $0x40] sm:$0xff] %vm209, %v467
        %484 = vst.msk [vmem:[#allocation2 + $0x48] sm:$0xff] %vm209, %v468
        %485 = vst.msk [vmem:[#allocation2 + $0x50] sm:$0xff] %vm209, %v469
        %486 = vst.msk [vmem:[#allocation2 + $0x58] sm:$0xff] %vm209, %v470
        %487 = vst.msk [vmem:[#allocation2 + $0x60] sm:$0xff] %vm209, %v471
        %488 = vst.msk [vmem:[#allocation2 + $0x68] sm:$0xff] %vm209, %v472
        %489 = vst.msk [vmem:[#allocation2 + $0x70] sm:$0xff] %vm209, %v473
        %490 = vst.msk [vmem:[#allocation2 + $0x78] sm:$0xff] %vm209, %v474
        %s491 = scalar_lea.vmem %s1, 4
        %v492 = vld [vmem:[%s491] sm:$0xf]
        %s493 = sadd.s32 %s201, 4294967290
        %p494 = scmp.ge.s32.totalorder %s493, 0
        %s495 = sadd.s32 %s201, 4294967292
        %p496 = scmp.le.s32.totalorder %s495, 8
        %p497 = pnand %p494, %p496
        %p498 = pneg %p497
        // Predicated region
        $region33: #{aspp_forward.1} parent=31 // pred_check
          _
        $region34: #{aspp_forward.1} parent=31 // pred_check_branch
          %500 = sbr.rel (%p497) target = $region36
        $region35: #{aspp_forward.1} parent=31 // pred_region
          %p501 = scmp.gt.s32.totalorder %s493, 0
          %s502 = scalar_select %p501, %s493, 0
          %p503 = scmp.lt.s32.totalorder %s502, 6
          %s504 = scalar_select %p503, %s502, 6
          %s505 = smul.u32 %s504, 64
          %s506 = scalar_lea.vmem %s195, %s505
          %v507 = vld [vmem:[%s506] sm:$0x3]
          %v508 = vld [vmem:[%s506 + $0x8] sm:$0x3]
          %v509 = vld [vmem:[%s506 + $0x40] sm:$0x3]
          %v510 = vld [vmem:[%s506 + $0x48] sm:$0x3]
          %v515 = vcombine.low %v507, %v508
          %v516 = vcombine.low %v509, %v510
          %v518 = vunpack.c.l.s4 1983009808
          %v519 = vunpack.c.0.s8 %v518
          %v520 = vlaneseq
          %v521 = vshrl.u32 %v520, 7
          %v522 = vsub.s32 %v519, %v521
          %v523 = vrot.slane %v515, %v522
          %v525 = vunpack.c.l.s4 1983009808
          %v526 = vunpack.c.0.s8 %v525
          %v527 = vlaneseq
          %v528 = vshrl.u32 %v527, 7
          %v529 = vsub.s32 %v526, %v528
          %v530 = vrot.slane %v516, %v529
          %v531 = vcombine.low %v523, %v530
          %v532 = vsel %vm245, %v531, 0
          %v535 = vsel %vm294, %v492, 0
          %537 = vmatprep.subr.mxu0 0.0
          %538 = vmatpush1.msra.mxu0 %v535
          %539 = vmatprep.subr.mxu0 0.0
          %540 = vmatpush1.msra.mxu0 0.0
          %541 = vmatprep.subr.mxu0 0.0
          %542 = vmatpush1.msra.mxu0 0.0
          %543 = vmatprep.subr.mxu0 0.0
          %544 = vmatpush1.msra.mxu0 0.0
          %545 = vmatprep.subr.mxu0 0.0
          %546 = vmatpush1.msra.mxu0 0.0
          %547 = vmatprep.subr.mxu0 0.0
          %548 = vmatpush1.msra.mxu0 0.0
          %549 = vmatprep.subr.mxu0 0.0
          %550 = vmatpush1.msra.mxu0 0.0
          %551 = vmatprep.subr.mxu0 0.0
          %552 = vmatpush1.msra.mxu0 0.0
          %553 = vmatprep.subr.mxu0 0.0
          %554 = vmatpush1.msra.mxu0 0.0
          %555 = vmatprep.subr.mxu0 0.0
          %556 = vmatpush1.msra.mxu0 0.0
          %557 = vmatprep.subr.mxu0 0.0
          %558 = vmatpush1.msra.mxu0 0.0
          %559 = vmatprep.subr.mxu0 0.0
          %560 = vmatpush1.msra.mxu0 0.0
          %561 = vmatprep.subr.mxu0 0.0
          %562 = vmatpush1.msra.mxu0 0.0
          %563 = vmatprep.subr.mxu0 0.0
          %564 = vmatpush1.msra.mxu0 0.0
          %565 = vmatprep.subr.mxu0 0.0
          %566 = vmatpush1.msra.mxu0 0.0
          %567 = vmatprep.subr.mxu0 0.0
          %568 = vmatpush1.msra.mxu0 0.0
          %569 = vmatprep.subr.mxu0 0.0
          %570 = vmatpush1.msra.mxu0 0.0
          %571 = vmatprep.subr.mxu0 0.0
          %572 = vmatpush1.msra.mxu0 0.0
          %573 = vmatprep.subr.mxu0 0.0
          %574 = vmatpush1.msra.mxu0 0.0
          %575 = vmatprep.subr.mxu0 0.0
          %576 = vmatpush1.msra.mxu0 0.0
          %577 = vmatprep.subr.mxu0 0.0
          %578 = vmatpush1.msra.mxu0 0.0
          %579 = vmatprep.subr.mxu0 0.0
          %580 = vmatpush1.msra.mxu0 0.0
          %581 = vmatprep.subr.mxu0 0.0
          %582 = vmatpush1.msra.mxu0 0.0
          %583 = vmatprep.subr.mxu0 0.0
          %584 = vmatpush1.msra.mxu0 0.0
          %585 = vmatprep.subr.mxu0 0.0
          %586 = vmatpush1.msra.mxu0 0.0
          %587 = vmatprep.subr.mxu0 0.0
          %588 = vmatpush1.msra.mxu0 0.0
          %589 = vmatprep.subr.mxu0 0.0
          %590 = vmatpush1.msra.mxu0 0.0
          %591 = vmatprep.subr.mxu0 0.0
          %592 = vmatpush1.msra.mxu0 0.0
          %593 = vmatprep.subr.mxu0 0.0
          %594 = vmatpush1.msra.mxu0 0.0
          %595 = vmatprep.subr.mxu0 0.0
          %596 = vmatpush1.msra.mxu0 0.0
          %597 = vmatprep.subr.mxu0 0.0
          %598 = vmatpush1.msra.mxu0 0.0
          %599 = vmatprep.subr.mxu0 0.0
          %600 = vmatpush1.msra.mxu0 0.0
          %601 = vmatprep.mubr.f32.mxu0 0.0
          %602 = vmatmul.mubr.f32.gmra.mrb[0].mxu0 %v532
          %v603 = vpop.f32.mrb[0].mxu0
          %v604 = vadd.f32 0.0, %v603
          %v605 = vpop.f32.mrb[0].mxu0
          %606 = vdwg.mxu0
          %s607 = scalar_lea.vmem [#allocation2], 48
          %v608 = vld [vmem:[%s607 + $0x6] sm:$0x3]
          %v609 = vld [vmem:[%s607 + $0xe] sm:$0x3]
          %v610 = vld [vmem:[%s607 + $0x46] sm:$0x3]
          %v611 = vld [vmem:[%s607 + $0x4e] sm:$0x3]
          %v613 = vcombine.high %v604, %v604
          %v615 = vunpack.c.l.s4 1983009808
          %v616 = vunpack.c.0.s8 %v615
          %v617 = vlaneseq
          %v618 = vshrl.u32 %v617, 7
          %v619 = vsub.s32 %v616, %v618
          %v620 = vrot.slane %v604, %v619
          %v622 = vunpack.c.l.s4 1983009808
          %v623 = vunpack.c.0.s8 %v622
          %v624 = vlaneseq
          %v625 = vshrl.u32 %v624, 7
          %v626 = vsub.s32 %v623, %v625
          %v627 = vrot.slane %v613, %v626
          %v628 = vcombine.high %v620, %v620
          %v629 = vcombine.high %v627, %v627
          %v634 = vadd.f32 %v608, %v620
          %v635 = vadd.f32 %v609, %v628
          %v636 = vadd.f32 %v610, %v627
          %v637 = vadd.f32 %v611, %v629
          %vm638 = vcmask 58368
          %639 = vst.msk [vmem:[%s607 + $0x6] sm:$0x3] %vm638, %v634
          %640 = vst.msk [vmem:[%s607 + $0xe] sm:$0x3] %vm638, %v635
          %641 = vst.msk [vmem:[%s607 + $0x46] sm:$0x3] %vm638, %v636
          %642 = vst.msk [vmem:[%s607 + $0x4e] sm:$0x3] %vm638, %v637
        $region36: #{aspp_forward.1} parent=31 // pred_fallthru
          _
        %s643 = scalar_lea.vmem %s1, 8
        %v644 = vld [vmem:[%s643] sm:$0xf]
        // Predicated region
        $region37: #{aspp_forward.1} parent=31 // pred_check
          _
        $region38: #{aspp_forward.1} parent=31 // pred_check_branch
          %646 = sbr.rel (%p497) target = $region40
        $region39: #{aspp_forward.1} parent=31 // pred_region
          %p647 = scmp.gt.s32.totalorder %s493, 0
          %s648 = scalar_select %p647, %s493, 0
          %p649 = scmp.lt.s32.totalorder %s648, 6
          %s650 = scalar_select %p649, %s648, 6
          %s651 = smul.u32 %s650, 64
          %s652 = scalar_lea.vmem %s195, %s651
          %v653 = vld [vmem:[%s652] sm:$0xff]
          %v654 = vld [vmem:[%s652 + $0x8] sm:$0xff]
          %v655 = vld [vmem:[%s652 + $0x40] sm:$0xff]
          %v656 = vld [vmem:[%s652 + $0x48] sm:$0xff]
          %v658 = vsel %vm245, %v653, 0
          %v661 = vsel %vm245, %v654, 0
          %v664 = vsel %vm245, %v655, 0
          %v667 = vsel %vm245, %v656, 0
          %v670 = vsel %vm294, %v644, 0
          %672 = vmatprep.subr.mxu0 0.0
          %673 = vmatpush1.msra.mxu0 %v670
          %674 = vmatprep.subr.mxu0 0.0
          %675 = vmatpush1.msra.mxu0 0.0
          %676 = vmatprep.subr.mxu0 0.0
          %677 = vmatpush1.msra.mxu0 0.0
          %678 = vmatprep.subr.mxu0 0.0
          %679 = vmatpush1.msra.mxu0 0.0
          %680 = vmatprep.subr.mxu0 0.0
          %681 = vmatpush1.msra.mxu0 0.0
          %682 = vmatprep.subr.mxu0 0.0
          %683 = vmatpush1.msra.mxu0 0.0
          %684 = vmatprep.subr.mxu0 0.0
          %685 = vmatpush1.msra.mxu0 0.0
          %686 = vmatprep.subr.mxu0 0.0
          %687 = vmatpush1.msra.mxu0 0.0
          %688 = vmatprep.subr.mxu0 0.0
          %689 = vmatpush1.msra.mxu0 0.0
          %690 = vmatprep.subr.mxu0 0.0
          %691 = vmatpush1.msra.mxu0 0.0
          %692 = vmatprep.subr.mxu0 0.0
          %693 = vmatpush1.msra.mxu0 0.0
          %694 = vmatprep.subr.mxu0 0.0
          %695 = vmatpush1.msra.mxu0 0.0
          %696 = vmatprep.subr.mxu0 0.0
          %697 = vmatpush1.msra.mxu0 0.0
          %698 = vmatprep.subr.mxu0 0.0
          %699 = vmatpush1.msra.mxu0 0.0
          %700 = vmatprep.subr.mxu0 0.0
          %701 = vmatpush1.msra.mxu0 0.0
          %702 = vmatprep.subr.mxu0 0.0
          %703 = vmatpush1.msra.mxu0 0.0
          %704 = vmatprep.subr.mxu0 0.0
          %705 = vmatpush1.msra.mxu0 0.0
          %706 = vmatprep.subr.mxu0 0.0
          %707 = vmatpush1.msra.mxu0 0.0
          %708 = vmatprep.subr.mxu0 0.0
          %709 = vmatpush1.msra.mxu0 0.0
          %710 = vmatprep.subr.mxu0 0.0
          %711 = vmatpush1.msra.mxu0 0.0
          %712 = vmatprep.subr.mxu0 0.0
          %713 = vmatpush1.msra.mxu0 0.0
          %714 = vmatprep.subr.mxu0 0.0
          %715 = vmatpush1.msra.mxu0 0.0
          %716 = vmatprep.subr.mxu0 0.0
          %717 = vmatpush1.msra.mxu0 0.0
          %718 = vmatprep.subr.mxu0 0.0
          %719 = vmatpush1.msra.mxu0 0.0
          %720 = vmatprep.subr.mxu0 0.0
          %721 = vmatpush1.msra.mxu0 0.0
          %722 = vmatprep.subr.mxu0 0.0
          %723 = vmatpush1.msra.mxu0 0.0
          %724 = vmatprep.subr.mxu0 0.0
          %725 = vmatpush1.msra.mxu0 0.0
          %726 = vmatprep.subr.mxu0 0.0
          %727 = vmatpush1.msra.mxu0 0.0
          %728 = vmatprep.subr.mxu0 0.0
          %729 = vmatpush1.msra.mxu0 0.0
          %730 = vmatprep.subr.mxu0 0.0
          %731 = vmatpush1.msra.mxu0 0.0
          %732 = vmatprep.subr.mxu0 0.0
          %733 = vmatpush1.msra.mxu0 0.0
          %734 = vmatprep.subr.mxu0 0.0
          %735 = vmatpush1.msra.mxu0 0.0
          %736 = vmatprep.mubr.f32.mxu0 0.0
          %737 = vmatmul.mubr.f32.gmra.mrb[0].mxu0 %v658
          %v738 = vpop.f32.mrb[0].mxu0
          %v739 = vadd.f32 0.0, %v738
          %v740 = vpop.f32.mrb[0].mxu0
          %741 = vmatprep.mubr.f32.mxu0 0.0
          %742 = vmatmul.mubr.f32.gmra.mrb[0].mxu0 %v661
          %v743 = vpop.f32.mrb[0].mxu0
          %v744 = vadd.f32 0.0, %v743
          %v745 = vpop.f32.mrb[0].mxu0
          %746 = vmatprep.mubr.f32.mxu0 0.0
          %747 = vmatmul.mubr.f32.gmra.mrb[0].mxu0 %v664
          %v748 = vpop.f32.mrb[0].mxu0
          %v749 = vadd.f32 0.0, %v748
          %v750 = vpop.f32.mrb[0].mxu0
          %751 = vmatprep.mubr.f32.mxu0 0.0
          %752 = vmatmul.mubr.f32.gmra.mrb[0].mxu0 %v667
          %v753 = vpop.f32.mrb[0].mxu0
          %v754 = vadd.f32 0.0, %v753
          %v755 = vpop.f32.mrb[0].mxu0
          %756 = vdwg.mxu0
          %s757 = scalar_lea.vmem [#allocation2], 48
          %v758 = vld [vmem:[%s757] sm:$0xff]
          %v759 = vld [vmem:[%s757 + $0x8] sm:$0xff]
          %v760 = vld [vmem:[%s757 + $0x40] sm:$0xff]
          %v761 = vld [vmem:[%s757 + $0x48] sm:$0xff]
          %v762 = vadd.f32 %v758, %v739
          %v763 = vadd.f32 %v759, %v744
          %v764 = vadd.f32 %v760, %v749
          %v765 = vadd.f32 %v761, %v754
          %766 = vst.msk [vmem:[%s757] sm:$0xff] %vm209, %v762
          %767 = vst.msk [vmem:[%s757 + $0x8] sm:$0xff] %vm209, %v763
          %768 = vst.msk [vmem:[%s757 + $0x40] sm:$0xff] %vm209, %v764
          %769 = vst.msk [vmem:[%s757 + $0x48] sm:$0xff] %vm209, %v765
        $region40: #{aspp_forward.1} parent=31 // pred_fallthru
          _
        %s770 = scalar_lea.vmem %s1, 12
        %v771 = vld [vmem:[%s770] sm:$0xf]
        // Predicated region
        $region41: #{aspp_forward.1} parent=31 // pred_check
          _
        $region42: #{aspp_forward.1} parent=31 // pred_check_branch
          %773 = sbr.rel (%p497) target = $region44
        $region43: #{aspp_forward.1} parent=31 // pred_region
          %p774 = scmp.gt.s32.totalorder %s493, 0
          %s775 = scalar_select %p774, %s493, 0
          %p776 = scmp.lt.s32.totalorder %s775, 6
          %s777 = scalar_select %p776, %s775, 6
          %s778 = smul.u32 %s777, 64
          %s779 = scalar_lea.vmem %s195, %s778
          %v780 = vld [vmem:[%s779 + $0x6] sm:$0x3]
          %v781 = vld [vmem:[%s779 + $0xe] sm:$0x3]
          %v782 = vld [vmem:[%s779 + $0x46] sm:$0x3]
          %v783 = vld [vmem:[%s779 + $0x4e] sm:$0x3]
          %v788 = vcombine.low %v780, %v781
          %v789 = vcombine.low %v782, %v783
          %v791 = vunpack.c.l.s4 1983009808
          %v792 = vunpack.c.0.s8 %v791
          %v793 = vlaneseq
          %v794 = vshrl.u32 %v793, 7
          %v795 = vsub.s32 %v792, %v794
          %v796 = vrot.slane %v788, %v795
          %v798 = vunpack.c.l.s4 1983009808
          %v799 = vunpack.c.0.s8 %v798
          %v800 = vlaneseq
          %v801 = vshrl.u32 %v800, 7
          %v802 = vsub.s32 %v799, %v801
          %v803 = vrot.slane %v789, %v802
          %v804 = vcombine.low %v796, %v803
          %v805 = vsel %vm245, %v804, 0
          %v808 = vsel %vm294, %v771, 0
          %810 = vmatprep.subr.mxu0 0.0
          %811 = vmatpush1.msra.mxu0 %v808
          %812 = vmatprep.subr.mxu0 0.0
          %813 = vmatpush1.msra.mxu0 0.0
          %814 = vmatprep.subr.mxu0 0.0
          %815 = vmatpush1.msra.mxu0 0.0
          %816 = vmatprep.subr.mxu0 0.0
          %817 = vmatpush1.msra.mxu0 0.0
          %818 = vmatprep.subr.mxu0 0.0
          %819 = vmatpush1.msra.mxu0 0.0
          %820 = vmatprep.subr.mxu0 0.0
          %821 = vmatpush1.msra.mxu0 0.0
          %822 = vmatprep.subr.mxu0 0.0
          %823 = vmatpush1.msra.mxu0 0.0
          %824 = vmatprep.subr.mxu0 0.0
          %825 = vmatpush1.msra.mxu0 0.0
          %826 = vmatprep.subr.mxu0 0.0
          %827 = vmatpush1.msra.mxu0 0.0
          %828 = vmatprep.subr.mxu0 0.0
          %829 = vmatpush1.msra.mxu0 0.0
          %830 = vmatprep.subr.mxu0 0.0
          %831 = vmatpush1.msra.mxu0 0.0
          %832 = vmatprep.subr.mxu0 0.0
          %833 = vmatpush1.msra.mxu0 0.0
          %834 = vmatprep.subr.mxu0 0.0
          %835 = vmatpush1.msra.mxu0 0.0
          %836 = vmatprep.subr.mxu0 0.0
          %837 = vmatpush1.msra.mxu0 0.0
          %838 = vmatprep.subr.mxu0 0.0
          %839 = vmatpush1.msra.mxu0 0.0
          %840 = vmatprep.subr.mxu0 0.0
          %841 = vmatpush1.msra.mxu0 0.0
          %842 = vmatprep.subr.mxu0 0.0
          %843 = vmatpush1.msra.mxu0 0.0
          %844 = vmatprep.subr.mxu0 0.0
          %845 = vmatpush1.msra.mxu0 0.0
          %846 = vmatprep.subr.mxu0 0.0
          %847 = vmatpush1.msra.mxu0 0.0
          %848 = vmatprep.subr.mxu0 0.0
          %849 = vmatpush1.msra.mxu0 0.0
          %850 = vmatprep.subr.mxu0 0.0
          %851 = vmatpush1.msra.mxu0 0.0
          %852 = vmatprep.subr.mxu0 0.0
          %853 = vmatpush1.msra.mxu0 0.0
          %854 = vmatprep.subr.mxu0 0.0
          %855 = vmatpush1.msra.mxu0 0.0
          %856 = vmatprep.subr.mxu0 0.0
          %857 = vmatpush1.msra.mxu0 0.0
          %858 = vmatprep.subr.mxu0 0.0
          %859 = vmatpush1.msra.mxu0 0.0
          %860 = vmatprep.subr.mxu0 0.0
          %861 = vmatpush1.msra.mxu0 0.0
          %862 = vmatprep.subr.mxu0 0.0
          %863 = vmatpush1.msra.mxu0 0.0
          %864 = vmatprep.subr.mxu0 0.0
          %865 = vmatpush1.msra.mxu0 0.0
          %866 = vmatprep.subr.mxu0 0.0
          %867 = vmatpush1.msra.mxu0 0.0
          %868 = vmatprep.subr.mxu0 0.0
          %869 = vmatpush1.msra.mxu0 0.0
          %870 = vmatprep.subr.mxu0 0.0
          %871 = vmatpush1.msra.mxu0 0.0
          %872 = vmatprep.subr.mxu0 0.0
          %873 = vmatpush1.msra.mxu0 0.0
          %874 = vmatprep.mubr.f32.mxu0 0.0
          %875 = vmatmul.mubr.f32.gmra.mrb[0].mxu0 %v805
          %v876 = vpop.f32.mrb[0].mxu0
          %v877 = vadd.f32 0.0, %v876
          %v878 = vpop.f32.mrb[0].mxu0
          %879 = vdwg.mxu0
          %s880 = scalar_lea.vmem [#allocation2], 48
          %v881 = vld [vmem:[%s880] sm:$0x3]
          %v882 = vld [vmem:[%s880 + $0x8] sm:$0x3]
          %v883 = vld [vmem:[%s880 + $0x40] sm:$0x3]
          %v884 = vld [vmem:[%s880 + $0x48] sm:$0x3]
          %v886 = vcombine.high %v877, %v877
          %v888 = vunpack.c.l.s4 1983009808
          %v889 = vunpack.c.0.s8 %v888
          %v890 = vlaneseq
          %v891 = vshrl.u32 %v890, 7
          %v892 = vsub.s32 %v889, %v891
          %v893 = vrot.slane %v877, %v892
          %v895 = vunpack.c.l.s4 1983009808
          %v896 = vunpack.c.0.s8 %v895
          %v897 = vlaneseq
          %v898 = vshrl.u32 %v897, 7
          %v899 = vsub.s32 %v896, %v898
          %v900 = vrot.slane %v886, %v899
          %v901 = vcombine.high %v893, %v893
          %v902 = vcombine.high %v900, %v900
          %v907 = vadd.f32 %v881, %v893
          %v908 = vadd.f32 %v882, %v901
          %v909 = vadd.f32 %v883, %v900
          %v910 = vadd.f32 %v884, %v902
          %vm911 = vcmask 58368
          %912 = vst.msk [vmem:[%s880] sm:$0x3] %vm911, %v907
          %913 = vst.msk [vmem:[%s880 + $0x8] sm:$0x3] %vm911, %v908
          %914 = vst.msk [vmem:[%s880 + $0x40] sm:$0x3] %vm911, %v909
          %915 = vst.msk [vmem:[%s880 + $0x48] sm:$0x3] %vm911, %v910
        $region44: #{aspp_forward.1} parent=31 // pred_fallthru
          _
        %s916 = scalar_lea.vmem %s1, 16
        %v917 = vld [vmem:[%s916] sm:$0xf]
        // Predicated region
        $region45: #{aspp_forward.1} parent=31 // pred_check
          _
        $region46: #{aspp_forward.1} parent=31 // pred_check_branch
          %919 = sbr.rel (%p497) target = $region48
        $region47: #{aspp_forward.1} parent=31 // pred_region
          %p920 = scmp.gt.s32.totalorder %s493, 0
          %s921 = scalar_select %p920, %s493, 0
          %p922 = scmp.lt.s32.totalorder %s921, 6
          %s923 = scalar_select %p922, %s921, 6
          %s924 = smul.u32 %s923, 64
          %s925 = scalar_lea.vmem %s195, %s924
          %v926 = vld [vmem:[%s925] sm:$0x3]
          %v927 = vld [vmem:[%s925 + $0x8] sm:$0x3]
          %v928 = vld [vmem:[%s925 + $0x10] sm:$0x3]
          %v929 = vld [vmem:[%s925 + $0x18] sm:$0x3]
          %v930 = vld [vmem:[%s925 + $0x20] sm:$0x3]
          %v931 = vld [vmem:[%s925 + $0x28] sm:$0x3]
          %v932 = vld [vmem:[%s925 + $0x30] sm:$0x3]
          %v933 = vld [vmem:[%s925 + $0x38] sm:$0x3]
          %v934 = vld [vmem:[%s925 + $0x40] sm:$0x3]
          %v935 = vld [vmem:[%s925 + $0x48] sm:$0x3]
          %v936 = vld [vmem:[%s925 + $0x50] sm:$0x3]
          %v937 = vld [vmem:[%s925 + $0x58] sm:$0x3]
          %v938 = vld [vmem:[%s925 + $0x60] sm:$0x3]
          %v939 = vld [vmem:[%s925 + $0x68] sm:$0x3]
          %v940 = vld [vmem:[%s925 + $0x70] sm:$0x3]
          %v941 = vld [vmem:[%s925 + $0x78] sm:$0x3]
          %v958 = vcombine.low %v926, %v927
          %v959 = vcombine.low %v928, %v929
          %v961 = vunpack.c.l.s4 1983009808
          %v962 = vunpack.c.0.s8 %v961
          %v963 = vlaneseq
          %v964 = vshrl.u32 %v963, 7
          %v965 = vsub.s32 %v962, %v964
          %v966 = vrot.slane %v958, %v965
          %v968 = vunpack.c.l.s4 1983009808
          %v969 = vunpack.c.0.s8 %v968
          %v970 = vlaneseq
          %v971 = vshrl.u32 %v970, 7
          %v972 = vsub.s32 %v969, %v971
          %v973 = vrot.slane %v959, %v972
          %v974 = vcombine.low %v966, %v973
          %v975 = vcombine.low %v930, %v931
          %v976 = vcombine.low %v932, %v933
          %v978 = vunpack.c.l.s4 1983009808
          %v979 = vunpack.c.0.s8 %v978
          %v980 = vlaneseq
          %v981 = vshrl.u32 %v980, 7
          %v982 = vsub.s32 %v979, %v981
          %v983 = vrot.slane %v975, %v982
          %v985 = vunpack.c.l.s4 1983009808
          %v986 = vunpack.c.0.s8 %v985
          %v987 = vlaneseq
          %v988 = vshrl.u32 %v987, 7
          %v989 = vsub.s32 %v986, %v988
          %v990 = vrot.slane %v976, %v989
          %v991 = vcombine.low %v983, %v990
          %v992 = vcombine.low %v934, %v935
          %v993 = vcombine.low %v936, %v937
          %v995 = vunpack.c.l.s4 1983009808
          %v996 = vunpack.c.0.s8 %v995
          %v997 = vlaneseq
          %v998 = vshrl.u32 %v997, 7
          %v999 = vsub.s32 %v996, %v998
          %v1000 = vrot.slane %v992, %v999
          %v1002 = vunpack.c.l.s4 1983009808
          %v1003 = vunpack.c.0.s8 %v1002
          %v1004 = vlaneseq
          %v1005 = vshrl.u32 %v1004, 7
          %v1006 = vsub.s32 %v1003, %v1005
          %v1007 = vrot.slane %v993, %v1006
          %v1008 = vcombine.low %v1000, %v1007
          %v1009 = vcombine.low %v938, %v939
          %v1010 = vcombine.low %v940, %v941
          %v1012 = vunpack.c.l.s4 1983009808
          %v1013 = vunpack.c.0.s8 %v1012
          %v1014 = vlaneseq
          %v1015 = vshrl.u32 %v1014, 7
          %v1016 = vsub.s32 %v1013, %v1015
          %v1017 = vrot.slane %v1009, %v1016
          %v1019 = vunpack.c.l.s4 1983009808
          %v1020 = vunpack.c.0.s8 %v1019
          %v1021 = vlaneseq
          %v1022 = vshrl.u32 %v1021, 7
          %v1023 = vsub.s32 %v1020, %v1022
          %v1024 = vrot.slane %v1010, %v1023
          %v1025 = vcombine.low %v1017, %v1024
          %v1026 = vsel %vm245, %v974, 0
          %v1028 = vsel %vm245, %v991, 0
          %v1030 = vsel %vm245, %v1008, 0
          %v1032 = vsel %vm245, %v1025, 0
          %v1035 = vsel %vm294, %v917, 0
          %1037 = vmatprep.subr.mxu0 0.0
          %1038 = vmatpush1.msra.mxu0 %v1035
          %1039 = vmatprep.subr.mxu0 0.0
          %1040 = vmatpush1.msra.mxu0 0.0
          %1041 = vmatprep.subr.mxu0 0.0
          %1042 = vmatpush1.msra.mxu0 0.0
          %1043 = vmatprep.subr.mxu0 0.0
          %1044 = vmatpush1.msra.mxu0 0.0
          %1045 = vmatprep.subr.mxu0 0.0
          %1046 = vmatpush1.msra.mxu0 0.0
          %1047 = vmatprep.subr.mxu0 0.0
          %1048 = vmatpush1.msra.mxu0 0.0
          %1049 = vmatprep.subr.mxu0 0.0
          %1050 = vmatpush1.msra.mxu0 0.0
          %1051 = vmatprep.subr.mxu0 0.0
          %1052 = vmatpush1.msra.mxu0 0.0
          %1053 = vmatprep.subr.mxu0 0.0
          %1054 = vmatpush1.msra.mxu0 0.0
          %1055 = vmatprep.subr.mxu0 0.0
          %1056 = vmatpush1.msra.mxu0 0.0
          %1057 = vmatprep.subr.mxu0 0.0
          %1058 = vmatpush1.msra.mxu0 0.0
          %1059 = vmatprep.subr.mxu0 0.0
          %1060 = vmatpush1.msra.mxu0 0.0
          %1061 = vmatprep.subr.mxu0 0.0
          %1062 = vmatpush1.msra.mxu0 0.0
          %1063 = vmatprep.subr.mxu0 0.0
          %1064 = vmatpush1.msra.mxu0 0.0
          %1065 = vmatprep.subr.mxu0 0.0
          %1066 = vmatpush1.msra.mxu0 0.0
          %1067 = vmatprep.subr.mxu0 0.0
          %1068 = vmatpush1.msra.mxu0 0.0
          %1069 = vmatprep.subr.mxu0 0.0
          %1070 = vmatpush1.msra.mxu0 0.0
          %1071 = vmatprep.subr.mxu0 0.0
          %1072 = vmatpush1.msra.mxu0 0.0
          %1073 = vmatprep.subr.mxu0 0.0
          %1074 = vmatpush1.msra.mxu0 0.0
          %1075 = vmatprep.subr.mxu0 0.0
          %1076 = vmatpush1.msra.mxu0 0.0
          %1077 = vmatprep.subr.mxu0 0.0
          %1078 = vmatpush1.msra.mxu0 0.0
          %1079 = vmatprep.subr.mxu0 0.0
          %1080 = vmatpush1.msra.mxu0 0.0
          %1081 = vmatprep.subr.mxu0 0.0
          %1082 = vmatpush1.msra.mxu0 0.0
          %1083 = vmatprep.subr.mxu0 0.0
          %1084 = vmatpush1.msra.mxu0 0.0
          %1085 = vmatprep.subr.mxu0 0.0
          %1086 = vmatpush1.msra.mxu0 0.0
          %1087 = vmatprep.subr.mxu0 0.0
          %1088 = vmatpush1.msra.mxu0 0.0
          %1089 = vmatprep.subr.mxu0 0.0
          %1090 = vmatpush1.msra.mxu0 0.0
          %1091 = vmatprep.subr.mxu0 0.0
          %1092 = vmatpush1.msra.mxu0 0.0
          %1093 = vmatprep.subr.mxu0 0.0
          %1094 = vmatpush1.msra.mxu0 0.0
          %1095 = vmatprep.subr.mxu0 0.0
          %1096 = vmatpush1.msra.mxu0 0.0
          %1097 = vmatprep.subr.mxu0 0.0
          %1098 = vmatpush1.msra.mxu0 0.0
          %1099 = vmatprep.subr.mxu0 0.0
          %1100 = vmatpush1.msra.mxu0 0.0
          %1101 = vmatprep.mubr.f32.mxu0 0.0
          %1102 = vmatmul.mubr.f32.gmra.mrb[0].mxu0 %v1026
          %v1103 = vpop.f32.mrb[0].mxu0
          %v1104 = vadd.f32 0.0, %v1103
          %v1105 = vpop.f32.mrb[0].mxu0
          %1106 = vmatprep.mubr.f32.mxu0 0.0
          %1107 = vmatmul.mubr.f32.gmra.mrb[0].mxu0 %v1028
          %v1108 = vpop.f32.mrb[0].mxu0
          %v1109 = vadd.f32 0.0, %v1108
          %v1110 = vpop.f32.mrb[0].mxu0
          %1111 = vmatprep.mubr.f32.mxu0 0.0
          %1112 = vmatmul.mubr.f32.gmra.mrb[0].mxu0 %v1030
          %v1113 = vpop.f32.mrb[0].mxu0
          %v1114 = vadd.f32 0.0, %v1113
          %v1115 = vpop.f32.mrb[0].mxu0
          %1116 = vmatprep.mubr.f32.mxu0 0.0
          %1117 = vmatmul.mubr.f32.gmra.mrb[0].mxu0 %v1032
          %v1118 = vpop.f32.mrb[0].mxu0
          %v1119 = vadd.f32 0.0, %v1118
          %v1120 = vpop.f32.mrb[0].mxu0
          %1121 = vdwg.mxu0
          %v1122 = vld [vmem:[#allocation2 + $0x6] sm:$0x3]
          %v1123 = vld [vmem:[#allocation2 + $0xe] sm:$0x3]
          %v1124 = vld [vmem:[#allocation2 + $0x16] sm:$0x3]
          %v1125 = vld [vmem:[#allocation2 + $0x1e] sm:$0x3]
          %v1126 = vld [vmem:[#allocation2 + $0x26] sm:$0x3]
          %v1127 = vld [vmem:[#allocation2 + $0x2e] sm:$0x3]
          %v1128 = vld [vmem:[#allocation2 + $0x36] sm:$0x3]
          %v1129 = vld [vmem:[#allocation2 + $0x3e] sm:$0x3]
          %v1130 = vld [vmem:[#allocation2 + $0x46] sm:$0x3]
          %v1131 = vld [vmem:[#allocation2 + $0x4e] sm:$0x3]
          %v1132 = vld [vmem:[#allocation2 + $0x56] sm:$0x3]
          %v1133 = vld [vmem:[#allocation2 + $0x5e] sm:$0x3]
          %v1134 = vld [vmem:[#allocation2 + $0x66] sm:$0x3]
          %v1135 = vld [vmem:[#allocation2 + $0x6e] sm:$0x3]
          %v1136 = vld [vmem:[#allocation2 + $0x76] sm:$0x3]
          %v1137 = vld [vmem:[#allocation2 + $0x7e] sm:$0x3]
          %v1142 = vcombine.high %v1104, %v1104
          %v1144 = vunpack.c.l.s4 1983009808
          %v1145 = vunpack.c.0.s8 %v1144
          %v1146 = vlaneseq
          %v1147 = vshrl.u32 %v1146, 7
          %v1148 = vsub.s32 %v1145, %v1147
          %v1149 = vrot.slane %v1104, %v1148
          %v1151 = vunpack.c.l.s4 1983009808
          %v1152 = vunpack.c.0.s8 %v1151
          %v1153 = vlaneseq
          %v1154 = vshrl.u32 %v1153, 7
          %v1155 = vsub.s32 %v1152, %v1154
          %v1156 = vrot.slane %v1142, %v1155
          %v1157 = vcombine.high %v1149, %v1149
          %v1158 = vcombine.high %v1156, %v1156
          %v1159 = vcombine.high %v1109, %v1109
          %v1161 = vunpack.c.l.s4 1983009808
          %v1162 = vunpack.c.0.s8 %v1161
          %v1163 = vlaneseq
          %v1164 = vshrl.u32 %v1163, 7
          %v1165 = vsub.s32 %v1162, %v1164
          %v1166 = vrot.slane %v1109, %v1165
          %v1168 = vunpack.c.l.s4 1983009808
          %v1169 = vunpack.c.0.s8 %v1168
          %v1170 = vlaneseq
          %v1171 = vshrl.u32 %v1170, 7
          %v1172 = vsub.s32 %v1169, %v1171
          %v1173 = vrot.slane %v1159, %v1172
          %v1174 = vcombine.high %v1166, %v1166
          %v1175 = vcombine.high %v1173, %v1173
          %v1176 = vcombine.high %v1114, %v1114
          %v1178 = vunpack.c.l.s4 1983009808
          %v1179 = vunpack.c.0.s8 %v1178
          %v1180 = vlaneseq
          %v1181 = vshrl.u32 %v1180, 7
          %v1182 = vsub.s32 %v1179, %v1181
          %v1183 = vrot.slane %v1114, %v1182
          %v1185 = vunpack.c.l.s4 1983009808
          %v1186 = vunpack.c.0.s8 %v1185
          %v1187 = vlaneseq
          %v1188 = vshrl.u32 %v1187, 7
          %v1189 = vsub.s32 %v1186, %v1188
          %v1190 = vrot.slane %v1176, %v1189
          %v1191 = vcombine.high %v1183, %v1183
          %v1192 = vcombine.high %v1190, %v1190
          %v1193 = vcombine.high %v1119, %v1119
          %v1195 = vunpack.c.l.s4 1983009808
          %v1196 = vunpack.c.0.s8 %v1195
          %v1197 = vlaneseq
          %v1198 = vshrl.u32 %v1197, 7
          %v1199 = vsub.s32 %v1196, %v1198
          %v1200 = vrot.slane %v1119, %v1199
          %v1202 = vunpack.c.l.s4 1983009808
          %v1203 = vunpack.c.0.s8 %v1202
          %v1204 = vlaneseq
          %v1205 = vshrl.u32 %v1204, 7
          %v1206 = vsub.s32 %v1203, %v1205
          %v1207 = vrot.slane %v1193, %v1206
          %v1208 = vcombine.high %v1200, %v1200
          %v1209 = vcombine.high %v1207, %v1207
          %v1226 = vadd.f32 %v1122, %v1149
          %v1227 = vadd.f32 %v1123, %v1157
          %v1228 = vadd.f32 %v1124, %v1156
          %v1229 = vadd.f32 %v1125, %v1158
          %v1230 = vadd.f32 %v1126, %v1166
          %v1231 = vadd.f32 %v1127, %v1174
          %v1232 = vadd.f32 %v1128, %v1173
          %v1233 = vadd.f32 %v1129, %v1175
          %v1234 = vadd.f32 %v1130, %v1183
          %v1235 = vadd.f32 %v1131, %v1191
          %v1236 = vadd.f32 %v1132, %v1190
          %v1237 = vadd.f32 %v1133, %v1192
          %v1238 = vadd.f32 %v1134, %v1200
          %v1239 = vadd.f32 %v1135, %v1208
          %v1240 = vadd.f32 %v1136, %v1207
          %v1241 = vadd.f32 %v1137, %v1209
          %vm1242 = vcmask 58368
          %1243 = vst.msk [vmem:[#allocation2 + $0x6] sm:$0x3] %vm1242, %v1226
          %1244 = vst.msk [vmem:[#allocation2 + $0xe] sm:$0x3] %vm1242, %v1227
          %1245 = vst.msk [vmem:[#allocation2 + $0x16] sm:$0x3] %vm1242, %v1228
          %1246 = vst.msk [vmem:[#allocation2 + $0x1e] sm:$0x3] %vm1242, %v1229
          %1247 = vst.msk [vmem:[#allocation2 + $0x26] sm:$0x3] %vm1242, %v1230
          %1248 = vst.msk [vmem:[#allocation2 + $0x2e] sm:$0x3] %vm1242, %v1231
          %1249 = vst.msk [vmem:[#allocation2 + $0x36] sm:$0x3] %vm1242, %v1232
          %1250 = vst.msk [vmem:[#allocation2 + $0x3e] sm:$0x3] %vm1242, %v1233
          %1251 = vst.msk [vmem:[#allocation2 + $0x46] sm:$0x3] %vm1242, %v1234
          %1252 = vst.msk [vmem:[#allocation2 + $0x4e] sm:$0x3] %vm1242, %v1235
          %1253 = vst.msk [vmem:[#allocation2 + $0x56] sm:$0x3] %vm1242, %v1236
          %1254 = vst.msk [vmem:[#allocation2 + $0x5e] sm:$0x3] %vm1242, %v1237
          %1255 = vst.msk [vmem:[#allocation2 + $0x66] sm:$0x3] %vm1242, %v1238
          %1256 = vst.msk [vmem:[#allocation2 + $0x6e] sm:$0x3] %vm1242, %v1239
          %1257 = vst.msk [vmem:[#allocation2 + $0x76] sm:$0x3] %vm1242, %v1240
          %1258 = vst.msk [vmem:[#allocation2 + $0x7e] sm:$0x3] %vm1242, %v1241
        $region48: #{aspp_forward.1} parent=31 // pred_fallthru
          _
        %s1259 = scalar_lea.vmem %s1, 20
        %v1260 = vld [vmem:[%s1259] sm:$0xf]
        // Predicated region
        $region49: #{aspp_forward.1} parent=31 // pred_check
          _
        $region50: #{aspp_forward.1} parent=31 // pred_check_branch
          %1262 = sbr.rel (%p497) target = $region52
        $region51: #{aspp_forward.1} parent=31 // pred_region
          %p1263 = scmp.gt.s32.totalorder %s493, 0
          %s1264 = scalar_select %p1263, %s493, 0
          %p1265 = scmp.lt.s32.totalorder %s1264, 6
          %s1266 = scalar_select %p1265, %s1264, 6
          %s1267 = smul.u32 %s1266, 64
          %s1268 = scalar_lea.vmem %s195, %s1267
          %v1269 = vld [vmem:[%s1268] sm:$0xff]
          %v1270 = vld [vmem:[%s1268 + $0x8] sm:$0xff]
          %v1271 = vld [vmem:[%s1268 + $0x10] sm:$0xff]
          %v1272 = vld [vmem:[%s1268 + $0x18] sm:$0xff]
          %v1273 = vld [vmem:[%s1268 + $0x20] sm:$0xff]
          %v1274 = vld [vmem:[%s1268 + $0x28] sm:$0xff]
          %v1275 = vld [vmem:[%s1268 + $0x30] sm:$0xff]
          %v1276 = vld [vmem:[%s1268 + $0x38] sm:$0xff]
          %v1277 = vld [vmem:[%s1268 + $0x40] sm:$0xff]
          %v1278 = vld [vmem:[%s1268 + $0x48] sm:$0xff]
          %v1279 = vld [vmem:[%s1268 + $0x50] sm:$0xff]
          %v1280 = vld [vmem:[%s1268 + $0x58] sm:$0xff]
          %v1281 = vld [vmem:[%s1268 + $0x60] sm:$0xff]
          %v1282 = vld [vmem:[%s1268 + $0x68] sm:$0xff]
          %v1283 = vld [vmem:[%s1268 + $0x70] sm:$0xff]
          %v1284 = vld [vmem:[%s1268 + $0x78] sm:$0xff]
          %v1286 = vsel %vm245, %v1269, 0
          %v1289 = vsel %vm245, %v1270, 0
          %v1292 = vsel %vm245, %v1271, 0
          %v1295 = vsel %vm245, %v1272, 0
          %v1298 = vsel %vm245, %v1273, 0
          %v1301 = vsel %vm245, %v1274, 0
          %v1304 = vsel %vm245, %v1275, 0
          %v1307 = vsel %vm245, %v1276, 0
          %v1310 = vsel %vm245, %v1277, 0
          %v1313 = vsel %vm245, %v1278, 0
          %v1316 = vsel %vm245, %v1279, 0
          %v1319 = vsel %vm245, %v1280, 0
          %v1322 = vsel %vm245, %v1281, 0
          %v1325 = vsel %vm245, %v1282, 0
          %v1328 = vsel %vm245, %v1283, 0
          %v1331 = vsel %vm245, %v1284, 0
          %v1334 = vsel %vm294, %v1260, 0
          %1336 = vmatprep.subr.mxu0 0.0
          %1337 = vmatpush1.msra.mxu0 %v1334
          %1338 = vmatprep.subr.mxu0 0.0
          %1339 = vmatpush1.msra.mxu0 0.0
          %1340 = vmatprep.subr.mxu0 0.0
          %1341 = vmatpush1.msra.mxu0 0.0
          %1342 = vmatprep.subr.mxu0 0.0
          %1343 = vmatpush1.msra.mxu0 0.0
          %1344 = vmatprep.subr.mxu0 0.0
          %1345 = vmatpush1.msra.mxu0 0.0
          %1346 = vmatprep.subr.mxu0 0.0
          %1347 = vmatpush1.msra.mxu0 0.0
          %1348 = vmatprep.subr.mxu0 0.0
          %1349 = vmatpush1.msra.mxu0 0.0
          %1350 = vmatprep.subr.mxu0 0.0
          %1351 = vmatpush1.msra.mxu0 0.0
          %1352 = vmatprep.subr.mxu0 0.0
          %1353 = vmatpush1.msra.mxu0 0.0
          %1354 = vmatprep.subr.mxu0 0.0
          %1355 = vmatpush1.msra.mxu0 0.0
          %1356 = vmatprep.subr.mxu0 0.0
          %1357 = vmatpush1.msra.mxu0 0.0
          %1358 = vmatprep.subr.mxu0 0.0
          %1359 = vmatpush1.msra.mxu0 0.0
          %1360 = vmatprep.subr.mxu0 0.0
          %1361 = vmatpush1.msra.mxu0 0.0
          %1362 = vmatprep.subr.mxu0 0.0
          %1363 = vmatpush1.msra.mxu0 0.0
          %1364 = vmatprep.subr.mxu0 0.0
          %1365 = vmatpush1.msra.mxu0 0.0
          %1366 = vmatprep.subr.mxu0 0.0
          %1367 = vmatpush1.msra.mxu0 0.0
          %1368 = vmatprep.subr.mxu0 0.0
          %1369 = vmatpush1.msra.mxu0 0.0
          %1370 = vmatprep.subr.mxu0 0.0
          %1371 = vmatpush1.msra.mxu0 0.0
          %1372 = vmatprep.subr.mxu0 0.0
          %1373 = vmatpush1.msra.mxu0 0.0
          %1374 = vmatprep.subr.mxu0 0.0
          %1375 = vmatpush1.msra.mxu0 0.0
          %1376 = vmatprep.subr.mxu0 0.0
          %1377 = vmatpush1.msra.mxu0 0.0
          %1378 = vmatprep.subr.mxu0 0.0
          %1379 = vmatpush1.msra.mxu0 0.0
          %1380 = vmatprep.subr.mxu0 0.0
          %1381 = vmatpush1.msra.mxu0 0.0
          %1382 = vmatprep.subr.mxu0 0.0
          %1383 = vmatpush1.msra.mxu0 0.0
          %1384 = vmatprep.subr.mxu0 0.0
          %1385 = vmatpush1.msra.mxu0 0.0
          %1386 = vmatprep.subr.mxu0 0.0
          %1387 = vmatpush1.msra.mxu0 0.0
          %1388 = vmatprep.subr.mxu0 0.0
          %1389 = vmatpush1.msra.mxu0 0.0
          %1390 = vmatprep.subr.mxu0 0.0
          %1391 = vmatpush1.msra.mxu0 0.0
          %1392 = vmatprep.subr.mxu0 0.0
          %1393 = vmatpush1.msra.mxu0 0.0
          %1394 = vmatprep.subr.mxu0 0.0
          %1395 = vmatpush1.msra.mxu0 0.0
          %1396 = vmatprep.subr.mxu0 0.0
          %1397 = vmatpush1.msra.mxu0 0.0
          %1398 = vmatprep.subr.mxu0 0.0
          %1399 = vmatpush1.msra.mxu0 0.0
          %1400 = vmatprep.mubr.f32.mxu0 0.0
          %1401 = vmatmul.mubr.f32.gmra.mrb[0].mxu0 %v1286
          %v1402 = vpop.f32.mrb[0].mxu0
          %v1403 = vadd.f32 0.0, %v1402
          %v1404 = vpop.f32.mrb[0].mxu0
          %1405 = vmatprep.mubr.f32.mxu0 0.0
          %1406 = vmatmul.mubr.f32.gmra.mrb[0].mxu0 %v1289
          %v1407 = vpop.f32.mrb[0].mxu0
          %v1408 = vadd.f32 0.0, %v1407
          %v1409 = vpop.f32.mrb[0].mxu0
          %1410 = vmatprep.mubr.f32.mxu0 0.0
          %1411 = vmatmul.mubr.f32.gmra.mrb[0].mxu0 %v1292
          %v1412 = vpop.f32.mrb[0].mxu0
          %v1413 = vadd.f32 0.0, %v1412
          %v1414 = vpop.f32.mrb[0].mxu0
          %1415 = vmatprep.mubr.f32.mxu0 0.0
          %1416 = vmatmul.mubr.f32.gmra.mrb[0].mxu0 %v1295
          %v1417 = vpop.f32.mrb[0].mxu0
          %v1418 = vadd.f32 0.0, %v1417
          %v1419 = vpop.f32.mrb[0].mxu0
          %1420 = vmatprep.mubr.f32.mxu0 0.0
          %1421 = vmatmul.mubr.f32.gmra.mrb[0].mxu0 %v1298
          %v1422 = vpop.f32.mrb[0].mxu0
          %v1423 = vadd.f32 0.0, %v1422
          %v1424 = vpop.f32.mrb[0].mxu0
          %1425 = vmatprep.mubr.f32.mxu0 0.0
          %1426 = vmatmul.mubr.f32.gmra.mrb[0].mxu0 %v1301
          %v1427 = vpop.f32.mrb[0].mxu0
          %v1428 = vadd.f32 0.0, %v1427
          %v1429 = vpop.f32.mrb[0].mxu0
          %1430 = vmatprep.mubr.f32.mxu0 0.0
          %1431 = vmatmul.mubr.f32.gmra.mrb[0].mxu0 %v1304
          %v1432 = vpop.f32.mrb[0].mxu0
          %v1433 = vadd.f32 0.0, %v1432
          %v1434 = vpop.f32.mrb[0].mxu0
          %1435 = vmatprep.mubr.f32.mxu0 0.0
          %1436 = vmatmul.mubr.f32.gmra.mrb[0].mxu0 %v1307
          %v1437 = vpop.f32.mrb[0].mxu0
          %v1438 = vadd.f32 0.0, %v1437
          %v1439 = vpop.f32.mrb[0].mxu0
          %1440 = vmatprep.mubr.f32.mxu0 0.0
          %1441 = vmatmul.mubr.f32.gmra.mrb[0].mxu0 %v1310
          %v1442 = vpop.f32.mrb[0].mxu0
          %v1443 = vadd.f32 0.0, %v1442
          %v1444 = vpop.f32.mrb[0].mxu0
          %1445 = vmatprep.mubr.f32.mxu0 0.0
          %1446 = vmatmul.mubr.f32.gmra.mrb[0].mxu0 %v1313
          %v1447 = vpop.f32.mrb[0].mxu0
          %v1448 = vadd.f32 0.0, %v1447
          %v1449 = vpop.f32.mrb[0].mxu0
          %1450 = vmatprep.mubr.f32.mxu0 0.0
          %1451 = vmatmul.mubr.f32.gmra.mrb[0].mxu0 %v1316
          %v1452 = vpop.f32.mrb[0].mxu0
          %v1453 = vadd.f32 0.0, %v1452
          %v1454 = vpop.f32.mrb[0].mxu0
          %1455 = vmatprep.mubr.f32.mxu0 0.0
          %1456 = vmatmul.mubr.f32.gmra.mrb[0].mxu0 %v1319
          %v1457 = vpop.f32.mrb[0].mxu0
          %v1458 = vadd.f32 0.0, %v1457
          %v1459 = vpop.f32.mrb[0].mxu0
          %1460 = vmatprep.mubr.f32.mxu0 0.0
          %1461 = vmatmul.mubr.f32.gmra.mrb[0].mxu0 %v1322
          %v1462 = vpop.f32.mrb[0].mxu0
          %v1463 = vadd.f32 0.0, %v1462
          %v1464 = vpop.f32.mrb[0].mxu0
          %1465 = vmatprep.mubr.f32.mxu0 0.0
          %1466 = vmatmul.mubr.f32.gmra.mrb[0].mxu0 %v1325
          %v1467 = vpop.f32.mrb[0].mxu0
          %v1468 = vadd.f32 0.0, %v1467
          %v1469 = vpop.f32.mrb[0].mxu0
          %1470 = vmatprep.mubr.f32.mxu0 0.0
          %1471 = vmatmul.mubr.f32.gmra.mrb[0].mxu0 %v1328
          %v1472 = vpop.f32.mrb[0].mxu0
          %v1473 = vadd.f32 0.0, %v1472
          %v1474 = vpop.f32.mrb[0].mxu0
          %1475 = vmatprep.mubr.f32.mxu0 0.0
          %1476 = vmatmul.mubr.f32.gmra.mrb[0].mxu0 %v1331
          %v1477 = vpop.f32.mrb[0].mxu0
          %v1478 = vadd.f32 0.0, %v1477
          %v1479 = vpop.f32.mrb[0].mxu0
          %1480 = vdwg.mxu0
          %v1481 = vld [vmem:[#allocation2] sm:$0xff]
          %v1482 = vld [vmem:[#allocation2 + $0x8] sm:$0xff]
          %v1483 = vld [vmem:[#allocation2 + $0x10] sm:$0xff]
          %v1484 = vld [vmem:[#allocation2 + $0x18] sm:$0xff]
          %v1485 = vld [vmem:[#allocation2 + $0x20] sm:$0xff]
          %v1486 = vld [vmem:[#allocation2 + $0x28] sm:$0xff]
          %v1487 = vld [vmem:[#allocation2 + $0x30] sm:$0xff]
          %v1488 = vld [vmem:[#allocation2 + $0x38] sm:$0xff]
          %v1489 = vld [vmem:[#allocation2 + $0x40] sm:$0xff]
          %v1490 = vld [vmem:[#allocation2 + $0x48] sm:$0xff]
          %v1491 = vld [vmem:[#allocation2 + $0x50] sm:$0xff]
          %v1492 = vld [vmem:[#allocation2 + $0x58] sm:$0xff]
          %v1493 = vld [vmem:[#allocation2 + $0x60] sm:$0xff]
          %v1494 = vld [vmem:[#allocation2 + $0x68] sm:$0xff]
          %v1495 = vld [vmem:[#allocation2 + $0x70] sm:$0xff]
          %v1496 = vld [vmem:[#allocation2 + $0x78] sm:$0xff]
          %v1497 = vadd.f32 %v1481, %v1403
          %v1498 = vadd.f32 %v1482, %v1408
          %v1499 = vadd.f32 %v1483, %v1413
          %v1500 = vadd.f32 %v1484, %v1418
          %v1501 = vadd.f32 %v1485, %v1423
          %v1502 = vadd.f32 %v1486, %v1428
          %v1503 = vadd.f32 %v1487, %v1433
          %v1504 = vadd.f32 %v1488, %v1438
          %v1505 = vadd.f32 %v1489, %v1443
          %v1506 = vadd.f32 %v1490, %v1448
          %v1507 = vadd.f32 %v1491, %v1453
          %v1508 = vadd.f32 %v1492, %v1458
          %v1509 = vadd.f32 %v1493, %v1463
          %v1510 = vadd.f32 %v1494, %v1468
          %v1511 = vadd.f32 %v1495, %v1473
          %v1512 = vadd.f32 %v1496, %v1478
          %1513 = vst.msk [vmem:[#allocation2] sm:$0xff] %vm209, %v1497
          %1514 = vst.msk [vmem:[#allocation2 + $0x8] sm:$0xff] %vm209, %v1498
          %1515 = vst.msk [vmem:[#allocation2 + $0x10] sm:$0xff] %vm209, %v1499
          %1516 = vst.msk [vmem:[#allocation2 + $0x18] sm:$0xff] %vm209, %v1500
          %1517 = vst.msk [vmem:[#allocation2 + $0x20] sm:$0xff] %vm209, %v1501
          %1518 = vst.msk [vmem:[#allocation2 + $0x28] sm:$0xff] %vm209, %v1502
          %1519 = vst.msk [vmem:[#allocation2 + $0x30] sm:$0xff] %vm209, %v1503
          %1520 = vst.msk [vmem:[#allocation2 + $0x38] sm:$0xff] %vm209, %v1504
          %1521 = vst.msk [vmem:[#allocation2 + $0x40] sm:$0xff] %vm209, %v1505
          %1522 = vst.msk [vmem:[#allocation2 + $0x48] sm:$0xff] %vm209, %v1506
          %1523 = vst.msk [vmem:[#allocation2 + $0x50] sm:$0xff] %vm209, %v1507
          %1524 = vst.msk [vmem:[#allocation2 + $0x58] sm:$0xff] %vm209, %v1508
          %1525 = vst.msk [vmem:[#allocation2 + $0x60] sm:$0xff] %vm209, %v1509
          %1526 = vst.msk [vmem:[#allocation2 + $0x68] sm:$0xff] %vm209, %v1510
          %1527 = vst.msk [vmem:[#allocation2 + $0x70] sm:$0xff] %vm209, %v1511
          %1528 = vst.msk [vmem:[#allocation2 + $0x78] sm:$0xff] %vm209, %v1512
        $region52: #{aspp_forward.1} parent=31 // pred_fallthru
          _
        %s1529 = scalar_lea.vmem %s1, 24
        %v1530 = vld [vmem:[%s1529] sm:$0xf]
        // Predicated region
        $region53: #{aspp_forward.1} parent=31 // pred_check
          _
        $region54: #{aspp_forward.1} parent=31 // pred_check_branch
          %1532 = sbr.rel (%p497) target = $region56
        $region55: #{aspp_forward.1} parent=31 // pred_region
          %p1533 = scmp.gt.s32.totalorder %s493, 0
          %s1534 = scalar_select %p1533, %s493, 0
          %p1535 = scmp.lt.s32.totalorder %s1534, 6
          %s1536 = scalar_select %p1535, %s1534, 6
          %s1537 = smul.u32 %s1536, 64
          %s1538 = scalar_lea.vmem %s195, %s1537
          %v1539 = vld [vmem:[%s1538 + $0x6] sm:$0x3]
          %v1540 = vld [vmem:[%s1538 + $0xe] sm:$0x3]
          %v1541 = vld [vmem:[%s1538 + $0x16] sm:$0x3]
          %v1542 = vld [vmem:[%s1538 + $0x1e] sm:$0x3]
          %v1543 = vld [vmem:[%s1538 + $0x26] sm:$0x3]
          %v1544 = vld [vmem:[%s1538 + $0x2e] sm:$0x3]
          %v1545 = vld [vmem:[%s1538 + $0x36] sm:$0x3]
          %v1546 = vld [vmem:[%s1538 + $0x3e] sm:$0x3]
          %v1547 = vld [vmem:[%s1538 + $0x46] sm:$0x3]
          %v1548 = vld [vmem:[%s1538 + $0x4e] sm:$0x3]
          %v1549 = vld [vmem:[%s1538 + $0x56] sm:$0x3]
          %v1550 = vld [vmem:[%s1538 + $0x5e] sm:$0x3]
          %v1551 = vld [vmem:[%s1538 + $0x66] sm:$0x3]
          %v1552 = vld [vmem:[%s1538 + $0x6e] sm:$0x3]
          %v1553 = vld [vmem:[%s1538 + $0x76] sm:$0x3]
          %v1554 = vld [vmem:[%s1538 + $0x7e] sm:$0x3]
          %v1571 = vcombine.low %v1539, %v1540
          %v1572 = vcombine.low %v1541, %v1542
          %v1574 = vunpack.c.l.s4 1983009808
          %v1575 = vunpack.c.0.s8 %v1574
          %v1576 = vlaneseq
          %v1577 = vshrl.u32 %v1576, 7
          %v1578 = vsub.s32 %v1575, %v1577
          %v1579 = vrot.slane %v1571, %v1578
          %v1581 = vunpack.c.l.s4 1983009808
          %v1582 = vunpack.c.0.s8 %v1581
          %v1583 = vlaneseq
          %v1584 = vshrl.u32 %v1583, 7
          %v1585 = vsub.s32 %v1582, %v1584
          %v1586 = vrot.slane %v1572, %v1585
          %v1587 = vcombine.low %v1579, %v1586
          %v1588 = vcombine.low %v1543, %v1544
          %v1589 = vcombine.low %v1545, %v1546
          %v1591 = vunpack.c.l.s4 1983009808
          %v1592 = vunpack.c.0.s8 %v1591
          %v1593 = vlaneseq
          %v1594 = vshrl.u32 %v1593, 7
          %v1595 = vsub.s32 %v1592, %v1594
          %v1596 = vrot.slane %v1588, %v1595
          %v1598 = vunpack.c.l.s4 1983009808
          %v1599 = vunpack.c.0.s8 %v1598
          %v1600 = vlaneseq
          %v1601 = vshrl.u32 %v1600, 7
          %v1602 = vsub.s32 %v1599, %v1601
          %v1603 = vrot.slane %v1589, %v1602
          %v1604 = vcombine.low %v1596, %v1603
          %v1605 = vcombine.low %v1547, %v1548
          %v1606 = vcombine.low %v1549, %v1550
          %v1608 = vunpack.c.l.s4 1983009808
          %v1609 = vunpack.c.0.s8 %v1608
          %v1610 = vlaneseq
          %v1611 = vshrl.u32 %v1610, 7
          %v1612 = vsub.s32 %v1609, %v1611
          %v1613 = vrot.slane %v1605, %v1612
          %v1615 = vunpack.c.l.s4 1983009808
          %v1616 = vunpack.c.0.s8 %v1615
          %v1617 = vlaneseq
          %v1618 = vshrl.u32 %v1617, 7
          %v1619 = vsub.s32 %v1616, %v1618
          %v1620 = vrot.slane %v1606, %v1619
          %v1621 = vcombine.low %v1613, %v1620
          %v1622 = vcombine.low %v1551, %v1552
          %v1623 = vcombine.low %v1553, %v1554
          %v1625 = vunpack.c.l.s4 1983009808
          %v1626 = vunpack.c.0.s8 %v1625
          %v1627 = vlaneseq
          %v1628 = vshrl.u32 %v1627, 7
          %v1629 = vsub.s32 %v1626, %v1628
          %v1630 = vrot.slane %v1622, %v1629
          %v1632 = vunpack.c.l.s4 1983009808
          %v1633 = vunpack.c.0.s8 %v1632
          %v1634 = vlaneseq
          %v1635 = vshrl.u32 %v1634, 7
          %v1636 = vsub.s32 %v1633, %v1635
          %v1637 = vrot.slane %v1623, %v1636
          %v1638 = vcombine.low %v1630, %v1637
          %v1639 = vsel %vm245, %v1587, 0
          %v1641 = vsel %vm245, %v1604, 0
          %v1643 = vsel %vm245, %v1621, 0
          %v1645 = vsel %vm245, %v1638, 0
          %v1648 = vsel %vm294, %v1530, 0
          %1650 = vmatprep.subr.mxu0 0.0
          %1651 = vmatpush1.msra.mxu0 %v1648
          %1652 = vmatprep.subr.mxu0 0.0
          %1653 = vmatpush1.msra.mxu0 0.0
          %1654 = vmatprep.subr.mxu0 0.0
          %1655 = vmatpush1.msra.mxu0 0.0
          %1656 = vmatprep.subr.mxu0 0.0
          %1657 = vmatpush1.msra.mxu0 0.0
          %1658 = vmatprep.subr.mxu0 0.0
          %1659 = vmatpush1.msra.mxu0 0.0
          %1660 = vmatprep.subr.mxu0 0.0
          %1661 = vmatpush1.msra.mxu0 0.0
          %1662 = vmatprep.subr.mxu0 0.0
          %1663 = vmatpush1.msra.mxu0 0.0
          %1664 = vmatprep.subr.mxu0 0.0
          %1665 = vmatpush1.msra.mxu0 0.0
          %1666 = vmatprep.subr.mxu0 0.0
          %1667 = vmatpush1.msra.mxu0 0.0
          %1668 = vmatprep.subr.mxu0 0.0
          %1669 = vmatpush1.msra.mxu0 0.0
          %1670 = vmatprep.subr.mxu0 0.0
          %1671 = vmatpush1.msra.mxu0 0.0
          %1672 = vmatprep.subr.mxu0 0.0
          %1673 = vmatpush1.msra.mxu0 0.0
          %1674 = vmatprep.subr.mxu0 0.0
          %1675 = vmatpush1.msra.mxu0 0.0
          %1676 = vmatprep.subr.mxu0 0.0
          %1677 = vmatpush1.msra.mxu0 0.0
          %1678 = vmatprep.subr.mxu0 0.0
          %1679 = vmatpush1.msra.mxu0 0.0
          %1680 = vmatprep.subr.mxu0 0.0
          %1681 = vmatpush1.msra.mxu0 0.0
          %1682 = vmatprep.subr.mxu0 0.0
          %1683 = vmatpush1.msra.mxu0 0.0
          %1684 = vmatprep.subr.mxu0 0.0
          %1685 = vmatpush1.msra.mxu0 0.0
          %1686 = vmatprep.subr.mxu0 0.0
          %1687 = vmatpush1.msra.mxu0 0.0
          %1688 = vmatprep.subr.mxu0 0.0
          %1689 = vmatpush1.msra.mxu0 0.0
          %1690 = vmatprep.subr.mxu0 0.0
          %1691 = vmatpush1.msra.mxu0 0.0
          %1692 = vmatprep.subr.mxu0 0.0
          %1693 = vmatpush1.msra.mxu0 0.0
          %1694 = vmatprep.subr.mxu0 0.0
          %1695 = vmatpush1.msra.mxu0 0.0
          %1696 = vmatprep.subr.mxu0 0.0
          %1697 = vmatpush1.msra.mxu0 0.0
          %1698 = vmatprep.subr.mxu0 0.0
          %1699 = vmatpush1.msra.mxu0 0.0
          %1700 = vmatprep.subr.mxu0 0.0
          %1701 = vmatpush1.msra.mxu0 0.0
          %1702 = vmatprep.subr.mxu0 0.0
          %1703 = vmatpush1.msra.mxu0 0.0
          %1704 = vmatprep.subr.mxu0 0.0
          %1705 = vmatpush1.msra.mxu0 0.0
          %1706 = vmatprep.subr.mxu0 0.0
          %1707 = vmatpush1.msra.mxu0 0.0
          %1708 = vmatprep.subr.mxu0 0.0
          %1709 = vmatpush1.msra.mxu0 0.0
          %1710 = vmatprep.subr.mxu0 0.0
          %1711 = vmatpush1.msra.mxu0 0.0
          %1712 = vmatprep.subr.mxu0 0.0
          %1713 = vmatpush1.msra.mxu0 0.0
          %1714 = vmatprep.mubr.f32.mxu0 0.0
          %1715 = vmatmul.mubr.f32.gmra.mrb[0].mxu0 %v1639
          %v1716 = vpop.f32.mrb[0].mxu0
          %v1717 = vadd.f32 0.0, %v1716
          %v1718 = vpop.f32.mrb[0].mxu0
          %1719 = vmatprep.mubr.f32.mxu0 0.0
          %1720 = vmatmul.mubr.f32.gmra.mrb[0].mxu0 %v1641
          %v1721 = vpop.f32.mrb[0].mxu0
          %v1722 = vadd.f32 0.0, %v1721
          %v1723 = vpop.f32.mrb[0].mxu0
          %1724 = vmatprep.mubr.f32.mxu0 0.0
          %1725 = vmatmul.mubr.f32.gmra.mrb[0].mxu0 %v1643
          %v1726 = vpop.f32.mrb[0].mxu0
          %v1727 = vadd.f32 0.0, %v1726
          %v1728 = vpop.f32.mrb[0].mxu0
          %1729 = vmatprep.mubr.f32.mxu0 0.0
          %1730 = vmatmul.mubr.f32.gmra.mrb[0].mxu0 %v1645
          %v1731 = vpop.f32.mrb[0].mxu0
          %v1732 = vadd.f32 0.0, %v1731
          %v1733 = vpop.f32.mrb[0].mxu0
          %1734 = vdwg.mxu0
          %v1735 = vld [vmem:[#allocation2] sm:$0x3]
          %v1736 = vld [vmem:[#allocation2 + $0x8] sm:$0x3]
          %v1737 = vld [vmem:[#allocation2 + $0x10] sm:$0x3]
          %v1738 = vld [vmem:[#allocation2 + $0x18] sm:$0x3]
          %v1739 = vld [vmem:[#allocation2 + $0x20] sm:$0x3]
          %v1740 = vld [vmem:[#allocation2 + $0x28] sm:$0x3]
          %v1741 = vld [vmem:[#allocation2 + $0x30] sm:$0x3]
          %v1742 = vld [vmem:[#allocation2 + $0x38] sm:$0x3]
          %v1743 = vld [vmem:[#allocation2 + $0x40] sm:$0x3]
          %v1744 = vld [vmem:[#allocation2 + $0x48] sm:$0x3]
          %v1745 = vld [vmem:[#allocation2 + $0x50] sm:$0x3]
          %v1746 = vld [vmem:[#allocation2 + $0x58] sm:$0x3]
          %v1747 = vld [vmem:[#allocation2 + $0x60] sm:$0x3]
          %v1748 = vld [vmem:[#allocation2 + $0x68] sm:$0x3]
          %v1749 = vld [vmem:[#allocation2 + $0x70] sm:$0x3]
          %v1750 = vld [vmem:[#allocation2 + $0x78] sm:$0x3]
          %v1755 = vcombine.high %v1717, %v1717
          %v1757 = vunpack.c.l.s4 1983009808
          %v1758 = vunpack.c.0.s8 %v1757
          %v1759 = vlaneseq
          %v1760 = vshrl.u32 %v1759, 7
          %v1761 = vsub.s32 %v1758, %v1760
          %v1762 = vrot.slane %v1717, %v1761
          %v1764 = vunpack.c.l.s4 1983009808
          %v1765 = vunpack.c.0.s8 %v1764
          %v1766 = vlaneseq
          %v1767 = vshrl.u32 %v1766, 7
          %v1768 = vsub.s32 %v1765, %v1767
          %v1769 = vrot.slane %v1755, %v1768
          %v1770 = vcombine.high %v1762, %v1762
          %v1771 = vcombine.high %v1769, %v1769
          %v1772 = vcombine.high %v1722, %v1722
          %v1774 = vunpack.c.l.s4 1983009808
          %v1775 = vunpack.c.0.s8 %v1774
          %v1776 = vlaneseq
          %v1777 = vshrl.u32 %v1776, 7
          %v1778 = vsub.s32 %v1775, %v1777
          %v1779 = vrot.slane %v1722, %v1778
          %v1781 = vunpack.c.l.s4 1983009808
          %v1782 = vunpack.c.0.s8 %v1781
          %v1783 = vlaneseq
          %v1784 = vshrl.u32 %v1783, 7
          %v1785 = vsub.s32 %v1782, %v1784
          %v1786 = vrot.slane %v1772, %v1785
          %v1787 = vcombine.high %v1779, %v1779
          %v1788 = vcombine.high %v1786, %v1786
          %v1789 = vcombine.high %v1727, %v1727
          %v1791 = vunpack.c.l.s4 1983009808
          %v1792 = vunpack.c.0.s8 %v1791
          %v1793 = vlaneseq
          %v1794 = vshrl.u32 %v1793, 7
          %v1795 = vsub.s32 %v1792, %v1794
          %v1796 = vrot.slane %v1727, %v1795
          %v1798 = vunpack.c.l.s4 1983009808
          %v1799 = vunpack.c.0.s8 %v1798
          %v1800 = vlaneseq
          %v1801 = vshrl.u32 %v1800, 7
          %v1802 = vsub.s32 %v1799, %v1801
          %v1803 = vrot.slane %v1789, %v1802
          %v1804 = vcombine.high %v1796, %v1796
          %v1805 = vcombine.high %v1803, %v1803
          %v1806 = vcombine.high %v1732, %v1732
          %v1808 = vunpack.c.l.s4 1983009808
          %v1809 = vunpack.c.0.s8 %v1808
          %v1810 = vlaneseq
          %v1811 = vshrl.u32 %v1810, 7
          %v1812 = vsub.s32 %v1809, %v1811
          %v1813 = vrot.slane %v1732, %v1812
          %v1815 = vunpack.c.l.s4 1983009808
          %v1816 = vunpack.c.0.s8 %v1815
          %v1817 = vlaneseq
          %v1818 = vshrl.u32 %v1817, 7
          %v1819 = vsub.s32 %v1816, %v1818
          %v1820 = vrot.slane %v1806, %v1819
          %v1821 = vcombine.high %v1813, %v1813
          %v1822 = vcombine.high %v1820, %v1820
          %v1839 = vadd.f32 %v1735, %v1762
          %v1840 = vadd.f32 %v1736, %v1770
          %v1841 = vadd.f32 %v1737, %v1769
          %v1842 = vadd.f32 %v1738, %v1771
          %v1843 = vadd.f32 %v1739, %v1779
          %v1844 = vadd.f32 %v1740, %v1787
          %v1845 = vadd.f32 %v1741, %v1786
          %v1846 = vadd.f32 %v1742, %v1788
          %v1847 = vadd.f32 %v1743, %v1796
          %v1848 = vadd.f32 %v1744, %v1804
          %v1849 = vadd.f32 %v1745, %v1803
          %v1850 = vadd.f32 %v1746, %v1805
          %v1851 = vadd.f32 %v1747, %v1813
          %v1852 = vadd.f32 %v1748, %v1821
          %v1853 = vadd.f32 %v1749, %v1820
          %v1854 = vadd.f32 %v1750, %v1822
          %vm1855 = vcmask 58368
          %1856 = vst.msk [vmem:[#allocation2] sm:$0x3] %vm1855, %v1839
          %1857 = vst.msk [vmem:[#allocation2 + $0x8] sm:$0x3] %vm1855, %v1840
          %1858 = vst.msk [vmem:[#allocation2 + $0x10] sm:$0x3] %vm1855, %v1841
          %1859 = vst.msk [vmem:[#allocation2 + $0x18] sm:$0x3] %vm1855, %v1842
          %1860 = vst.msk [vmem:[#allocation2 + $0x20] sm:$0x3] %vm1855, %v1843
          %1861 = vst.msk [vmem:[#allocation2 + $0x28] sm:$0x3] %vm1855, %v1844
          %1862 = vst.msk [vmem:[#allocation2 + $0x30] sm:$0x3] %vm1855, %v1845
          %1863 = vst.msk [vmem:[#allocation2 + $0x38] sm:$0x3] %vm1855, %v1846
          %1864 = vst.msk [vmem:[#allocation2 + $0x40] sm:$0x3] %vm1855, %v1847
          %1865 = vst.msk [vmem:[#allocation2 + $0x48] sm:$0x3] %vm1855, %v1848
          %1866 = vst.msk [vmem:[#allocation2 + $0x50] sm:$0x3] %vm1855, %v1849
          %1867 = vst.msk [vmem:[#allocation2 + $0x58] sm:$0x3] %vm1855, %v1850
          %1868 = vst.msk [vmem:[#allocation2 + $0x60] sm:$0x3] %vm1855, %v1851
          %1869 = vst.msk [vmem:[#allocation2 + $0x68] sm:$0x3] %vm1855, %v1852
          %1870 = vst.msk [vmem:[#allocation2 + $0x70] sm:$0x3] %vm1855, %v1853
          %1871 = vst.msk [vmem:[#allocation2 + $0x78] sm:$0x3] %vm1855, %v1854
        $region56: #{aspp_forward.1} parent=31 // pred_fallthru
          _
        %s1872 = scalar_lea.vmem %s1, 28
        %v1873 = vld [vmem:[%s1872] sm:$0xf]
        // Predicated region
        $region57: #{aspp_forward.1} parent=31 // pred_check
          _
        $region58: #{aspp_forward.1} parent=31 // pred_check_branch
          %1875 = sbr.rel (%p497) target = $region60
        $region59: #{aspp_forward.1} parent=31 // pred_region
          %p1876 = scmp.gt.s32.totalorder %s493, 0
          %s1877 = scalar_select %p1876, %s493, 0
          %p1878 = scmp.lt.s32.totalorder %s1877, 6
          %s1879 = scalar_select %p1878, %s1877, 6
          %s1880 = smul.u32 %s1879, 64
          %s1881 = sadd.s32 48, %s1880
          %s1882 = scalar_lea.vmem %s195, %s1881
          %v1883 = vld [vmem:[%s1882] sm:$0x3]
          %v1884 = vld [vmem:[%s1882 + $0x8] sm:$0x3]
          %v1885 = vld [vmem:[%s1882 + $0x40] sm:$0x3]
          %v1886 = vld [vmem:[%s1882 + $0x48] sm:$0x3]
          %v1891 = vcombine.low %v1883, %v1884
          %v1892 = vcombine.low %v1885, %v1886
          %v1894 = vunpack.c.l.s4 1983009808
          %v1895 = vunpack.c.0.s8 %v1894
          %v1896 = vlaneseq
          %v1897 = vshrl.u32 %v1896, 7
          %v1898 = vsub.s32 %v1895, %v1897
          %v1899 = vrot.slane %v1891, %v1898
          %v1901 = vunpack.c.l.s4 1983009808
          %v1902 = vunpack.c.0.s8 %v1901
          %v1903 = vlaneseq
          %v1904 = vshrl.u32 %v1903, 7
          %v1905 = vsub.s32 %v1902, %v1904
          %v1906 = vrot.slane %v1892, %v1905
          %v1907 = vcombine.low %v1899, %v1906
          %v1908 = vsel %vm245, %v1907, 0
          %v1911 = vsel %vm294, %v1873, 0
          %1913 = vmatprep.subr.mxu0 0.0
          %1914 = vmatpush1.msra.mxu0 %v1911
          %1915 = vmatprep.subr.mxu0 0.0
          %1916 = vmatpush1.msra.mxu0 0.0
          %1917 = vmatprep.subr.mxu0 0.0
          %1918 = vmatpush1.msra.mxu0 0.0
          %1919 = vmatprep.subr.mxu0 0.0
          %1920 = vmatpush1.msra.mxu0 0.0
          %1921 = vmatprep.subr.mxu0 0.0
          %1922 = vmatpush1.msra.mxu0 0.0
          %1923 = vmatprep.subr.mxu0 0.0
          %1924 = vmatpush1.msra.mxu0 0.0
          %1925 = vmatprep.subr.mxu0 0.0
          %1926 = vmatpush1.msra.mxu0 0.0
          %1927 = vmatprep.subr.mxu0 0.0
          %1928 = vmatpush1.msra.mxu0 0.0
          %1929 = vmatprep.subr.mxu0 0.0
          %1930 = vmatpush1.msra.mxu0 0.0
          %1931 = vmatprep.subr.mxu0 0.0
          %1932 = vmatpush1.msra.mxu0 0.0
          %1933 = vmatprep.subr.mxu0 0.0
          %1934 = vmatpush1.msra.mxu0 0.0
          %1935 = vmatprep.subr.mxu0 0.0
          %1936 = vmatpush1.msra.mxu0 0.0
          %1937 = vmatprep.subr.mxu0 0.0
          %1938 = vmatpush1.msra.mxu0 0.0
          %1939 = vmatprep.subr.mxu0 0.0
          %1940 = vmatpush1.msra.mxu0 0.0
          %1941 = vmatprep.subr.mxu0 0.0
          %1942 = vmatpush1.msra.mxu0 0.0
          %1943 = vmatprep.subr.mxu0 0.0
          %1944 = vmatpush1.msra.mxu0 0.0
          %1945 = vmatprep.subr.mxu0 0.0
          %1946 = vmatpush1.msra.mxu0 0.0
          %1947 = vmatprep.subr.mxu0 0.0
          %1948 = vmatpush1.msra.mxu0 0.0
          %1949 = vmatprep.subr.mxu0 0.0
          %1950 = vmatpush1.msra.mxu0 0.0
          %1951 = vmatprep.subr.mxu0 0.0
          %1952 = vmatpush1.msra.mxu0 0.0
          %1953 = vmatprep.subr.mxu0 0.0
          %1954 = vmatpush1.msra.mxu0 0.0
          %1955 = vmatprep.subr.mxu0 0.0
          %1956 = vmatpush1.msra.mxu0 0.0
          %1957 = vmatprep.subr.mxu0 0.0
          %1958 = vmatpush1.msra.mxu0 0.0
          %1959 = vmatprep.subr.mxu0 0.0
          %1960 = vmatpush1.msra.mxu0 0.0
          %1961 = vmatprep.subr.mxu0 0.0
          %1962 = vmatpush1.msra.mxu0 0.0
          %1963 = vmatprep.subr.mxu0 0.0
          %1964 = vmatpush1.msra.mxu0 0.0
          %1965 = vmatprep.subr.mxu0 0.0
          %1966 = vmatpush1.msra.mxu0 0.0
          %1967 = vmatprep.subr.mxu0 0.0
          %1968 = vmatpush1.msra.mxu0 0.0
          %1969 = vmatprep.subr.mxu0 0.0
          %1970 = vmatpush1.msra.mxu0 0.0
          %1971 = vmatprep.subr.mxu0 0.0
          %1972 = vmatpush1.msra.mxu0 0.0
          %1973 = vmatprep.subr.mxu0 0.0
          %1974 = vmatpush1.msra.mxu0 0.0
          %1975 = vmatprep.subr.mxu0 0.0
          %1976 = vmatpush1.msra.mxu0 0.0
          %1977 = vmatprep.mubr.f32.mxu0 0.0
          %1978 = vmatmul.mubr.f32.gmra.mrb[0].mxu0 %v1908
          %v1979 = vpop.f32.mrb[0].mxu0
          %v1980 = vadd.f32 0.0, %v1979
          %v1981 = vpop.f32.mrb[0].mxu0
          %1982 = vdwg.mxu0
          %v1983 = vld [vmem:[#allocation2 + $0x6] sm:$0x3]
          %v1984 = vld [vmem:[#allocation2 + $0xe] sm:$0x3]
          %v1985 = vld [vmem:[#allocation2 + $0x46] sm:$0x3]
          %v1986 = vld [vmem:[#allocation2 + $0x4e] sm:$0x3]
          %v1988 = vcombine.high %v1980, %v1980
          %v1990 = vunpack.c.l.s4 1983009808
          %v1991 = vunpack.c.0.s8 %v1990
          %v1992 = vlaneseq
          %v1993 = vshrl.u32 %v1992, 7
          %v1994 = vsub.s32 %v1991, %v1993
          %v1995 = vrot.slane %v1980, %v1994
          %v1997 = vunpack.c.l.s4 1983009808
          %v1998 = vunpack.c.0.s8 %v1997
          %v1999 = vlaneseq
          %v2000 = vshrl.u32 %v1999, 7
          %v2001 = vsub.s32 %v1998, %v2000
          %v2002 = vrot.slane %v1988, %v2001
          %v2003 = vcombine.high %v1995, %v1995
          %v2004 = vcombine.high %v2002, %v2002
          %v2009 = vadd.f32 %v1983, %v1995
          %v2010 = vadd.f32 %v1984, %v2003
          %v2011 = vadd.f32 %v1985, %v2002
          %v2012 = vadd.f32 %v1986, %v2004
          %vm2013 = vcmask 58368
          %2014 = vst.msk [vmem:[#allocation2 + $0x6] sm:$0x3] %vm2013, %v2009
          %2015 = vst.msk [vmem:[#allocation2 + $0xe] sm:$0x3] %vm2013, %v2010
          %2016 = vst.msk [vmem:[#allocation2 + $0x46] sm:$0x3] %vm2013, %v2011
          %2017 = vst.msk [vmem:[#allocation2 + $0x4e] sm:$0x3] %vm2013, %v2012
        $region60: #{aspp_forward.1} parent=31 // pred_fallthru
          _
        %s2018 = scalar_lea.vmem %s1, 32
        %v2019 = vld [vmem:[%s2018] sm:$0xf]
        // Predicated region
        $region61: #{aspp_forward.1} parent=31 // pred_check
          _
        $region62: #{aspp_forward.1} parent=31 // pred_check_branch
          %2021 = sbr.rel (%p497) target = $region64
        $region63: #{aspp_forward.1} parent=31 // pred_region
          %p2022 = scmp.gt.s32.totalorder %s493, 0
          %s2023 = scalar_select %p2022, %s493, 0
          %p2024 = scmp.lt.s32.totalorder %s2023, 6
          %s2025 = scalar_select %p2024, %s2023, 6
          %s2026 = smul.u32 %s2025, 64
          %s2027 = sadd.s32 48, %s2026
          %s2028 = scalar_lea.vmem %s195, %s2027
          %v2029 = vld [vmem:[%s2028] sm:$0xff]
          %v2030 = vld [vmem:[%s2028 + $0x8] sm:$0xff]
          %v2031 = vld [vmem:[%s2028 + $0x40] sm:$0xff]
          %v2032 = vld [vmem:[%s2028 + $0x48] sm:$0xff]
          %v2034 = vsel %vm245, %v2029, 0
          %v2037 = vsel %vm245, %v2030, 0
          %v2040 = vsel %vm245, %v2031, 0
          %v2043 = vsel %vm245, %v2032, 0
          %v2046 = vsel %vm294, %v2019, 0
          %2048 = vmatprep.subr.mxu0 0.0
          %2049 = vmatpush1.msra.mxu0 %v2046
          %2050 = vmatprep.subr.mxu0 0.0
          %2051 = vmatpush1.msra.mxu0 0.0
          %2052 = vmatprep.subr.mxu0 0.0
          %2053 = vmatpush1.msra.mxu0 0.0
          %2054 = vmatprep.subr.mxu0 0.0
          %2055 = vmatpush1.msra.mxu0 0.0
          %2056 = vmatprep.subr.mxu0 0.0
          %2057 = vmatpush1.msra.mxu0 0.0
          %2058 = vmatprep.subr.mxu0 0.0
          %2059 = vmatpush1.msra.mxu0 0.0
          %2060 = vmatprep.subr.mxu0 0.0
          %2061 = vmatpush1.msra.mxu0 0.0
          %2062 = vmatprep.subr.mxu0 0.0
          %2063 = vmatpush1.msra.mxu0 0.0
          %2064 = vmatprep.subr.mxu0 0.0
          %2065 = vmatpush1.msra.mxu0 0.0
          %2066 = vmatprep.subr.mxu0 0.0
          %2067 = vmatpush1.msra.mxu0 0.0
          %2068 = vmatprep.subr.mxu0 0.0
          %2069 = vmatpush1.msra.mxu0 0.0
          %2070 = vmatprep.subr.mxu0 0.0
          %2071 = vmatpush1.msra.mxu0 0.0
          %2072 = vmatprep.subr.mxu0 0.0
          %2073 = vmatpush1.msra.mxu0 0.0
          %2074 = vmatprep.subr.mxu0 0.0
          %2075 = vmatpush1.msra.mxu0 0.0
          %2076 = vmatprep.subr.mxu0 0.0
          %2077 = vmatpush1.msra.mxu0 0.0
          %2078 = vmatprep.subr.mxu0 0.0
          %2079 = vmatpush1.msra.mxu0 0.0
          %2080 = vmatprep.subr.mxu0 0.0
          %2081 = vmatpush1.msra.mxu0 0.0
          %2082 = vmatprep.subr.mxu0 0.0
          %2083 = vmatpush1.msra.mxu0 0.0
          %2084 = vmatprep.subr.mxu0 0.0
          %2085 = vmatpush1.msra.mxu0 0.0
          %2086 = vmatprep.subr.mxu0 0.0
          %2087 = vmatpush1.msra.mxu0 0.0
          %2088 = vmatprep.subr.mxu0 0.0
          %2089 = vmatpush1.msra.mxu0 0.0
          %2090 = vmatprep.subr.mxu0 0.0
          %2091 = vmatpush1.msra.mxu0 0.0
          %2092 = vmatprep.subr.mxu0 0.0
          %2093 = vmatpush1.msra.mxu0 0.0
          %2094 = vmatprep.subr.mxu0 0.0
          %2095 = vmatpush1.msra.mxu0 0.0
          %2096 = vmatprep.subr.mxu0 0.0
          %2097 = vmatpush1.msra.mxu0 0.0
          %2098 = vmatprep.subr.mxu0 0.0
          %2099 = vmatpush1.msra.mxu0 0.0
          %2100 = vmatprep.subr.mxu0 0.0
          %2101 = vmatpush1.msra.mxu0 0.0
          %2102 = vmatprep.subr.mxu0 0.0
          %2103 = vmatpush1.msra.mxu0 0.0
          %2104 = vmatprep.subr.mxu0 0.0
          %2105 = vmatpush1.msra.mxu0 0.0
          %2106 = vmatprep.subr.mxu0 0.0
          %2107 = vmatpush1.msra.mxu0 0.0
          %2108 = vmatprep.subr.mxu0 0.0
          %2109 = vmatpush1.msra.mxu0 0.0
          %2110 = vmatprep.subr.mxu0 0.0
          %2111 = vmatpush1.msra.mxu0 0.0
          %2112 = vmatprep.mubr.f32.mxu0 0.0
          %2113 = vmatmul.mubr.f32.gmra.mrb[0].mxu0 %v2034
          %v2114 = vpop.f32.mrb[0].mxu0
          %v2115 = vadd.f32 0.0, %v2114
          %v2116 = vpop.f32.mrb[0].mxu0
          %2117 = vmatprep.mubr.f32.mxu0 0.0
          %2118 = vmatmul.mubr.f32.gmra.mrb[0].mxu0 %v2037
          %v2119 = vpop.f32.mrb[0].mxu0
          %v2120 = vadd.f32 0.0, %v2119
          %v2121 = vpop.f32.mrb[0].mxu0
          %2122 = vmatprep.mubr.f32.mxu0 0.0
          %2123 = vmatmul.mubr.f32.gmra.mrb[0].mxu0 %v2040
          %v2124 = vpop.f32.mrb[0].mxu0
          %v2125 = vadd.f32 0.0, %v2124
          %v2126 = vpop.f32.mrb[0].mxu0
          %2127 = vmatprep.mubr.f32.mxu0 0.0
          %2128 = vmatmul.mubr.f32.gmra.mrb[0].mxu0 %v2043
          %v2129 = vpop.f32.mrb[0].mxu0
          %v2130 = vadd.f32 0.0, %v2129
          %v2131 = vpop.f32.mrb[0].mxu0
          %2132 = vdwg.mxu0
          %v2133 = vld [vmem:[#allocation2] sm:$0xff]
          %v2134 = vld [vmem:[#allocation2 + $0x8] sm:$0xff]
          %v2135 = vld [vmem:[#allocation2 + $0x40] sm:$0xff]
          %v2136 = vld [vmem:[#allocation2 + $0x48] sm:$0xff]
          %v2137 = vadd.f32 %v2133, %v2115
          %v2138 = vadd.f32 %v2134, %v2120
          %v2139 = vadd.f32 %v2135, %v2125
          %v2140 = vadd.f32 %v2136, %v2130
          %2141 = vst.msk [vmem:[#allocation2] sm:$0xff] %vm209, %v2137
          %2142 = vst.msk [vmem:[#allocation2 + $0x8] sm:$0xff] %vm209, %v2138
          %2143 = vst.msk [vmem:[#allocation2 + $0x40] sm:$0xff] %vm209, %v2139
          %2144 = vst.msk [vmem:[#allocation2 + $0x48] sm:$0xff] %vm209, %v2140
        $region64: #{aspp_forward.1} parent=31 // pred_fallthru
          _
        %s2145 = scalar_lea.vmem %s1, 36
        %v2146 = vld [vmem:[%s2145] sm:$0xf]
        // Predicated region
        $region65: #{aspp_forward.1} parent=31 // pred_check
          _
        $region66: #{aspp_forward.1} parent=31 // pred_check_branch
          %2148 = sbr.rel (%p497) target = $region68
        $region67: #{aspp_forward.1} parent=31 // pred_region
          %p2149 = scmp.gt.s32.totalorder %s493, 0
          %s2150 = scalar_select %p2149, %s493, 0
          %p2151 = scmp.lt.s32.totalorder %s2150, 6
          %s2152 = scalar_select %p2151, %s2150, 6
          %s2153 = smul.u32 %s2152, 64
          %s2154 = sadd.s32 48, %s2153
          %s2155 = scalar_lea.vmem %s195, %s2154
          %v2156 = vld [vmem:[%s2155 + $0x6] sm:$0x3]
          %v2157 = vld [vmem:[%s2155 + $0xe] sm:$0x3]
          %v2158 = vld [vmem:[%s2155 + $0x46] sm:$0x3]
          %v2159 = vld [vmem:[%s2155 + $0x4e] sm:$0x3]
          %v2164 = vcombine.low %v2156, %v2157
          %v2165 = vcombine.low %v2158, %v2159
          %v2167 = vunpack.c.l.s4 1983009808
          %v2168 = vunpack.c.0.s8 %v2167
          %v2169 = vlaneseq
          %v2170 = vshrl.u32 %v2169, 7
          %v2171 = vsub.s32 %v2168, %v2170
          %v2172 = vrot.slane %v2164, %v2171
          %v2174 = vunpack.c.l.s4 1983009808
          %v2175 = vunpack.c.0.s8 %v2174
          %v2176 = vlaneseq
          %v2177 = vshrl.u32 %v2176, 7
          %v2178 = vsub.s32 %v2175, %v2177
          %v2179 = vrot.slane %v2165, %v2178
          %v2180 = vcombine.low %v2172, %v2179
          %v2181 = vsel %vm245, %v2180, 0
          %v2184 = vsel %vm294, %v2146, 0
          %2186 = vmatprep.subr.mxu0 0.0
          %2187 = vmatpush1.msra.mxu0 %v2184
          %2188 = vmatprep.subr.mxu0 0.0
          %2189 = vmatpush1.msra.mxu0 0.0
          %2190 = vmatprep.subr.mxu0 0.0
          %2191 = vmatpush1.msra.mxu0 0.0
          %2192 = vmatprep.subr.mxu0 0.0
          %2193 = vmatpush1.msra.mxu0 0.0
          %2194 = vmatprep.subr.mxu0 0.0
          %2195 = vmatpush1.msra.mxu0 0.0
          %2196 = vmatprep.subr.mxu0 0.0
          %2197 = vmatpush1.msra.mxu0 0.0
          %2198 = vmatprep.subr.mxu0 0.0
          %2199 = vmatpush1.msra.mxu0 0.0
          %2200 = vmatprep.subr.mxu0 0.0
          %2201 = vmatpush1.msra.mxu0 0.0
          %2202 = vmatprep.subr.mxu0 0.0
          %2203 = vmatpush1.msra.mxu0 0.0
          %2204 = vmatprep.subr.mxu0 0.0
          %2205 = vmatpush1.msra.mxu0 0.0
          %2206 = vmatprep.subr.mxu0 0.0
          %2207 = vmatpush1.msra.mxu0 0.0
          %2208 = vmatprep.subr.mxu0 0.0
          %2209 = vmatpush1.msra.mxu0 0.0
          %2210 = vmatprep.subr.mxu0 0.0
          %2211 = vmatpush1.msra.mxu0 0.0
          %2212 = vmatprep.subr.mxu0 0.0
          %2213 = vmatpush1.msra.mxu0 0.0
          %2214 = vmatprep.subr.mxu0 0.0
          %2215 = vmatpush1.msra.mxu0 0.0
          %2216 = vmatprep.subr.mxu0 0.0
          %2217 = vmatpush1.msra.mxu0 0.0
          %2218 = vmatprep.subr.mxu0 0.0
          %2219 = vmatpush1.msra.mxu0 0.0
          %2220 = vmatprep.subr.mxu0 0.0
          %2221 = vmatpush1.msra.mxu0 0.0
          %2222 = vmatprep.subr.mxu0 0.0
          %2223 = vmatpush1.msra.mxu0 0.0
          %2224 = vmatprep.subr.mxu0 0.0
          %2225 = vmatpush1.msra.mxu0 0.0
          %2226 = vmatprep.subr.mxu0 0.0
          %2227 = vmatpush1.msra.mxu0 0.0
          %2228 = vmatprep.subr.mxu0 0.0
          %2229 = vmatpush1.msra.mxu0 0.0
          %2230 = vmatprep.subr.mxu0 0.0
          %2231 = vmatpush1.msra.mxu0 0.0
          %2232 = vmatprep.subr.mxu0 0.0
          %2233 = vmatpush1.msra.mxu0 0.0
          %2234 = vmatprep.subr.mxu0 0.0
          %2235 = vmatpush1.msra.mxu0 0.0
          %2236 = vmatprep.subr.mxu0 0.0
          %2237 = vmatpush1.msra.mxu0 0.0
          %2238 = vmatprep.subr.mxu0 0.0
          %2239 = vmatpush1.msra.mxu0 0.0
          %2240 = vmatprep.subr.mxu0 0.0
          %2241 = vmatpush1.msra.mxu0 0.0
          %2242 = vmatprep.subr.mxu0 0.0
          %2243 = vmatpush1.msra.mxu0 0.0
          %2244 = vmatprep.subr.mxu0 0.0
          %2245 = vmatpush1.msra.mxu0 0.0
          %2246 = vmatprep.subr.mxu0 0.0
          %2247 = vmatpush1.msra.mxu0 0.0
          %2248 = vmatprep.subr.mxu0 0.0
          %2249 = vmatpush1.msra.mxu0 0.0
          %2250 = vmatprep.mubr.f32.mxu0 0.0
          %2251 = vmatmul.mubr.f32.gmra.mrb[0].mxu0 %v2181
          %v2252 = vpop.f32.mrb[0].mxu0
          %v2253 = vadd.f32 0.0, %v2252
          %v2254 = vpop.f32.mrb[0].mxu0
          %2255 = vdwg.mxu0
          %v2256 = vld [vmem:[#allocation2] sm:$0x3]
          %v2257 = vld [vmem:[#allocation2 + $0x8] sm:$0x3]
          %v2258 = vld [vmem:[#allocation2 + $0x40] sm:$0x3]
          %v2259 = vld [vmem:[#allocation2 + $0x48] sm:$0x3]
          %v2261 = vcombine.high %v2253, %v2253
          %v2263 = vunpack.c.l.s4 1983009808
          %v2264 = vunpack.c.0.s8 %v2263
          %v2265 = vlaneseq
          %v2266 = vshrl.u32 %v2265, 7
          %v2267 = vsub.s32 %v2264, %v2266
          %v2268 = vrot.slane %v2253, %v2267
          %v2270 = vunpack.c.l.s4 1983009808
          %v2271 = vunpack.c.0.s8 %v2270
          %v2272 = vlaneseq
          %v2273 = vshrl.u32 %v2272, 7
          %v2274 = vsub.s32 %v2271, %v2273
          %v2275 = vrot.slane %v2261, %v2274
          %v2276 = vcombine.high %v2268, %v2268
          %v2277 = vcombine.high %v2275, %v2275
          %v2282 = vadd.f32 %v2256, %v2268
          %v2283 = vadd.f32 %v2257, %v2276
          %v2284 = vadd.f32 %v2258, %v2275
          %v2285 = vadd.f32 %v2259, %v2277
          %vm2286 = vcmask 58368
          %2287 = vst.msk [vmem:[#allocation2] sm:$0x3] %vm2286, %v2282
          %2288 = vst.msk [vmem:[#allocation2 + $0x8] sm:$0x3] %vm2286, %v2283
          %2289 = vst.msk [vmem:[#allocation2 + $0x40] sm:$0x3] %vm2286, %v2284
          %2290 = vst.msk [vmem:[#allocation2 + $0x48] sm:$0x3] %vm2286, %v2285
        $region68: #{aspp_forward.1} parent=31 // pred_fallthru
          _
        %s2291 = scalar_lea.vmem %s1, 40
        %v2292 = vld [vmem:[%s2291] sm:$0xf]
        %v2293 = vld [vmem:[%s228] sm:$0x3]
        %v2294 = vld [vmem:[%s228 + $0x8] sm:$0x3]
        %v2295 = vld [vmem:[%s228 + $0x40] sm:$0x3]
        %v2296 = vld [vmem:[%s228 + $0x48] sm:$0x3]
        %v2301 = vcombine.low %v2293, %v2294
        %v2302 = vcombine.low %v2295, %v2296
        %v2304 = vunpack.c.l.s4 1983009808
        %v2305 = vunpack.c.0.s8 %v2304
        %v2306 = vlaneseq
        %v2307 = vshrl.u32 %v2306, 7
        %v2308 = vsub.s32 %v2305, %v2307
        %v2309 = vrot.slane %v2301, %v2308
        %v2311 = vunpack.c.l.s4 1983009808
        %v2312 = vunpack.c.0.s8 %v2311
        %v2313 = vlaneseq
        %v2314 = vshrl.u32 %v2313, 7
        %v2315 = vsub.s32 %v2312, %v2314
        %v2316 = vrot.slane %v2302, %v2315
        %v2317 = vcombine.low %v2309, %v2316
        %v2318 = vsel %vm245, %v2317, 0
        %v2321 = vsel %vm294, %v2292, 0
        %2323 = vmatprep.subr.mxu0 0.0
        %2324 = vmatpush1.msra.mxu0 %v2321
        %2325 = vmatprep.subr.mxu0 0.0
        %2326 = vmatpush1.msra.mxu0 0.0
        %2327 = vmatprep.subr.mxu0 0.0
        %2328 = vmatpush1.msra.mxu0 0.0
        %2329 = vmatprep.subr.mxu0 0.0
        %2330 = vmatpush1.msra.mxu0 0.0
        %2331 = vmatprep.subr.mxu0 0.0
        %2332 = vmatpush1.msra.mxu0 0.0
        %2333 = vmatprep.subr.mxu0 0.0
        %2334 = vmatpush1.msra.mxu0 0.0
        %2335 = vmatprep.subr.mxu0 0.0
        %2336 = vmatpush1.msra.mxu0 0.0
        %2337 = vmatprep.subr.mxu0 0.0
        %2338 = vmatpush1.msra.mxu0 0.0
        %2339 = vmatprep.subr.mxu0 0.0
        %2340 = vmatpush1.msra.mxu0 0.0
        %2341 = vmatprep.subr.mxu0 0.0
        %2342 = vmatpush1.msra.mxu0 0.0
        %2343 = vmatprep.subr.mxu0 0.0
        %2344 = vmatpush1.msra.mxu0 0.0
        %2345 = vmatprep.subr.mxu0 0.0
        %2346 = vmatpush1.msra.mxu0 0.0
        %2347 = vmatprep.subr.mxu0 0.0
        %2348 = vmatpush1.msra.mxu0 0.0
        %2349 = vmatprep.subr.mxu0 0.0
        %2350 = vmatpush1.msra.mxu0 0.0
        %2351 = vmatprep.subr.mxu0 0.0
        %2352 = vmatpush1.msra.mxu0 0.0
        %2353 = vmatprep.subr.mxu0 0.0
        %2354 = vmatpush1.msra.mxu0 0.0
        %2355 = vmatprep.subr.mxu0 0.0
        %2356 = vmatpush1.msra.mxu0 0.0
        %2357 = vmatprep.subr.mxu0 0.0
        %2358 = vmatpush1.msra.mxu0 0.0
        %2359 = vmatprep.subr.mxu0 0.0
        %2360 = vmatpush1.msra.mxu0 0.0
        %2361 = vmatprep.subr.mxu0 0.0
        %2362 = vmatpush1.msra.mxu0 0.0
        %2363 = vmatprep.subr.mxu0 0.0
        %2364 = vmatpush1.msra.mxu0 0.0
        %2365 = vmatprep.subr.mxu0 0.0
        %2366 = vmatpush1.msra.mxu0 0.0
        %2367 = vmatprep.subr.mxu0 0.0
        %2368 = vmatpush1.msra.mxu0 0.0
        %2369 = vmatprep.subr.mxu0 0.0
        %2370 = vmatpush1.msra.mxu0 0.0
        %2371 = vmatprep.subr.mxu0 0.0
        %2372 = vmatpush1.msra.mxu0 0.0
        %2373 = vmatprep.subr.mxu0 0.0
        %2374 = vmatpush1.msra.mxu0 0.0
        %2375 = vmatprep.subr.mxu0 0.0
        %2376 = vmatpush1.msra.mxu0 0.0
        %2377 = vmatprep.subr.mxu0 0.0
        %2378 = vmatpush1.msra.mxu0 0.0
        %2379 = vmatprep.subr.mxu0 0.0
        %2380 = vmatpush1.msra.mxu0 0.0
        %2381 = vmatprep.subr.mxu0 0.0
        %2382 = vmatpush1.msra.mxu0 0.0
        %2383 = vmatprep.subr.mxu0 0.0
        %2384 = vmatpush1.msra.mxu0 0.0
        %2385 = vmatprep.subr.mxu0 0.0
        %2386 = vmatpush1.msra.mxu0 0.0
        %2387 = vmatprep.mubr.f32.mxu0 0.0
        %2388 = vmatmul.mubr.f32.gmra.mrb[0].mxu0 %v2318
        %v2389 = vpop.f32.mrb[0].mxu0
        %v2390 = vadd.f32 0.0, %v2389
        %v2391 = vpop.f32.mrb[0].mxu0
        %2392 = vdwg.mxu0
        %s2393 = scalar_lea.vmem [#allocation2], 48
        %v2394 = vld [vmem:[%s2393 + $0x6] sm:$0x3]
        %v2395 = vld [vmem:[%s2393 + $0xe] sm:$0x3]
        %v2396 = vld [vmem:[%s2393 + $0x46] sm:$0x3]
        %v2397 = vld [vmem:[%s2393 + $0x4e] sm:$0x3]
        %v2399 = vcombine.high %v2390, %v2390
        %v2401 = vunpack.c.l.s4 1983009808
        %v2402 = vunpack.c.0.s8 %v2401
        %v2403 = vlaneseq
        %v2404 = vshrl.u32 %v2403, 7
        %v2405 = vsub.s32 %v2402, %v2404
        %v2406 = vrot.slane %v2390, %v2405
        %v2408 = vunpack.c.l.s4 1983009808
        %v2409 = vunpack.c.0.s8 %v2408
        %v2410 = vlaneseq
        %v2411 = vshrl.u32 %v2410, 7
        %v2412 = vsub.s32 %v2409, %v2411
        %v2413 = vrot.slane %v2399, %v2412
        %v2414 = vcombine.high %v2406, %v2406
        %v2415 = vcombine.high %v2413, %v2413
        %v2420 = vadd.f32 %v2394, %v2406
        %v2421 = vadd.f32 %v2395, %v2414
        %v2422 = vadd.f32 %v2396, %v2413
        %v2423 = vadd.f32 %v2397, %v2415
        %vm2424 = vcmask 58368
        %2425 = vst.msk [vmem:[%s2393 + $0x6] sm:$0x3] %vm2424, %v2420
        %2426 = vst.msk [vmem:[%s2393 + $0xe] sm:$0x3] %vm2424, %v2421
        %2427 = vst.msk [vmem:[%s2393 + $0x46] sm:$0x3] %vm2424, %v2422
        %2428 = vst.msk [vmem:[%s2393 + $0x4e] sm:$0x3] %vm2424, %v2423
        %s2429 = scalar_lea.vmem %s1, 44
        %v2430 = vld [vmem:[%s2429] sm:$0xf]
        %v2431 = vld [vmem:[%s228] sm:$0xff]
        %v2432 = vld [vmem:[%s228 + $0x8] sm:$0xff]
        %v2433 = vld [vmem:[%s228 + $0x40] sm:$0xff]
        %v2434 = vld [vmem:[%s228 + $0x48] sm:$0xff]
        %v2436 = vsel %vm245, %v2431, 0
        %v2439 = vsel %vm245, %v2432, 0
        %v2442 = vsel %vm245, %v2433, 0
        %v2445 = vsel %vm245, %v2434, 0
        %v2448 = vsel %vm294, %v2430, 0
        %2450 = vmatprep.subr.mxu0 0.0
        %2451 = vmatpush1.msra.mxu0 %v2448
        %2452 = vmatprep.subr.mxu0 0.0
        %2453 = vmatpush1.msra.mxu0 0.0
        %2454 = vmatprep.subr.mxu0 0.0
        %2455 = vmatpush1.msra.mxu0 0.0
        %2456 = vmatprep.subr.mxu0 0.0
        %2457 = vmatpush1.msra.mxu0 0.0
        %2458 = vmatprep.subr.mxu0 0.0
        %2459 = vmatpush1.msra.mxu0 0.0
        %2460 = vmatprep.subr.mxu0 0.0
        %2461 = vmatpush1.msra.mxu0 0.0
        %2462 = vmatprep.subr.mxu0 0.0
        %2463 = vmatpush1.msra.mxu0 0.0
        %2464 = vmatprep.subr.mxu0 0.0
        %2465 = vmatpush1.msra.mxu0 0.0
        %2466 = vmatprep.subr.mxu0 0.0
        %2467 = vmatpush1.msra.mxu0 0.0
        %2468 = vmatprep.subr.mxu0 0.0
        %2469 = vmatpush1.msra.mxu0 0.0
        %2470 = vmatprep.subr.mxu0 0.0
        %2471 = vmatpush1.msra.mxu0 0.0
        %2472 = vmatprep.subr.mxu0 0.0
        %2473 = vmatpush1.msra.mxu0 0.0
        %2474 = vmatprep.subr.mxu0 0.0
        %2475 = vmatpush1.msra.mxu0 0.0
        %2476 = vmatprep.subr.mxu0 0.0
        %2477 = vmatpush1.msra.mxu0 0.0
        %2478 = vmatprep.subr.mxu0 0.0
        %2479 = vmatpush1.msra.mxu0 0.0
        %2480 = vmatprep.subr.mxu0 0.0
        %2481 = vmatpush1.msra.mxu0 0.0
        %2482 = vmatprep.subr.mxu0 0.0
        %2483 = vmatpush1.msra.mxu0 0.0
        %2484 = vmatprep.subr.mxu0 0.0
        %2485 = vmatpush1.msra.mxu0 0.0
        %2486 = vmatprep.subr.mxu0 0.0
        %2487 = vmatpush1.msra.mxu0 0.0
        %2488 = vmatprep.subr.mxu0 0.0
        %2489 = vmatpush1.msra.mxu0 0.0
        %2490 = vmatprep.subr.mxu0 0.0
        %2491 = vmatpush1.msra.mxu0 0.0
        %2492 = vmatprep.subr.mxu0 0.0
        %2493 = vmatpush1.msra.mxu0 0.0
        %2494 = vmatprep.subr.mxu0 0.0
        %2495 = vmatpush1.msra.mxu0 0.0
        %2496 = vmatprep.subr.mxu0 0.0
        %2497 = vmatpush1.msra.mxu0 0.0
        %2498 = vmatprep.subr.mxu0 0.0
        %2499 = vmatpush1.msra.mxu0 0.0
        %2500 = vmatprep.subr.mxu0 0.0
        %2501 = vmatpush1.msra.mxu0 0.0
        %2502 = vmatprep.subr.mxu0 0.0
        %2503 = vmatpush1.msra.mxu0 0.0
        %2504 = vmatprep.subr.mxu0 0.0
        %2505 = vmatpush1.msra.mxu0 0.0
        %2506 = vmatprep.subr.mxu0 0.0
        %2507 = vmatpush1.msra.mxu0 0.0
        %2508 = vmatprep.subr.mxu0 0.0
        %2509 = vmatpush1.msra.mxu0 0.0
        %2510 = vmatprep.subr.mxu0 0.0
        %2511 = vmatpush1.msra.mxu0 0.0
        %2512 = vmatprep.subr.mxu0 0.0
        %2513 = vmatpush1.msra.mxu0 0.0
        %2514 = vmatprep.mubr.f32.mxu0 0.0
        %2515 = vmatmul.mubr.f32.gmra.mrb[0].mxu0 %v2436
        %v2516 = vpop.f32.mrb[0].mxu0
        %v2517 = vadd.f32 0.0, %v2516
        %v2518 = vpop.f32.mrb[0].mxu0
        %2519 = vmatprep.mubr.f32.mxu0 0.0
        %2520 = vmatmul.mubr.f32.gmra.mrb[0].mxu0 %v2439
        %v2521 = vpop.f32.mrb[0].mxu0
        %v2522 = vadd.f32 0.0, %v2521
        %v2523 = vpop.f32.mrb[0].mxu0
        %2524 = vmatprep.mubr.f32.mxu0 0.0
        %2525 = vmatmul.mubr.f32.gmra.mrb[0].mxu0 %v2442
        %v2526 = vpop.f32.mrb[0].mxu0
        %v2527 = vadd.f32 0.0, %v2526
        %v2528 = vpop.f32.mrb[0].mxu0
        %2529 = vmatprep.mubr.f32.mxu0 0.0
        %2530 = vmatmul.mubr.f32.gmra.mrb[0].mxu0 %v2445
        %v2531 = vpop.f32.mrb[0].mxu0
        %v2532 = vadd.f32 0.0, %v2531
        %v2533 = vpop.f32.mrb[0].mxu0
        %2534 = vdwg.mxu0
        %v2535 = vld [vmem:[%s2393] sm:$0xff]
        %v2536 = vld [vmem:[%s2393 + $0x8] sm:$0xff]
        %v2537 = vld [vmem:[%s2393 + $0x40] sm:$0xff]
        %v2538 = vld [vmem:[%s2393 + $0x48] sm:$0xff]
        %v2539 = vadd.f32 %v2535, %v2517
        %v2540 = vadd.f32 %v2536, %v2522
        %v2541 = vadd.f32 %v2537, %v2527
        %v2542 = vadd.f32 %v2538, %v2532
        %2543 = vst.msk [vmem:[%s2393] sm:$0xff] %vm209, %v2539
        %2544 = vst.msk [vmem:[%s2393 + $0x8] sm:$0xff] %vm209, %v2540
        %2545 = vst.msk [vmem:[%s2393 + $0x40] sm:$0xff] %vm209, %v2541
        %2546 = vst.msk [vmem:[%s2393 + $0x48] sm:$0xff] %vm209, %v2542
        %s2547 = scalar_lea.vmem %s1, 48
        %v2548 = vld [vmem:[%s2547] sm:$0xf]
        %v2549 = vld [vmem:[%s228 + $0x6] sm:$0x3]
        %v2550 = vld [vmem:[%s228 + $0xe] sm:$0x3]
        %v2551 = vld [vmem:[%s228 + $0x46] sm:$0x3]
        %v2552 = vld [vmem:[%s228 + $0x4e] sm:$0x3]
        %v2557 = vcombine.low %v2549, %v2550
        %v2558 = vcombine.low %v2551, %v2552
        %v2560 = vunpack.c.l.s4 1983009808
        %v2561 = vunpack.c.0.s8 %v2560
        %v2562 = vlaneseq
        %v2563 = vshrl.u32 %v2562, 7
        %v2564 = vsub.s32 %v2561, %v2563
        %v2565 = vrot.slane %v2557, %v2564
        %v2567 = vunpack.c.l.s4 1983009808
        %v2568 = vunpack.c.0.s8 %v2567
        %v2569 = vlaneseq
        %v2570 = vshrl.u32 %v2569, 7
        %v2571 = vsub.s32 %v2568, %v2570
        %v2572 = vrot.slane %v2558, %v2571
        %v2573 = vcombine.low %v2565, %v2572
        %v2574 = vsel %vm245, %v2573, 0
        %v2577 = vsel %vm294, %v2548, 0
        %2579 = vmatprep.subr.mxu0 0.0
        %2580 = vmatpush1.msra.mxu0 %v2577
        %2581 = vmatprep.subr.mxu0 0.0
        %2582 = vmatpush1.msra.mxu0 0.0
        %2583 = vmatprep.subr.mxu0 0.0
        %2584 = vmatpush1.msra.mxu0 0.0
        %2585 = vmatprep.subr.mxu0 0.0
        %2586 = vmatpush1.msra.mxu0 0.0
        %2587 = vmatprep.subr.mxu0 0.0
        %2588 = vmatpush1.msra.mxu0 0.0
        %2589 = vmatprep.subr.mxu0 0.0
        %2590 = vmatpush1.msra.mxu0 0.0
        %2591 = vmatprep.subr.mxu0 0.0
        %2592 = vmatpush1.msra.mxu0 0.0
        %2593 = vmatprep.subr.mxu0 0.0
        %2594 = vmatpush1.msra.mxu0 0.0
        %2595 = vmatprep.subr.mxu0 0.0
        %2596 = vmatpush1.msra.mxu0 0.0
        %2597 = vmatprep.subr.mxu0 0.0
        %2598 = vmatpush1.msra.mxu0 0.0
        %2599 = vmatprep.subr.mxu0 0.0
        %2600 = vmatpush1.msra.mxu0 0.0
        %2601 = vmatprep.subr.mxu0 0.0
        %2602 = vmatpush1.msra.mxu0 0.0
        %2603 = vmatprep.subr.mxu0 0.0
        %2604 = vmatpush1.msra.mxu0 0.0
        %2605 = vmatprep.subr.mxu0 0.0
        %2606 = vmatpush1.msra.mxu0 0.0
        %2607 = vmatprep.subr.mxu0 0.0
        %2608 = vmatpush1.msra.mxu0 0.0
        %2609 = vmatprep.subr.mxu0 0.0
        %2610 = vmatpush1.msra.mxu0 0.0
        %2611 = vmatprep.subr.mxu0 0.0
        %2612 = vmatpush1.msra.mxu0 0.0
        %2613 = vmatprep.subr.mxu0 0.0
        %2614 = vmatpush1.msra.mxu0 0.0
        %2615 = vmatprep.subr.mxu0 0.0
        %2616 = vmatpush1.msra.mxu0 0.0
        %2617 = vmatprep.subr.mxu0 0.0
        %2618 = vmatpush1.msra.mxu0 0.0
        %2619 = vmatprep.subr.mxu0 0.0
        %2620 = vmatpush1.msra.mxu0 0.0
        %2621 = vmatprep.subr.mxu0 0.0
        %2622 = vmatpush1.msra.mxu0 0.0
        %2623 = vmatprep.subr.mxu0 0.0
        %2624 = vmatpush1.msra.mxu0 0.0
        %2625 = vmatprep.subr.mxu0 0.0
        %2626 = vmatpush1.msra.mxu0 0.0
        %2627 = vmatprep.subr.mxu0 0.0
        %2628 = vmatpush1.msra.mxu0 0.0
        %2629 = vmatprep.subr.mxu0 0.0
        %2630 = vmatpush1.msra.mxu0 0.0
        %2631 = vmatprep.subr.mxu0 0.0
        %2632 = vmatpush1.msra.mxu0 0.0
        %2633 = vmatprep.subr.mxu0 0.0
        %2634 = vmatpush1.msra.mxu0 0.0
        %2635 = vmatprep.subr.mxu0 0.0
        %2636 = vmatpush1.msra.mxu0 0.0
        %2637 = vmatprep.subr.mxu0 0.0
        %2638 = vmatpush1.msra.mxu0 0.0
        %2639 = vmatprep.subr.mxu0 0.0
        %2640 = vmatpush1.msra.mxu0 0.0
        %2641 = vmatprep.subr.mxu0 0.0
        %2642 = vmatpush1.msra.mxu0 0.0
        %2643 = vmatprep.mubr.f32.mxu0 0.0
        %2644 = vmatmul.mubr.f32.gmra.mrb[0].mxu0 %v2574
        %v2645 = vpop.f32.mrb[0].mxu0
        %v2646 = vadd.f32 0.0, %v2645
        %v2647 = vpop.f32.mrb[0].mxu0
        %2648 = vdwg.mxu0
        %v2649 = vld [vmem:[%s2393] sm:$0x3]
        %v2650 = vld [vmem:[%s2393 + $0x8] sm:$0x3]
        %v2651 = vld [vmem:[%s2393 + $0x40] sm:$0x3]
        %v2652 = vld [vmem:[%s2393 + $0x48] sm:$0x3]
        %v2654 = vcombine.high %v2646, %v2646
        %v2656 = vunpack.c.l.s4 1983009808
        %v2657 = vunpack.c.0.s8 %v2656
        %v2658 = vlaneseq
        %v2659 = vshrl.u32 %v2658, 7
        %v2660 = vsub.s32 %v2657, %v2659
        %v2661 = vrot.slane %v2646, %v2660
        %v2663 = vunpack.c.l.s4 1983009808
        %v2664 = vunpack.c.0.s8 %v2663
        %v2665 = vlaneseq
        %v2666 = vshrl.u32 %v2665, 7
        %v2667 = vsub.s32 %v2664, %v2666
        %v2668 = vrot.slane %v2654, %v2667
        %v2669 = vcombine.high %v2661, %v2661
        %v2670 = vcombine.high %v2668, %v2668
        %v2675 = vadd.f32 %v2649, %v2661
        %v2676 = vadd.f32 %v2650, %v2669
        %v2677 = vadd.f32 %v2651, %v2668
        %v2678 = vadd.f32 %v2652, %v2670
        %2679 = vst.msk [vmem:[%s2393] sm:$0x3] %vm2424, %v2675
        %2680 = vst.msk [vmem:[%s2393 + $0x8] sm:$0x3] %vm2424, %v2676
        %2681 = vst.msk [vmem:[%s2393 + $0x40] sm:$0x3] %vm2424, %v2677
        %2682 = vst.msk [vmem:[%s2393 + $0x48] sm:$0x3] %vm2424, %v2678
        %s2683 = scalar_lea.vmem %s1, 52
        %v2684 = vld [vmem:[%s2683] sm:$0xf]
        %v2685 = vld [vmem:[%s228] sm:$0x3]
        %v2686 = vld [vmem:[%s228 + $0x8] sm:$0x3]
        %v2687 = vld [vmem:[%s228 + $0x10] sm:$0x3]
        %v2688 = vld [vmem:[%s228 + $0x18] sm:$0x3]
        %v2689 = vld [vmem:[%s228 + $0x20] sm:$0x3]
        %v2690 = vld [vmem:[%s228 + $0x28] sm:$0x3]
        %v2691 = vld [vmem:[%s228 + $0x30] sm:$0x3]
        %v2692 = vld [vmem:[%s228 + $0x38] sm:$0x3]
        %v2693 = vld [vmem:[%s228 + $0x40] sm:$0x3]
        %v2694 = vld [vmem:[%s228 + $0x48] sm:$0x3]
        %v2695 = vld [vmem:[%s228 + $0x50] sm:$0x3]
        %v2696 = vld [vmem:[%s228 + $0x58] sm:$0x3]
        %v2697 = vld [vmem:[%s228 + $0x60] sm:$0x3]
        %v2698 = vld [vmem:[%s228 + $0x68] sm:$0x3]
        %v2699 = vld [vmem:[%s228 + $0x70] sm:$0x3]
        %v2700 = vld [vmem:[%s228 + $0x78] sm:$0x3]
        %v2717 = vcombine.low %v2685, %v2686
        %v2718 = vcombine.low %v2687, %v2688
        %v2720 = vunpack.c.l.s4 1983009808
        %v2721 = vunpack.c.0.s8 %v2720
        %v2722 = vlaneseq
        %v2723 = vshrl.u32 %v2722, 7
        %v2724 = vsub.s32 %v2721, %v2723
        %v2725 = vrot.slane %v2717, %v2724
        %v2727 = vunpack.c.l.s4 1983009808
        %v2728 = vunpack.c.0.s8 %v2727
        %v2729 = vlaneseq
        %v2730 = vshrl.u32 %v2729, 7
        %v2731 = vsub.s32 %v2728, %v2730
        %v2732 = vrot.slane %v2718, %v2731
        %v2733 = vcombine.low %v2725, %v2732
        %v2734 = vcombine.low %v2689, %v2690
        %v2735 = vcombine.low %v2691, %v2692
        %v2737 = vunpack.c.l.s4 1983009808
        %v2738 = vunpack.c.0.s8 %v2737
        %v2739 = vlaneseq
        %v2740 = vshrl.u32 %v2739, 7
        %v2741 = vsub.s32 %v2738, %v2740
        %v2742 = vrot.slane %v2734, %v2741
        %v2744 = vunpack.c.l.s4 1983009808
        %v2745 = vunpack.c.0.s8 %v2744
        %v2746 = vlaneseq
        %v2747 = vshrl.u32 %v2746, 7
        %v2748 = vsub.s32 %v2745, %v2747
        %v2749 = vrot.slane %v2735, %v2748
        %v2750 = vcombine.low %v2742, %v2749
        %v2751 = vcombine.low %v2693, %v2694
        %v2752 = vcombine.low %v2695, %v2696
        %v2754 = vunpack.c.l.s4 1983009808
        %v2755 = vunpack.c.0.s8 %v2754
        %v2756 = vlaneseq
        %v2757 = vshrl.u32 %v2756, 7
        %v2758 = vsub.s32 %v2755, %v2757
        %v2759 = vrot.slane %v2751, %v2758
        %v2761 = vunpack.c.l.s4 1983009808
        %v2762 = vunpack.c.0.s8 %v2761
        %v2763 = vlaneseq
        %v2764 = vshrl.u32 %v2763, 7
        %v2765 = vsub.s32 %v2762, %v2764
        %v2766 = vrot.slane %v2752, %v2765
        %v2767 = vcombine.low %v2759, %v2766
        %v2768 = vcombine.low %v2697, %v2698
        %v2769 = vcombine.low %v2699, %v2700
        %v2771 = vunpack.c.l.s4 1983009808
        %v2772 = vunpack.c.0.s8 %v2771
        %v2773 = vlaneseq
        %v2774 = vshrl.u32 %v2773, 7
        %v2775 = vsub.s32 %v2772, %v2774
        %v2776 = vrot.slane %v2768, %v2775
        %v2778 = vunpack.c.l.s4 1983009808
        %v2779 = vunpack.c.0.s8 %v2778
        %v2780 = vlaneseq
        %v2781 = vshrl.u32 %v2780, 7
        %v2782 = vsub.s32 %v2779, %v2781
        %v2783 = vrot.slane %v2769, %v2782
        %v2784 = vcombine.low %v2776, %v2783
        %v2785 = vsel %vm245, %v2733, 0
        %v2787 = vsel %vm245, %v2750, 0
        %v2789 = vsel %vm245, %v2767, 0
        %v2791 = vsel %vm245, %v2784, 0
        %v2794 = vsel %vm294, %v2684, 0
        %2796 = vmatprep.subr.mxu0 0.0
        %2797 = vmatpush1.msra.mxu0 %v2794
        %2798 = vmatprep.subr.mxu0 0.0
        %2799 = vmatpush1.msra.mxu0 0.0
        %2800 = vmatprep.subr.mxu0 0.0
        %2801 = vmatpush1.msra.mxu0 0.0
        %2802 = vmatprep.subr.mxu0 0.0
        %2803 = vmatpush1.msra.mxu0 0.0
        %2804 = vmatprep.subr.mxu0 0.0
        %2805 = vmatpush1.msra.mxu0 0.0
        %2806 = vmatprep.subr.mxu0 0.0
        %2807 = vmatpush1.msra.mxu0 0.0
        %2808 = vmatprep.subr.mxu0 0.0
        %2809 = vmatpush1.msra.mxu0 0.0
        %2810 = vmatprep.subr.mxu0 0.0
        %2811 = vmatpush1.msra.mxu0 0.0
        %2812 = vmatprep.subr.mxu0 0.0
        %2813 = vmatpush1.msra.mxu0 0.0
        %2814 = vmatprep.subr.mxu0 0.0
        %2815 = vmatpush1.msra.mxu0 0.0
        %2816 = vmatprep.subr.mxu0 0.0
        %2817 = vmatpush1.msra.mxu0 0.0
        %2818 = vmatprep.subr.mxu0 0.0
        %2819 = vmatpush1.msra.mxu0 0.0
        %2820 = vmatprep.subr.mxu0 0.0
        %2821 = vmatpush1.msra.mxu0 0.0
        %2822 = vmatprep.subr.mxu0 0.0
        %2823 = vmatpush1.msra.mxu0 0.0
        %2824 = vmatprep.subr.mxu0 0.0
        %2825 = vmatpush1.msra.mxu0 0.0
        %2826 = vmatprep.subr.mxu0 0.0
        %2827 = vmatpush1.msra.mxu0 0.0
        %2828 = vmatprep.subr.mxu0 0.0
        %2829 = vmatpush1.msra.mxu0 0.0
        %2830 = vmatprep.subr.mxu0 0.0
        %2831 = vmatpush1.msra.mxu0 0.0
        %2832 = vmatprep.subr.mxu0 0.0
        %2833 = vmatpush1.msra.mxu0 0.0
        %2834 = vmatprep.subr.mxu0 0.0
        %2835 = vmatpush1.msra.mxu0 0.0
        %2836 = vmatprep.subr.mxu0 0.0
        %2837 = vmatpush1.msra.mxu0 0.0
        %2838 = vmatprep.subr.mxu0 0.0
        %2839 = vmatpush1.msra.mxu0 0.0
        %2840 = vmatprep.subr.mxu0 0.0
        %2841 = vmatpush1.msra.mxu0 0.0
        %2842 = vmatprep.subr.mxu0 0.0
        %2843 = vmatpush1.msra.mxu0 0.0
        %2844 = vmatprep.subr.mxu0 0.0
        %2845 = vmatpush1.msra.mxu0 0.0
        %2846 = vmatprep.subr.mxu0 0.0
        %2847 = vmatpush1.msra.mxu0 0.0
        %2848 = vmatprep.subr.mxu0 0.0
        %2849 = vmatpush1.msra.mxu0 0.0
        %2850 = vmatprep.subr.mxu0 0.0
        %2851 = vmatpush1.msra.mxu0 0.0
        %2852 = vmatprep.subr.mxu0 0.0
        %2853 = vmatpush1.msra.mxu0 0.0
        %2854 = vmatprep.subr.mxu0 0.0
        %2855 = vmatpush1.msra.mxu0 0.0
        %2856 = vmatprep.subr.mxu0 0.0
        %2857 = vmatpush1.msra.mxu0 0.0
        %2858 = vmatprep.subr.mxu0 0.0
        %2859 = vmatpush1.msra.mxu0 0.0
        %2860 = vmatprep.mubr.f32.mxu0 0.0
        %2861 = vmatmul.mubr.f32.gmra.mrb[0].mxu0 %v2785
        %v2862 = vpop.f32.mrb[0].mxu0
        %v2863 = vadd.f32 0.0, %v2862
        %v2864 = vpop.f32.mrb[0].mxu0
        %2865 = vmatprep.mubr.f32.mxu0 0.0
        %2866 = vmatmul.mubr.f32.gmra.mrb[0].mxu0 %v2787
        %v2867 = vpop.f32.mrb[0].mxu0
        %v2868 = vadd.f32 0.0, %v2867
        %v2869 = vpop.f32.mrb[0].mxu0
        %2870 = vmatprep.mubr.f32.mxu0 0.0
        %2871 = vmatmul.mubr.f32.gmra.mrb[0].mxu0 %v2789
        %v2872 = vpop.f32.mrb[0].mxu0
        %v2873 = vadd.f32 0.0, %v2872
        %v2874 = vpop.f32.mrb[0].mxu0
        %2875 = vmatprep.mubr.f32.mxu0 0.0
        %2876 = vmatmul.mubr.f32.gmra.mrb[0].mxu0 %v2791
        %v2877 = vpop.f32.mrb[0].mxu0
        %v2878 = vadd.f32 0.0, %v2877
        %v2879 = vpop.f32.mrb[0].mxu0
        %2880 = vdwg.mxu0
        %v2881 = vld [vmem:[#allocation2 + $0x6] sm:$0x3]
        %v2882 = vld [vmem:[#allocation2 + $0xe] sm:$0x3]
        %v2883 = vld [vmem:[#allocation2 + $0x16] sm:$0x3]
        %v2884 = vld [vmem:[#allocation2 + $0x1e] sm:$0x3]
        %v2885 = vld [vmem:[#allocation2 + $0x26] sm:$0x3]
        %v2886 = vld [vmem:[#allocation2 + $0x2e] sm:$0x3]
        %v2887 = vld [vmem:[#allocation2 + $0x36] sm:$0x3]
        %v2888 = vld [vmem:[#allocation2 + $0x3e] sm:$0x3]
        %v2889 = vld [vmem:[#allocation2 + $0x46] sm:$0x3]
        %v2890 = vld [vmem:[#allocation2 + $0x4e] sm:$0x3]
        %v2891 = vld [vmem:[#allocation2 + $0x56] sm:$0x3]
        %v2892 = vld [vmem:[#allocation2 + $0x5e] sm:$0x3]
        %v2893 = vld [vmem:[#allocation2 + $0x66] sm:$0x3]
        %v2894 = vld [vmem:[#allocation2 + $0x6e] sm:$0x3]
        %v2895 = vld [vmem:[#allocation2 + $0x76] sm:$0x3]
        %v2896 = vld [vmem:[#allocation2 + $0x7e] sm:$0x3]
        %v2901 = vcombine.high %v2863, %v2863
        %v2903 = vunpack.c.l.s4 1983009808
        %v2904 = vunpack.c.0.s8 %v2903
        %v2905 = vlaneseq
        %v2906 = vshrl.u32 %v2905, 7
        %v2907 = vsub.s32 %v2904, %v2906
        %v2908 = vrot.slane %v2863, %v2907
        %v2910 = vunpack.c.l.s4 1983009808
        %v2911 = vunpack.c.0.s8 %v2910
        %v2912 = vlaneseq
        %v2913 = vshrl.u32 %v2912, 7
        %v2914 = vsub.s32 %v2911, %v2913
        %v2915 = vrot.slane %v2901, %v2914
        %v2916 = vcombine.high %v2908, %v2908
        %v2917 = vcombine.high %v2915, %v2915
        %v2918 = vcombine.high %v2868, %v2868
        %v2920 = vunpack.c.l.s4 1983009808
        %v2921 = vunpack.c.0.s8 %v2920
        %v2922 = vlaneseq
        %v2923 = vshrl.u32 %v2922, 7
        %v2924 = vsub.s32 %v2921, %v2923
        %v2925 = vrot.slane %v2868, %v2924
        %v2927 = vunpack.c.l.s4 1983009808
        %v2928 = vunpack.c.0.s8 %v2927
        %v2929 = vlaneseq
        %v2930 = vshrl.u32 %v2929, 7
        %v2931 = vsub.s32 %v2928, %v2930
        %v2932 = vrot.slane %v2918, %v2931
        %v2933 = vcombine.high %v2925, %v2925
        %v2934 = vcombine.high %v2932, %v2932
        %v2935 = vcombine.high %v2873, %v2873
        %v2937 = vunpack.c.l.s4 1983009808
        %v2938 = vunpack.c.0.s8 %v2937
        %v2939 = vlaneseq
        %v2940 = vshrl.u32 %v2939, 7
        %v2941 = vsub.s32 %v2938, %v2940
        %v2942 = vrot.slane %v2873, %v2941
        %v2944 = vunpack.c.l.s4 1983009808
        %v2945 = vunpack.c.0.s8 %v2944
        %v2946 = vlaneseq
        %v2947 = vshrl.u32 %v2946, 7
        %v2948 = vsub.s32 %v2945, %v2947
        %v2949 = vrot.slane %v2935, %v2948
        %v2950 = vcombine.high %v2942, %v2942
        %v2951 = vcombine.high %v2949, %v2949
        %v2952 = vcombine.high %v2878, %v2878
        %v2954 = vunpack.c.l.s4 1983009808
        %v2955 = vunpack.c.0.s8 %v2954
        %v2956 = vlaneseq
        %v2957 = vshrl.u32 %v2956, 7
        %v2958 = vsub.s32 %v2955, %v2957
        %v2959 = vrot.slane %v2878, %v2958
        %v2961 = vunpack.c.l.s4 1983009808
        %v2962 = vunpack.c.0.s8 %v2961
        %v2963 = vlaneseq
        %v2964 = vshrl.u32 %v2963, 7
        %v2965 = vsub.s32 %v2962, %v2964
        %v2966 = vrot.slane %v2952, %v2965
        %v2967 = vcombine.high %v2959, %v2959
        %v2968 = vcombine.high %v2966, %v2966
        %v2985 = vadd.f32 %v2881, %v2908
        %v2986 = vadd.f32 %v2882, %v2916
        %v2987 = vadd.f32 %v2883, %v2915
        %v2988 = vadd.f32 %v2884, %v2917
        %v2989 = vadd.f32 %v2885, %v2925
        %v2990 = vadd.f32 %v2886, %v2933
        %v2991 = vadd.f32 %v2887, %v2932
        %v2992 = vadd.f32 %v2888, %v2934
        %v2993 = vadd.f32 %v2889, %v2942
        %v2994 = vadd.f32 %v2890, %v2950
        %v2995 = vadd.f32 %v2891, %v2949
        %v2996 = vadd.f32 %v2892, %v2951
        %v2997 = vadd.f32 %v2893, %v2959
        %v2998 = vadd.f32 %v2894, %v2967
        %v2999 = vadd.f32 %v2895, %v2966
        %v3000 = vadd.f32 %v2896, %v2968
        %3001 = vst.msk [vmem:[#allocation2 + $0x6] sm:$0x3] %vm2424, %v2985
        %3002 = vst.msk [vmem:[#allocation2 + $0xe] sm:$0x3] %vm2424, %v2986
        %3003 = vst.msk [vmem:[#allocation2 + $0x16] sm:$0x3] %vm2424, %v2987
        %3004 = vst.msk [vmem:[#allocation2 + $0x1e] sm:$0x3] %vm2424, %v2988
        %3005 = vst.msk [vmem:[#allocation2 + $0x26] sm:$0x3] %vm2424, %v2989
        %3006 = vst.msk [vmem:[#allocation2 + $0x2e] sm:$0x3] %vm2424, %v2990
        %3007 = vst.msk [vmem:[#allocation2 + $0x36] sm:$0x3] %vm2424, %v2991
        %3008 = vst.msk [vmem:[#allocation2 + $0x3e] sm:$0x3] %vm2424, %v2992
        %3009 = vst.msk [vmem:[#allocation2 + $0x46] sm:$0x3] %vm2424, %v2993
        %3010 = vst.msk [vmem:[#allocation2 + $0x4e] sm:$0x3] %vm2424, %v2994
        %3011 = vst.msk [vmem:[#allocation2 + $0x56] sm:$0x3] %vm2424, %v2995
        %3012 = vst.msk [vmem:[#allocation2 + $0x5e] sm:$0x3] %vm2424, %v2996
        %3013 = vst.msk [vmem:[#allocation2 + $0x66] sm:$0x3] %vm2424, %v2997
        %3014 = vst.msk [vmem:[#allocation2 + $0x6e] sm:$0x3] %vm2424, %v2998
        %3015 = vst.msk [vmem:[#allocation2 + $0x76] sm:$0x3] %vm2424, %v2999
        %3016 = vst.msk [vmem:[#allocation2 + $0x7e] sm:$0x3] %vm2424, %v3000
        %s3017 = scalar_lea.vmem %s1, 56
        %v3018 = vld [vmem:[%s3017] sm:$0xf]
        %v3019 = vld [vmem:[%s228 + $0x6] sm:$0x3]
        %v3020 = vld [vmem:[%s228 + $0xe] sm:$0x3]
        %v3021 = vld [vmem:[%s228 + $0x16] sm:$0x3]
        %v3022 = vld [vmem:[%s228 + $0x1e] sm:$0x3]
        %v3023 = vld [vmem:[%s228 + $0x26] sm:$0x3]
        %v3024 = vld [vmem:[%s228 + $0x2e] sm:$0x3]
        %v3025 = vld [vmem:[%s228 + $0x36] sm:$0x3]
        %v3026 = vld [vmem:[%s228 + $0x3e] sm:$0x3]
        %v3027 = vld [vmem:[%s228 + $0x46] sm:$0x3]
        %v3028 = vld [vmem:[%s228 + $0x4e] sm:$0x3]
        %v3029 = vld [vmem:[%s228 + $0x56] sm:$0x3]
        %v3030 = vld [vmem:[%s228 + $0x5e] sm:$0x3]
        %v3031 = vld [vmem:[%s228 + $0x66] sm:$0x3]
        %v3032 = vld [vmem:[%s228 + $0x6e] sm:$0x3]
        %v3033 = vld [vmem:[%s228 + $0x76] sm:$0x3]
        %v3034 = vld [vmem:[%s228 + $0x7e] sm:$0x3]
        %v3051 = vcombine.low %v3019, %v3020
        %v3052 = vcombine.low %v3021, %v3022
        %v3054 = vunpack.c.l.s4 1983009808
        %v3055 = vunpack.c.0.s8 %v3054
        %v3056 = vlaneseq
        %v3057 = vshrl.u32 %v3056, 7
        %v3058 = vsub.s32 %v3055, %v3057
        %v3059 = vrot.slane %v3051, %v3058
        %v3061 = vunpack.c.l.s4 1983009808
        %v3062 = vunpack.c.0.s8 %v3061
        %v3063 = vlaneseq
        %v3064 = vshrl.u32 %v3063, 7
        %v3065 = vsub.s32 %v3062, %v3064
        %v3066 = vrot.slane %v3052, %v3065
        %v3067 = vcombine.low %v3059, %v3066
        %v3068 = vcombine.low %v3023, %v3024
        %v3069 = vcombine.low %v3025, %v3026
        %v3071 = vunpack.c.l.s4 1983009808
        %v3072 = vunpack.c.0.s8 %v3071
        %v3073 = vlaneseq
        %v3074 = vshrl.u32 %v3073, 7
        %v3075 = vsub.s32 %v3072, %v3074
        %v3076 = vrot.slane %v3068, %v3075
        %v3078 = vunpack.c.l.s4 1983009808
        %v3079 = vunpack.c.0.s8 %v3078
        %v3080 = vlaneseq
        %v3081 = vshrl.u32 %v3080, 7
        %v3082 = vsub.s32 %v3079, %v3081
        %v3083 = vrot.slane %v3069, %v3082
        %v3084 = vcombine.low %v3076, %v3083
        %v3085 = vcombine.low %v3027, %v3028
        %v3086 = vcombine.low %v3029, %v3030
        %v3088 = vunpack.c.l.s4 1983009808
        %v3089 = vunpack.c.0.s8 %v3088
        %v3090 = vlaneseq
        %v3091 = vshrl.u32 %v3090, 7
        %v3092 = vsub.s32 %v3089, %v3091
        %v3093 = vrot.slane %v3085, %v3092
        %v3095 = vunpack.c.l.s4 1983009808
        %v3096 = vunpack.c.0.s8 %v3095
        %v3097 = vlaneseq
        %v3098 = vshrl.u32 %v3097, 7
        %v3099 = vsub.s32 %v3096, %v3098
        %v3100 = vrot.slane %v3086, %v3099
        %v3101 = vcombine.low %v3093, %v3100
        %v3102 = vcombine.low %v3031, %v3032
        %v3103 = vcombine.low %v3033, %v3034
        %v3105 = vunpack.c.l.s4 1983009808
        %v3106 = vunpack.c.0.s8 %v3105
        %v3107 = vlaneseq
        %v3108 = vshrl.u32 %v3107, 7
        %v3109 = vsub.s32 %v3106, %v3108
        %v3110 = vrot.slane %v3102, %v3109
        %v3112 = vunpack.c.l.s4 1983009808
        %v3113 = vunpack.c.0.s8 %v3112
        %v3114 = vlaneseq
        %v3115 = vshrl.u32 %v3114, 7
        %v3116 = vsub.s32 %v3113, %v3115
        %v3117 = vrot.slane %v3103, %v3116
        %v3118 = vcombine.low %v3110, %v3117
        %v3119 = vsel %vm245, %v3067, 0
        %v3121 = vsel %vm245, %v3084, 0
        %v3123 = vsel %vm245, %v3101, 0
        %v3125 = vsel %vm245, %v3118, 0
        %v3128 = vsel %vm294, %v3018, 0
        %3130 = vmatprep.subr.mxu0 0.0
        %3131 = vmatpush1.msra.mxu0 %v3128
        %3132 = vmatprep.subr.mxu0 0.0
        %3133 = vmatpush1.msra.mxu0 0.0
        %3134 = vmatprep.subr.mxu0 0.0
        %3135 = vmatpush1.msra.mxu0 0.0
        %3136 = vmatprep.subr.mxu0 0.0
        %3137 = vmatpush1.msra.mxu0 0.0
        %3138 = vmatprep.subr.mxu0 0.0
        %3139 = vmatpush1.msra.mxu0 0.0
        %3140 = vmatprep.subr.mxu0 0.0
        %3141 = vmatpush1.msra.mxu0 0.0
        %3142 = vmatprep.subr.mxu0 0.0
        %3143 = vmatpush1.msra.mxu0 0.0
        %3144 = vmatprep.subr.mxu0 0.0
        %3145 = vmatpush1.msra.mxu0 0.0
        %3146 = vmatprep.subr.mxu0 0.0
        %3147 = vmatpush1.msra.mxu0 0.0
        %3148 = vmatprep.subr.mxu0 0.0
        %3149 = vmatpush1.msra.mxu0 0.0
        %3150 = vmatprep.subr.mxu0 0.0
        %3151 = vmatpush1.msra.mxu0 0.0
        %3152 = vmatprep.subr.mxu0 0.0
        %3153 = vmatpush1.msra.mxu0 0.0
        %3154 = vmatprep.subr.mxu0 0.0
        %3155 = vmatpush1.msra.mxu0 0.0
        %3156 = vmatprep.subr.mxu0 0.0
        %3157 = vmatpush1.msra.mxu0 0.0
        %3158 = vmatprep.subr.mxu0 0.0
        %3159 = vmatpush1.msra.mxu0 0.0
        %3160 = vmatprep.subr.mxu0 0.0
        %3161 = vmatpush1.msra.mxu0 0.0
        %3162 = vmatprep.subr.mxu0 0.0
        %3163 = vmatpush1.msra.mxu0 0.0
        %3164 = vmatprep.subr.mxu0 0.0
        %3165 = vmatpush1.msra.mxu0 0.0
        %3166 = vmatprep.subr.mxu0 0.0
        %3167 = vmatpush1.msra.mxu0 0.0
        %3168 = vmatprep.subr.mxu0 0.0
        %3169 = vmatpush1.msra.mxu0 0.0
        %3170 = vmatprep.subr.mxu0 0.0
        %3171 = vmatpush1.msra.mxu0 0.0
        %3172 = vmatprep.subr.mxu0 0.0
        %3173 = vmatpush1.msra.mxu0 0.0
        %3174 = vmatprep.subr.mxu0 0.0
        %3175 = vmatpush1.msra.mxu0 0.0
        %3176 = vmatprep.subr.mxu0 0.0
        %3177 = vmatpush1.msra.mxu0 0.0
        %3178 = vmatprep.subr.mxu0 0.0
        %3179 = vmatpush1.msra.mxu0 0.0
        %3180 = vmatprep.subr.mxu0 0.0
        %3181 = vmatpush1.msra.mxu0 0.0
        %3182 = vmatprep.subr.mxu0 0.0
        %3183 = vmatpush1.msra.mxu0 0.0
        %3184 = vmatprep.subr.mxu0 0.0
        %3185 = vmatpush1.msra.mxu0 0.0
        %3186 = vmatprep.subr.mxu0 0.0
        %3187 = vmatpush1.msra.mxu0 0.0
        %3188 = vmatprep.subr.mxu0 0.0
        %3189 = vmatpush1.msra.mxu0 0.0
        %3190 = vmatprep.subr.mxu0 0.0
        %3191 = vmatpush1.msra.mxu0 0.0
        %3192 = vmatprep.subr.mxu0 0.0
        %3193 = vmatpush1.msra.mxu0 0.0
        %3194 = vmatprep.mubr.f32.mxu0 0.0
        %3195 = vmatmul.mubr.f32.gmra.mrb[0].mxu0 %v3119
        %v3196 = vpop.f32.mrb[0].mxu0
        %v3197 = vadd.f32 0.0, %v3196
        %v3198 = vpop.f32.mrb[0].mxu0
        %3199 = vmatprep.mubr.f32.mxu0 0.0
        %3200 = vmatmul.mubr.f32.gmra.mrb[0].mxu0 %v3121
        %v3201 = vpop.f32.mrb[0].mxu0
        %v3202 = vadd.f32 0.0, %v3201
        %v3203 = vpop.f32.mrb[0].mxu0
        %3204 = vmatprep.mubr.f32.mxu0 0.0
        %3205 = vmatmul.mubr.f32.gmra.mrb[0].mxu0 %v3123
        %v3206 = vpop.f32.mrb[0].mxu0
        %v3207 = vadd.f32 0.0, %v3206
        %v3208 = vpop.f32.mrb[0].mxu0
        %3209 = vmatprep.mubr.f32.mxu0 0.0
        %3210 = vmatmul.mubr.f32.gmra.mrb[0].mxu0 %v3125
        %v3211 = vpop.f32.mrb[0].mxu0
        %v3212 = vadd.f32 0.0, %v3211
        %v3213 = vpop.f32.mrb[0].mxu0
        %3214 = vdwg.mxu0
        %v3215 = vld [vmem:[#allocation2] sm:$0x3]
        %v3216 = vld [vmem:[#allocation2 + $0x8] sm:$0x3]
        %v3217 = vld [vmem:[#allocation2 + $0x10] sm:$0x3]
        %v3218 = vld [vmem:[#allocation2 + $0x18] sm:$0x3]
        %v3219 = vld [vmem:[#allocation2 + $0x20] sm:$0x3]
        %v3220 = vld [vmem:[#allocation2 + $0x28] sm:$0x3]
        %v3221 = vld [vmem:[#allocation2 + $0x30] sm:$0x3]
        %v3222 = vld [vmem:[#allocation2 + $0x38] sm:$0x3]
        %v3223 = vld [vmem:[#allocation2 + $0x40] sm:$0x3]
        %v3224 = vld [vmem:[#allocation2 + $0x48] sm:$0x3]
        %v3225 = vld [vmem:[#allocation2 + $0x50] sm:$0x3]
        %v3226 = vld [vmem:[#allocation2 + $0x58] sm:$0x3]
        %v3227 = vld [vmem:[#allocation2 + $0x60] sm:$0x3]
        %v3228 = vld [vmem:[#allocation2 + $0x68] sm:$0x3]
        %v3229 = vld [vmem:[#allocation2 + $0x70] sm:$0x3]
        %v3230 = vld [vmem:[#allocation2 + $0x78] sm:$0x3]
        %v3235 = vcombine.high %v3197, %v3197
        %v3237 = vunpack.c.l.s4 1983009808
        %v3238 = vunpack.c.0.s8 %v3237
        %v3239 = vlaneseq
        %v3240 = vshrl.u32 %v3239, 7
        %v3241 = vsub.s32 %v3238, %v3240
        %v3242 = vrot.slane %v3197, %v3241
        %v3244 = vunpack.c.l.s4 1983009808
        %v3245 = vunpack.c.0.s8 %v3244
        %v3246 = vlaneseq
        %v3247 = vshrl.u32 %v3246, 7
        %v3248 = vsub.s32 %v3245, %v3247
        %v3249 = vrot.slane %v3235, %v3248
        %v3250 = vcombine.high %v3242, %v3242
        %v3251 = vcombine.high %v3249, %v3249
        %v3252 = vcombine.high %v3202, %v3202
        %v3254 = vunpack.c.l.s4 1983009808
        %v3255 = vunpack.c.0.s8 %v3254
        %v3256 = vlaneseq
        %v3257 = vshrl.u32 %v3256, 7
        %v3258 = vsub.s32 %v3255, %v3257
        %v3259 = vrot.slane %v3202, %v3258
        %v3261 = vunpack.c.l.s4 1983009808
        %v3262 = vunpack.c.0.s8 %v3261
        %v3263 = vlaneseq
        %v3264 = vshrl.u32 %v3263, 7
        %v3265 = vsub.s32 %v3262, %v3264
        %v3266 = vrot.slane %v3252, %v3265
        %v3267 = vcombine.high %v3259, %v3259
        %v3268 = vcombine.high %v3266, %v3266
        %v3269 = vcombine.high %v3207, %v3207
        %v3271 = vunpack.c.l.s4 1983009808
        %v3272 = vunpack.c.0.s8 %v3271
        %v3273 = vlaneseq
        %v3274 = vshrl.u32 %v3273, 7
        %v3275 = vsub.s32 %v3272, %v3274
        %v3276 = vrot.slane %v3207, %v3275
        %v3278 = vunpack.c.l.s4 1983009808
        %v3279 = vunpack.c.0.s8 %v3278
        %v3280 = vlaneseq
        %v3281 = vshrl.u32 %v3280, 7
        %v3282 = vsub.s32 %v3279, %v3281
        %v3283 = vrot.slane %v3269, %v3282
        %v3284 = vcombine.high %v3276, %v3276
        %v3285 = vcombine.high %v3283, %v3283
        %v3286 = vcombine.high %v3212, %v3212
        %v3288 = vunpack.c.l.s4 1983009808
        %v3289 = vunpack.c.0.s8 %v3288
        %v3290 = vlaneseq
        %v3291 = vshrl.u32 %v3290, 7
        %v3292 = vsub.s32 %v3289, %v3291
        %v3293 = vrot.slane %v3212, %v3292
        %v3295 = vunpack.c.l.s4 1983009808
        %v3296 = vunpack.c.0.s8 %v3295
        %v3297 = vlaneseq
        %v3298 = vshrl.u32 %v3297, 7
        %v3299 = vsub.s32 %v3296, %v3298
        %v3300 = vrot.slane %v3286, %v3299
        %v3301 = vcombine.high %v3293, %v3293
        %v3302 = vcombine.high %v3300, %v3300
        %v3319 = vadd.f32 %v3215, %v3242
        %v3320 = vadd.f32 %v3216, %v3250
        %v3321 = vadd.f32 %v3217, %v3249
        %v3322 = vadd.f32 %v3218, %v3251
        %v3323 = vadd.f32 %v3219, %v3259
        %v3324 = vadd.f32 %v3220, %v3267
        %v3325 = vadd.f32 %v3221, %v3266
        %v3326 = vadd.f32 %v3222, %v3268
        %v3327 = vadd.f32 %v3223, %v3276
        %v3328 = vadd.f32 %v3224, %v3284
        %v3329 = vadd.f32 %v3225, %v3283
        %v3330 = vadd.f32 %v3226, %v3285
        %v3331 = vadd.f32 %v3227, %v3293
        %v3332 = vadd.f32 %v3228, %v3301
        %v3333 = vadd.f32 %v3229, %v3300
        %v3334 = vadd.f32 %v3230, %v3302
        %3335 = vst.msk [vmem:[#allocation2] sm:$0x3] %vm2424, %v3319
        %3336 = vst.msk [vmem:[#allocation2 + $0x8] sm:$0x3] %vm2424, %v3320
        %3337 = vst.msk [vmem:[#allocation2 + $0x10] sm:$0x3] %vm2424, %v3321
        %3338 = vst.msk [vmem:[#allocation2 + $0x18] sm:$0x3] %vm2424, %v3322
        %3339 = vst.msk [vmem:[#allocation2 + $0x20] sm:$0x3] %vm2424, %v3323
        %3340 = vst.msk [vmem:[#allocation2 + $0x28] sm:$0x3] %vm2424, %v3324
        %3341 = vst.msk [vmem:[#allocation2 + $0x30] sm:$0x3] %vm2424, %v3325
        %3342 = vst.msk [vmem:[#allocation2 + $0x38] sm:$0x3] %vm2424, %v3326
        %3343 = vst.msk [vmem:[#allocation2 + $0x40] sm:$0x3] %vm2424, %v3327
        %3344 = vst.msk [vmem:[#allocation2 + $0x48] sm:$0x3] %vm2424, %v3328
        %3345 = vst.msk [vmem:[#allocation2 + $0x50] sm:$0x3] %vm2424, %v3329
        %3346 = vst.msk [vmem:[#allocation2 + $0x58] sm:$0x3] %vm2424, %v3330
        %3347 = vst.msk [vmem:[#allocation2 + $0x60] sm:$0x3] %vm2424, %v3331
        %3348 = vst.msk [vmem:[#allocation2 + $0x68] sm:$0x3] %vm2424, %v3332
        %3349 = vst.msk [vmem:[#allocation2 + $0x70] sm:$0x3] %vm2424, %v3333
        %3350 = vst.msk [vmem:[#allocation2 + $0x78] sm:$0x3] %vm2424, %v3334
        %s3351 = scalar_lea.vmem %s1, 60
        %v3352 = vld [vmem:[%s3351] sm:$0xf]
        %s3353 = sadd.s32 48, %s227
        %s3354 = scalar_lea.vmem %s195, %s3353
        %v3355 = vld [vmem:[%s3354] sm:$0x3]
        %v3356 = vld [vmem:[%s3354 + $0x8] sm:$0x3]
        %v3357 = vld [vmem:[%s3354 + $0x40] sm:$0x3]
        %v3358 = vld [vmem:[%s3354 + $0x48] sm:$0x3]
        %v3363 = vcombine.low %v3355, %v3356
        %v3364 = vcombine.low %v3357, %v3358
        %v3366 = vunpack.c.l.s4 1983009808
        %v3367 = vunpack.c.0.s8 %v3366
        %v3368 = vlaneseq
        %v3369 = vshrl.u32 %v3368, 7
        %v3370 = vsub.s32 %v3367, %v3369
        %v3371 = vrot.slane %v3363, %v3370
        %v3373 = vunpack.c.l.s4 1983009808
        %v3374 = vunpack.c.0.s8 %v3373
        %v3375 = vlaneseq
        %v3376 = vshrl.u32 %v3375, 7
        %v3377 = vsub.s32 %v3374, %v3376
        %v3378 = vrot.slane %v3364, %v3377
        %v3379 = vcombine.low %v3371, %v3378
        %v3380 = vsel %vm245, %v3379, 0
        %v3383 = vsel %vm294, %v3352, 0
        %3385 = vmatprep.subr.mxu0 0.0
        %3386 = vmatpush1.msra.mxu0 %v3383
        %3387 = vmatprep.subr.mxu0 0.0
        %3388 = vmatpush1.msra.mxu0 0.0
        %3389 = vmatprep.subr.mxu0 0.0
        %3390 = vmatpush1.msra.mxu0 0.0
        %3391 = vmatprep.subr.mxu0 0.0
        %3392 = vmatpush1.msra.mxu0 0.0
        %3393 = vmatprep.subr.mxu0 0.0
        %3394 = vmatpush1.msra.mxu0 0.0
        %3395 = vmatprep.subr.mxu0 0.0
        %3396 = vmatpush1.msra.mxu0 0.0
        %3397 = vmatprep.subr.mxu0 0.0
        %3398 = vmatpush1.msra.mxu0 0.0
        %3399 = vmatprep.subr.mxu0 0.0
        %3400 = vmatpush1.msra.mxu0 0.0
        %3401 = vmatprep.subr.mxu0 0.0
        %3402 = vmatpush1.msra.mxu0 0.0
        %3403 = vmatprep.subr.mxu0 0.0
        %3404 = vmatpush1.msra.mxu0 0.0
        %3405 = vmatprep.subr.mxu0 0.0
        %3406 = vmatpush1.msra.mxu0 0.0
        %3407 = vmatprep.subr.mxu0 0.0
        %3408 = vmatpush1.msra.mxu0 0.0
        %3409 = vmatprep.subr.mxu0 0.0
        %3410 = vmatpush1.msra.mxu0 0.0
        %3411 = vmatprep.subr.mxu0 0.0
        %3412 = vmatpush1.msra.mxu0 0.0
        %3413 = vmatprep.subr.mxu0 0.0
        %3414 = vmatpush1.msra.mxu0 0.0
        %3415 = vmatprep.subr.mxu0 0.0
        %3416 = vmatpush1.msra.mxu0 0.0
        %3417 = vmatprep.subr.mxu0 0.0
        %3418 = vmatpush1.msra.mxu0 0.0
        %3419 = vmatprep.subr.mxu0 0.0
        %3420 = vmatpush1.msra.mxu0 0.0
        %3421 = vmatprep.subr.mxu0 0.0
        %3422 = vmatpush1.msra.mxu0 0.0
        %3423 = vmatprep.subr.mxu0 0.0
        %3424 = vmatpush1.msra.mxu0 0.0
        %3425 = vmatprep.subr.mxu0 0.0
        %3426 = vmatpush1.msra.mxu0 0.0
        %3427 = vmatprep.subr.mxu0 0.0
        %3428 = vmatpush1.msra.mxu0 0.0
        %3429 = vmatprep.subr.mxu0 0.0
        %3430 = vmatpush1.msra.mxu0 0.0
        %3431 = vmatprep.subr.mxu0 0.0
        %3432 = vmatpush1.msra.mxu0 0.0
        %3433 = vmatprep.subr.mxu0 0.0
        %3434 = vmatpush1.msra.mxu0 0.0
        %3435 = vmatprep.subr.mxu0 0.0
        %3436 = vmatpush1.msra.mxu0 0.0
        %3437 = vmatprep.subr.mxu0 0.0
        %3438 = vmatpush1.msra.mxu0 0.0
        %3439 = vmatprep.subr.mxu0 0.0
        %3440 = vmatpush1.msra.mxu0 0.0
        %3441 = vmatprep.subr.mxu0 0.0
        %3442 = vmatpush1.msra.mxu0 0.0
        %3443 = vmatprep.subr.mxu0 0.0
        %3444 = vmatpush1.msra.mxu0 0.0
        %3445 = vmatprep.subr.mxu0 0.0
        %3446 = vmatpush1.msra.mxu0 0.0
        %3447 = vmatprep.subr.mxu0 0.0
        %3448 = vmatpush1.msra.mxu0 0.0
        %3449 = vmatprep.mubr.f32.mxu0 0.0
        %3450 = vmatmul.mubr.f32.gmra.mrb[0].mxu0 %v3380
        %v3451 = vpop.f32.mrb[0].mxu0
        %v3452 = vadd.f32 0.0, %v3451
        %v3453 = vpop.f32.mrb[0].mxu0
        %3454 = vdwg.mxu0
        %v3455 = vld [vmem:[#allocation2 + $0x6] sm:$0x3]
        %v3456 = vld [vmem:[#allocation2 + $0xe] sm:$0x3]
        %v3457 = vld [vmem:[#allocation2 + $0x46] sm:$0x3]
        %v3458 = vld [vmem:[#allocation2 + $0x4e] sm:$0x3]
        %v3460 = vcombine.high %v3452, %v3452
        %v3462 = vunpack.c.l.s4 1983009808
        %v3463 = vunpack.c.0.s8 %v3462
        %v3464 = vlaneseq
        %v3465 = vshrl.u32 %v3464, 7
        %v3466 = vsub.s32 %v3463, %v3465
        %v3467 = vrot.slane %v3452, %v3466
        %v3469 = vunpack.c.l.s4 1983009808
        %v3470 = vunpack.c.0.s8 %v3469
        %v3471 = vlaneseq
        %v3472 = vshrl.u32 %v3471, 7
        %v3473 = vsub.s32 %v3470, %v3472
        %v3474 = vrot.slane %v3460, %v3473
        %v3475 = vcombine.high %v3467, %v3467
        %v3476 = vcombine.high %v3474, %v3474
        %v3481 = vadd.f32 %v3455, %v3467
        %v3482 = vadd.f32 %v3456, %v3475
        %v3483 = vadd.f32 %v3457, %v3474
        %v3484 = vadd.f32 %v3458, %v3476
        %3485 = vst.msk [vmem:[#allocation2 + $0x6] sm:$0x3] %vm2424, %v3481
        %3486 = vst.msk [vmem:[#allocation2 + $0xe] sm:$0x3] %vm2424, %v3482
        %3487 = vst.msk [vmem:[#allocation2 + $0x46] sm:$0x3] %vm2424, %v3483
        %3488 = vst.msk [vmem:[#allocation2 + $0x4e] sm:$0x3] %vm2424, %v3484
        %s3489 = scalar_lea.vmem %s1, 64
        %v3490 = vld [vmem:[%s3489] sm:$0xf]
        %v3491 = vld [vmem:[%s3354] sm:$0xff]
        %v3492 = vld [vmem:[%s3354 + $0x8] sm:$0xff]
        %v3493 = vld [vmem:[%s3354 + $0x40] sm:$0xff]
        %v3494 = vld [vmem:[%s3354 + $0x48] sm:$0xff]
        %v3496 = vsel %vm245, %v3491, 0
        %v3499 = vsel %vm245, %v3492, 0
        %v3502 = vsel %vm245, %v3493, 0
        %v3505 = vsel %vm245, %v3494, 0
        %v3508 = vsel %vm294, %v3490, 0
        %3510 = vmatprep.subr.mxu0 0.0
        %3511 = vmatpush1.msra.mxu0 %v3508
        %3512 = vmatprep.subr.mxu0 0.0
        %3513 = vmatpush1.msra.mxu0 0.0
        %3514 = vmatprep.subr.mxu0 0.0
        %3515 = vmatpush1.msra.mxu0 0.0
        %3516 = vmatprep.subr.mxu0 0.0
        %3517 = vmatpush1.msra.mxu0 0.0
        %3518 = vmatprep.subr.mxu0 0.0
        %3519 = vmatpush1.msra.mxu0 0.0
        %3520 = vmatprep.subr.mxu0 0.0
        %3521 = vmatpush1.msra.mxu0 0.0
        %3522 = vmatprep.subr.mxu0 0.0
        %3523 = vmatpush1.msra.mxu0 0.0
        %3524 = vmatprep.subr.mxu0 0.0
        %3525 = vmatpush1.msra.mxu0 0.0
        %3526 = vmatprep.subr.mxu0 0.0
        %3527 = vmatpush1.msra.mxu0 0.0
        %3528 = vmatprep.subr.mxu0 0.0
        %3529 = vmatpush1.msra.mxu0 0.0
        %3530 = vmatprep.subr.mxu0 0.0
        %3531 = vmatpush1.msra.mxu0 0.0
        %3532 = vmatprep.subr.mxu0 0.0
        %3533 = vmatpush1.msra.mxu0 0.0
        %3534 = vmatprep.subr.mxu0 0.0
        %3535 = vmatpush1.msra.mxu0 0.0
        %3536 = vmatprep.subr.mxu0 0.0
        %3537 = vmatpush1.msra.mxu0 0.0
        %3538 = vmatprep.subr.mxu0 0.0
        %3539 = vmatpush1.msra.mxu0 0.0
        %3540 = vmatprep.subr.mxu0 0.0
        %3541 = vmatpush1.msra.mxu0 0.0
        %3542 = vmatprep.subr.mxu0 0.0
        %3543 = vmatpush1.msra.mxu0 0.0
        %3544 = vmatprep.subr.mxu0 0.0
        %3545 = vmatpush1.msra.mxu0 0.0
        %3546 = vmatprep.subr.mxu0 0.0
        %3547 = vmatpush1.msra.mxu0 0.0
        %3548 = vmatprep.subr.mxu0 0.0
        %3549 = vmatpush1.msra.mxu0 0.0
        %3550 = vmatprep.subr.mxu0 0.0
        %3551 = vmatpush1.msra.mxu0 0.0
        %3552 = vmatprep.subr.mxu0 0.0
        %3553 = vmatpush1.msra.mxu0 0.0
        %3554 = vmatprep.subr.mxu0 0.0
        %3555 = vmatpush1.msra.mxu0 0.0
        %3556 = vmatprep.subr.mxu0 0.0
        %3557 = vmatpush1.msra.mxu0 0.0
        %3558 = vmatprep.subr.mxu0 0.0
        %3559 = vmatpush1.msra.mxu0 0.0
        %3560 = vmatprep.subr.mxu0 0.0
        %3561 = vmatpush1.msra.mxu0 0.0
        %3562 = vmatprep.subr.mxu0 0.0
        %3563 = vmatpush1.msra.mxu0 0.0
        %3564 = vmatprep.subr.mxu0 0.0
        %3565 = vmatpush1.msra.mxu0 0.0
        %3566 = vmatprep.subr.mxu0 0.0
        %3567 = vmatpush1.msra.mxu0 0.0
        %3568 = vmatprep.subr.mxu0 0.0
        %3569 = vmatpush1.msra.mxu0 0.0
        %3570 = vmatprep.subr.mxu0 0.0
        %3571 = vmatpush1.msra.mxu0 0.0
        %3572 = vmatprep.subr.mxu0 0.0
        %3573 = vmatpush1.msra.mxu0 0.0
        %3574 = vmatprep.mubr.f32.mxu0 0.0
        %3575 = vmatmul.mubr.f32.gmra.mrb[0].mxu0 %v3496
        %v3576 = vpop.f32.mrb[0].mxu0
        %v3577 = vadd.f32 0.0, %v3576
        %v3578 = vpop.f32.mrb[0].mxu0
        %3579 = vmatprep.mubr.f32.mxu0 0.0
        %3580 = vmatmul.mubr.f32.gmra.mrb[0].mxu0 %v3499
        %v3581 = vpop.f32.mrb[0].mxu0
        %v3582 = vadd.f32 0.0, %v3581
        %v3583 = vpop.f32.mrb[0].mxu0
        %3584 = vmatprep.mubr.f32.mxu0 0.0
        %3585 = vmatmul.mubr.f32.gmra.mrb[0].mxu0 %v3502
        %v3586 = vpop.f32.mrb[0].mxu0
        %v3587 = vadd.f32 0.0, %v3586
        %v3588 = vpop.f32.mrb[0].mxu0
        %3589 = vmatprep.mubr.f32.mxu0 0.0
        %3590 = vmatmul.mubr.f32.gmra.mrb[0].mxu0 %v3505
        %v3591 = vpop.f32.mrb[0].mxu0
        %v3592 = vadd.f32 0.0, %v3591
        %v3593 = vpop.f32.mrb[0].mxu0
        %3594 = vdwg.mxu0
        %v3595 = vld [vmem:[#allocation2] sm:$0xff]
        %v3596 = vld [vmem:[#allocation2 + $0x8] sm:$0xff]
        %v3597 = vld [vmem:[#allocation2 + $0x40] sm:$0xff]
        %v3598 = vld [vmem:[#allocation2 + $0x48] sm:$0xff]
        %v3599 = vadd.f32 %v3595, %v3577
        %v3600 = vadd.f32 %v3596, %v3582
        %v3601 = vadd.f32 %v3597, %v3587
        %v3602 = vadd.f32 %v3598, %v3592
        %3603 = vst.msk [vmem:[#allocation2] sm:$0xff] %vm209, %v3599
        %3604 = vst.msk [vmem:[#allocation2 + $0x8] sm:$0xff] %vm209, %v3600
        %3605 = vst.msk [vmem:[#allocation2 + $0x40] sm:$0xff] %vm209, %v3601
        %3606 = vst.msk [vmem:[#allocation2 + $0x48] sm:$0xff] %vm209, %v3602
        %s3607 = scalar_lea.vmem %s1, 68
        %v3608 = vld [vmem:[%s3607] sm:$0xf]
        %v3609 = vld [vmem:[%s3354 + $0x6] sm:$0x3]
        %v3610 = vld [vmem:[%s3354 + $0xe] sm:$0x3]
        %v3611 = vld [vmem:[%s3354 + $0x46] sm:$0x3]
        %v3612 = vld [vmem:[%s3354 + $0x4e] sm:$0x3]
        %v3617 = vcombine.low %v3609, %v3610
        %v3618 = vcombine.low %v3611, %v3612
        %v3620 = vunpack.c.l.s4 1983009808
        %v3621 = vunpack.c.0.s8 %v3620
        %v3622 = vlaneseq
        %v3623 = vshrl.u32 %v3622, 7
        %v3624 = vsub.s32 %v3621, %v3623
        %v3625 = vrot.slane %v3617, %v3624
        %v3627 = vunpack.c.l.s4 1983009808
        %v3628 = vunpack.c.0.s8 %v3627
        %v3629 = vlaneseq
        %v3630 = vshrl.u32 %v3629, 7
        %v3631 = vsub.s32 %v3628, %v3630
        %v3632 = vrot.slane %v3618, %v3631
        %v3633 = vcombine.low %v3625, %v3632
        %v3634 = vsel %vm245, %v3633, 0
        %v3637 = vsel %vm294, %v3608, 0
        %3639 = vmatprep.subr.mxu0 0.0
        %3640 = vmatpush1.msra.mxu0 %v3637
        %3641 = vmatprep.subr.mxu0 0.0
        %3642 = vmatpush1.msra.mxu0 0.0
        %3643 = vmatprep.subr.mxu0 0.0
        %3644 = vmatpush1.msra.mxu0 0.0
        %3645 = vmatprep.subr.mxu0 0.0
        %3646 = vmatpush1.msra.mxu0 0.0
        %3647 = vmatprep.subr.mxu0 0.0
        %3648 = vmatpush1.msra.mxu0 0.0
        %3649 = vmatprep.subr.mxu0 0.0
        %3650 = vmatpush1.msra.mxu0 0.0
        %3651 = vmatprep.subr.mxu0 0.0
        %3652 = vmatpush1.msra.mxu0 0.0
        %3653 = vmatprep.subr.mxu0 0.0
        %3654 = vmatpush1.msra.mxu0 0.0
        %3655 = vmatprep.subr.mxu0 0.0
        %3656 = vmatpush1.msra.mxu0 0.0
        %3657 = vmatprep.subr.mxu0 0.0
        %3658 = vmatpush1.msra.mxu0 0.0
        %3659 = vmatprep.subr.mxu0 0.0
        %3660 = vmatpush1.msra.mxu0 0.0
        %3661 = vmatprep.subr.mxu0 0.0
        %3662 = vmatpush1.msra.mxu0 0.0
        %3663 = vmatprep.subr.mxu0 0.0
        %3664 = vmatpush1.msra.mxu0 0.0
        %3665 = vmatprep.subr.mxu0 0.0
        %3666 = vmatpush1.msra.mxu0 0.0
        %3667 = vmatprep.subr.mxu0 0.0
        %3668 = vmatpush1.msra.mxu0 0.0
        %3669 = vmatprep.subr.mxu0 0.0
        %3670 = vmatpush1.msra.mxu0 0.0
        %3671 = vmatprep.subr.mxu0 0.0
        %3672 = vmatpush1.msra.mxu0 0.0
        %3673 = vmatprep.subr.mxu0 0.0
        %3674 = vmatpush1.msra.mxu0 0.0
        %3675 = vmatprep.subr.mxu0 0.0
        %3676 = vmatpush1.msra.mxu0 0.0
        %3677 = vmatprep.subr.mxu0 0.0
        %3678 = vmatpush1.msra.mxu0 0.0
        %3679 = vmatprep.subr.mxu0 0.0
        %3680 = vmatpush1.msra.mxu0 0.0
        %3681 = vmatprep.subr.mxu0 0.0
        %3682 = vmatpush1.msra.mxu0 0.0
        %3683 = vmatprep.subr.mxu0 0.0
        %3684 = vmatpush1.msra.mxu0 0.0
        %3685 = vmatprep.subr.mxu0 0.0
        %3686 = vmatpush1.msra.mxu0 0.0
        %3687 = vmatprep.subr.mxu0 0.0
        %3688 = vmatpush1.msra.mxu0 0.0
        %3689 = vmatprep.subr.mxu0 0.0
        %3690 = vmatpush1.msra.mxu0 0.0
        %3691 = vmatprep.subr.mxu0 0.0
        %3692 = vmatpush1.msra.mxu0 0.0
        %3693 = vmatprep.subr.mxu0 0.0
        %3694 = vmatpush1.msra.mxu0 0.0
        %3695 = vmatprep.subr.mxu0 0.0
        %3696 = vmatpush1.msra.mxu0 0.0
        %3697 = vmatprep.subr.mxu0 0.0
        %3698 = vmatpush1.msra.mxu0 0.0
        %3699 = vmatprep.subr.mxu0 0.0
        %3700 = vmatpush1.msra.mxu0 0.0
        %3701 = vmatprep.subr.mxu0 0.0
        %3702 = vmatpush1.msra.mxu0 0.0
        %3703 = vmatprep.mubr.f32.mxu0 0.0
        %3704 = vmatmul.mubr.f32.gmra.mrb[0].mxu0 %v3634
        %v3705 = vpop.f32.mrb[0].mxu0
        %v3706 = vadd.f32 0.0, %v3705
        %v3707 = vpop.f32.mrb[0].mxu0
        %3708 = vdwg.mxu0
        %v3709 = vld [vmem:[#allocation2] sm:$0x3]
        %v3710 = vld [vmem:[#allocation2 + $0x8] sm:$0x3]
        %v3711 = vld [vmem:[#allocation2 + $0x40] sm:$0x3]
        %v3712 = vld [vmem:[#allocation2 + $0x48] sm:$0x3]
        %v3714 = vcombine.high %v3706, %v3706
        %v3716 = vunpack.c.l.s4 1983009808
        %v3717 = vunpack.c.0.s8 %v3716
        %v3718 = vlaneseq
        %v3719 = vshrl.u32 %v3718, 7
        %v3720 = vsub.s32 %v3717, %v3719
        %v3721 = vrot.slane %v3706, %v3720
        %v3723 = vunpack.c.l.s4 1983009808
        %v3724 = vunpack.c.0.s8 %v3723
        %v3725 = vlaneseq
        %v3726 = vshrl.u32 %v3725, 7
        %v3727 = vsub.s32 %v3724, %v3726
        %v3728 = vrot.slane %v3714, %v3727
        %v3729 = vcombine.high %v3721, %v3721
        %v3730 = vcombine.high %v3728, %v3728
        %v3735 = vadd.f32 %v3709, %v3721
        %v3736 = vadd.f32 %v3710, %v3729
        %v3737 = vadd.f32 %v3711, %v3728
        %v3738 = vadd.f32 %v3712, %v3730
        %3739 = vst.msk [vmem:[#allocation2] sm:$0x3] %vm2424, %v3735
        %3740 = vst.msk [vmem:[#allocation2 + $0x8] sm:$0x3] %vm2424, %v3736
        %3741 = vst.msk [vmem:[#allocation2 + $0x40] sm:$0x3] %vm2424, %v3737
        %3742 = vst.msk [vmem:[#allocation2 + $0x48] sm:$0x3] %vm2424, %v3738
        %s3743 = scalar_lea.vmem %s1, 72
        %v3744 = vld [vmem:[%s3743] sm:$0xf]
        %s3745 = sadd.s32 %s201, 6
        %p3746 = scmp.ge.s32.totalorder %s3745, 0
        %s3747 = sadd.s32 %s201, 8
        %p3748 = scmp.le.s32.totalorder %s3747, 8
        %p3749 = pnand %p3746, %p3748
        %p3750 = pneg %p3749
        // Predicated region
        $region69: #{aspp_forward.1} parent=31 // pred_check
          _
        $region70: #{aspp_forward.1} parent=31 // pred_check_branch
          %3752 = sbr.rel (%p3749) target = $region72
        $region71: #{aspp_forward.1} parent=31 // pred_region
          %p3753 = scmp.gt.s32.totalorder %s3745, 0
          %s3754 = scalar_select %p3753, %s3745, 0
          %p3755 = scmp.lt.s32.totalorder %s3754, 6
          %s3756 = scalar_select %p3755, %s3754, 6
          %s3757 = smul.u32 %s3756, 64
          %s3758 = scalar_lea.vmem %s195, %s3757
          %v3759 = vld [vmem:[%s3758] sm:$0x3]
          %v3760 = vld [vmem:[%s3758 + $0x8] sm:$0x3]
          %v3761 = vld [vmem:[%s3758 + $0x40] sm:$0x3]
          %v3762 = vld [vmem:[%s3758 + $0x48] sm:$0x3]
          %v3767 = vcombine.low %v3759, %v3760
          %v3768 = vcombine.low %v3761, %v3762
          %v3770 = vunpack.c.l.s4 1983009808
          %v3771 = vunpack.c.0.s8 %v3770
          %v3772 = vlaneseq
          %v3773 = vshrl.u32 %v3772, 7
          %v3774 = vsub.s32 %v3771, %v3773
          %v3775 = vrot.slane %v3767, %v3774
          %v3777 = vunpack.c.l.s4 1983009808
          %v3778 = vunpack.c.0.s8 %v3777
          %v3779 = vlaneseq
          %v3780 = vshrl.u32 %v3779, 7
          %v3781 = vsub.s32 %v3778, %v3780
          %v3782 = vrot.slane %v3768, %v3781
          %v3783 = vcombine.low %v3775, %v3782
          %v3784 = vsel %vm245, %v3783, 0
          %v3787 = vsel %vm294, %v3744, 0
          %3789 = vmatprep.subr.mxu0 0.0
          %3790 = vmatpush1.msra.mxu0 %v3787
          %3791 = vmatprep.subr.mxu0 0.0
          %3792 = vmatpush1.msra.mxu0 0.0
          %3793 = vmatprep.subr.mxu0 0.0
          %3794 = vmatpush1.msra.mxu0 0.0
          %3795 = vmatprep.subr.mxu0 0.0
          %3796 = vmatpush1.msra.mxu0 0.0
          %3797 = vmatprep.subr.mxu0 0.0
          %3798 = vmatpush1.msra.mxu0 0.0
          %3799 = vmatprep.subr.mxu0 0.0
          %3800 = vmatpush1.msra.mxu0 0.0
          %3801 = vmatprep.subr.mxu0 0.0
          %3802 = vmatpush1.msra.mxu0 0.0
          %3803 = vmatprep.subr.mxu0 0.0
          %3804 = vmatpush1.msra.mxu0 0.0
          %3805 = vmatprep.subr.mxu0 0.0
          %3806 = vmatpush1.msra.mxu0 0.0
          %3807 = vmatprep.subr.mxu0 0.0
          %3808 = vmatpush1.msra.mxu0 0.0
          %3809 = vmatprep.subr.mxu0 0.0
          %3810 = vmatpush1.msra.mxu0 0.0
          %3811 = vmatprep.subr.mxu0 0.0
          %3812 = vmatpush1.msra.mxu0 0.0
          %3813 = vmatprep.subr.mxu0 0.0
          %3814 = vmatpush1.msra.mxu0 0.0
          %3815 = vmatprep.subr.mxu0 0.0
          %3816 = vmatpush1.msra.mxu0 0.0
          %3817 = vmatprep.subr.mxu0 0.0
          %3818 = vmatpush1.msra.mxu0 0.0
          %3819 = vmatprep.subr.mxu0 0.0
          %3820 = vmatpush1.msra.mxu0 0.0
          %3821 = vmatprep.subr.mxu0 0.0
          %3822 = vmatpush1.msra.mxu0 0.0
          %3823 = vmatprep.subr.mxu0 0.0
          %3824 = vmatpush1.msra.mxu0 0.0
          %3825 = vmatprep.subr.mxu0 0.0
          %3826 = vmatpush1.msra.mxu0 0.0
          %3827 = vmatprep.subr.mxu0 0.0
          %3828 = vmatpush1.msra.mxu0 0.0
          %3829 = vmatprep.subr.mxu0 0.0
          %3830 = vmatpush1.msra.mxu0 0.0
          %3831 = vmatprep.subr.mxu0 0.0
          %3832 = vmatpush1.msra.mxu0 0.0
          %3833 = vmatprep.subr.mxu0 0.0
          %3834 = vmatpush1.msra.mxu0 0.0
          %3835 = vmatprep.subr.mxu0 0.0
          %3836 = vmatpush1.msra.mxu0 0.0
          %3837 = vmatprep.subr.mxu0 0.0
          %3838 = vmatpush1.msra.mxu0 0.0
          %3839 = vmatprep.subr.mxu0 0.0
          %3840 = vmatpush1.msra.mxu0 0.0
          %3841 = vmatprep.subr.mxu0 0.0
          %3842 = vmatpush1.msra.mxu0 0.0
          %3843 = vmatprep.subr.mxu0 0.0
          %3844 = vmatpush1.msra.mxu0 0.0
          %3845 = vmatprep.subr.mxu0 0.0
          %3846 = vmatpush1.msra.mxu0 0.0
          %3847 = vmatprep.subr.mxu0 0.0
          %3848 = vmatpush1.msra.mxu0 0.0
          %3849 = vmatprep.subr.mxu0 0.0
          %3850 = vmatpush1.msra.mxu0 0.0
          %3851 = vmatprep.subr.mxu0 0.0
          %3852 = vmatpush1.msra.mxu0 0.0
          %3853 = vmatprep.mubr.f32.mxu0 0.0
          %3854 = vmatmul.mubr.f32.gmra.mrb[0].mxu0 %v3784
          %v3855 = vpop.f32.mrb[0].mxu0
          %v3856 = vadd.f32 0.0, %v3855
          %v3857 = vpop.f32.mrb[0].mxu0
          %3858 = vdwg.mxu0
          %v3859 = vld [vmem:[%s2393 + $0x6] sm:$0x3]
          %v3860 = vld [vmem:[%s2393 + $0xe] sm:$0x3]
          %v3861 = vld [vmem:[%s2393 + $0x46] sm:$0x3]
          %v3862 = vld [vmem:[%s2393 + $0x4e] sm:$0x3]
          %v3864 = vcombine.high %v3856, %v3856
          %v3866 = vunpack.c.l.s4 1983009808
          %v3867 = vunpack.c.0.s8 %v3866
          %v3868 = vlaneseq
          %v3869 = vshrl.u32 %v3868, 7
          %v3870 = vsub.s32 %v3867, %v3869
          %v3871 = vrot.slane %v3856, %v3870
          %v3873 = vunpack.c.l.s4 1983009808
          %v3874 = vunpack.c.0.s8 %v3873
          %v3875 = vlaneseq
          %v3876 = vshrl.u32 %v3875, 7
          %v3877 = vsub.s32 %v3874, %v3876
          %v3878 = vrot.slane %v3864, %v3877
          %v3879 = vcombine.high %v3871, %v3871
          %v3880 = vcombine.high %v3878, %v3878
          %v3885 = vadd.f32 %v3859, %v3871
          %v3886 = vadd.f32 %v3860, %v3879
          %v3887 = vadd.f32 %v3861, %v3878
          %v3888 = vadd.f32 %v3862, %v3880
          %3889 = vst.msk [vmem:[%s2393 + $0x6] sm:$0x3] %vm2424, %v3885
          %3890 = vst.msk [vmem:[%s2393 + $0xe] sm:$0x3] %vm2424, %v3886
          %3891 = vst.msk [vmem:[%s2393 + $0x46] sm:$0x3] %vm2424, %v3887
          %3892 = vst.msk [vmem:[%s2393 + $0x4e] sm:$0x3] %vm2424, %v3888
        $region72: #{aspp_forward.1} parent=31 // pred_fallthru
          _
        %s3893 = scalar_lea.vmem %s1, 76
        %v3894 = vld [vmem:[%s3893] sm:$0xf]
        // Predicated region
        $region73: #{aspp_forward.1} parent=31 // pred_check
          _
        $region74: #{aspp_forward.1} parent=31 // pred_check_branch
          %3896 = sbr.rel (%p3749) target = $region76
        $region75: #{aspp_forward.1} parent=31 // pred_region
          %p3897 = scmp.gt.s32.totalorder %s3745, 0
          %s3898 = scalar_select %p3897, %s3745, 0
          %p3899 = scmp.lt.s32.totalorder %s3898, 6
          %s3900 = scalar_select %p3899, %s3898, 6
          %s3901 = smul.u32 %s3900, 64
          %s3902 = scalar_lea.vmem %s195, %s3901
          %v3903 = vld [vmem:[%s3902] sm:$0xff]
          %v3904 = vld [vmem:[%s3902 + $0x8] sm:$0xff]
          %v3905 = vld [vmem:[%s3902 + $0x40] sm:$0xff]
          %v3906 = vld [vmem:[%s3902 + $0x48] sm:$0xff]
          %v3908 = vsel %vm245, %v3903, 0
          %v3911 = vsel %vm245, %v3904, 0
          %v3914 = vsel %vm245, %v3905, 0
          %v3917 = vsel %vm245, %v3906, 0
          %v3920 = vsel %vm294, %v3894, 0
          %3922 = vmatprep.subr.mxu0 0.0
          %3923 = vmatpush1.msra.mxu0 %v3920
          %3924 = vmatprep.subr.mxu0 0.0
          %3925 = vmatpush1.msra.mxu0 0.0
          %3926 = vmatprep.subr.mxu0 0.0
          %3927 = vmatpush1.msra.mxu0 0.0
          %3928 = vmatprep.subr.mxu0 0.0
          %3929 = vmatpush1.msra.mxu0 0.0
          %3930 = vmatprep.subr.mxu0 0.0
          %3931 = vmatpush1.msra.mxu0 0.0
          %3932 = vmatprep.subr.mxu0 0.0
          %3933 = vmatpush1.msra.mxu0 0.0
          %3934 = vmatprep.subr.mxu0 0.0
          %3935 = vmatpush1.msra.mxu0 0.0
          %3936 = vmatprep.subr.mxu0 0.0
          %3937 = vmatpush1.msra.mxu0 0.0
          %3938 = vmatprep.subr.mxu0 0.0
          %3939 = vmatpush1.msra.mxu0 0.0
          %3940 = vmatprep.subr.mxu0 0.0
          %3941 = vmatpush1.msra.mxu0 0.0
          %3942 = vmatprep.subr.mxu0 0.0
          %3943 = vmatpush1.msra.mxu0 0.0
          %3944 = vmatprep.subr.mxu0 0.0
          %3945 = vmatpush1.msra.mxu0 0.0
          %3946 = vmatprep.subr.mxu0 0.0
          %3947 = vmatpush1.msra.mxu0 0.0
          %3948 = vmatprep.subr.mxu0 0.0
          %3949 = vmatpush1.msra.mxu0 0.0
          %3950 = vmatprep.subr.mxu0 0.0
          %3951 = vmatpush1.msra.mxu0 0.0
          %3952 = vmatprep.subr.mxu0 0.0
          %3953 = vmatpush1.msra.mxu0 0.0
          %3954 = vmatprep.subr.mxu0 0.0
          %3955 = vmatpush1.msra.mxu0 0.0
          %3956 = vmatprep.subr.mxu0 0.0
          %3957 = vmatpush1.msra.mxu0 0.0
          %3958 = vmatprep.subr.mxu0 0.0
          %3959 = vmatpush1.msra.mxu0 0.0
          %3960 = vmatprep.subr.mxu0 0.0
          %3961 = vmatpush1.msra.mxu0 0.0
          %3962 = vmatprep.subr.mxu0 0.0
          %3963 = vmatpush1.msra.mxu0 0.0
          %3964 = vmatprep.subr.mxu0 0.0
          %3965 = vmatpush1.msra.mxu0 0.0
          %3966 = vmatprep.subr.mxu0 0.0
          %3967 = vmatpush1.msra.mxu0 0.0
          %3968 = vmatprep.subr.mxu0 0.0
          %3969 = vmatpush1.msra.mxu0 0.0
          %3970 = vmatprep.subr.mxu0 0.0
          %3971 = vmatpush1.msra.mxu0 0.0
          %3972 = vmatprep.subr.mxu0 0.0
          %3973 = vmatpush1.msra.mxu0 0.0
          %3974 = vmatprep.subr.mxu0 0.0
          %3975 = vmatpush1.msra.mxu0 0.0
          %3976 = vmatprep.subr.mxu0 0.0
          %3977 = vmatpush1.msra.mxu0 0.0
          %3978 = vmatprep.subr.mxu0 0.0
          %3979 = vmatpush1.msra.mxu0 0.0
          %3980 = vmatprep.subr.mxu0 0.0
          %3981 = vmatpush1.msra.mxu0 0.0
          %3982 = vmatprep.subr.mxu0 0.0
          %3983 = vmatpush1.msra.mxu0 0.0
          %3984 = vmatprep.subr.mxu0 0.0
          %3985 = vmatpush1.msra.mxu0 0.0
          %3986 = vmatprep.mubr.f32.mxu0 0.0
          %3987 = vmatmul.mubr.f32.gmra.mrb[0].mxu0 %v3908
          %v3988 = vpop.f32.mrb[0].mxu0
          %v3989 = vadd.f32 0.0, %v3988
          %v3990 = vpop.f32.mrb[0].mxu0
          %3991 = vmatprep.mubr.f32.mxu0 0.0
          %3992 = vmatmul.mubr.f32.gmra.mrb[0].mxu0 %v3911
          %v3993 = vpop.f32.mrb[0].mxu0
          %v3994 = vadd.f32 0.0, %v3993
          %v3995 = vpop.f32.mrb[0].mxu0
          %3996 = vmatprep.mubr.f32.mxu0 0.0
          %3997 = vmatmul.mubr.f32.gmra.mrb[0].mxu0 %v3914
          %v3998 = vpop.f32.mrb[0].mxu0
          %v3999 = vadd.f32 0.0, %v3998
          %v4000 = vpop.f32.mrb[0].mxu0
          %4001 = vmatprep.mubr.f32.mxu0 0.0
          %4002 = vmatmul.mubr.f32.gmra.mrb[0].mxu0 %v3917
          %v4003 = vpop.f32.mrb[0].mxu0
          %v4004 = vadd.f32 0.0, %v4003
          %v4005 = vpop.f32.mrb[0].mxu0
          %4006 = vdwg.mxu0
          %v4007 = vld [vmem:[%s2393] sm:$0xff]
          %v4008 = vld [vmem:[%s2393 + $0x8] sm:$0xff]
          %v4009 = vld [vmem:[%s2393 + $0x40] sm:$0xff]
          %v4010 = vld [vmem:[%s2393 + $0x48] sm:$0xff]
          %v4011 = vadd.f32 %v4007, %v3989
          %v4012 = vadd.f32 %v4008, %v3994
          %v4013 = vadd.f32 %v4009, %v3999
          %v4014 = vadd.f32 %v4010, %v4004
          %4015 = vst.msk [vmem:[%s2393] sm:$0xff] %vm209, %v4011
          %4016 = vst.msk [vmem:[%s2393 + $0x8] sm:$0xff] %vm209, %v4012
          %4017 = vst.msk [vmem:[%s2393 + $0x40] sm:$0xff] %vm209, %v4013
          %4018 = vst.msk [vmem:[%s2393 + $0x48] sm:$0xff] %vm209, %v4014
        $region76: #{aspp_forward.1} parent=31 // pred_fallthru
          _
        %s4019 = scalar_lea.vmem %s1, 80
        %v4020 = vld [vmem:[%s4019] sm:$0xf]
        // Predicated region
        $region77: #{aspp_forward.1} parent=31 // pred_check
          _
        $region78: #{aspp_forward.1} parent=31 // pred_check_branch
          %4022 = sbr.rel (%p3749) target = $region80
        $region79: #{aspp_forward.1} parent=31 // pred_region
          %p4023 = scmp.gt.s32.totalorder %s3745, 0
          %s4024 = scalar_select %p4023, %s3745, 0
          %p4025 = scmp.lt.s32.totalorder %s4024, 6
          %s4026 = scalar_select %p4025, %s4024, 6
          %s4027 = smul.u32 %s4026, 64
          %s4028 = scalar_lea.vmem %s195, %s4027
          %v4029 = vld [vmem:[%s4028 + $0x6] sm:$0x3]
          %v4030 = vld [vmem:[%s4028 + $0xe] sm:$0x3]
          %v4031 = vld [vmem:[%s4028 + $0x46] sm:$0x3]
          %v4032 = vld [vmem:[%s4028 + $0x4e] sm:$0x3]
          %v4037 = vcombine.low %v4029, %v4030
          %v4038 = vcombine.low %v4031, %v4032
          %v4040 = vunpack.c.l.s4 1983009808
          %v4041 = vunpack.c.0.s8 %v4040
          %v4042 = vlaneseq
          %v4043 = vshrl.u32 %v4042, 7
          %v4044 = vsub.s32 %v4041, %v4043
          %v4045 = vrot.slane %v4037, %v4044
          %v4047 = vunpack.c.l.s4 1983009808
          %v4048 = vunpack.c.0.s8 %v4047
          %v4049 = vlaneseq
          %v4050 = vshrl.u32 %v4049, 7
          %v4051 = vsub.s32 %v4048, %v4050
          %v4052 = vrot.slane %v4038, %v4051
          %v4053 = vcombine.low %v4045, %v4052
          %v4054 = vsel %vm245, %v4053, 0
          %v4057 = vsel %vm294, %v4020, 0
          %4059 = vmatprep.subr.mxu0 0.0
          %4060 = vmatpush1.msra.mxu0 %v4057
          %4061 = vmatprep.subr.mxu0 0.0
          %4062 = vmatpush1.msra.mxu0 0.0
          %4063 = vmatprep.subr.mxu0 0.0
          %4064 = vmatpush1.msra.mxu0 0.0
          %4065 = vmatprep.subr.mxu0 0.0
          %4066 = vmatpush1.msra.mxu0 0.0
          %4067 = vmatprep.subr.mxu0 0.0
          %4068 = vmatpush1.msra.mxu0 0.0
          %4069 = vmatprep.subr.mxu0 0.0
          %4070 = vmatpush1.msra.mxu0 0.0
          %4071 = vmatprep.subr.mxu0 0.0
          %4072 = vmatpush1.msra.mxu0 0.0
          %4073 = vmatprep.subr.mxu0 0.0
          %4074 = vmatpush1.msra.mxu0 0.0
          %4075 = vmatprep.subr.mxu0 0.0
          %4076 = vmatpush1.msra.mxu0 0.0
          %4077 = vmatprep.subr.mxu0 0.0
          %4078 = vmatpush1.msra.mxu0 0.0
          %4079 = vmatprep.subr.mxu0 0.0
          %4080 = vmatpush1.msra.mxu0 0.0
          %4081 = vmatprep.subr.mxu0 0.0
          %4082 = vmatpush1.msra.mxu0 0.0
          %4083 = vmatprep.subr.mxu0 0.0
          %4084 = vmatpush1.msra.mxu0 0.0
          %4085 = vmatprep.subr.mxu0 0.0
          %4086 = vmatpush1.msra.mxu0 0.0
          %4087 = vmatprep.subr.mxu0 0.0
          %4088 = vmatpush1.msra.mxu0 0.0
          %4089 = vmatprep.subr.mxu0 0.0
          %4090 = vmatpush1.msra.mxu0 0.0
          %4091 = vmatprep.subr.mxu0 0.0
          %4092 = vmatpush1.msra.mxu0 0.0
          %4093 = vmatprep.subr.mxu0 0.0
          %4094 = vmatpush1.msra.mxu0 0.0
          %4095 = vmatprep.subr.mxu0 0.0
          %4096 = vmatpush1.msra.mxu0 0.0
          %4097 = vmatprep.subr.mxu0 0.0
          %4098 = vmatpush1.msra.mxu0 0.0
          %4099 = vmatprep.subr.mxu0 0.0
          %4100 = vmatpush1.msra.mxu0 0.0
          %4101 = vmatprep.subr.mxu0 0.0
          %4102 = vmatpush1.msra.mxu0 0.0
          %4103 = vmatprep.subr.mxu0 0.0
          %4104 = vmatpush1.msra.mxu0 0.0
          %4105 = vmatprep.subr.mxu0 0.0
          %4106 = vmatpush1.msra.mxu0 0.0
          %4107 = vmatprep.subr.mxu0 0.0
          %4108 = vmatpush1.msra.mxu0 0.0
          %4109 = vmatprep.subr.mxu0 0.0
          %4110 = vmatpush1.msra.mxu0 0.0
          %4111 = vmatprep.subr.mxu0 0.0
          %4112 = vmatpush1.msra.mxu0 0.0
          %4113 = vmatprep.subr.mxu0 0.0
          %4114 = vmatpush1.msra.mxu0 0.0
          %4115 = vmatprep.subr.mxu0 0.0
          %4116 = vmatpush1.msra.mxu0 0.0
          %4117 = vmatprep.subr.mxu0 0.0
          %4118 = vmatpush1.msra.mxu0 0.0
          %4119 = vmatprep.subr.mxu0 0.0
          %4120 = vmatpush1.msra.mxu0 0.0
          %4121 = vmatprep.subr.mxu0 0.0
          %4122 = vmatpush1.msra.mxu0 0.0
          %4123 = vmatprep.mubr.f32.mxu0 0.0
          %4124 = vmatmul.mubr.f32.gmra.mrb[0].mxu0 %v4054
          %v4125 = vpop.f32.mrb[0].mxu0
          %v4126 = vadd.f32 0.0, %v4125
          %v4127 = vpop.f32.mrb[0].mxu0
          %4128 = vdwg.mxu0
          %v4129 = vld [vmem:[%s2393] sm:$0x3]
          %v4130 = vld [vmem:[%s2393 + $0x8] sm:$0x3]
          %v4131 = vld [vmem:[%s2393 + $0x40] sm:$0x3]
          %v4132 = vld [vmem:[%s2393 + $0x48] sm:$0x3]
          %v4134 = vcombine.high %v4126, %v4126
          %v4136 = vunpack.c.l.s4 1983009808
          %v4137 = vunpack.c.0.s8 %v4136
          %v4138 = vlaneseq
          %v4139 = vshrl.u32 %v4138, 7
          %v4140 = vsub.s32 %v4137, %v4139
          %v4141 = vrot.slane %v4126, %v4140
          %v4143 = vunpack.c.l.s4 1983009808
          %v4144 = vunpack.c.0.s8 %v4143
          %v4145 = vlaneseq
          %v4146 = vshrl.u32 %v4145, 7
          %v4147 = vsub.s32 %v4144, %v4146
          %v4148 = vrot.slane %v4134, %v4147
          %v4149 = vcombine.high %v4141, %v4141
          %v4150 = vcombine.high %v4148, %v4148
          %v4155 = vadd.f32 %v4129, %v4141
          %v4156 = vadd.f32 %v4130, %v4149
          %v4157 = vadd.f32 %v4131, %v4148
          %v4158 = vadd.f32 %v4132, %v4150
          %4159 = vst.msk [vmem:[%s2393] sm:$0x3] %vm2424, %v4155
          %4160 = vst.msk [vmem:[%s2393 + $0x8] sm:$0x3] %vm2424, %v4156
          %4161 = vst.msk [vmem:[%s2393 + $0x40] sm:$0x3] %vm2424, %v4157
          %4162 = vst.msk [vmem:[%s2393 + $0x48] sm:$0x3] %vm2424, %v4158
        $region80: #{aspp_forward.1} parent=31 // pred_fallthru
          _
        %s4163 = scalar_lea.vmem %s1, 84
        %v4164 = vld [vmem:[%s4163] sm:$0xf]
        // Predicated region
        $region81: #{aspp_forward.1} parent=31 // pred_check
          _
        $region82: #{aspp_forward.1} parent=31 // pred_check_branch
          %4166 = sbr.rel (%p3749) target = $region84
        $region83: #{aspp_forward.1} parent=31 // pred_region
          %p4167 = scmp.gt.s32.totalorder %s3745, 0
          %s4168 = scalar_select %p4167, %s3745, 0
          %p4169 = scmp.lt.s32.totalorder %s4168, 6
          %s4170 = scalar_select %p4169, %s4168, 6
          %s4171 = smul.u32 %s4170, 64
          %s4172 = scalar_lea.vmem %s195, %s4171
          %v4173 = vld [vmem:[%s4172] sm:$0x3]
          %v4174 = vld [vmem:[%s4172 + $0x8] sm:$0x3]
          %v4175 = vld [vmem:[%s4172 + $0x10] sm:$0x3]
          %v4176 = vld [vmem:[%s4172 + $0x18] sm:$0x3]
          %v4177 = vld [vmem:[%s4172 + $0x20] sm:$0x3]
          %v4178 = vld [vmem:[%s4172 + $0x28] sm:$0x3]
          %v4179 = vld [vmem:[%s4172 + $0x30] sm:$0x3]
          %v4180 = vld [vmem:[%s4172 + $0x38] sm:$0x3]
          %v4181 = vld [vmem:[%s4172 + $0x40] sm:$0x3]
          %v4182 = vld [vmem:[%s4172 + $0x48] sm:$0x3]
          %v4183 = vld [vmem:[%s4172 + $0x50] sm:$0x3]
          %v4184 = vld [vmem:[%s4172 + $0x58] sm:$0x3]
          %v4185 = vld [vmem:[%s4172 + $0x60] sm:$0x3]
          %v4186 = vld [vmem:[%s4172 + $0x68] sm:$0x3]
          %v4187 = vld [vmem:[%s4172 + $0x70] sm:$0x3]
          %v4188 = vld [vmem:[%s4172 + $0x78] sm:$0x3]
          %v4205 = vcombine.low %v4173, %v4174
          %v4206 = vcombine.low %v4175, %v4176
          %v4208 = vunpack.c.l.s4 1983009808
          %v4209 = vunpack.c.0.s8 %v4208
          %v4210 = vlaneseq
          %v4211 = vshrl.u32 %v4210, 7
          %v4212 = vsub.s32 %v4209, %v4211
          %v4213 = vrot.slane %v4205, %v4212
          %v4215 = vunpack.c.l.s4 1983009808
          %v4216 = vunpack.c.0.s8 %v4215
          %v4217 = vlaneseq
          %v4218 = vshrl.u32 %v4217, 7
          %v4219 = vsub.s32 %v4216, %v4218
          %v4220 = vrot.slane %v4206, %v4219
          %v4221 = vcombine.low %v4213, %v4220
          %v4222 = vcombine.low %v4177, %v4178
          %v4223 = vcombine.low %v4179, %v4180
          %v4225 = vunpack.c.l.s4 1983009808
          %v4226 = vunpack.c.0.s8 %v4225
          %v4227 = vlaneseq
          %v4228 = vshrl.u32 %v4227, 7
          %v4229 = vsub.s32 %v4226, %v4228
          %v4230 = vrot.slane %v4222, %v4229
          %v4232 = vunpack.c.l.s4 1983009808
          %v4233 = vunpack.c.0.s8 %v4232
          %v4234 = vlaneseq
          %v4235 = vshrl.u32 %v4234, 7
          %v4236 = vsub.s32 %v4233, %v4235
          %v4237 = vrot.slane %v4223, %v4236
          %v4238 = vcombine.low %v4230, %v4237
          %v4239 = vcombine.low %v4181, %v4182
          %v4240 = vcombine.low %v4183, %v4184
          %v4242 = vunpack.c.l.s4 1983009808
          %v4243 = vunpack.c.0.s8 %v4242
          %v4244 = vlaneseq
          %v4245 = vshrl.u32 %v4244, 7
          %v4246 = vsub.s32 %v4243, %v4245
          %v4247 = vrot.slane %v4239, %v4246
          %v4249 = vunpack.c.l.s4 1983009808
          %v4250 = vunpack.c.0.s8 %v4249
          %v4251 = vlaneseq
          %v4252 = vshrl.u32 %v4251, 7
          %v4253 = vsub.s32 %v4250, %v4252
          %v4254 = vrot.slane %v4240, %v4253
          %v4255 = vcombine.low %v4247, %v4254
          %v4256 = vcombine.low %v4185, %v4186
          %v4257 = vcombine.low %v4187, %v4188
          %v4259 = vunpack.c.l.s4 1983009808
          %v4260 = vunpack.c.0.s8 %v4259
          %v4261 = vlaneseq
          %v4262 = vshrl.u32 %v4261, 7
          %v4263 = vsub.s32 %v4260, %v4262
          %v4264 = vrot.slane %v4256, %v4263
          %v4266 = vunpack.c.l.s4 1983009808
          %v4267 = vunpack.c.0.s8 %v4266
          %v4268 = vlaneseq
          %v4269 = vshrl.u32 %v4268, 7
          %v4270 = vsub.s32 %v4267, %v4269
          %v4271 = vrot.slane %v4257, %v4270
          %v4272 = vcombine.low %v4264, %v4271
          %v4273 = vsel %vm245, %v4221, 0
          %v4275 = vsel %vm245, %v4238, 0
          %v4277 = vsel %vm245, %v4255, 0
          %v4279 = vsel %vm245, %v4272, 0
          %v4282 = vsel %vm294, %v4164, 0
          %4284 = vmatprep.subr.mxu0 0.0
          %4285 = vmatpush1.msra.mxu0 %v4282
          %4286 = vmatprep.subr.mxu0 0.0
          %4287 = vmatpush1.msra.mxu0 0.0
          %4288 = vmatprep.subr.mxu0 0.0
          %4289 = vmatpush1.msra.mxu0 0.0
          %4290 = vmatprep.subr.mxu0 0.0
          %4291 = vmatpush1.msra.mxu0 0.0
          %4292 = vmatprep.subr.mxu0 0.0
          %4293 = vmatpush1.msra.mxu0 0.0
          %4294 = vmatprep.subr.mxu0 0.0
          %4295 = vmatpush1.msra.mxu0 0.0
          %4296 = vmatprep.subr.mxu0 0.0
          %4297 = vmatpush1.msra.mxu0 0.0
          %4298 = vmatprep.subr.mxu0 0.0
          %4299 = vmatpush1.msra.mxu0 0.0
          %4300 = vmatprep.subr.mxu0 0.0
          %4301 = vmatpush1.msra.mxu0 0.0
          %4302 = vmatprep.subr.mxu0 0.0
          %4303 = vmatpush1.msra.mxu0 0.0
          %4304 = vmatprep.subr.mxu0 0.0
          %4305 = vmatpush1.msra.mxu0 0.0
          %4306 = vmatprep.subr.mxu0 0.0
          %4307 = vmatpush1.msra.mxu0 0.0
          %4308 = vmatprep.subr.mxu0 0.0
          %4309 = vmatpush1.msra.mxu0 0.0
          %4310 = vmatprep.subr.mxu0 0.0
          %4311 = vmatpush1.msra.mxu0 0.0
          %4312 = vmatprep.subr.mxu0 0.0
          %4313 = vmatpush1.msra.mxu0 0.0
          %4314 = vmatprep.subr.mxu0 0.0
          %4315 = vmatpush1.msra.mxu0 0.0
          %4316 = vmatprep.subr.mxu0 0.0
          %4317 = vmatpush1.msra.mxu0 0.0
          %4318 = vmatprep.subr.mxu0 0.0
          %4319 = vmatpush1.msra.mxu0 0.0
          %4320 = vmatprep.subr.mxu0 0.0
          %4321 = vmatpush1.msra.mxu0 0.0
          %4322 = vmatprep.subr.mxu0 0.0
          %4323 = vmatpush1.msra.mxu0 0.0
          %4324 = vmatprep.subr.mxu0 0.0
          %4325 = vmatpush1.msra.mxu0 0.0
          %4326 = vmatprep.subr.mxu0 0.0
          %4327 = vmatpush1.msra.mxu0 0.0
          %4328 = vmatprep.subr.mxu0 0.0
          %4329 = vmatpush1.msra.mxu0 0.0
          %4330 = vmatprep.subr.mxu0 0.0
          %4331 = vmatpush1.msra.mxu0 0.0
          %4332 = vmatprep.subr.mxu0 0.0
          %4333 = vmatpush1.msra.mxu0 0.0
          %4334 = vmatprep.subr.mxu0 0.0
          %4335 = vmatpush1.msra.mxu0 0.0
          %4336 = vmatprep.subr.mxu0 0.0
          %4337 = vmatpush1.msra.mxu0 0.0
          %4338 = vmatprep.subr.mxu0 0.0
          %4339 = vmatpush1.msra.mxu0 0.0
          %4340 = vmatprep.subr.mxu0 0.0
          %4341 = vmatpush1.msra.mxu0 0.0
          %4342 = vmatprep.subr.mxu0 0.0
          %4343 = vmatpush1.msra.mxu0 0.0
          %4344 = vmatprep.subr.mxu0 0.0
          %4345 = vmatpush1.msra.mxu0 0.0
          %4346 = vmatprep.subr.mxu0 0.0
          %4347 = vmatpush1.msra.mxu0 0.0
          %4348 = vmatprep.mubr.f32.mxu0 0.0
          %4349 = vmatmul.mubr.f32.gmra.mrb[0].mxu0 %v4273
          %v4350 = vpop.f32.mrb[0].mxu0
          %v4351 = vadd.f32 0.0, %v4350
          %v4352 = vpop.f32.mrb[0].mxu0
          %4353 = vmatprep.mubr.f32.mxu0 0.0
          %4354 = vmatmul.mubr.f32.gmra.mrb[0].mxu0 %v4275
          %v4355 = vpop.f32.mrb[0].mxu0
          %v4356 = vadd.f32 0.0, %v4355
          %v4357 = vpop.f32.mrb[0].mxu0
          %4358 = vmatprep.mubr.f32.mxu0 0.0
          %4359 = vmatmul.mubr.f32.gmra.mrb[0].mxu0 %v4277
          %v4360 = vpop.f32.mrb[0].mxu0
          %v4361 = vadd.f32 0.0, %v4360
          %v4362 = vpop.f32.mrb[0].mxu0
          %4363 = vmatprep.mubr.f32.mxu0 0.0
          %4364 = vmatmul.mubr.f32.gmra.mrb[0].mxu0 %v4279
          %v4365 = vpop.f32.mrb[0].mxu0
          %v4366 = vadd.f32 0.0, %v4365
          %v4367 = vpop.f32.mrb[0].mxu0
          %4368 = vdwg.mxu0
          %v4369 = vld [vmem:[#allocation2 + $0x6] sm:$0x3]
          %v4370 = vld [vmem:[#allocation2 + $0xe] sm:$0x3]
          %v4371 = vld [vmem:[#allocation2 + $0x16] sm:$0x3]
          %v4372 = vld [vmem:[#allocation2 + $0x1e] sm:$0x3]
          %v4373 = vld [vmem:[#allocation2 + $0x26] sm:$0x3]
          %v4374 = vld [vmem:[#allocation2 + $0x2e] sm:$0x3]
          %v4375 = vld [vmem:[#allocation2 + $0x36] sm:$0x3]
          %v4376 = vld [vmem:[#allocation2 + $0x3e] sm:$0x3]
          %v4377 = vld [vmem:[#allocation2 + $0x46] sm:$0x3]
          %v4378 = vld [vmem:[#allocation2 + $0x4e] sm:$0x3]
          %v4379 = vld [vmem:[#allocation2 + $0x56] sm:$0x3]
          %v4380 = vld [vmem:[#allocation2 + $0x5e] sm:$0x3]
          %v4381 = vld [vmem:[#allocation2 + $0x66] sm:$0x3]
          %v4382 = vld [vmem:[#allocation2 + $0x6e] sm:$0x3]
          %v4383 = vld [vmem:[#allocation2 + $0x76] sm:$0x3]
          %v4384 = vld [vmem:[#allocation2 + $0x7e] sm:$0x3]
          %v4389 = vcombine.high %v4351, %v4351
          %v4391 = vunpack.c.l.s4 1983009808
          %v4392 = vunpack.c.0.s8 %v4391
          %v4393 = vlaneseq
          %v4394 = vshrl.u32 %v4393, 7
          %v4395 = vsub.s32 %v4392, %v4394
          %v4396 = vrot.slane %v4351, %v4395
          %v4398 = vunpack.c.l.s4 1983009808
          %v4399 = vunpack.c.0.s8 %v4398
          %v4400 = vlaneseq
          %v4401 = vshrl.u32 %v4400, 7
          %v4402 = vsub.s32 %v4399, %v4401
          %v4403 = vrot.slane %v4389, %v4402
          %v4404 = vcombine.high %v4396, %v4396
          %v4405 = vcombine.high %v4403, %v4403
          %v4406 = vcombine.high %v4356, %v4356
          %v4408 = vunpack.c.l.s4 1983009808
          %v4409 = vunpack.c.0.s8 %v4408
          %v4410 = vlaneseq
          %v4411 = vshrl.u32 %v4410, 7
          %v4412 = vsub.s32 %v4409, %v4411
          %v4413 = vrot.slane %v4356, %v4412
          %v4415 = vunpack.c.l.s4 1983009808
          %v4416 = vunpack.c.0.s8 %v4415
          %v4417 = vlaneseq
          %v4418 = vshrl.u32 %v4417, 7
          %v4419 = vsub.s32 %v4416, %v4418
          %v4420 = vrot.slane %v4406, %v4419
          %v4421 = vcombine.high %v4413, %v4413
          %v4422 = vcombine.high %v4420, %v4420
          %v4423 = vcombine.high %v4361, %v4361
          %v4425 = vunpack.c.l.s4 1983009808
          %v4426 = vunpack.c.0.s8 %v4425
          %v4427 = vlaneseq
          %v4428 = vshrl.u32 %v4427, 7
          %v4429 = vsub.s32 %v4426, %v4428
          %v4430 = vrot.slane %v4361, %v4429
          %v4432 = vunpack.c.l.s4 1983009808
          %v4433 = vunpack.c.0.s8 %v4432
          %v4434 = vlaneseq
          %v4435 = vshrl.u32 %v4434, 7
          %v4436 = vsub.s32 %v4433, %v4435
          %v4437 = vrot.slane %v4423, %v4436
          %v4438 = vcombine.high %v4430, %v4430
          %v4439 = vcombine.high %v4437, %v4437
          %v4440 = vcombine.high %v4366, %v4366
          %v4442 = vunpack.c.l.s4 1983009808
          %v4443 = vunpack.c.0.s8 %v4442
          %v4444 = vlaneseq
          %v4445 = vshrl.u32 %v4444, 7
          %v4446 = vsub.s32 %v4443, %v4445
          %v4447 = vrot.slane %v4366, %v4446
          %v4449 = vunpack.c.l.s4 1983009808
          %v4450 = vunpack.c.0.s8 %v4449
          %v4451 = vlaneseq
          %v4452 = vshrl.u32 %v4451, 7
          %v4453 = vsub.s32 %v4450, %v4452
          %v4454 = vrot.slane %v4440, %v4453
          %v4455 = vcombine.high %v4447, %v4447
          %v4456 = vcombine.high %v4454, %v4454
          %v4473 = vadd.f32 %v4369, %v4396
          %v4474 = vadd.f32 %v4370, %v4404
          %v4475 = vadd.f32 %v4371, %v4403
          %v4476 = vadd.f32 %v4372, %v4405
          %v4477 = vadd.f32 %v4373, %v4413
          %v4478 = vadd.f32 %v4374, %v4421
          %v4479 = vadd.f32 %v4375, %v4420
          %v4480 = vadd.f32 %v4376, %v4422
          %v4481 = vadd.f32 %v4377, %v4430
          %v4482 = vadd.f32 %v4378, %v4438
          %v4483 = vadd.f32 %v4379, %v4437
          %v4484 = vadd.f32 %v4380, %v4439
          %v4485 = vadd.f32 %v4381, %v4447
          %v4486 = vadd.f32 %v4382, %v4455
          %v4487 = vadd.f32 %v4383, %v4454
          %v4488 = vadd.f32 %v4384, %v4456
          %4489 = vst.msk [vmem:[#allocation2 + $0x6] sm:$0x3] %vm2424, %v4473
          %4490 = vst.msk [vmem:[#allocation2 + $0xe] sm:$0x3] %vm2424, %v4474
          %4491 = vst.msk [vmem:[#allocation2 + $0x16] sm:$0x3] %vm2424, %v4475
          %4492 = vst.msk [vmem:[#allocation2 + $0x1e] sm:$0x3] %vm2424, %v4476
          %4493 = vst.msk [vmem:[#allocation2 + $0x26] sm:$0x3] %vm2424, %v4477
          %4494 = vst.msk [vmem:[#allocation2 + $0x2e] sm:$0x3] %vm2424, %v4478
          %4495 = vst.msk [vmem:[#allocation2 + $0x36] sm:$0x3] %vm2424, %v4479
          %4496 = vst.msk [vmem:[#allocation2 + $0x3e] sm:$0x3] %vm2424, %v4480
          %4497 = vst.msk [vmem:[#allocation2 + $0x46] sm:$0x3] %vm2424, %v4481
          %4498 = vst.msk [vmem:[#allocation2 + $0x4e] sm:$0x3] %vm2424, %v4482
          %4499 = vst.msk [vmem:[#allocation2 + $0x56] sm:$0x3] %vm2424, %v4483
          %4500 = vst.msk [vmem:[#allocation2 + $0x5e] sm:$0x3] %vm2424, %v4484
          %4501 = vst.msk [vmem:[#allocation2 + $0x66] sm:$0x3] %vm2424, %v4485
          %4502 = vst.msk [vmem:[#allocation2 + $0x6e] sm:$0x3] %vm2424, %v4486
          %4503 = vst.msk [vmem:[#allocation2 + $0x76] sm:$0x3] %vm2424, %v4487
          %4504 = vst.msk [vmem:[#allocation2 + $0x7e] sm:$0x3] %vm2424, %v4488
        $region84: #{aspp_forward.1} parent=31 // pred_fallthru
          _
        %s4505 = scalar_lea.vmem %s1, 88
        %v4506 = vld [vmem:[%s4505] sm:$0xf]
        // Predicated region
        $region85: #{aspp_forward.1} parent=31 // pred_check
          _
        $region86: #{aspp_forward.1} parent=31 // pred_check_branch
          %4508 = sbr.rel (%p3749) target = $region88
        $region87: #{aspp_forward.1} parent=31 // pred_region
          %p4509 = scmp.gt.s32.totalorder %s3745, 0
          %s4510 = scalar_select %p4509, %s3745, 0
          %p4511 = scmp.lt.s32.totalorder %s4510, 6
          %s4512 = scalar_select %p4511, %s4510, 6
          %s4513 = smul.u32 %s4512, 64
          %s4514 = scalar_lea.vmem %s195, %s4513
          %v4515 = vld [vmem:[%s4514] sm:$0xff]
          %v4516 = vld [vmem:[%s4514 + $0x8] sm:$0xff]
          %v4517 = vld [vmem:[%s4514 + $0x10] sm:$0xff]
          %v4518 = vld [vmem:[%s4514 + $0x18] sm:$0xff]
          %v4519 = vld [vmem:[%s4514 + $0x20] sm:$0xff]
          %v4520 = vld [vmem:[%s4514 + $0x28] sm:$0xff]
          %v4521 = vld [vmem:[%s4514 + $0x30] sm:$0xff]
          %v4522 = vld [vmem:[%s4514 + $0x38] sm:$0xff]
          %v4523 = vld [vmem:[%s4514 + $0x40] sm:$0xff]
          %v4524 = vld [vmem:[%s4514 + $0x48] sm:$0xff]
          %v4525 = vld [vmem:[%s4514 + $0x50] sm:$0xff]
          %v4526 = vld [vmem:[%s4514 + $0x58] sm:$0xff]
          %v4527 = vld [vmem:[%s4514 + $0x60] sm:$0xff]
          %v4528 = vld [vmem:[%s4514 + $0x68] sm:$0xff]
          %v4529 = vld [vmem:[%s4514 + $0x70] sm:$0xff]
          %v4530 = vld [vmem:[%s4514 + $0x78] sm:$0xff]
          %v4532 = vsel %vm245, %v4515, 0
          %v4535 = vsel %vm245, %v4516, 0
          %v4538 = vsel %vm245, %v4517, 0
          %v4541 = vsel %vm245, %v4518, 0
          %v4544 = vsel %vm245, %v4519, 0
          %v4547 = vsel %vm245, %v4520, 0
          %v4550 = vsel %vm245, %v4521, 0
          %v4553 = vsel %vm245, %v4522, 0
          %v4556 = vsel %vm245, %v4523, 0
          %v4559 = vsel %vm245, %v4524, 0
          %v4562 = vsel %vm245, %v4525, 0
          %v4565 = vsel %vm245, %v4526, 0
          %v4568 = vsel %vm245, %v4527, 0
          %v4571 = vsel %vm245, %v4528, 0
          %v4574 = vsel %vm245, %v4529, 0
          %v4577 = vsel %vm245, %v4530, 0
          %v4580 = vsel %vm294, %v4506, 0
          %4582 = vmatprep.subr.mxu0 0.0
          %4583 = vmatpush1.msra.mxu0 %v4580
          %4584 = vmatprep.subr.mxu0 0.0
          %4585 = vmatpush1.msra.mxu0 0.0
          %4586 = vmatprep.subr.mxu0 0.0
          %4587 = vmatpush1.msra.mxu0 0.0
          %4588 = vmatprep.subr.mxu0 0.0
          %4589 = vmatpush1.msra.mxu0 0.0
          %4590 = vmatprep.subr.mxu0 0.0
          %4591 = vmatpush1.msra.mxu0 0.0
          %4592 = vmatprep.subr.mxu0 0.0
          %4593 = vmatpush1.msra.mxu0 0.0
          %4594 = vmatprep.subr.mxu0 0.0
          %4595 = vmatpush1.msra.mxu0 0.0
          %4596 = vmatprep.subr.mxu0 0.0
          %4597 = vmatpush1.msra.mxu0 0.0
          %4598 = vmatprep.subr.mxu0 0.0
          %4599 = vmatpush1.msra.mxu0 0.0
          %4600 = vmatprep.subr.mxu0 0.0
          %4601 = vmatpush1.msra.mxu0 0.0
          %4602 = vmatprep.subr.mxu0 0.0
          %4603 = vmatpush1.msra.mxu0 0.0
          %4604 = vmatprep.subr.mxu0 0.0
          %4605 = vmatpush1.msra.mxu0 0.0
          %4606 = vmatprep.subr.mxu0 0.0
          %4607 = vmatpush1.msra.mxu0 0.0
          %4608 = vmatprep.subr.mxu0 0.0
          %4609 = vmatpush1.msra.mxu0 0.0
          %4610 = vmatprep.subr.mxu0 0.0
          %4611 = vmatpush1.msra.mxu0 0.0
          %4612 = vmatprep.subr.mxu0 0.0
          %4613 = vmatpush1.msra.mxu0 0.0
          %4614 = vmatprep.subr.mxu0 0.0
          %4615 = vmatpush1.msra.mxu0 0.0
          %4616 = vmatprep.subr.mxu0 0.0
          %4617 = vmatpush1.msra.mxu0 0.0
          %4618 = vmatprep.subr.mxu0 0.0
          %4619 = vmatpush1.msra.mxu0 0.0
          %4620 = vmatprep.subr.mxu0 0.0
          %4621 = vmatpush1.msra.mxu0 0.0
          %4622 = vmatprep.subr.mxu0 0.0
          %4623 = vmatpush1.msra.mxu0 0.0
          %4624 = vmatprep.subr.mxu0 0.0
          %4625 = vmatpush1.msra.mxu0 0.0
          %4626 = vmatprep.subr.mxu0 0.0
          %4627 = vmatpush1.msra.mxu0 0.0
          %4628 = vmatprep.subr.mxu0 0.0
          %4629 = vmatpush1.msra.mxu0 0.0
          %4630 = vmatprep.subr.mxu0 0.0
          %4631 = vmatpush1.msra.mxu0 0.0
          %4632 = vmatprep.subr.mxu0 0.0
          %4633 = vmatpush1.msra.mxu0 0.0
          %4634 = vmatprep.subr.mxu0 0.0
          %4635 = vmatpush1.msra.mxu0 0.0
          %4636 = vmatprep.subr.mxu0 0.0
          %4637 = vmatpush1.msra.mxu0 0.0
          %4638 = vmatprep.subr.mxu0 0.0
          %4639 = vmatpush1.msra.mxu0 0.0
          %4640 = vmatprep.subr.mxu0 0.0
          %4641 = vmatpush1.msra.mxu0 0.0
          %4642 = vmatprep.subr.mxu0 0.0
          %4643 = vmatpush1.msra.mxu0 0.0
          %4644 = vmatprep.subr.mxu0 0.0
          %4645 = vmatpush1.msra.mxu0 0.0
          %4646 = vmatprep.mubr.f32.mxu0 0.0
          %4647 = vmatmul.mubr.f32.gmra.mrb[0].mxu0 %v4532
          %v4648 = vpop.f32.mrb[0].mxu0
          %v4649 = vadd.f32 0.0, %v4648
          %v4650 = vpop.f32.mrb[0].mxu0
          %4651 = vmatprep.mubr.f32.mxu0 0.0
          %4652 = vmatmul.mubr.f32.gmra.mrb[0].mxu0 %v4535
          %v4653 = vpop.f32.mrb[0].mxu0
          %v4654 = vadd.f32 0.0, %v4653
          %v4655 = vpop.f32.mrb[0].mxu0
          %4656 = vmatprep.mubr.f32.mxu0 0.0
          %4657 = vmatmul.mubr.f32.gmra.mrb[0].mxu0 %v4538
          %v4658 = vpop.f32.mrb[0].mxu0
          %v4659 = vadd.f32 0.0, %v4658
          %v4660 = vpop.f32.mrb[0].mxu0
          %4661 = vmatprep.mubr.f32.mxu0 0.0
          %4662 = vmatmul.mubr.f32.gmra.mrb[0].mxu0 %v4541
          %v4663 = vpop.f32.mrb[0].mxu0
          %v4664 = vadd.f32 0.0, %v4663
          %v4665 = vpop.f32.mrb[0].mxu0
          %4666 = vmatprep.mubr.f32.mxu0 0.0
          %4667 = vmatmul.mubr.f32.gmra.mrb[0].mxu0 %v4544
          %v4668 = vpop.f32.mrb[0].mxu0
          %v4669 = vadd.f32 0.0, %v4668
          %v4670 = vpop.f32.mrb[0].mxu0
          %4671 = vmatprep.mubr.f32.mxu0 0.0
          %4672 = vmatmul.mubr.f32.gmra.mrb[0].mxu0 %v4547
          %v4673 = vpop.f32.mrb[0].mxu0
          %v4674 = vadd.f32 0.0, %v4673
          %v4675 = vpop.f32.mrb[0].mxu0
          %4676 = vmatprep.mubr.f32.mxu0 0.0
          %4677 = vmatmul.mubr.f32.gmra.mrb[0].mxu0 %v4550
          %v4678 = vpop.f32.mrb[0].mxu0
          %v4679 = vadd.f32 0.0, %v4678
          %v4680 = vpop.f32.mrb[0].mxu0
          %4681 = vmatprep.mubr.f32.mxu0 0.0
          %4682 = vmatmul.mubr.f32.gmra.mrb[0].mxu0 %v4553
          %v4683 = vpop.f32.mrb[0].mxu0
          %v4684 = vadd.f32 0.0, %v4683
          %v4685 = vpop.f32.mrb[0].mxu0
          %4686 = vmatprep.mubr.f32.mxu0 0.0
          %4687 = vmatmul.mubr.f32.gmra.mrb[0].mxu0 %v4556
          %v4688 = vpop.f32.mrb[0].mxu0
          %v4689 = vadd.f32 0.0, %v4688
          %v4690 = vpop.f32.mrb[0].mxu0
          %4691 = vmatprep.mubr.f32.mxu0 0.0
          %4692 = vmatmul.mubr.f32.gmra.mrb[0].mxu0 %v4559
          %v4693 = vpop.f32.mrb[0].mxu0
          %v4694 = vadd.f32 0.0, %v4693
          %v4695 = vpop.f32.mrb[0].mxu0
          %4696 = vmatprep.mubr.f32.mxu0 0.0
          %4697 = vmatmul.mubr.f32.gmra.mrb[0].mxu0 %v4562
          %v4698 = vpop.f32.mrb[0].mxu0
          %v4699 = vadd.f32 0.0, %v4698
          %v4700 = vpop.f32.mrb[0].mxu0
          %4701 = vmatprep.mubr.f32.mxu0 0.0
          %4702 = vmatmul.mubr.f32.gmra.mrb[0].mxu0 %v4565
          %v4703 = vpop.f32.mrb[0].mxu0
          %v4704 = vadd.f32 0.0, %v4703
          %v4705 = vpop.f32.mrb[0].mxu0
          %4706 = vmatprep.mubr.f32.mxu0 0.0
          %4707 = vmatmul.mubr.f32.gmra.mrb[0].mxu0 %v4568
          %v4708 = vpop.f32.mrb[0].mxu0
          %v4709 = vadd.f32 0.0, %v4708
          %v4710 = vpop.f32.mrb[0].mxu0
          %4711 = vmatprep.mubr.f32.mxu0 0.0
          %4712 = vmatmul.mubr.f32.gmra.mrb[0].mxu0 %v4571
          %v4713 = vpop.f32.mrb[0].mxu0
          %v4714 = vadd.f32 0.0, %v4713
          %v4715 = vpop.f32.mrb[0].mxu0
          %4716 = vmatprep.mubr.f32.mxu0 0.0
          %4717 = vmatmul.mubr.f32.gmra.mrb[0].mxu0 %v4574
          %v4718 = vpop.f32.mrb[0].mxu0
          %v4719 = vadd.f32 0.0, %v4718
          %v4720 = vpop.f32.mrb[0].mxu0
          %4721 = vmatprep.mubr.f32.mxu0 0.0
          %4722 = vmatmul.mubr.f32.gmra.mrb[0].mxu0 %v4577
          %v4723 = vpop.f32.mrb[0].mxu0
          %v4724 = vadd.f32 0.0, %v4723
          %v4725 = vpop.f32.mrb[0].mxu0
          %4726 = vdwg.mxu0
          %v4727 = vld [vmem:[#allocation2] sm:$0xff]
          %v4728 = vld [vmem:[#allocation2 + $0x8] sm:$0xff]
          %v4729 = vld [vmem:[#allocation2 + $0x10] sm:$0xff]
          %v4730 = vld [vmem:[#allocation2 + $0x18] sm:$0xff]
          %v4731 = vld [vmem:[#allocation2 + $0x20] sm:$0xff]
          %v4732 = vld [vmem:[#allocation2 + $0x28] sm:$0xff]
          %v4733 = vld [vmem:[#allocation2 + $0x30] sm:$0xff]
          %v4734 = vld [vmem:[#allocation2 + $0x38] sm:$0xff]
          %v4735 = vld [vmem:[#allocation2 + $0x40] sm:$0xff]
          %v4736 = vld [vmem:[#allocation2 + $0x48] sm:$0xff]
          %v4737 = vld [vmem:[#allocation2 + $0x50] sm:$0xff]
          %v4738 = vld [vmem:[#allocation2 + $0x58] sm:$0xff]
          %v4739 = vld [vmem:[#allocation2 + $0x60] sm:$0xff]
          %v4740 = vld [vmem:[#allocation2 + $0x68] sm:$0xff]
          %v4741 = vld [vmem:[#allocation2 + $0x70] sm:$0xff]
          %v4742 = vld [vmem:[#allocation2 + $0x78] sm:$0xff]
          %v4743 = vadd.f32 %v4727, %v4649
          %v4744 = vadd.f32 %v4728, %v4654
          %v4745 = vadd.f32 %v4729, %v4659
          %v4746 = vadd.f32 %v4730, %v4664
          %v4747 = vadd.f32 %v4731, %v4669
          %v4748 = vadd.f32 %v4732, %v4674
          %v4749 = vadd.f32 %v4733, %v4679
          %v4750 = vadd.f32 %v4734, %v4684
          %v4751 = vadd.f32 %v4735, %v4689
          %v4752 = vadd.f32 %v4736, %v4694
          %v4753 = vadd.f32 %v4737, %v4699
          %v4754 = vadd.f32 %v4738, %v4704
          %v4755 = vadd.f32 %v4739, %v4709
          %v4756 = vadd.f32 %v4740, %v4714
          %v4757 = vadd.f32 %v4741, %v4719
          %v4758 = vadd.f32 %v4742, %v4724
          %4759 = vst.msk [vmem:[#allocation2] sm:$0xff] %vm209, %v4743
          %4760 = vst.msk [vmem:[#allocation2 + $0x8] sm:$0xff] %vm209, %v4744
          %4761 = vst.msk [vmem:[#allocation2 + $0x10] sm:$0xff] %vm209, %v4745
          %4762 = vst.msk [vmem:[#allocation2 + $0x18] sm:$0xff] %vm209, %v4746
          %4763 = vst.msk [vmem:[#allocation2 + $0x20] sm:$0xff] %vm209, %v4747
          %4764 = vst.msk [vmem:[#allocation2 + $0x28] sm:$0xff] %vm209, %v4748
          %4765 = vst.msk [vmem:[#allocation2 + $0x30] sm:$0xff] %vm209, %v4749
          %4766 = vst.msk [vmem:[#allocation2 + $0x38] sm:$0xff] %vm209, %v4750
          %4767 = vst.msk [vmem:[#allocation2 + $0x40] sm:$0xff] %vm209, %v4751
          %4768 = vst.msk [vmem:[#allocation2 + $0x48] sm:$0xff] %vm209, %v4752
          %4769 = vst.msk [vmem:[#allocation2 + $0x50] sm:$0xff] %vm209, %v4753
          %4770 = vst.msk [vmem:[#allocation2 + $0x58] sm:$0xff] %vm209, %v4754
          %4771 = vst.msk [vmem:[#allocation2 + $0x60] sm:$0xff] %vm209, %v4755
          %4772 = vst.msk [vmem:[#allocation2 + $0x68] sm:$0xff] %vm209, %v4756
          %4773 = vst.msk [vmem:[#allocation2 + $0x70] sm:$0xff] %vm209, %v4757
          %4774 = vst.msk [vmem:[#allocation2 + $0x78] sm:$0xff] %vm209, %v4758
        $region88: #{aspp_forward.1} parent=31 // pred_fallthru
          _
        %s4775 = scalar_lea.vmem %s1, 92
        %v4776 = vld [vmem:[%s4775] sm:$0xf]
        // Predicated region
        $region89: #{aspp_forward.1} parent=31 // pred_check
          _
        $region90: #{aspp_forward.1} parent=31 // pred_check_branch
          %4778 = sbr.rel (%p3749) target = $region92
        $region91: #{aspp_forward.1} parent=31 // pred_region
          %p4779 = scmp.gt.s32.totalorder %s3745, 0
          %s4780 = scalar_select %p4779, %s3745, 0
          %p4781 = scmp.lt.s32.totalorder %s4780, 6
          %s4782 = scalar_select %p4781, %s4780, 6
          %s4783 = smul.u32 %s4782, 64
          %s4784 = scalar_lea.vmem %s195, %s4783
          %v4785 = vld [vmem:[%s4784 + $0x6] sm:$0x3]
          %v4786 = vld [vmem:[%s4784 + $0xe] sm:$0x3]
          %v4787 = vld [vmem:[%s4784 + $0x16] sm:$0x3]
          %v4788 = vld [vmem:[%s4784 + $0x1e] sm:$0x3]
          %v4789 = vld [vmem:[%s4784 + $0x26] sm:$0x3]
          %v4790 = vld [vmem:[%s4784 + $0x2e] sm:$0x3]
          %v4791 = vld [vmem:[%s4784 + $0x36] sm:$0x3]
          %v4792 = vld [vmem:[%s4784 + $0x3e] sm:$0x3]
          %v4793 = vld [vmem:[%s4784 + $0x46] sm:$0x3]
          %v4794 = vld [vmem:[%s4784 + $0x4e] sm:$0x3]
          %v4795 = vld [vmem:[%s4784 + $0x56] sm:$0x3]
          %v4796 = vld [vmem:[%s4784 + $0x5e] sm:$0x3]
          %v4797 = vld [vmem:[%s4784 + $0x66] sm:$0x3]
          %v4798 = vld [vmem:[%s4784 + $0x6e] sm:$0x3]
          %v4799 = vld [vmem:[%s4784 + $0x76] sm:$0x3]
          %v4800 = vld [vmem:[%s4784 + $0x7e] sm:$0x3]
          %v4817 = vcombine.low %v4785, %v4786
          %v4818 = vcombine.low %v4787, %v4788
          %v4820 = vunpack.c.l.s4 1983009808
          %v4821 = vunpack.c.0.s8 %v4820
          %v4822 = vlaneseq
          %v4823 = vshrl.u32 %v4822, 7
          %v4824 = vsub.s32 %v4821, %v4823
          %v4825 = vrot.slane %v4817, %v4824
          %v4827 = vunpack.c.l.s4 1983009808
          %v4828 = vunpack.c.0.s8 %v4827
          %v4829 = vlaneseq
          %v4830 = vshrl.u32 %v4829, 7
          %v4831 = vsub.s32 %v4828, %v4830
          %v4832 = vrot.slane %v4818, %v4831
          %v4833 = vcombine.low %v4825, %v4832
          %v4834 = vcombine.low %v4789, %v4790
          %v4835 = vcombine.low %v4791, %v4792
          %v4837 = vunpack.c.l.s4 1983009808
          %v4838 = vunpack.c.0.s8 %v4837
          %v4839 = vlaneseq
          %v4840 = vshrl.u32 %v4839, 7
          %v4841 = vsub.s32 %v4838, %v4840
          %v4842 = vrot.slane %v4834, %v4841
          %v4844 = vunpack.c.l.s4 1983009808
          %v4845 = vunpack.c.0.s8 %v4844
          %v4846 = vlaneseq
          %v4847 = vshrl.u32 %v4846, 7
          %v4848 = vsub.s32 %v4845, %v4847
          %v4849 = vrot.slane %v4835, %v4848
          %v4850 = vcombine.low %v4842, %v4849
          %v4851 = vcombine.low %v4793, %v4794
          %v4852 = vcombine.low %v4795, %v4796
          %v4854 = vunpack.c.l.s4 1983009808
          %v4855 = vunpack.c.0.s8 %v4854
          %v4856 = vlaneseq
          %v4857 = vshrl.u32 %v4856, 7
          %v4858 = vsub.s32 %v4855, %v4857
          %v4859 = vrot.slane %v4851, %v4858
          %v4861 = vunpack.c.l.s4 1983009808
          %v4862 = vunpack.c.0.s8 %v4861
          %v4863 = vlaneseq
          %v4864 = vshrl.u32 %v4863, 7
          %v4865 = vsub.s32 %v4862, %v4864
          %v4866 = vrot.slane %v4852, %v4865
          %v4867 = vcombine.low %v4859, %v4866
          %v4868 = vcombine.low %v4797, %v4798
          %v4869 = vcombine.low %v4799, %v4800
          %v4871 = vunpack.c.l.s4 1983009808
          %v4872 = vunpack.c.0.s8 %v4871
          %v4873 = vlaneseq
          %v4874 = vshrl.u32 %v4873, 7
          %v4875 = vsub.s32 %v4872, %v4874
          %v4876 = vrot.slane %v4868, %v4875
          %v4878 = vunpack.c.l.s4 1983009808
          %v4879 = vunpack.c.0.s8 %v4878
          %v4880 = vlaneseq
          %v4881 = vshrl.u32 %v4880, 7
          %v4882 = vsub.s32 %v4879, %v4881
          %v4883 = vrot.slane %v4869, %v4882
          %v4884 = vcombine.low %v4876, %v4883
          %v4885 = vsel %vm245, %v4833, 0
          %v4887 = vsel %vm245, %v4850, 0
          %v4889 = vsel %vm245, %v4867, 0
          %v4891 = vsel %vm245, %v4884, 0
          %v4894 = vsel %vm294, %v4776, 0
          %4896 = vmatprep.subr.mxu0 0.0
          %4897 = vmatpush1.msra.mxu0 %v4894
          %4898 = vmatprep.subr.mxu0 0.0
          %4899 = vmatpush1.msra.mxu0 0.0
          %4900 = vmatprep.subr.mxu0 0.0
          %4901 = vmatpush1.msra.mxu0 0.0
          %4902 = vmatprep.subr.mxu0 0.0
          %4903 = vmatpush1.msra.mxu0 0.0
          %4904 = vmatprep.subr.mxu0 0.0
          %4905 = vmatpush1.msra.mxu0 0.0
          %4906 = vmatprep.subr.mxu0 0.0
          %4907 = vmatpush1.msra.mxu0 0.0
          %4908 = vmatprep.subr.mxu0 0.0
          %4909 = vmatpush1.msra.mxu0 0.0
          %4910 = vmatprep.subr.mxu0 0.0
          %4911 = vmatpush1.msra.mxu0 0.0
          %4912 = vmatprep.subr.mxu0 0.0
          %4913 = vmatpush1.msra.mxu0 0.0
          %4914 = vmatprep.subr.mxu0 0.0
          %4915 = vmatpush1.msra.mxu0 0.0
          %4916 = vmatprep.subr.mxu0 0.0
          %4917 = vmatpush1.msra.mxu0 0.0
          %4918 = vmatprep.subr.mxu0 0.0
          %4919 = vmatpush1.msra.mxu0 0.0
          %4920 = vmatprep.subr.mxu0 0.0
          %4921 = vmatpush1.msra.mxu0 0.0
          %4922 = vmatprep.subr.mxu0 0.0
          %4923 = vmatpush1.msra.mxu0 0.0
          %4924 = vmatprep.subr.mxu0 0.0
          %4925 = vmatpush1.msra.mxu0 0.0
          %4926 = vmatprep.subr.mxu0 0.0
          %4927 = vmatpush1.msra.mxu0 0.0
          %4928 = vmatprep.subr.mxu0 0.0
          %4929 = vmatpush1.msra.mxu0 0.0
          %4930 = vmatprep.subr.mxu0 0.0
          %4931 = vmatpush1.msra.mxu0 0.0
          %4932 = vmatprep.subr.mxu0 0.0
          %4933 = vmatpush1.msra.mxu0 0.0
          %4934 = vmatprep.subr.mxu0 0.0
          %4935 = vmatpush1.msra.mxu0 0.0
          %4936 = vmatprep.subr.mxu0 0.0
          %4937 = vmatpush1.msra.mxu0 0.0
          %4938 = vmatprep.subr.mxu0 0.0
          %4939 = vmatpush1.msra.mxu0 0.0
          %4940 = vmatprep.subr.mxu0 0.0
          %4941 = vmatpush1.msra.mxu0 0.0
          %4942 = vmatprep.subr.mxu0 0.0
          %4943 = vmatpush1.msra.mxu0 0.0
          %4944 = vmatprep.subr.mxu0 0.0
          %4945 = vmatpush1.msra.mxu0 0.0
          %4946 = vmatprep.subr.mxu0 0.0
          %4947 = vmatpush1.msra.mxu0 0.0
          %4948 = vmatprep.subr.mxu0 0.0
          %4949 = vmatpush1.msra.mxu0 0.0
          %4950 = vmatprep.subr.mxu0 0.0
          %4951 = vmatpush1.msra.mxu0 0.0
          %4952 = vmatprep.subr.mxu0 0.0
          %4953 = vmatpush1.msra.mxu0 0.0
          %4954 = vmatprep.subr.mxu0 0.0
          %4955 = vmatpush1.msra.mxu0 0.0
          %4956 = vmatprep.subr.mxu0 0.0
          %4957 = vmatpush1.msra.mxu0 0.0
          %4958 = vmatprep.subr.mxu0 0.0
          %4959 = vmatpush1.msra.mxu0 0.0
          %4960 = vmatprep.mubr.f32.mxu0 0.0
          %4961 = vmatmul.mubr.f32.gmra.mrb[0].mxu0 %v4885
          %v4962 = vpop.f32.mrb[0].mxu0
          %v4963 = vadd.f32 0.0, %v4962
          %v4964 = vpop.f32.mrb[0].mxu0
          %4965 = vmatprep.mubr.f32.mxu0 0.0
          %4966 = vmatmul.mubr.f32.gmra.mrb[0].mxu0 %v4887
          %v4967 = vpop.f32.mrb[0].mxu0
          %v4968 = vadd.f32 0.0, %v4967
          %v4969 = vpop.f32.mrb[0].mxu0
          %4970 = vmatprep.mubr.f32.mxu0 0.0
          %4971 = vmatmul.mubr.f32.gmra.mrb[0].mxu0 %v4889
          %v4972 = vpop.f32.mrb[0].mxu0
          %v4973 = vadd.f32 0.0, %v4972
          %v4974 = vpop.f32.mrb[0].mxu0
          %4975 = vmatprep.mubr.f32.mxu0 0.0
          %4976 = vmatmul.mubr.f32.gmra.mrb[0].mxu0 %v4891
          %v4977 = vpop.f32.mrb[0].mxu0
          %v4978 = vadd.f32 0.0, %v4977
          %v4979 = vpop.f32.mrb[0].mxu0
          %4980 = vdwg.mxu0
          %v4981 = vld [vmem:[#allocation2] sm:$0x3]
          %v4982 = vld [vmem:[#allocation2 + $0x8] sm:$0x3]
          %v4983 = vld [vmem:[#allocation2 + $0x10] sm:$0x3]
          %v4984 = vld [vmem:[#allocation2 + $0x18] sm:$0x3]
          %v4985 = vld [vmem:[#allocation2 + $0x20] sm:$0x3]
          %v4986 = vld [vmem:[#allocation2 + $0x28] sm:$0x3]
          %v4987 = vld [vmem:[#allocation2 + $0x30] sm:$0x3]
          %v4988 = vld [vmem:[#allocation2 + $0x38] sm:$0x3]
          %v4989 = vld [vmem:[#allocation2 + $0x40] sm:$0x3]
          %v4990 = vld [vmem:[#allocation2 + $0x48] sm:$0x3]
          %v4991 = vld [vmem:[#allocation2 + $0x50] sm:$0x3]
          %v4992 = vld [vmem:[#allocation2 + $0x58] sm:$0x3]
          %v4993 = vld [vmem:[#allocation2 + $0x60] sm:$0x3]
          %v4994 = vld [vmem:[#allocation2 + $0x68] sm:$0x3]
          %v4995 = vld [vmem:[#allocation2 + $0x70] sm:$0x3]
          %v4996 = vld [vmem:[#allocation2 + $0x78] sm:$0x3]
          %v5001 = vcombine.high %v4963, %v4963
          %v5003 = vunpack.c.l.s4 1983009808
          %v5004 = vunpack.c.0.s8 %v5003
          %v5005 = vlaneseq
          %v5006 = vshrl.u32 %v5005, 7
          %v5007 = vsub.s32 %v5004, %v5006
          %v5008 = vrot.slane %v4963, %v5007
          %v5010 = vunpack.c.l.s4 1983009808
          %v5011 = vunpack.c.0.s8 %v5010
          %v5012 = vlaneseq
          %v5013 = vshrl.u32 %v5012, 7
          %v5014 = vsub.s32 %v5011, %v5013
          %v5015 = vrot.slane %v5001, %v5014
          %v5016 = vcombine.high %v5008, %v5008
          %v5017 = vcombine.high %v5015, %v5015
          %v5018 = vcombine.high %v4968, %v4968
          %v5020 = vunpack.c.l.s4 1983009808
          %v5021 = vunpack.c.0.s8 %v5020
          %v5022 = vlaneseq
          %v5023 = vshrl.u32 %v5022, 7
          %v5024 = vsub.s32 %v5021, %v5023
          %v5025 = vrot.slane %v4968, %v5024
          %v5027 = vunpack.c.l.s4 1983009808
          %v5028 = vunpack.c.0.s8 %v5027
          %v5029 = vlaneseq
          %v5030 = vshrl.u32 %v5029, 7
          %v5031 = vsub.s32 %v5028, %v5030
          %v5032 = vrot.slane %v5018, %v5031
          %v5033 = vcombine.high %v5025, %v5025
          %v5034 = vcombine.high %v5032, %v5032
          %v5035 = vcombine.high %v4973, %v4973
          %v5037 = vunpack.c.l.s4 1983009808
          %v5038 = vunpack.c.0.s8 %v5037
          %v5039 = vlaneseq
          %v5040 = vshrl.u32 %v5039, 7
          %v5041 = vsub.s32 %v5038, %v5040
          %v5042 = vrot.slane %v4973, %v5041
          %v5044 = vunpack.c.l.s4 1983009808
          %v5045 = vunpack.c.0.s8 %v5044
          %v5046 = vlaneseq
          %v5047 = vshrl.u32 %v5046, 7
          %v5048 = vsub.s32 %v5045, %v5047
          %v5049 = vrot.slane %v5035, %v5048
          %v5050 = vcombine.high %v5042, %v5042
          %v5051 = vcombine.high %v5049, %v5049
          %v5052 = vcombine.high %v4978, %v4978
          %v5054 = vunpack.c.l.s4 1983009808
          %v5055 = vunpack.c.0.s8 %v5054
          %v5056 = vlaneseq
          %v5057 = vshrl.u32 %v5056, 7
          %v5058 = vsub.s32 %v5055, %v5057
          %v5059 = vrot.slane %v4978, %v5058
          %v5061 = vunpack.c.l.s4 1983009808
          %v5062 = vunpack.c.0.s8 %v5061
          %v5063 = vlaneseq
          %v5064 = vshrl.u32 %v5063, 7
          %v5065 = vsub.s32 %v5062, %v5064
          %v5066 = vrot.slane %v5052, %v5065
          %v5067 = vcombine.high %v5059, %v5059
          %v5068 = vcombine.high %v5066, %v5066
          %v5085 = vadd.f32 %v4981, %v5008
          %v5086 = vadd.f32 %v4982, %v5016
          %v5087 = vadd.f32 %v4983, %v5015
          %v5088 = vadd.f32 %v4984, %v5017
          %v5089 = vadd.f32 %v4985, %v5025
          %v5090 = vadd.f32 %v4986, %v5033
          %v5091 = vadd.f32 %v4987, %v5032
          %v5092 = vadd.f32 %v4988, %v5034
          %v5093 = vadd.f32 %v4989, %v5042
          %v5094 = vadd.f32 %v4990, %v5050
          %v5095 = vadd.f32 %v4991, %v5049
          %v5096 = vadd.f32 %v4992, %v5051
          %v5097 = vadd.f32 %v4993, %v5059
          %v5098 = vadd.f32 %v4994, %v5067
          %v5099 = vadd.f32 %v4995, %v5066
          %v5100 = vadd.f32 %v4996, %v5068
          %5101 = vst.msk [vmem:[#allocation2] sm:$0x3] %vm2424, %v5085
          %5102 = vst.msk [vmem:[#allocation2 + $0x8] sm:$0x3] %vm2424, %v5086
          %5103 = vst.msk [vmem:[#allocation2 + $0x10] sm:$0x3] %vm2424, %v5087
          %5104 = vst.msk [vmem:[#allocation2 + $0x18] sm:$0x3] %vm2424, %v5088
          %5105 = vst.msk [vmem:[#allocation2 + $0x20] sm:$0x3] %vm2424, %v5089
          %5106 = vst.msk [vmem:[#allocation2 + $0x28] sm:$0x3] %vm2424, %v5090
          %5107 = vst.msk [vmem:[#allocation2 + $0x30] sm:$0x3] %vm2424, %v5091
          %5108 = vst.msk [vmem:[#allocation2 + $0x38] sm:$0x3] %vm2424, %v5092
          %5109 = vst.msk [vmem:[#allocation2 + $0x40] sm:$0x3] %vm2424, %v5093
          %5110 = vst.msk [vmem:[#allocation2 + $0x48] sm:$0x3] %vm2424, %v5094
          %5111 = vst.msk [vmem:[#allocation2 + $0x50] sm:$0x3] %vm2424, %v5095
          %5112 = vst.msk [vmem:[#allocation2 + $0x58] sm:$0x3] %vm2424, %v5096
          %5113 = vst.msk [vmem:[#allocation2 + $0x60] sm:$0x3] %vm2424, %v5097
          %5114 = vst.msk [vmem:[#allocation2 + $0x68] sm:$0x3] %vm2424, %v5098
          %5115 = vst.msk [vmem:[#allocation2 + $0x70] sm:$0x3] %vm2424, %v5099
          %5116 = vst.msk [vmem:[#allocation2 + $0x78] sm:$0x3] %vm2424, %v5100
        $region92: #{aspp_forward.1} parent=31 // pred_fallthru
          _
        %s5117 = scalar_lea.vmem %s1, 96
        %v5118 = vld [vmem:[%s5117] sm:$0xf]
        // Predicated region
        $region93: #{aspp_forward.1} parent=31 // pred_check
          _
        $region94: #{aspp_forward.1} parent=31 // pred_check_branch
          %5120 = sbr.rel (%p3749) target = $region96
        $region95: #{aspp_forward.1} parent=31 // pred_region
          %p5121 = scmp.gt.s32.totalorder %s3745, 0
          %s5122 = scalar_select %p5121, %s3745, 0
          %p5123 = scmp.lt.s32.totalorder %s5122, 6
          %s5124 = scalar_select %p5123, %s5122, 6
          %s5125 = smul.u32 %s5124, 64
          %s5126 = sadd.s32 48, %s5125
          %s5127 = scalar_lea.vmem %s195, %s5126
          %v5128 = vld [vmem:[%s5127] sm:$0x3]
          %v5129 = vld [vmem:[%s5127 + $0x8] sm:$0x3]
          %v5130 = vld [vmem:[%s5127 + $0x40] sm:$0x3]
          %v5131 = vld [vmem:[%s5127 + $0x48] sm:$0x3]
          %v5136 = vcombine.low %v5128, %v5129
          %v5137 = vcombine.low %v5130, %v5131
          %v5139 = vunpack.c.l.s4 1983009808
          %v5140 = vunpack.c.0.s8 %v5139
          %v5141 = vlaneseq
          %v5142 = vshrl.u32 %v5141, 7
          %v5143 = vsub.s32 %v5140, %v5142
          %v5144 = vrot.slane %v5136, %v5143
          %v5146 = vunpack.c.l.s4 1983009808
          %v5147 = vunpack.c.0.s8 %v5146
          %v5148 = vlaneseq
          %v5149 = vshrl.u32 %v5148, 7
          %v5150 = vsub.s32 %v5147, %v5149
          %v5151 = vrot.slane %v5137, %v5150
          %v5152 = vcombine.low %v5144, %v5151
          %v5153 = vsel %vm245, %v5152, 0
          %v5156 = vsel %vm294, %v5118, 0
          %5158 = vmatprep.subr.mxu0 0.0
          %5159 = vmatpush1.msra.mxu0 %v5156
          %5160 = vmatprep.subr.mxu0 0.0
          %5161 = vmatpush1.msra.mxu0 0.0
          %5162 = vmatprep.subr.mxu0 0.0
          %5163 = vmatpush1.msra.mxu0 0.0
          %5164 = vmatprep.subr.mxu0 0.0
          %5165 = vmatpush1.msra.mxu0 0.0
          %5166 = vmatprep.subr.mxu0 0.0
          %5167 = vmatpush1.msra.mxu0 0.0
          %5168 = vmatprep.subr.mxu0 0.0
          %5169 = vmatpush1.msra.mxu0 0.0
          %5170 = vmatprep.subr.mxu0 0.0
          %5171 = vmatpush1.msra.mxu0 0.0
          %5172 = vmatprep.subr.mxu0 0.0
          %5173 = vmatpush1.msra.mxu0 0.0
          %5174 = vmatprep.subr.mxu0 0.0
          %5175 = vmatpush1.msra.mxu0 0.0
          %5176 = vmatprep.subr.mxu0 0.0
          %5177 = vmatpush1.msra.mxu0 0.0
          %5178 = vmatprep.subr.mxu0 0.0
          %5179 = vmatpush1.msra.mxu0 0.0
          %5180 = vmatprep.subr.mxu0 0.0
          %5181 = vmatpush1.msra.mxu0 0.0
          %5182 = vmatprep.subr.mxu0 0.0
          %5183 = vmatpush1.msra.mxu0 0.0
          %5184 = vmatprep.subr.mxu0 0.0
          %5185 = vmatpush1.msra.mxu0 0.0
          %5186 = vmatprep.subr.mxu0 0.0
          %5187 = vmatpush1.msra.mxu0 0.0
          %5188 = vmatprep.subr.mxu0 0.0
          %5189 = vmatpush1.msra.mxu0 0.0
          %5190 = vmatprep.subr.mxu0 0.0
          %5191 = vmatpush1.msra.mxu0 0.0
          %5192 = vmatprep.subr.mxu0 0.0
          %5193 = vmatpush1.msra.mxu0 0.0
          %5194 = vmatprep.subr.mxu0 0.0
          %5195 = vmatpush1.msra.mxu0 0.0
          %5196 = vmatprep.subr.mxu0 0.0
          %5197 = vmatpush1.msra.mxu0 0.0
          %5198 = vmatprep.subr.mxu0 0.0
          %5199 = vmatpush1.msra.mxu0 0.0
          %5200 = vmatprep.subr.mxu0 0.0
          %5201 = vmatpush1.msra.mxu0 0.0
          %5202 = vmatprep.subr.mxu0 0.0
          %5203 = vmatpush1.msra.mxu0 0.0
          %5204 = vmatprep.subr.mxu0 0.0
          %5205 = vmatpush1.msra.mxu0 0.0
          %5206 = vmatprep.subr.mxu0 0.0
          %5207 = vmatpush1.msra.mxu0 0.0
          %5208 = vmatprep.subr.mxu0 0.0
          %5209 = vmatpush1.msra.mxu0 0.0
          %5210 = vmatprep.subr.mxu0 0.0
          %5211 = vmatpush1.msra.mxu0 0.0
          %5212 = vmatprep.subr.mxu0 0.0
          %5213 = vmatpush1.msra.mxu0 0.0
          %5214 = vmatprep.subr.mxu0 0.0
          %5215 = vmatpush1.msra.mxu0 0.0
          %5216 = vmatprep.subr.mxu0 0.0
          %5217 = vmatpush1.msra.mxu0 0.0
          %5218 = vmatprep.subr.mxu0 0.0
          %5219 = vmatpush1.msra.mxu0 0.0
          %5220 = vmatprep.subr.mxu0 0.0
          %5221 = vmatpush1.msra.mxu0 0.0
          %5222 = vmatprep.mubr.f32.mxu0 0.0
          %5223 = vmatmul.mubr.f32.gmra.mrb[0].mxu0 %v5153
          %v5224 = vpop.f32.mrb[0].mxu0
          %v5225 = vadd.f32 0.0, %v5224
          %v5226 = vpop.f32.mrb[0].mxu0
          %5227 = vdwg.mxu0
          %v5228 = vld [vmem:[#allocation2 + $0x6] sm:$0x3]
          %v5229 = vld [vmem:[#allocation2 + $0xe] sm:$0x3]
          %v5230 = vld [vmem:[#allocation2 + $0x46] sm:$0x3]
          %v5231 = vld [vmem:[#allocation2 + $0x4e] sm:$0x3]
          %v5233 = vcombine.high %v5225, %v5225
          %v5235 = vunpack.c.l.s4 1983009808
          %v5236 = vunpack.c.0.s8 %v5235
          %v5237 = vlaneseq
          %v5238 = vshrl.u32 %v5237, 7
          %v5239 = vsub.s32 %v5236, %v5238
          %v5240 = vrot.slane %v5225, %v5239
          %v5242 = vunpack.c.l.s4 1983009808
          %v5243 = vunpack.c.0.s8 %v5242
          %v5244 = vlaneseq
          %v5245 = vshrl.u32 %v5244, 7
          %v5246 = vsub.s32 %v5243, %v5245
          %v5247 = vrot.slane %v5233, %v5246
          %v5248 = vcombine.high %v5240, %v5240
          %v5249 = vcombine.high %v5247, %v5247
          %v5254 = vadd.f32 %v5228, %v5240
          %v5255 = vadd.f32 %v5229, %v5248
          %v5256 = vadd.f32 %v5230, %v5247
          %v5257 = vadd.f32 %v5231, %v5249
          %5258 = vst.msk [vmem:[#allocation2 + $0x6] sm:$0x3] %vm2424, %v5254
          %5259 = vst.msk [vmem:[#allocation2 + $0xe] sm:$0x3] %vm2424, %v5255
          %5260 = vst.msk [vmem:[#allocation2 + $0x46] sm:$0x3] %vm2424, %v5256
          %5261 = vst.msk [vmem:[#allocation2 + $0x4e] sm:$0x3] %vm2424, %v5257
        $region96: #{aspp_forward.1} parent=31 // pred_fallthru
          _
        %s5262 = scalar_lea.vmem %s1, 100
        %v5263 = vld [vmem:[%s5262] sm:$0xf]
        // Predicated region
        $region97: #{aspp_forward.1} parent=31 // pred_check
          _
        $region98: #{aspp_forward.1} parent=31 // pred_check_branch
          %5265 = sbr.rel (%p3749) target = $region100
        $region99: #{aspp_forward.1} parent=31 // pred_region
          %p5266 = scmp.gt.s32.totalorder %s3745, 0
          %s5267 = scalar_select %p5266, %s3745, 0
          %p5268 = scmp.lt.s32.totalorder %s5267, 6
          %s5269 = scalar_select %p5268, %s5267, 6
          %s5270 = smul.u32 %s5269, 64
          %s5271 = sadd.s32 48, %s5270
          %s5272 = scalar_lea.vmem %s195, %s5271
          %v5273 = vld [vmem:[%s5272] sm:$0xff]
          %v5274 = vld [vmem:[%s5272 + $0x8] sm:$0xff]
          %v5275 = vld [vmem:[%s5272 + $0x40] sm:$0xff]
          %v5276 = vld [vmem:[%s5272 + $0x48] sm:$0xff]
          %v5278 = vsel %vm245, %v5273, 0
          %v5281 = vsel %vm245, %v5274, 0
          %v5284 = vsel %vm245, %v5275, 0
          %v5287 = vsel %vm245, %v5276, 0
          %v5290 = vsel %vm294, %v5263, 0
          %5292 = vmatprep.subr.mxu0 0.0
          %5293 = vmatpush1.msra.mxu0 %v5290
          %5294 = vmatprep.subr.mxu0 0.0
          %5295 = vmatpush1.msra.mxu0 0.0
          %5296 = vmatprep.subr.mxu0 0.0
          %5297 = vmatpush1.msra.mxu0 0.0
          %5298 = vmatprep.subr.mxu0 0.0
          %5299 = vmatpush1.msra.mxu0 0.0
          %5300 = vmatprep.subr.mxu0 0.0
          %5301 = vmatpush1.msra.mxu0 0.0
          %5302 = vmatprep.subr.mxu0 0.0
          %5303 = vmatpush1.msra.mxu0 0.0
          %5304 = vmatprep.subr.mxu0 0.0
          %5305 = vmatpush1.msra.mxu0 0.0
          %5306 = vmatprep.subr.mxu0 0.0
          %5307 = vmatpush1.msra.mxu0 0.0
          %5308 = vmatprep.subr.mxu0 0.0
          %5309 = vmatpush1.msra.mxu0 0.0
          %5310 = vmatprep.subr.mxu0 0.0
          %5311 = vmatpush1.msra.mxu0 0.0
          %5312 = vmatprep.subr.mxu0 0.0
          %5313 = vmatpush1.msra.mxu0 0.0
          %5314 = vmatprep.subr.mxu0 0.0
          %5315 = vmatpush1.msra.mxu0 0.0
          %5316 = vmatprep.subr.mxu0 0.0
          %5317 = vmatpush1.msra.mxu0 0.0
          %5318 = vmatprep.subr.mxu0 0.0
          %5319 = vmatpush1.msra.mxu0 0.0
          %5320 = vmatprep.subr.mxu0 0.0
          %5321 = vmatpush1.msra.mxu0 0.0
          %5322 = vmatprep.subr.mxu0 0.0
          %5323 = vmatpush1.msra.mxu0 0.0
          %5324 = vmatprep.subr.mxu0 0.0
          %5325 = vmatpush1.msra.mxu0 0.0
          %5326 = vmatprep.subr.mxu0 0.0
          %5327 = vmatpush1.msra.mxu0 0.0
          %5328 = vmatprep.subr.mxu0 0.0
          %5329 = vmatpush1.msra.mxu0 0.0
          %5330 = vmatprep.subr.mxu0 0.0
          %5331 = vmatpush1.msra.mxu0 0.0
          %5332 = vmatprep.subr.mxu0 0.0
          %5333 = vmatpush1.msra.mxu0 0.0
          %5334 = vmatprep.subr.mxu0 0.0
          %5335 = vmatpush1.msra.mxu0 0.0
          %5336 = vmatprep.subr.mxu0 0.0
          %5337 = vmatpush1.msra.mxu0 0.0
          %5338 = vmatprep.subr.mxu0 0.0
          %5339 = vmatpush1.msra.mxu0 0.0
          %5340 = vmatprep.subr.mxu0 0.0
          %5341 = vmatpush1.msra.mxu0 0.0
          %5342 = vmatprep.subr.mxu0 0.0
          %5343 = vmatpush1.msra.mxu0 0.0
          %5344 = vmatprep.subr.mxu0 0.0
          %5345 = vmatpush1.msra.mxu0 0.0
          %5346 = vmatprep.subr.mxu0 0.0
          %5347 = vmatpush1.msra.mxu0 0.0
          %5348 = vmatprep.subr.mxu0 0.0
          %5349 = vmatpush1.msra.mxu0 0.0
          %5350 = vmatprep.subr.mxu0 0.0
          %5351 = vmatpush1.msra.mxu0 0.0
          %5352 = vmatprep.subr.mxu0 0.0
          %5353 = vmatpush1.msra.mxu0 0.0
          %5354 = vmatprep.subr.mxu0 0.0
          %5355 = vmatpush1.msra.mxu0 0.0
          %5356 = vmatprep.mubr.f32.mxu0 0.0
          %5357 = vmatmul.mubr.f32.gmra.mrb[0].mxu0 %v5278
          %v5358 = vpop.f32.mrb[0].mxu0
          %v5359 = vadd.f32 0.0, %v5358
          %v5360 = vpop.f32.mrb[0].mxu0
          %5361 = vmatprep.mubr.f32.mxu0 0.0
          %5362 = vmatmul.mubr.f32.gmra.mrb[0].mxu0 %v5281
          %v5363 = vpop.f32.mrb[0].mxu0
          %v5364 = vadd.f32 0.0, %v5363
          %v5365 = vpop.f32.mrb[0].mxu0
          %5366 = vmatprep.mubr.f32.mxu0 0.0
          %5367 = vmatmul.mubr.f32.gmra.mrb[0].mxu0 %v5284
          %v5368 = vpop.f32.mrb[0].mxu0
          %v5369 = vadd.f32 0.0, %v5368
          %v5370 = vpop.f32.mrb[0].mxu0
          %5371 = vmatprep.mubr.f32.mxu0 0.0
          %5372 = vmatmul.mubr.f32.gmra.mrb[0].mxu0 %v5287
          %v5373 = vpop.f32.mrb[0].mxu0
          %v5374 = vadd.f32 0.0, %v5373
          %v5375 = vpop.f32.mrb[0].mxu0
          %5376 = vdwg.mxu0
          %v5377 = vld [vmem:[#allocation2] sm:$0xff]
          %v5378 = vld [vmem:[#allocation2 + $0x8] sm:$0xff]
          %v5379 = vld [vmem:[#allocation2 + $0x40] sm:$0xff]
          %v5380 = vld [vmem:[#allocation2 + $0x48] sm:$0xff]
          %v5381 = vadd.f32 %v5377, %v5359
          %v5382 = vadd.f32 %v5378, %v5364
          %v5383 = vadd.f32 %v5379, %v5369
          %v5384 = vadd.f32 %v5380, %v5374
          %5385 = vst.msk [vmem:[#allocation2] sm:$0xff] %vm209, %v5381
          %5386 = vst.msk [vmem:[#allocation2 + $0x8] sm:$0xff] %vm209, %v5382
          %5387 = vst.msk [vmem:[#allocation2 + $0x40] sm:$0xff] %vm209, %v5383
          %5388 = vst.msk [vmem:[#allocation2 + $0x48] sm:$0xff] %vm209, %v5384
        $region100: #{aspp_forward.1} parent=31 // pred_fallthru
          _
        %s5389 = scalar_lea.vmem %s1, 104
        %v5390 = vld [vmem:[%s5389] sm:$0xf]
        // Predicated region
        $region101: #{aspp_forward.1} parent=31 // pred_check
          _
        $region102: #{aspp_forward.1} parent=31 // pred_check_branch
          %5392 = sbr.rel (%p3749) target = $region104
        $region103: #{aspp_forward.1} parent=31 // pred_region
          %p5393 = scmp.gt.s32.totalorder %s3745, 0
          %s5394 = scalar_select %p5393, %s3745, 0
          %p5395 = scmp.lt.s32.totalorder %s5394, 6
          %s5396 = scalar_select %p5395, %s5394, 6
          %s5397 = smul.u32 %s5396, 64
          %s5398 = sadd.s32 48, %s5397
          %s5399 = scalar_lea.vmem %s195, %s5398
          %v5400 = vld [vmem:[%s5399 + $0x6] sm:$0x3]
          %v5401 = vld [vmem:[%s5399 + $0xe] sm:$0x3]
          %v5402 = vld [vmem:[%s5399 + $0x46] sm:$0x3]
          %v5403 = vld [vmem:[%s5399 + $0x4e] sm:$0x3]
          %v5408 = vcombine.low %v5400, %v5401
          %v5409 = vcombine.low %v5402, %v5403
          %v5411 = vunpack.c.l.s4 1983009808
          %v5412 = vunpack.c.0.s8 %v5411
          %v5413 = vlaneseq
          %v5414 = vshrl.u32 %v5413, 7
          %v5415 = vsub.s32 %v5412, %v5414
          %v5416 = vrot.slane %v5408, %v5415
          %v5418 = vunpack.c.l.s4 1983009808
          %v5419 = vunpack.c.0.s8 %v5418
          %v5420 = vlaneseq
          %v5421 = vshrl.u32 %v5420, 7
          %v5422 = vsub.s32 %v5419, %v5421
          %v5423 = vrot.slane %v5409, %v5422
          %v5424 = vcombine.low %v5416, %v5423
          %v5425 = vsel %vm245, %v5424, 0
          %v5428 = vsel %vm294, %v5390, 0
          %5430 = vmatprep.subr.mxu0 0.0
          %5431 = vmatpush1.msra.mxu0 %v5428
          %5432 = vmatprep.subr.mxu0 0.0
          %5433 = vmatpush1.msra.mxu0 0.0
          %5434 = vmatprep.subr.mxu0 0.0
          %5435 = vmatpush1.msra.mxu0 0.0
          %5436 = vmatprep.subr.mxu0 0.0
          %5437 = vmatpush1.msra.mxu0 0.0
          %5438 = vmatprep.subr.mxu0 0.0
          %5439 = vmatpush1.msra.mxu0 0.0
          %5440 = vmatprep.subr.mxu0 0.0
          %5441 = vmatpush1.msra.mxu0 0.0
          %5442 = vmatprep.subr.mxu0 0.0
          %5443 = vmatpush1.msra.mxu0 0.0
          %5444 = vmatprep.subr.mxu0 0.0
          %5445 = vmatpush1.msra.mxu0 0.0
          %5446 = vmatprep.subr.mxu0 0.0
          %5447 = vmatpush1.msra.mxu0 0.0
          %5448 = vmatprep.subr.mxu0 0.0
          %5449 = vmatpush1.msra.mxu0 0.0
          %5450 = vmatprep.subr.mxu0 0.0
          %5451 = vmatpush1.msra.mxu0 0.0
          %5452 = vmatprep.subr.mxu0 0.0
          %5453 = vmatpush1.msra.mxu0 0.0
          %5454 = vmatprep.subr.mxu0 0.0
          %5455 = vmatpush1.msra.mxu0 0.0
          %5456 = vmatprep.subr.mxu0 0.0
          %5457 = vmatpush1.msra.mxu0 0.0
          %5458 = vmatprep.subr.mxu0 0.0
          %5459 = vmatpush1.msra.mxu0 0.0
          %5460 = vmatprep.subr.mxu0 0.0
          %5461 = vmatpush1.msra.mxu0 0.0
          %5462 = vmatprep.subr.mxu0 0.0
          %5463 = vmatpush1.msra.mxu0 0.0
          %5464 = vmatprep.subr.mxu0 0.0
          %5465 = vmatpush1.msra.mxu0 0.0
          %5466 = vmatprep.subr.mxu0 0.0
          %5467 = vmatpush1.msra.mxu0 0.0
          %5468 = vmatprep.subr.mxu0 0.0
          %5469 = vmatpush1.msra.mxu0 0.0
          %5470 = vmatprep.subr.mxu0 0.0
          %5471 = vmatpush1.msra.mxu0 0.0
          %5472 = vmatprep.subr.mxu0 0.0
          %5473 = vmatpush1.msra.mxu0 0.0
          %5474 = vmatprep.subr.mxu0 0.0
          %5475 = vmatpush1.msra.mxu0 0.0
          %5476 = vmatprep.subr.mxu0 0.0
          %5477 = vmatpush1.msra.mxu0 0.0
          %5478 = vmatprep.subr.mxu0 0.0
          %5479 = vmatpush1.msra.mxu0 0.0
          %5480 = vmatprep.subr.mxu0 0.0
          %5481 = vmatpush1.msra.mxu0 0.0
          %5482 = vmatprep.subr.mxu0 0.0
          %5483 = vmatpush1.msra.mxu0 0.0
          %5484 = vmatprep.subr.mxu0 0.0
          %5485 = vmatpush1.msra.mxu0 0.0
          %5486 = vmatprep.subr.mxu0 0.0
          %5487 = vmatpush1.msra.mxu0 0.0
          %5488 = vmatprep.subr.mxu0 0.0
          %5489 = vmatpush1.msra.mxu0 0.0
          %5490 = vmatprep.subr.mxu0 0.0
          %5491 = vmatpush1.msra.mxu0 0.0
          %5492 = vmatprep.subr.mxu0 0.0
          %5493 = vmatpush1.msra.mxu0 0.0
          %5494 = vmatprep.mubr.f32.mxu0 0.0
          %5495 = vmatmul.mubr.f32.gmra.mrb[0].mxu0 %v5425
          %v5496 = vpop.f32.mrb[0].mxu0
          %v5497 = vadd.f32 0.0, %v5496
          %v5498 = vpop.f32.mrb[0].mxu0
          %5499 = vdwg.mxu0
          %v5500 = vld [vmem:[#allocation2] sm:$0x3]
          %v5501 = vld [vmem:[#allocation2 + $0x8] sm:$0x3]
          %v5502 = vld [vmem:[#allocation2 + $0x40] sm:$0x3]
          %v5503 = vld [vmem:[#allocation2 + $0x48] sm:$0x3]
          %v5505 = vcombine.high %v5497, %v5497
          %v5507 = vunpack.c.l.s4 1983009808
          %v5508 = vunpack.c.0.s8 %v5507
          %v5509 = vlaneseq
          %v5510 = vshrl.u32 %v5509, 7
          %v5511 = vsub.s32 %v5508, %v5510
          %v5512 = vrot.slane %v5497, %v5511
          %v5514 = vunpack.c.l.s4 1983009808
          %v5515 = vunpack.c.0.s8 %v5514
          %v5516 = vlaneseq
          %v5517 = vshrl.u32 %v5516, 7
          %v5518 = vsub.s32 %v5515, %v5517
          %v5519 = vrot.slane %v5505, %v5518
          %v5520 = vcombine.high %v5512, %v5512
          %v5521 = vcombine.high %v5519, %v5519
          %v5526 = vadd.f32 %v5500, %v5512
          %v5527 = vadd.f32 %v5501, %v5520
          %v5528 = vadd.f32 %v5502, %v5519
          %v5529 = vadd.f32 %v5503, %v5521
          %5530 = vst.msk [vmem:[#allocation2] sm:$0x3] %vm2424, %v5526
          %5531 = vst.msk [vmem:[#allocation2 + $0x8] sm:$0x3] %vm2424, %v5527
          %5532 = vst.msk [vmem:[#allocation2 + $0x40] sm:$0x3] %vm2424, %v5528
          %5533 = vst.msk [vmem:[#allocation2 + $0x48] sm:$0x3] %vm2424, %v5529
        $region104: #{aspp_forward.1} parent=31 // pred_fallthru
          _
        %v5534 = vld [vmem:[#allocation2] sm:$0xff]
        %v5535 = vld [vmem:[#allocation2 + $0x8] sm:$0xff]
        %v5536 = vld [vmem:[#allocation2 + $0x10] sm:$0xff]
        %v5537 = vld [vmem:[#allocation2 + $0x18] sm:$0xff]
        %v5538 = vld [vmem:[#allocation2 + $0x20] sm:$0xff]
        %v5539 = vld [vmem:[#allocation2 + $0x28] sm:$0xff]
        %v5540 = vld [vmem:[#allocation2 + $0x30] sm:$0xff]
        %v5541 = vld [vmem:[#allocation2 + $0x38] sm:$0xff]
        %v5542 = vld [vmem:[#allocation2 + $0x40] sm:$0xff]
        %v5543 = vld [vmem:[#allocation2 + $0x48] sm:$0xff]
        %v5544 = vld [vmem:[#allocation2 + $0x50] sm:$0xff]
        %v5545 = vld [vmem:[#allocation2 + $0x58] sm:$0xff]
        %v5546 = vld [vmem:[#allocation2 + $0x60] sm:$0xff]
        %v5547 = vld [vmem:[#allocation2 + $0x68] sm:$0xff]
        %v5548 = vld [vmem:[#allocation2 + $0x70] sm:$0xff]
        %v5549 = vld [vmem:[#allocation2 + $0x78] sm:$0xff]
        %5550 = vst.msk [vmem:[%s190] sm:$0xff] %vm209, %v5534
        %5551 = vst.msk [vmem:[%s190 + $0x8] sm:$0xff] %vm209, %v5535
        %5552 = vst.msk [vmem:[%s190 + $0x10] sm:$0xff] %vm209, %v5536
        %5553 = vst.msk [vmem:[%s190 + $0x18] sm:$0xff] %vm209, %v5537
        %5554 = vst.msk [vmem:[%s190 + $0x20] sm:$0xff] %vm209, %v5538
        %5555 = vst.msk [vmem:[%s190 + $0x28] sm:$0xff] %vm209, %v5539
        %5556 = vst.msk [vmem:[%s190 + $0x30] sm:$0xff] %vm209, %v5540
        %5557 = vst.msk [vmem:[%s190 + $0x38] sm:$0xff] %vm209, %v5541
        %5558 = vst.msk [vmem:[%s190 + $0x40] sm:$0xff] %vm209, %v5542
        %5559 = vst.msk [vmem:[%s190 + $0x48] sm:$0xff] %vm209, %v5543
        %5560 = vst.msk [vmem:[%s190 + $0x50] sm:$0xff] %vm209, %v5544
        %5561 = vst.msk [vmem:[%s190 + $0x58] sm:$0xff] %vm209, %v5545
        %5562 = vst.msk [vmem:[%s190 + $0x60] sm:$0xff] %vm209, %v5546
        %5563 = vst.msk [vmem:[%s190 + $0x68] sm:$0xff] %vm209, %v5547
        %5564 = vst.msk [vmem:[%s190 + $0x70] sm:$0xff] %vm209, %v5548
        %5565 = vst.msk [vmem:[%s190 + $0x78] sm:$0xff] %vm209, %v5549
        %s5566 = sand.u32 %s114, 1
        %s5567 = scalar_lea.sflag [#allocation4], %s5566
        %s5568 = sand.u32 %s114, 1
        %s5569 = smul.addr %s5568, 128
        %s5570 = scalar_lea.vmem [#allocation3], %s5569
        // Predicated region
        $region105: #{aspp_forward.1} parent=31 // pred_check
          %p5571 = pneg %p124
        $region106: #{aspp_forward.1} parent=31 // pred_check_branch
          %5573 = sbr.rel (%p5571) target = $region108
        $region107: #{aspp_forward.1} parent=31 // pred_region
          %s5574 = smul.u32 %s21, 4
          %s5575 = sadd.s32 %s5574, %s22
          %s5577 = ssub.s32 2048, 2048
          %5578 = vsyncadd %s5567, %s5577
          %s5579 = smul.addr %s5575, 16
          %s5580 = smul.addr %s5579, 128
          %s5581 = scalar_lea.hbm %s3, %s5580
          %s5582 = sshll.u32 %s5570, 4
          %s5583 = int_to_ptr.vmem [resolvable:$true] %s5582
          %5588 = dma.vmem_to_hbm [thread:$0]  %s5583, 2048, %s5581, %s5567, 128, 128, 8
        $region108: #{aspp_forward.1} parent=31 // pred_fallthru
          _
      $region32: #{aspp_forward.1} parent=5 // pred_fallthru
        _
      %p5589 = scmp.le.s32.totalorder 2, %s12
      // Predicated region
      $region109: #{aspp_forward.1} parent=5 // pred_check
        %p5590 = pneg %p5589
      $region110: #{aspp_forward.1} parent=5 // pred_check_branch
        %5592 = sbr.rel (%p5590) target = $region112
      $region111: #{aspp_forward.1} parent=5 // pred_region
        %s5593 = ssub.s32 %s12, 2
        // Predicated region
        $region113: #{aspp_forward.1} parent=111 // pred_check
          %p5594 = pneg %p130
        $region114: #{aspp_forward.1} parent=111 // pred_check_branch
          %5596 = sbr.rel (%p5594) target = $region116
        $region115: #{aspp_forward.1} parent=111 // pred_region
          %s5597 = sand.u32 %s115, 1
          %s5598 = scalar_lea.sflag [#allocation4], %s5597
          %s5599 = sand.u32 %s115, 1
          %s5600 = smul.addr %s5599, 128
          %s5601 = scalar_lea.vmem [#allocation3], %s5600
          %5602 = dma.done %s5598, 2048
        $region116: #{aspp_forward.1} parent=111 // pred_fallthru
          _
      $region112: #{aspp_forward.1} parent=5 // pred_fallthru
        _
    $region6: #{aspp_forward.1} parent=1 // loop_footer
      %s16 = sadd.s32 1, %s12
    $region7: #{aspp_forward.1} parent=1 // loop_footer_branch
      %11 = sbr.rel target = $region3
    $region8: #{aspp_forward.1} parent=1 // loop_exit
      _
    %5603 = vsyncpa [#allocation4], 1
    %s5604 = scalar_lea.sflag [#allocation4], 1
    %5605 = vsyncpa %s5604, 1

</llo_original>
